<compile_context>
chip_gen: v5e
topology: v5e:2x2
jax: 0.10.0
libtpu: 0.0.40
codegen_flags: <defaults>
</compile_context>

<pallas_src>
import functools

import jax
import jax.numpy as jnp
from jax import lax
from jax.experimental import pallas as pl
from jax.experimental.pallas import tpu as pltpu


# ---------------------------------------------------------------------------
# Fused kernel: conv1+ReLU -> conv2+ReLU -> GAP -> FC   (one image per grid step)
# ---------------------------------------------------------------------------
def _fused_cnn_kernel(x_ref, w1_ref, b1_ref, w2_ref, b2_ref, wfc_ref, bfc_ref,
                      o_ref, act1_ref, *, H, W, pad):
    HW = H * W
    C1 = w1_ref.shape[-1]

    # Column index of every flattened spatial row -> horizontal-boundary masks.
    col = lax.broadcasted_iota(jnp.int32, (HW, 1), 0) % W
    left_ok = col > 0           # reading column w-1 is valid
    right_ok = col < (W - 1)    # reading column w+1 is valid

    def conv3x3(load_rows, w_ref):
        # 3x3 conv (stride 1, pad 1) as 9 accumulating dots over shifted slices of the
        # zero-haloed flattened input.  Vertical out-of-range taps land in the zero halo
        # rows; horizontal wrap-around rows are masked to zero before the matmul.
        acc = jnp.zeros((HW, w_ref.shape[-1]), jnp.float32)
        for t in range(9):
            dh, dw = t // 3, t % 3
            off = (dh - 1) * W + (dw - 1)
            tap = load_rows(pad + off).astype(jnp.bfloat16)          # (HW, Cin) bf16
            if dw == 0:
                tap = jnp.where(left_ok, tap, 0)
            elif dw == 2:
                tap = jnp.where(right_ok, tap, 0)
            acc += jnp.dot(tap, w_ref[t], preferred_element_type=jnp.float32)
        return acc

    # ---- conv1 (3 -> 64) + bias + ReLU -------------------------------------------------
    acc1 = conv3x3(lambda s: x_ref[0, s:s + HW, :], w1_ref)
    act1 = jnp.maximum(acc1 + b1_ref[...], 0.0)                      # (HW, 64) f32

    # Stash conv1 output into a zero-haloed VMEM scratch so conv2 can slice its taps.
    act1_ref[0:pad, :] = jnp.zeros((pad, C1), jnp.float32)
    act1_ref[pad + HW:pad + HW + pad, :] = jnp.zeros((pad, C1), jnp.float32)
    act1_ref[pad:pad + HW, :] = act1

    # ---- conv2 (64 -> 128) + bias + ReLU, GAP fused as a row-sum -----------------------
    acc2 = conv3x3(lambda s: act1_ref[s:s + HW, :], w2_ref)
    act2 = jnp.maximum(acc2 + b2_ref[...], 0.0)                      # (HW, 128) f32
    pooled = jnp.sum(act2, axis=0, keepdims=True) * jnp.float32(1.0 / HW)   # (1, 128)

    # ---- classifier (128 -> 128 lane-dense; logits live in the first 10 lanes) ---------
    logits = jnp.dot(pooled.astype(jnp.bfloat16), wfc_ref[...],
                     preferred_element_type=jnp.float32) + bfc_ref[...]
    o_ref[0] = logits


# ---------------------------------------------------------------------------
# Wrapper: parameter re-layout + single pallas_call
# ---------------------------------------------------------------------------
def simple_cnn_forward(x_nchw, params):
    N, Cin, H, W = x_nchw.shape
    HW = H * W
    PAD = W + 8                      # >= W+1 halo rows, kept 8-aligned
    HWP = HW + 2 * PAD
    FCN = 128                        # lane-dense padded classifier width

    # Conv weights: (Cout, Cin, kh, kw) -> (9, Cin, Cout), bf16 (MXU-native operands).
    w1 = jnp.transpose(params["w1"], (2, 3, 1, 0)).reshape(9, Cin, -1).astype(jnp.bfloat16)
    C1 = w1.shape[-1]
    w2 = jnp.transpose(params["w2"], (2, 3, 1, 0)).reshape(9, C1, -1).astype(jnp.bfloat16)
    C2 = w2.shape[-1]
    b1 = params["b1"].reshape(1, C1).astype(jnp.float32)
    b2 = params["b2"].reshape(1, C2).astype(jnp.float32)

    # Classifier: (10, 128) -> lane-dense (128, 128) padded weight / (1, 128) padded bias.
    n_cls = params["wfc"].shape[0]
    wfc = jnp.zeros((C2, FCN), jnp.float32).at[:, :n_cls].set(params["wfc"].T)
    wfc = wfc.astype(jnp.bfloat16)
    bfc = jnp.zeros((1, FCN), jnp.float32).at[0, :n_cls].set(params["bfc"])

    # NCHW -> flattened NHWC rows with a zero vertical halo (horizontal wrap masked in-kernel).
    x_rows = jnp.transpose(x_nchw, (0, 2, 3, 1)).reshape(N, HW, Cin).astype(jnp.float32)
    x_rows = jnp.pad(x_rows, ((0, 0), (PAD, PAD), (0, 0)))

    kernel = functools.partial(_fused_cnn_kernel, H=H, W=W, pad=PAD)
    out = pl.pallas_call(
        kernel,
        out_shape=jax.ShapeDtypeStruct((N, 1, FCN), jnp.float32),
        grid=(N,),
        in_specs=[
            pl.BlockSpec((1, HWP, Cin), lambda n: (n, 0, 0)),   # per-image haloed input
            pl.BlockSpec((9, Cin, C1), lambda n: (0, 0, 0)),    # conv1 weight (resident)
            pl.BlockSpec((1, C1), lambda n: (0, 0)),            # conv1 bias
            pl.BlockSpec((9, C1, C2), lambda n: (0, 0, 0)),     # conv2 weight (resident)
            pl.BlockSpec((1, C2), lambda n: (0, 0)),            # conv2 bias
            pl.BlockSpec((C2, FCN), lambda n: (0, 0)),          # fc weight (lane-dense)
            pl.BlockSpec((1, FCN), lambda n: (0, 0)),           # fc bias
        ],
        out_specs=pl.BlockSpec((1, 1, FCN), lambda n: (n, 0, 0)),
        scratch_shapes=[pltpu.VMEM((HWP, C1), jnp.float32)],    # haloed conv1 activation
        compiler_params=pltpu.CompilerParams(
            dimension_semantics=("parallel",),
            vmem_limit_bytes=32 * 1024 * 1024,
        ),
    )(x_rows, w1, b1, w2, b2, wfc, bfc)

    return out.reshape(N, FCN)[:, :n_cls]


# ---------------------------------------------------------------------------
# Pure-JAX reference for a sanity check
# ---------------------------------------------------------------------------
def reference_forward(x_nchw, p):
    def conv(x, w, b):
        y = lax.conv_general_dilated(
            x, w, (1, 1), ((1, 1), (1, 1)),
            dimension_numbers=("NCHW", "OIHW", "NCHW"),
            precision=lax.Precision.HIGHEST)
        return jnp.maximum(y + b[None, :, None, None], 0.0)

    x = conv(x_nchw, p["w1"], p["b1"])
    x = conv(x, p["w2"], p["b2"])
    pooled = jnp.mean(x, axis=(2, 3))
    return pooled @ p["wfc"].T + p["bfc"]


# ---------------------------------------------------------------------------
if __name__ == "__main__":
    key = jax.random.PRNGKey(0)
    kx, k1, k2, k3, k4, k5, k6 = jax.random.split(key, 7)

    N, Cin, H, W = 2, 3, 16, 16
    x = jax.random.normal(kx, (N, Cin, H, W), jnp.float32)

    def uinit(k, shape, fan_in):
        bound = 1.0 / (fan_in ** 0.5)
        return jax.random.uniform(k, shape, jnp.float32, -bound, bound)

    # Deterministic parameters, PyTorch shapes: conv (Cout, Cin, 3, 3), linear (10, 128).
    params = {
        "w1": uinit(k1, (64, 3, 3, 3), 3 * 9),
        "b1": uinit(k2, (64,), 3 * 9),
        "w2": uinit(k3, (128, 64, 3, 3), 64 * 9),
        "b2": uinit(k4, (128,), 64 * 9),
        "wfc": uinit(k5, (10, 128), 128),
        "bfc": uinit(k6, (10,), 128),
    }

    out = jax.jit(simple_cnn_forward)(x, params)
    out = jax.block_until_ready(out)
    assert out.shape == (N, 10), out.shape

    ref = reference_forward(x, params)
    # bf16 MXU operands with f32 accumulation -> keep a loose-ish tolerance.
    assert jnp.allclose(out, ref, atol=2e-2, rtol=2e-2), (
        float(jnp.max(jnp.abs(out - ref))))

    print("KERNEL_OK")
</pallas_src>

<mosaic_0001>
module attributes {stable_mosaic.version = 11 : i64} {
  func.func @_fused_cnn_kernel(%arg0: i32, %arg1: memref<1x304x3xf32, #tpu.memory_space<vmem>>, %arg2: memref<9x3x64xbf16, #tpu.memory_space<vmem>>, %arg3: memref<1x64xf32, #tpu.memory_space<vmem>>, %arg4: memref<9x64x128xbf16, #tpu.memory_space<vmem>>, %arg5: memref<1x128xf32, #tpu.memory_space<vmem>>, %arg6: memref<128x128xbf16, #tpu.memory_space<vmem>>, %arg7: memref<1x128xf32, #tpu.memory_space<vmem>>, %arg8: memref<1x1x128xf32, #tpu.memory_space<vmem>>, %arg9: memref<304x64xf32, #tpu.memory_space<vmem>>) attributes {dimension_semantics = [#tpu.dimension_semantics<parallel>], iteration_bounds = array<i64: 2>, scalar_prefetch = 0 : i64, scratch_operands = 1 : i64, tpu.core_type = #tpu.core_type<tc>, window_params = [{transform_indices = @transform_0, window_bounds = array<i64: 1, 304, 3>}, {pipeline_mode = #tpu.pipeline_mode<synchronous>, transform_indices = @transform_1, window_bounds = array<i64: 9, 3, 64>}, {pipeline_mode = #tpu.pipeline_mode<synchronous>, transform_indices = @transform_2, window_bounds = array<i64: 1, 64>}, {pipeline_mode = #tpu.pipeline_mode<synchronous>, transform_indices = @transform_3, window_bounds = array<i64: 9, 64, 128>}, {pipeline_mode = #tpu.pipeline_mode<synchronous>, transform_indices = @transform_4, window_bounds = array<i64: 1, 128>}, {pipeline_mode = #tpu.pipeline_mode<synchronous>, transform_indices = @transform_5, window_bounds = array<i64: 128, 128>}, {pipeline_mode = #tpu.pipeline_mode<synchronous>, transform_indices = @transform_6, window_bounds = array<i64: 1, 128>}, {transform_indices = @transform_7, window_bounds = array<i64: 1, 1, 128>}]} {
    %0 = tpu.iota {dimensions = array<i32: 0>} : vector<256x1xi32>
    %c16_i32 = arith.constant 16 : i32
    %c0_i32 = arith.constant 0 : i32
    %1 = arith.cmpi eq, %c16_i32, %c0_i32 : i32
    %c1_i32 = arith.constant 1 : i32
    %2 = arith.select %1, %c1_i32, %c16_i32 : i32
    %3 = vector.broadcast %2 : i32 to vector<256x1xi32>
    %4 = arith.remsi %0, %3 : vector<256x1xi32>
    %c0_i32_0 = arith.constant 0 : i32
    %5 = vector.broadcast %c0_i32_0 : i32 to vector<256x1xi32>
    %6 = arith.cmpi ne, %4, %5 : vector<256x1xi32>
    %c0_i32_1 = arith.constant 0 : i32
    %7 = vector.broadcast %c0_i32_1 : i32 to vector<256x1xi32>
    %8 = arith.cmpi slt, %4, %7 : vector<256x1xi32>
    %c0_i32_2 = arith.constant 0 : i32
    %9 = arith.cmpi slt, %2, %c0_i32_2 : i32
    %10 = vector.broadcast %9 : i1 to vector<256x1xi1>
    %11 = vector.broadcast %10 : vector<256x1xi1> to vector<256x1xi1>
    %12 = arith.xori %8, %11 : vector<256x1xi1>
    %13 = arith.andi %12, %6 : vector<256x1xi1>
    %14 = vector.broadcast %2 : i32 to vector<256x1xi32>
    %15 = arith.addi %4, %14 : vector<256x1xi32>
    %16 = arith.select %13, %15, %4 : vector<256x1xi1>, vector<256x1xi32>
    %c0_i32_3 = arith.constant 0 : i32
    %17 = vector.broadcast %c0_i32_3 : i32 to vector<256x1xi32>
    %18 = arith.cmpi sgt, %16, %17 : vector<256x1xi32>
    %c15_i32 = arith.constant 15 : i32
    %19 = vector.broadcast %c15_i32 : i32 to vector<256x1xi32>
    %20 = arith.cmpi slt, %16, %19 : vector<256x1xi32>
    %cst = arith.constant 0.000000e+00 : f32
    %21 = vector.broadcast %cst : f32 to vector<256x64xf32>
    %c0 = arith.constant 0 : index
    %c7 = arith.constant 7 : index
    %c0_4 = arith.constant 0 : index
    %22 = vector.load %arg1[%c0, %c7, %c0_4] : memref<1x304x3xf32, #tpu.memory_space<vmem>>, vector<1x256x3xf32>
    %23 = vector.shape_cast %22 : vector<1x256x3xf32> to vector<256x3xf32>
    %24 = arith.truncf %23 : vector<256x3xf32> to vector<256x3xbf16>
    %c0_i32_5 = arith.constant 0 : i32
    %25 = arith.sitofp %c0_i32_5 : i32 to bf16
    %26 = vector.shape_cast %18 : vector<256x1xi1> to vector<256x1xi1>
    %27 = vector.broadcast %26 : vector<256x1xi1> to vector<256x3xi1>
    %28 = vector.broadcast %25 : bf16 to vector<256x3xbf16>
    %29 = arith.select %27, %24, %28 : vector<256x3xi1>, vector<256x3xbf16>
    %c0_6 = arith.constant 0 : index
    %c0_7 = arith.constant 0 : index
    %c0_8 = arith.constant 0 : index
    %30 = vector.load %arg2[%c0_6, %c0_7, %c0_8] : memref<9x3x64xbf16, #tpu.memory_space<vmem>>, vector<1x3x64xbf16>
    %31 = vector.shape_cast %30 : vector<1x3x64xbf16> to vector<3x64xbf16>
    %cst_9 = arith.constant dense<0.000000e+00> : vector<256x64xf32>
    %32 = tpu.matmul %29, %31, %cst_9 {dimension_numbers = #tpu.dot_dimension_numbers<[1], [0], [0], [1], [0, 0, 1, 1], [], []>} : vector<256x3xbf16>, vector<3x64xbf16>, vector<256x64xf32> -> vector<256x64xf32>
    %33 = arith.addf %21, %32 : vector<256x64xf32>
    %c0_10 = arith.constant 0 : index
    %c8 = arith.constant 8 : index
    %c0_11 = arith.constant 0 : index
    %34 = vector.load %arg1[%c0_10, %c8, %c0_11] : memref<1x304x3xf32, #tpu.memory_space<vmem>>, vector<1x256x3xf32>
    %35 = vector.shape_cast %34 : vector<1x256x3xf32> to vector<256x3xf32>
    %36 = arith.truncf %35 : vector<256x3xf32> to vector<256x3xbf16>
    %c1 = arith.constant 1 : index
    %c0_12 = arith.constant 0 : index
    %c0_13 = arith.constant 0 : index
    %37 = vector.load %arg2[%c1, %c0_12, %c0_13] : memref<9x3x64xbf16, #tpu.memory_space<vmem>>, vector<1x3x64xbf16>
    %38 = vector.shape_cast %37 : vector<1x3x64xbf16> to vector<3x64xbf16>
    %cst_14 = arith.constant dense<0.000000e+00> : vector<256x64xf32>
    %39 = tpu.matmul %36, %38, %cst_14 {dimension_numbers = #tpu.dot_dimension_numbers<[1], [0], [0], [1], [0, 0, 1, 1], [], []>} : vector<256x3xbf16>, vector<3x64xbf16>, vector<256x64xf32> -> vector<256x64xf32>
    %40 = arith.addf %33, %39 : vector<256x64xf32>
    %c0_15 = arith.constant 0 : index
    %c9 = arith.constant 9 : index
    %c0_16 = arith.constant 0 : index
    %41 = vector.load %arg1[%c0_15, %c9, %c0_16] : memref<1x304x3xf32, #tpu.memory_space<vmem>>, vector<1x256x3xf32>
    %42 = vector.shape_cast %41 : vector<1x256x3xf32> to vector<256x3xf32>
    %43 = arith.truncf %42 : vector<256x3xf32> to vector<256x3xbf16>
    %c0_i32_17 = arith.constant 0 : i32
    %44 = arith.sitofp %c0_i32_17 : i32 to bf16
    %45 = vector.shape_cast %20 : vector<256x1xi1> to vector<256x1xi1>
    %46 = vector.broadcast %45 : vector<256x1xi1> to vector<256x3xi1>
    %47 = vector.broadcast %44 : bf16 to vector<256x3xbf16>
    %48 = arith.select %46, %43, %47 : vector<256x3xi1>, vector<256x3xbf16>
    %c2 = arith.constant 2 : index
    %c0_18 = arith.constant 0 : index
    %c0_19 = arith.constant 0 : index
    %49 = vector.load %arg2[%c2, %c0_18, %c0_19] : memref<9x3x64xbf16, #tpu.memory_space<vmem>>, vector<1x3x64xbf16>
    %50 = vector.shape_cast %49 : vector<1x3x64xbf16> to vector<3x64xbf16>
    %cst_20 = arith.constant dense<0.000000e+00> : vector<256x64xf32>
    %51 = tpu.matmul %48, %50, %cst_20 {dimension_numbers = #tpu.dot_dimension_numbers<[1], [0], [0], [1], [0, 0, 1, 1], [], []>} : vector<256x3xbf16>, vector<3x64xbf16>, vector<256x64xf32> -> vector<256x64xf32>
    %52 = arith.addf %40, %51 : vector<256x64xf32>
    %c0_21 = arith.constant 0 : index
    %c23 = arith.constant 23 : index
    %c0_22 = arith.constant 0 : index
    %53 = vector.load %arg1[%c0_21, %c23, %c0_22] : memref<1x304x3xf32, #tpu.memory_space<vmem>>, vector<1x256x3xf32>
    %54 = vector.shape_cast %53 : vector<1x256x3xf32> to vector<256x3xf32>
    %55 = arith.truncf %54 : vector<256x3xf32> to vector<256x3xbf16>
    %c0_i32_23 = arith.constant 0 : i32
    %56 = arith.sitofp %c0_i32_23 : i32 to bf16
    %57 = vector.shape_cast %18 : vector<256x1xi1> to vector<256x1xi1>
    %58 = vector.broadcast %57 : vector<256x1xi1> to vector<256x3xi1>
    %59 = vector.broadcast %56 : bf16 to vector<256x3xbf16>
    %60 = arith.select %58, %55, %59 : vector<256x3xi1>, vector<256x3xbf16>
    %c3 = arith.constant 3 : index
    %c0_24 = arith.constant 0 : index
    %c0_25 = arith.constant 0 : index
    %61 = vector.load %arg2[%c3, %c0_24, %c0_25] : memref<9x3x64xbf16, #tpu.memory_space<vmem>>, vector<1x3x64xbf16>
    %62 = vector.shape_cast %61 : vector<1x3x64xbf16> to vector<3x64xbf16>
    %cst_26 = arith.constant dense<0.000000e+00> : vector<256x64xf32>
    %63 = tpu.matmul %60, %62, %cst_26 {dimension_numbers = #tpu.dot_dimension_numbers<[1], [0], [0], [1], [0, 0, 1, 1], [], []>} : vector<256x3xbf16>, vector<3x64xbf16>, vector<256x64xf32> -> vector<256x64xf32>
    %64 = arith.addf %52, %63 : vector<256x64xf32>
    %c0_27 = arith.constant 0 : index
    %c24 = arith.constant 24 : index
    %c0_28 = arith.constant 0 : index
    %65 = vector.load %arg1[%c0_27, %c24, %c0_28] : memref<1x304x3xf32, #tpu.memory_space<vmem>>, vector<1x256x3xf32>
    %66 = vector.shape_cast %65 : vector<1x256x3xf32> to vector<256x3xf32>
    %67 = arith.truncf %66 : vector<256x3xf32> to vector<256x3xbf16>
    %c4 = arith.constant 4 : index
    %c0_29 = arith.constant 0 : index
    %c0_30 = arith.constant 0 : index
    %68 = vector.load %arg2[%c4, %c0_29, %c0_30] : memref<9x3x64xbf16, #tpu.memory_space<vmem>>, vector<1x3x64xbf16>
    %69 = vector.shape_cast %68 : vector<1x3x64xbf16> to vector<3x64xbf16>
    %cst_31 = arith.constant dense<0.000000e+00> : vector<256x64xf32>
    %70 = tpu.matmul %67, %69, %cst_31 {dimension_numbers = #tpu.dot_dimension_numbers<[1], [0], [0], [1], [0, 0, 1, 1], [], []>} : vector<256x3xbf16>, vector<3x64xbf16>, vector<256x64xf32> -> vector<256x64xf32>
    %71 = arith.addf %64, %70 : vector<256x64xf32>
    %c0_32 = arith.constant 0 : index
    %c25 = arith.constant 25 : index
    %c0_33 = arith.constant 0 : index
    %72 = vector.load %arg1[%c0_32, %c25, %c0_33] : memref<1x304x3xf32, #tpu.memory_space<vmem>>, vector<1x256x3xf32>
    %73 = vector.shape_cast %72 : vector<1x256x3xf32> to vector<256x3xf32>
    %74 = arith.truncf %73 : vector<256x3xf32> to vector<256x3xbf16>
    %c0_i32_34 = arith.constant 0 : i32
    %75 = arith.sitofp %c0_i32_34 : i32 to bf16
    %76 = vector.shape_cast %20 : vector<256x1xi1> to vector<256x1xi1>
    %77 = vector.broadcast %76 : vector<256x1xi1> to vector<256x3xi1>
    %78 = vector.broadcast %75 : bf16 to vector<256x3xbf16>
    %79 = arith.select %77, %74, %78 : vector<256x3xi1>, vector<256x3xbf16>
    %c5 = arith.constant 5 : index
    %c0_35 = arith.constant 0 : index
    %c0_36 = arith.constant 0 : index
    %80 = vector.load %arg2[%c5, %c0_35, %c0_36] : memref<9x3x64xbf16, #tpu.memory_space<vmem>>, vector<1x3x64xbf16>
    %81 = vector.shape_cast %80 : vector<1x3x64xbf16> to vector<3x64xbf16>
    %cst_37 = arith.constant dense<0.000000e+00> : vector<256x64xf32>
    %82 = tpu.matmul %79, %81, %cst_37 {dimension_numbers = #tpu.dot_dimension_numbers<[1], [0], [0], [1], [0, 0, 1, 1], [], []>} : vector<256x3xbf16>, vector<3x64xbf16>, vector<256x64xf32> -> vector<256x64xf32>
    %83 = arith.addf %71, %82 : vector<256x64xf32>
    %c0_38 = arith.constant 0 : index
    %c39 = arith.constant 39 : index
    %c0_39 = arith.constant 0 : index
    %84 = vector.load %arg1[%c0_38, %c39, %c0_39] : memref<1x304x3xf32, #tpu.memory_space<vmem>>, vector<1x256x3xf32>
    %85 = vector.shape_cast %84 : vector<1x256x3xf32> to vector<256x3xf32>
    %86 = arith.truncf %85 : vector<256x3xf32> to vector<256x3xbf16>
    %c0_i32_40 = arith.constant 0 : i32
    %87 = arith.sitofp %c0_i32_40 : i32 to bf16
    %88 = vector.shape_cast %18 : vector<256x1xi1> to vector<256x1xi1>
    %89 = vector.broadcast %88 : vector<256x1xi1> to vector<256x3xi1>
    %90 = vector.broadcast %87 : bf16 to vector<256x3xbf16>
    %91 = arith.select %89, %86, %90 : vector<256x3xi1>, vector<256x3xbf16>
    %c6 = arith.constant 6 : index
    %c0_41 = arith.constant 0 : index
    %c0_42 = arith.constant 0 : index
    %92 = vector.load %arg2[%c6, %c0_41, %c0_42] : memref<9x3x64xbf16, #tpu.memory_space<vmem>>, vector<1x3x64xbf16>
    %93 = vector.shape_cast %92 : vector<1x3x64xbf16> to vector<3x64xbf16>
    %cst_43 = arith.constant dense<0.000000e+00> : vector<256x64xf32>
    %94 = tpu.matmul %91, %93, %cst_43 {dimension_numbers = #tpu.dot_dimension_numbers<[1], [0], [0], [1], [0, 0, 1, 1], [], []>} : vector<256x3xbf16>, vector<3x64xbf16>, vector<256x64xf32> -> vector<256x64xf32>
    %95 = arith.addf %83, %94 : vector<256x64xf32>
    %c0_44 = arith.constant 0 : index
    %c40 = arith.constant 40 : index
    %c0_45 = arith.constant 0 : index
    %96 = vector.load %arg1[%c0_44, %c40, %c0_45] : memref<1x304x3xf32, #tpu.memory_space<vmem>>, vector<1x256x3xf32>
    %97 = vector.shape_cast %96 : vector<1x256x3xf32> to vector<256x3xf32>
    %98 = arith.truncf %97 : vector<256x3xf32> to vector<256x3xbf16>
    %c7_46 = arith.constant 7 : index
    %c0_47 = arith.constant 0 : index
    %c0_48 = arith.constant 0 : index
    %99 = vector.load %arg2[%c7_46, %c0_47, %c0_48] : memref<9x3x64xbf16, #tpu.memory_space<vmem>>, vector<1x3x64xbf16>
    %100 = vector.shape_cast %99 : vector<1x3x64xbf16> to vector<3x64xbf16>
    %cst_49 = arith.constant dense<0.000000e+00> : vector<256x64xf32>
    %101 = tpu.matmul %98, %100, %cst_49 {dimension_numbers = #tpu.dot_dimension_numbers<[1], [0], [0], [1], [0, 0, 1, 1], [], []>} : vector<256x3xbf16>, vector<3x64xbf16>, vector<256x64xf32> -> vector<256x64xf32>
    %102 = arith.addf %95, %101 : vector<256x64xf32>
    %c0_50 = arith.constant 0 : index
    %c41 = arith.constant 41 : index
    %c0_51 = arith.constant 0 : index
    %103 = vector.load %arg1[%c0_50, %c41, %c0_51] : memref<1x304x3xf32, #tpu.memory_space<vmem>>, vector<1x256x3xf32>
    %104 = vector.shape_cast %103 : vector<1x256x3xf32> to vector<256x3xf32>
    %105 = arith.truncf %104 : vector<256x3xf32> to vector<256x3xbf16>
    %c0_i32_52 = arith.constant 0 : i32
    %106 = arith.sitofp %c0_i32_52 : i32 to bf16
    %107 = vector.shape_cast %20 : vector<256x1xi1> to vector<256x1xi1>
    %108 = vector.broadcast %107 : vector<256x1xi1> to vector<256x3xi1>
    %109 = vector.broadcast %106 : bf16 to vector<256x3xbf16>
    %110 = arith.select %108, %105, %109 : vector<256x3xi1>, vector<256x3xbf16>
    %c8_53 = arith.constant 8 : index
    %c0_54 = arith.constant 0 : index
    %c0_55 = arith.constant 0 : index
    %111 = vector.load %arg2[%c8_53, %c0_54, %c0_55] : memref<9x3x64xbf16, #tpu.memory_space<vmem>>, vector<1x3x64xbf16>
    %112 = vector.shape_cast %111 : vector<1x3x64xbf16> to vector<3x64xbf16>
    %cst_56 = arith.constant dense<0.000000e+00> : vector<256x64xf32>
    %113 = tpu.matmul %110, %112, %cst_56 {dimension_numbers = #tpu.dot_dimension_numbers<[1], [0], [0], [1], [0, 0, 1, 1], [], []>} : vector<256x3xbf16>, vector<3x64xbf16>, vector<256x64xf32> -> vector<256x64xf32>
    %114 = arith.addf %102, %113 : vector<256x64xf32>
    %c0_57 = arith.constant 0 : index
    %c0_58 = arith.constant 0 : index
    %115 = vector.load %arg3[%c0_57, %c0_58] : memref<1x64xf32, #tpu.memory_space<vmem>>, vector<1x64xf32>
    %116 = vector.broadcast %115 : vector<1x64xf32> to vector<256x64xf32>
    %117 = arith.addf %114, %116 : vector<256x64xf32>
    %cst_59 = arith.constant 0.000000e+00 : f32
    %118 = vector.broadcast %cst_59 : f32 to vector<256x64xf32>
    %119 = arith.maximumf %117, %118 : vector<256x64xf32>
    %cst_60 = arith.constant 0.000000e+00 : f32
    %120 = vector.broadcast %cst_60 : f32 to vector<24x64xf32>
    %c0_61 = arith.constant 0 : index
    %c0_62 = arith.constant 0 : index
    %121 = vector.load %arg9[%c0_61, %c0_62] : memref<304x64xf32, #tpu.memory_space<vmem>>, vector<24x64xf32>
    tpu.vector_store %arg9[%c0_61, %c0_62], %120 {strides = array<i32>} : memref<304x64xf32, #tpu.memory_space<vmem>>, vector<24x64xf32>,
    %cst_63 = arith.constant 0.000000e+00 : f32
    %122 = vector.broadcast %cst_63 : f32 to vector<24x64xf32>
    %c280 = arith.constant 280 : index
    %c0_64 = arith.constant 0 : index
    %123 = vector.load %arg9[%c280, %c0_64] : memref<304x64xf32, #tpu.memory_space<vmem>>, vector<24x64xf32>
    tpu.vector_store %arg9[%c280, %c0_64], %122 {strides = array<i32>} : memref<304x64xf32, #tpu.memory_space<vmem>>, vector<24x64xf32>,
    %c24_65 = arith.constant 24 : index
    %c0_66 = arith.constant 0 : index
    %124 = vector.load %arg9[%c24_65, %c0_66] : memref<304x64xf32, #tpu.memory_space<vmem>>, vector<256x64xf32>
    tpu.vector_store %arg9[%c24_65, %c0_66], %119 {strides = array<i32>} : memref<304x64xf32, #tpu.memory_space<vmem>>, vector<256x64xf32>,
    %cst_67 = arith.constant 0.000000e+00 : f32
    %125 = vector.broadcast %cst_67 : f32 to vector<256x128xf32>
    %c7_68 = arith.constant 7 : index
    %c0_69 = arith.constant 0 : index
    %126 = vector.load %arg9[%c7_68, %c0_69] : memref<304x64xf32, #tpu.memory_space<vmem>>, vector<256x64xf32>
    %127 = arith.truncf %126 : vector<256x64xf32> to vector<256x64xbf16>
    %c0_i32_70 = arith.constant 0 : i32
    %128 = arith.sitofp %c0_i32_70 : i32 to bf16
    %129 = vector.shape_cast %18 : vector<256x1xi1> to vector<256x1xi1>
    %130 = vector.broadcast %129 : vector<256x1xi1> to vector<256x64xi1>
    %131 = vector.broadcast %128 : bf16 to vector<256x64xbf16>
    %132 = arith.select %130, %127, %131 : vector<256x64xi1>, vector<256x64xbf16>
    %c0_71 = arith.constant 0 : index
    %c0_72 = arith.constant 0 : index
    %c0_73 = arith.constant 0 : index
    %133 = vector.load %arg4[%c0_71, %c0_72, %c0_73] : memref<9x64x128xbf16, #tpu.memory_space<vmem>>, vector<1x64x128xbf16>
    %134 = vector.shape_cast %133 : vector<1x64x128xbf16> to vector<64x128xbf16>
    %cst_74 = arith.constant dense<0.000000e+00> : vector<256x128xf32>
    %135 = tpu.matmul %132, %134, %cst_74 {dimension_numbers = #tpu.dot_dimension_numbers<[1], [0], [0], [1], [0, 0, 1, 1], [], []>} : vector<256x64xbf16>, vector<64x128xbf16>, vector<256x128xf32> -> vector<256x128xf32>
    %136 = arith.addf %125, %135 : vector<256x128xf32>
    %c8_75 = arith.constant 8 : index
    %c0_76 = arith.constant 0 : index
    %137 = vector.load %arg9[%c8_75, %c0_76] : memref<304x64xf32, #tpu.memory_space<vmem>>, vector<256x64xf32>
    %138 = arith.truncf %137 : vector<256x64xf32> to vector<256x64xbf16>
    %c1_77 = arith.constant 1 : index
    %c0_78 = arith.constant 0 : index
    %c0_79 = arith.constant 0 : index
    %139 = vector.load %arg4[%c1_77, %c0_78, %c0_79] : memref<9x64x128xbf16, #tpu.memory_space<vmem>>, vector<1x64x128xbf16>
    %140 = vector.shape_cast %139 : vector<1x64x128xbf16> to vector<64x128xbf16>
    %cst_80 = arith.constant dense<0.000000e+00> : vector<256x128xf32>
    %141 = tpu.matmul %138, %140, %cst_80 {dimension_numbers = #tpu.dot_dimension_numbers<[1], [0], [0], [1], [0, 0, 1, 1], [], []>} : vector<256x64xbf16>, vector<64x128xbf16>, vector<256x128xf32> -> vector<256x128xf32>
    %142 = arith.addf %136, %141 : vector<256x128xf32>
    %c9_81 = arith.constant 9 : index
    %c0_82 = arith.constant 0 : index
    %143 = vector.load %arg9[%c9_81, %c0_82] : memref<304x64xf32, #tpu.memory_space<vmem>>, vector<256x64xf32>
    %144 = arith.truncf %143 : vector<256x64xf32> to vector<256x64xbf16>
    %c0_i32_83 = arith.constant 0 : i32
    %145 = arith.sitofp %c0_i32_83 : i32 to bf16
    %146 = vector.shape_cast %20 : vector<256x1xi1> to vector<256x1xi1>
    %147 = vector.broadcast %146 : vector<256x1xi1> to vector<256x64xi1>
    %148 = vector.broadcast %145 : bf16 to vector<256x64xbf16>
    %149 = arith.select %147, %144, %148 : vector<256x64xi1>, vector<256x64xbf16>
    %c2_84 = arith.constant 2 : index
    %c0_85 = arith.constant 0 : index
    %c0_86 = arith.constant 0 : index
    %150 = vector.load %arg4[%c2_84, %c0_85, %c0_86] : memref<9x64x128xbf16, #tpu.memory_space<vmem>>, vector<1x64x128xbf16>
    %151 = vector.shape_cast %150 : vector<1x64x128xbf16> to vector<64x128xbf16>
    %cst_87 = arith.constant dense<0.000000e+00> : vector<256x128xf32>
    %152 = tpu.matmul %149, %151, %cst_87 {dimension_numbers = #tpu.dot_dimension_numbers<[1], [0], [0], [1], [0, 0, 1, 1], [], []>} : vector<256x64xbf16>, vector<64x128xbf16>, vector<256x128xf32> -> vector<256x128xf32>
    %153 = arith.addf %142, %152 : vector<256x128xf32>
    %c23_88 = arith.constant 23 : index
    %c0_89 = arith.constant 0 : index
    %154 = vector.load %arg9[%c23_88, %c0_89] : memref<304x64xf32, #tpu.memory_space<vmem>>, vector<256x64xf32>
    %155 = arith.truncf %154 : vector<256x64xf32> to vector<256x64xbf16>
    %c0_i32_90 = arith.constant 0 : i32
    %156 = arith.sitofp %c0_i32_90 : i32 to bf16
    %157 = vector.shape_cast %18 : vector<256x1xi1> to vector<256x1xi1>
    %158 = vector.broadcast %157 : vector<256x1xi1> to vector<256x64xi1>
    %159 = vector.broadcast %156 : bf16 to vector<256x64xbf16>
    %160 = arith.select %158, %155, %159 : vector<256x64xi1>, vector<256x64xbf16>
    %c3_91 = arith.constant 3 : index
    %c0_92 = arith.constant 0 : index
    %c0_93 = arith.constant 0 : index
    %161 = vector.load %arg4[%c3_91, %c0_92, %c0_93] : memref<9x64x128xbf16, #tpu.memory_space<vmem>>, vector<1x64x128xbf16>
    %162 = vector.shape_cast %161 : vector<1x64x128xbf16> to vector<64x128xbf16>
    %cst_94 = arith.constant dense<0.000000e+00> : vector<256x128xf32>
    %163 = tpu.matmul %160, %162, %cst_94 {dimension_numbers = #tpu.dot_dimension_numbers<[1], [0], [0], [1], [0, 0, 1, 1], [], []>} : vector<256x64xbf16>, vector<64x128xbf16>, vector<256x128xf32> -> vector<256x128xf32>
    %164 = arith.addf %153, %163 : vector<256x128xf32>
    %c24_95 = arith.constant 24 : index
    %c0_96 = arith.constant 0 : index
    %165 = vector.load %arg9[%c24_95, %c0_96] : memref<304x64xf32, #tpu.memory_space<vmem>>, vector<256x64xf32>
    %166 = arith.truncf %165 : vector<256x64xf32> to vector<256x64xbf16>
    %c4_97 = arith.constant 4 : index
    %c0_98 = arith.constant 0 : index
    %c0_99 = arith.constant 0 : index
    %167 = vector.load %arg4[%c4_97, %c0_98, %c0_99] : memref<9x64x128xbf16, #tpu.memory_space<vmem>>, vector<1x64x128xbf16>
    %168 = vector.shape_cast %167 : vector<1x64x128xbf16> to vector<64x128xbf16>
    %cst_100 = arith.constant dense<0.000000e+00> : vector<256x128xf32>
    %169 = tpu.matmul %166, %168, %cst_100 {dimension_numbers = #tpu.dot_dimension_numbers<[1], [0], [0], [1], [0, 0, 1, 1], [], []>} : vector<256x64xbf16>, vector<64x128xbf16>, vector<256x128xf32> -> vector<256x128xf32>
    %170 = arith.addf %164, %169 : vector<256x128xf32>
    %c25_101 = arith.constant 25 : index
    %c0_102 = arith.constant 0 : index
    %171 = vector.load %arg9[%c25_101, %c0_102] : memref<304x64xf32, #tpu.memory_space<vmem>>, vector<256x64xf32>
    %172 = arith.truncf %171 : vector<256x64xf32> to vector<256x64xbf16>
    %c0_i32_103 = arith.constant 0 : i32
    %173 = arith.sitofp %c0_i32_103 : i32 to bf16
    %174 = vector.shape_cast %20 : vector<256x1xi1> to vector<256x1xi1>
    %175 = vector.broadcast %174 : vector<256x1xi1> to vector<256x64xi1>
    %176 = vector.broadcast %173 : bf16 to vector<256x64xbf16>
    %177 = arith.select %175, %172, %176 : vector<256x64xi1>, vector<256x64xbf16>
    %c5_104 = arith.constant 5 : index
    %c0_105 = arith.constant 0 : index
    %c0_106 = arith.constant 0 : index
    %178 = vector.load %arg4[%c5_104, %c0_105, %c0_106] : memref<9x64x128xbf16, #tpu.memory_space<vmem>>, vector<1x64x128xbf16>
    %179 = vector.shape_cast %178 : vector<1x64x128xbf16> to vector<64x128xbf16>
    %cst_107 = arith.constant dense<0.000000e+00> : vector<256x128xf32>
    %180 = tpu.matmul %177, %179, %cst_107 {dimension_numbers = #tpu.dot_dimension_numbers<[1], [0], [0], [1], [0, 0, 1, 1], [], []>} : vector<256x64xbf16>, vector<64x128xbf16>, vector<256x128xf32> -> vector<256x128xf32>
    %181 = arith.addf %170, %180 : vector<256x128xf32>
    %c39_108 = arith.constant 39 : index
    %c0_109 = arith.constant 0 : index
    %182 = vector.load %arg9[%c39_108, %c0_109] : memref<304x64xf32, #tpu.memory_space<vmem>>, vector<256x64xf32>
    %183 = arith.truncf %182 : vector<256x64xf32> to vector<256x64xbf16>
    %c0_i32_110 = arith.constant 0 : i32
    %184 = arith.sitofp %c0_i32_110 : i32 to bf16
    %185 = vector.shape_cast %18 : vector<256x1xi1> to vector<256x1xi1>
    %186 = vector.broadcast %185 : vector<256x1xi1> to vector<256x64xi1>
    %187 = vector.broadcast %184 : bf16 to vector<256x64xbf16>
    %188 = arith.select %186, %183, %187 : vector<256x64xi1>, vector<256x64xbf16>
    %c6_111 = arith.constant 6 : index
    %c0_112 = arith.constant 0 : index
    %c0_113 = arith.constant 0 : index
    %189 = vector.load %arg4[%c6_111, %c0_112, %c0_113] : memref<9x64x128xbf16, #tpu.memory_space<vmem>>, vector<1x64x128xbf16>
    %190 = vector.shape_cast %189 : vector<1x64x128xbf16> to vector<64x128xbf16>
    %cst_114 = arith.constant dense<0.000000e+00> : vector<256x128xf32>
    %191 = tpu.matmul %188, %190, %cst_114 {dimension_numbers = #tpu.dot_dimension_numbers<[1], [0], [0], [1], [0, 0, 1, 1], [], []>} : vector<256x64xbf16>, vector<64x128xbf16>, vector<256x128xf32> -> vector<256x128xf32>
    %192 = arith.addf %181, %191 : vector<256x128xf32>
    %c40_115 = arith.constant 40 : index
    %c0_116 = arith.constant 0 : index
    %193 = vector.load %arg9[%c40_115, %c0_116] : memref<304x64xf32, #tpu.memory_space<vmem>>, vector<256x64xf32>
    %194 = arith.truncf %193 : vector<256x64xf32> to vector<256x64xbf16>
    %c7_117 = arith.constant 7 : index
    %c0_118 = arith.constant 0 : index
    %c0_119 = arith.constant 0 : index
    %195 = vector.load %arg4[%c7_117, %c0_118, %c0_119] : memref<9x64x128xbf16, #tpu.memory_space<vmem>>, vector<1x64x128xbf16>
    %196 = vector.shape_cast %195 : vector<1x64x128xbf16> to vector<64x128xbf16>
    %cst_120 = arith.constant dense<0.000000e+00> : vector<256x128xf32>
    %197 = tpu.matmul %194, %196, %cst_120 {dimension_numbers = #tpu.dot_dimension_numbers<[1], [0], [0], [1], [0, 0, 1, 1], [], []>} : vector<256x64xbf16>, vector<64x128xbf16>, vector<256x128xf32> -> vector<256x128xf32>
    %198 = arith.addf %192, %197 : vector<256x128xf32>
    %c41_121 = arith.constant 41 : index
    %c0_122 = arith.constant 0 : index
    %199 = vector.load %arg9[%c41_121, %c0_122] : memref<304x64xf32, #tpu.memory_space<vmem>>, vector<256x64xf32>
    %200 = arith.truncf %199 : vector<256x64xf32> to vector<256x64xbf16>
    %c0_i32_123 = arith.constant 0 : i32
    %201 = arith.sitofp %c0_i32_123 : i32 to bf16
    %202 = vector.shape_cast %20 : vector<256x1xi1> to vector<256x1xi1>
    %203 = vector.broadcast %202 : vector<256x1xi1> to vector<256x64xi1>
    %204 = vector.broadcast %201 : bf16 to vector<256x64xbf16>
    %205 = arith.select %203, %200, %204 : vector<256x64xi1>, vector<256x64xbf16>
    %c8_124 = arith.constant 8 : index
    %c0_125 = arith.constant 0 : index
    %c0_126 = arith.constant 0 : index
    %206 = vector.load %arg4[%c8_124, %c0_125, %c0_126] : memref<9x64x128xbf16, #tpu.memory_space<vmem>>, vector<1x64x128xbf16>
    %207 = vector.shape_cast %206 : vector<1x64x128xbf16> to vector<64x128xbf16>
    %cst_127 = arith.constant dense<0.000000e+00> : vector<256x128xf32>
    %208 = tpu.matmul %205, %207, %cst_127 {dimension_numbers = #tpu.dot_dimension_numbers<[1], [0], [0], [1], [0, 0, 1, 1], [], []>} : vector<256x64xbf16>, vector<64x128xbf16>, vector<256x128xf32> -> vector<256x128xf32>
    %209 = arith.addf %198, %208 : vector<256x128xf32>
    %c0_128 = arith.constant 0 : index
    %c0_129 = arith.constant 0 : index
    %210 = vector.load %arg5[%c0_128, %c0_129] : memref<1x128xf32, #tpu.memory_space<vmem>>, vector<1x128xf32>
    %211 = vector.broadcast %210 : vector<1x128xf32> to vector<256x128xf32>
    %212 = arith.addf %209, %211 : vector<256x128xf32>
    %cst_130 = arith.constant 0.000000e+00 : f32
    %213 = vector.broadcast %cst_130 : f32 to vector<256x128xf32>
    %214 = arith.maximumf %212, %213 : vector<256x128xf32>
    %cst_131 = arith.constant dense<0.000000e+00> : vector<128xf32>
    %215 = vector.multi_reduction <add>, %214, %cst_131 [0] : vector<256x128xf32> to vector<128xf32>
    %216 = vector.shape_cast %215 : vector<128xf32> to vector<1x128xf32>
    %cst_132 = arith.constant 3.906250e-03 : f32
    %217 = vector.broadcast %cst_132 : f32 to vector<1x128xf32>
    %218 = arith.mulf %216, %217 : vector<1x128xf32>
    %219 = arith.truncf %218 : vector<1x128xf32> to vector<1x128xbf16>
    %c0_133 = arith.constant 0 : index
    %c0_134 = arith.constant 0 : index
    %220 = vector.load %arg6[%c0_133, %c0_134] : memref<128x128xbf16, #tpu.memory_space<vmem>>, vector<128x128xbf16>
    %cst_135 = arith.constant dense<0.000000e+00> : vector<1x128xf32>
    %221 = tpu.matmul %219, %220, %cst_135 {dimension_numbers = #tpu.dot_dimension_numbers<[1], [0], [0], [1], [0, 0, 1, 1], [], []>} : vector<1x128xbf16>, vector<128x128xbf16>, vector<1x128xf32> -> vector<1x128xf32>
    %c0_136 = arith.constant 0 : index
    %c0_137 = arith.constant 0 : index
    %222 = vector.load %arg7[%c0_136, %c0_137] : memref<1x128xf32, #tpu.memory_space<vmem>>, vector<1x128xf32>
    %223 = arith.addf %221, %222 : vector<1x128xf32>
    %c0_138 = arith.constant 0 : index
    %c0_139 = arith.constant 0 : index
    %c0_140 = arith.constant 0 : index
    %224 = vector.load %arg8[%c0_138, %c0_139, %c0_140] : memref<1x1x128xf32, #tpu.memory_space<vmem>>, vector<1x1x128xf32>
    %225 = vector.shape_cast %224 : vector<1x1x128xf32> to vector<1x128xf32>
    %226 = vector.shape_cast %223 : vector<1x128xf32> to vector<1x1x128xf32>
    tpu.vector_store %arg8[%c0_138, %c0_139, %c0_140], %226 {strides = array<i32>} : memref<1x1x128xf32, #tpu.memory_space<vmem>>, vector<1x1x128xf32>,
    return
  }
  func.func @transform_0(%arg0: i32) -> (i32, i32, i32) {
    %c0_i32 = arith.constant 0 : i32
    %c0_i32_0 = arith.constant 0 : i32
    %c0_i32_1 = arith.constant 0 : i32
    return %arg0, %c0_i32, %c0_i32_0 : i32, i32, i32
  }
  func.func @transform_1(%arg0: i32) -> (i32, i32, i32) {
    %c0_i32 = arith.constant 0 : i32
    %c0_i32_0 = arith.constant 0 : i32
    %c0_i32_1 = arith.constant 0 : i32
    %c0_i32_2 = arith.constant 0 : i32
    return %c0_i32, %c0_i32_0, %c0_i32_1 : i32, i32, i32
  }
  func.func @transform_2(%arg0: i32) -> (i32, i32) {
    %c0_i32 = arith.constant 0 : i32
    %c0_i32_0 = arith.constant 0 : i32
    %c0_i32_1 = arith.constant 0 : i32
    return %c0_i32, %c0_i32_0 : i32, i32
  }
  func.func @transform_3(%arg0: i32) -> (i32, i32, i32) {
    %c0_i32 = arith.constant 0 : i32
    %c0_i32_0 = arith.constant 0 : i32
    %c0_i32_1 = arith.constant 0 : i32
    %c0_i32_2 = arith.constant 0 : i32
    return %c0_i32, %c0_i32_0, %c0_i32_1 : i32, i32, i32
  }
  func.func @transform_4(%arg0: i32) -> (i32, i32) {
    %c0_i32 = arith.constant 0 : i32
    %c0_i32_0 = arith.constant 0 : i32
    %c0_i32_1 = arith.constant 0 : i32
    return %c0_i32, %c0_i32_0 : i32, i32
  }
  func.func @transform_5(%arg0: i32) -> (i32, i32) {
    %c0_i32 = arith.constant 0 : i32
    %c0_i32_0 = arith.constant 0 : i32
    %c0_i32_1 = arith.constant 0 : i32
    return %c0_i32, %c0_i32_0 : i32, i32
  }
  func.func @transform_6(%arg0: i32) -> (i32, i32) {
    %c0_i32 = arith.constant 0 : i32
    %c0_i32_0 = arith.constant 0 : i32
    %c0_i32_1 = arith.constant 0 : i32
    return %c0_i32, %c0_i32_0 : i32, i32
  }
  func.func @transform_7(%arg0: i32) -> (i32, i32, i32) {
    %c0_i32 = arith.constant 0 : i32
    %c0_i32_0 = arith.constant 0 : i32
    %c0_i32_1 = arith.constant 0 : i32
    return %arg0, %c0_i32, %c0_i32_0 : i32, i32, i32
  }
}

</mosaic_0001>

<llo_original>
// kernel: simple_cnn_forward.1
$region0: #{simple_cnn_forward.1}
  #allocation0 [shape = 'u32[]', space=smem, size = 0x4, offset = 0x4, fixed_abs, tag = 'smem constant byte address 0x4 - core index']
  #allocation1 [shape = 'u32[72,128]{1,0:T(1,128)}', space=vmem, size = 0x9000, scoped, tag = 'internal scratch']
  #allocation2 [shape = 'f32[304,64]{1,0:T(8,128)}', space=vmem, size = 0x26000, scoped, tag = 'scratch operand']
  %s0 = inlined_call_operand.vmem [shape: f32[2,304,3], index: 0, kind: input, shape index: {}]
  %s1 = inlined_call_operand.vmem [shape: bf16[9,3,64], index: 1, kind: input, shape index: {}]
  %s2 = inlined_call_operand.vmem [shape: f32[1,64], index: 2, kind: input, shape index: {}]
  %s3 = inlined_call_operand.vmem [shape: bf16[9,64,128], index: 3, kind: input, shape index: {}]
  %s4 = inlined_call_operand.vmem [shape: f32[1,128], index: 4, kind: input, shape index: {}]
  %s5 = inlined_call_operand.vmem [shape: bf16[128,128], index: 5, kind: input, shape index: {}]
  %s6 = inlined_call_operand.vmem [shape: f32[1,128], index: 6, kind: input, shape index: {}]
  %s7 = inlined_call_operand.hbm [shape: f32[2,1,128], index: 7, kind: output, shape index: {}]
  %s8 = sld [smem:[#allocation0]]
  $region61: #{simple_cnn_forward.1} parent=0
    _
  %s10 = ssub.s32 1, %s8
  %s11 = scalar_select 0, %s10, %s8
  $region1: #{simple_cnn_forward.1} parent=0
    #allocation3 [shape = 'u8[1024]{0}', space=vmem, size = 0x400, scoped, tag = 'output window, operand 0']
    #allocation4 [shape = 's32[2]{0}', space=sflag, size = 0x8, scoped, tag = 'scoped memory for simple_cnn_forward.1']
    %12 = vsyncpa [#allocation4], 0
    %s13 = scalar_lea.sflag [#allocation4], 1
    %14 = vsyncpa %s13, 0
    loop: start=0, step=1, limit=4
    $region2: #{simple_cnn_forward.1} parent=1 // loop_pre_header
      _
    $region3: #{simple_cnn_forward.1} parent=1 // loop_header
      %s16 = sphi 0, %s20
      %p17 = scmp.ge.s32.totalorder %s16, 4
      %s26 = sphi 0, %s28
      %s29 = sphi 0, %s26
      %s30 = sphi 0, %s29
      %s46 = sphi 0, %s30
      %s50 = sphi 0, %s50
      %s52 = sphi 0, %s50
      %s53 = sphi 0, %s52
      %s67 = sphi 0, %s53
      %s71 = sphi 0, %s71
      %s73 = sphi 0, %s71
      %s74 = sphi 0, %s73
      %s88 = sphi 0, %s74
      %s92 = sphi 0, %s92
      %s94 = sphi 0, %s92
      %s95 = sphi 0, %s94
      %s109 = sphi 0, %s95
      %s113 = sphi 0, %s113
      %s115 = sphi 0, %s113
      %s116 = sphi 0, %s115
      %s130 = sphi 0, %s116
      %s134 = sphi 0, %s134
      %s136 = sphi 0, %s134
      %s137 = sphi 0, %s136
      %s151 = sphi 0, %s137
      %s155 = sphi 0, %s155
      %s157 = sphi 0, %s155
      %s158 = sphi 0, %s157
      %s172 = sphi 0, %s158
      %s178 = sphi 0, %s180
      %s181 = sphi 0, %s178
      %s182 = sphi 0, %s181
      %s198 = sphi 0, %s182
    $region4: #{simple_cnn_forward.1} parent=1 // loop_header_branch
      %19 = sbr.rel (%p17) target = $region8
    $region5: #{simple_cnn_forward.1} parent=1 // loop_body
      %s21 = ssub.s32 %s16, 1
      %s22 = ssub.s32 %s16, 2
      %s23 = sadd.s32 %s16, 1
      %s24 = ssub.s32 %s16, %s23
      %p25 = scmp.eq.s32.totalorder %s24, 0
      %s27 = sadd.s32 %s26, 1
      %s28 = scalar_select %p25, %s26, %s27
      %p31 = pneg %p25
      %p32 = scmp.eq.s32.totalorder %s16, 1
      %p33 = por %p31, %p32
      %p34 = scmp.ne.s32.totalorder %s26, %s29
      %p35 = scmp.eq.s32.totalorder %s16, 0
      %p36 = por %p34, %p35
      %p37 = scmp.ne.s32.totalorder %s26, %s29
      %p38 = scmp.eq.s32.totalorder %s21, 1
      %p39 = por %p37, %p38
      %p40 = scmp.ne.s32.totalorder %s29, %s30
      %p41 = scmp.eq.s32.totalorder %s21, 0
      %p42 = por %p40, %p41
      %p43 = scmp.ne.s32.totalorder %s29, %s30
      %p44 = scmp.eq.s32.totalorder %s22, 1
      %p45 = por %p43, %p44
      %p47 = scmp.ne.s32.totalorder %s30, %s46
      %p48 = scmp.eq.s32.totalorder %s22, 0
      %p49 = por %p47, %p48
      %s51 = sadd.s32 %s50, 1
      %p54 = scmp.eq.s32.totalorder %s16, 1
      %p55 = scmp.ne.s32.totalorder %s50, %s52
      %p56 = scmp.eq.s32.totalorder %s16, 0
      %p57 = por %p55, %p56
      %p58 = scmp.ne.s32.totalorder %s50, %s52
      %p59 = scmp.eq.s32.totalorder %s21, 1
      %p60 = por %p58, %p59
      %p61 = scmp.ne.s32.totalorder %s52, %s53
      %p62 = scmp.eq.s32.totalorder %s21, 0
      %p63 = por %p61, %p62
      %p64 = scmp.ne.s32.totalorder %s52, %s53
      %p65 = scmp.eq.s32.totalorder %s22, 1
      %p66 = por %p64, %p65
      %p68 = scmp.ne.s32.totalorder %s53, %s67
      %p69 = scmp.eq.s32.totalorder %s22, 0
      %p70 = por %p68, %p69
      %s72 = sadd.s32 %s71, 1
      %p75 = scmp.eq.s32.totalorder %s16, 1
      %p76 = scmp.ne.s32.totalorder %s71, %s73
      %p77 = scmp.eq.s32.totalorder %s16, 0
      %p78 = por %p76, %p77
      %p79 = scmp.ne.s32.totalorder %s71, %s73
      %p80 = scmp.eq.s32.totalorder %s21, 1
      %p81 = por %p79, %p80
      %p82 = scmp.ne.s32.totalorder %s73, %s74
      %p83 = scmp.eq.s32.totalorder %s21, 0
      %p84 = por %p82, %p83
      %p85 = scmp.ne.s32.totalorder %s73, %s74
      %p86 = scmp.eq.s32.totalorder %s22, 1
      %p87 = por %p85, %p86
      %p89 = scmp.ne.s32.totalorder %s74, %s88
      %p90 = scmp.eq.s32.totalorder %s22, 0
      %p91 = por %p89, %p90
      %s93 = sadd.s32 %s92, 1
      %p96 = scmp.eq.s32.totalorder %s16, 1
      %p97 = scmp.ne.s32.totalorder %s92, %s94
      %p98 = scmp.eq.s32.totalorder %s16, 0
      %p99 = por %p97, %p98
      %p100 = scmp.ne.s32.totalorder %s92, %s94
      %p101 = scmp.eq.s32.totalorder %s21, 1
      %p102 = por %p100, %p101
      %p103 = scmp.ne.s32.totalorder %s94, %s95
      %p104 = scmp.eq.s32.totalorder %s21, 0
      %p105 = por %p103, %p104
      %p106 = scmp.ne.s32.totalorder %s94, %s95
      %p107 = scmp.eq.s32.totalorder %s22, 1
      %p108 = por %p106, %p107
      %p110 = scmp.ne.s32.totalorder %s95, %s109
      %p111 = scmp.eq.s32.totalorder %s22, 0
      %p112 = por %p110, %p111
      %s114 = sadd.s32 %s113, 1
      %p117 = scmp.eq.s32.totalorder %s16, 1
      %p118 = scmp.ne.s32.totalorder %s113, %s115
      %p119 = scmp.eq.s32.totalorder %s16, 0
      %p120 = por %p118, %p119
      %p121 = scmp.ne.s32.totalorder %s113, %s115
      %p122 = scmp.eq.s32.totalorder %s21, 1
      %p123 = por %p121, %p122
      %p124 = scmp.ne.s32.totalorder %s115, %s116
      %p125 = scmp.eq.s32.totalorder %s21, 0
      %p126 = por %p124, %p125
      %p127 = scmp.ne.s32.totalorder %s115, %s116
      %p128 = scmp.eq.s32.totalorder %s22, 1
      %p129 = por %p127, %p128
      %p131 = scmp.ne.s32.totalorder %s116, %s130
      %p132 = scmp.eq.s32.totalorder %s22, 0
      %p133 = por %p131, %p132
      %s135 = sadd.s32 %s134, 1
      %p138 = scmp.eq.s32.totalorder %s16, 1
      %p139 = scmp.ne.s32.totalorder %s134, %s136
      %p140 = scmp.eq.s32.totalorder %s16, 0
      %p141 = por %p139, %p140
      %p142 = scmp.ne.s32.totalorder %s134, %s136
      %p143 = scmp.eq.s32.totalorder %s21, 1
      %p144 = por %p142, %p143
      %p145 = scmp.ne.s32.totalorder %s136, %s137
      %p146 = scmp.eq.s32.totalorder %s21, 0
      %p147 = por %p145, %p146
      %p148 = scmp.ne.s32.totalorder %s136, %s137
      %p149 = scmp.eq.s32.totalorder %s22, 1
      %p150 = por %p148, %p149
      %p152 = scmp.ne.s32.totalorder %s137, %s151
      %p153 = scmp.eq.s32.totalorder %s22, 0
      %p154 = por %p152, %p153
      %s156 = sadd.s32 %s155, 1
      %p159 = scmp.eq.s32.totalorder %s16, 1
      %p160 = scmp.ne.s32.totalorder %s155, %s157
      %p161 = scmp.eq.s32.totalorder %s16, 0
      %p162 = por %p160, %p161
      %p163 = scmp.ne.s32.totalorder %s155, %s157
      %p164 = scmp.eq.s32.totalorder %s21, 1
      %p165 = por %p163, %p164
      %p166 = scmp.ne.s32.totalorder %s157, %s158
      %p167 = scmp.eq.s32.totalorder %s21, 0
      %p168 = por %p166, %p167
      %p169 = scmp.ne.s32.totalorder %s157, %s158
      %p170 = scmp.eq.s32.totalorder %s22, 1
      %p171 = por %p169, %p170
      %p173 = scmp.ne.s32.totalorder %s158, %s172
      %p174 = scmp.eq.s32.totalorder %s22, 0
      %p175 = por %p173, %p174
      %s176 = ssub.s32 %s16, %s23
      %p177 = scmp.eq.s32.totalorder %s176, 0
      %s179 = sadd.s32 %s178, 1
      %s180 = scalar_select %p177, %s178, %s179
      %p183 = pneg %p177
      %p184 = scmp.eq.s32.totalorder %s16, 1
      %p185 = por %p183, %p184
      %p186 = scmp.ne.s32.totalorder %s178, %s181
      %p187 = scmp.eq.s32.totalorder %s16, 0
      %p188 = por %p186, %p187
      %p189 = scmp.ne.s32.totalorder %s178, %s181
      %p190 = scmp.eq.s32.totalorder %s21, 1
      %p191 = por %p189, %p190
      %p192 = scmp.ne.s32.totalorder %s181, %s182
      %p193 = scmp.eq.s32.totalorder %s21, 0
      %p194 = por %p192, %p193
      %p195 = scmp.ne.s32.totalorder %s181, %s182
      %p196 = scmp.eq.s32.totalorder %s22, 1
      %p197 = por %p195, %p196
      %p199 = scmp.ne.s32.totalorder %s182, %s198
      %p200 = scmp.eq.s32.totalorder %s22, 0
      %p201 = por %p199, %p200
      %p202 = scmp.le.s32.totalorder 1, %s16
      %p203 = scmp.lt.s32.totalorder %s16, 3
      %p204 = pnand %p202, %p203
      %p205 = pneg %p204
      // Predicated region
      $region9: #{simple_cnn_forward.1} parent=5 // pred_check
        _
      $region10: #{simple_cnn_forward.1} parent=5 // pred_check_branch
        %207 = sbr.rel (%p204) target = $region12
      $region11: #{simple_cnn_forward.1} parent=5 // pred_region
        %s208 = ssub.s32 %s16, 1
        // Predicated region
        $region13: #{simple_cnn_forward.1} parent=11 // pred_check
          %p209 = pneg %p63
        $region14: #{simple_cnn_forward.1} parent=11 // pred_check_branch
          %211 = sbr.rel (%p209) target = $region16
        $region15: #{simple_cnn_forward.1} parent=11 // pred_region
          _
        $region16: #{simple_cnn_forward.1} parent=11 // pred_fallthru
          _
        // Predicated region
        $region17: #{simple_cnn_forward.1} parent=11 // pred_check
          %p212 = pneg %p84
        $region18: #{simple_cnn_forward.1} parent=11 // pred_check_branch
          %214 = sbr.rel (%p212) target = $region20
        $region19: #{simple_cnn_forward.1} parent=11 // pred_region
          _
        $region20: #{simple_cnn_forward.1} parent=11 // pred_fallthru
          _
        // Predicated region
        $region21: #{simple_cnn_forward.1} parent=11 // pred_check
          %p215 = pneg %p105
        $region22: #{simple_cnn_forward.1} parent=11 // pred_check_branch
          %217 = sbr.rel (%p215) target = $region24
        $region23: #{simple_cnn_forward.1} parent=11 // pred_region
          _
        $region24: #{simple_cnn_forward.1} parent=11 // pred_fallthru
          _
        // Predicated region
        $region25: #{simple_cnn_forward.1} parent=11 // pred_check
          %p218 = pneg %p126
        $region26: #{simple_cnn_forward.1} parent=11 // pred_check_branch
          %220 = sbr.rel (%p218) target = $region28
        $region27: #{simple_cnn_forward.1} parent=11 // pred_region
          _
        $region28: #{simple_cnn_forward.1} parent=11 // pred_fallthru
          _
        // Predicated region
        $region29: #{simple_cnn_forward.1} parent=11 // pred_check
          %p221 = pneg %p147
        $region30: #{simple_cnn_forward.1} parent=11 // pred_check_branch
          %223 = sbr.rel (%p221) target = $region32
        $region31: #{simple_cnn_forward.1} parent=11 // pred_region
          _
        $region32: #{simple_cnn_forward.1} parent=11 // pred_fallthru
          _
        // Predicated region
        $region33: #{simple_cnn_forward.1} parent=11 // pred_check
          %p224 = pneg %p168
        $region34: #{simple_cnn_forward.1} parent=11 // pred_check_branch
          %226 = sbr.rel (%p224) target = $region36
        $region35: #{simple_cnn_forward.1} parent=11 // pred_region
          _
        $region36: #{simple_cnn_forward.1} parent=11 // pred_fallthru
          _
      $region12: #{simple_cnn_forward.1} parent=5 // pred_fallthru
        _
      %p227 = scmp.lt.s32.totalorder %s16, 2
      // Predicated region
      $region37: #{simple_cnn_forward.1} parent=5 // pred_check
        %p228 = pneg %p227
      $region38: #{simple_cnn_forward.1} parent=5 // pred_check_branch
        %230 = sbr.rel (%p228) target = $region40
      $region39: #{simple_cnn_forward.1} parent=5 // pred_region
        // Predicated region
        $region41: #{simple_cnn_forward.1} parent=39 // pred_check
          %p231 = pneg %p36
        $region42: #{simple_cnn_forward.1} parent=39 // pred_check_branch
          %233 = sbr.rel (%p231) target = $region44
        $region43: #{simple_cnn_forward.1} parent=39 // pred_region
          %p234 = scmp.lt.s32.totalorder %s16, 1
          %s235 = scalar_select %p234, %s16, 1
          %s236 = smul.addr %s235, 38
          %s237 = smul.addr %s236, 8
          %s238 = scalar_lea.vmem %s0, %s237
        $region44: #{simple_cnn_forward.1} parent=39 // pred_fallthru
          _
      $region40: #{simple_cnn_forward.1} parent=5 // pred_fallthru
        _
      %p239 = scmp.le.s32.totalorder 1, %s16
      %p240 = scmp.lt.s32.totalorder %s16, 3
      %p241 = pnand %p239, %p240
      %p242 = pneg %p241
      // Predicated region
      $region45: #{simple_cnn_forward.1} parent=5 // pred_check
        _
      $region46: #{simple_cnn_forward.1} parent=5 // pred_check_branch
        %244 = sbr.rel (%p241) target = $region48
      $region47: #{simple_cnn_forward.1} parent=5 // pred_region
        %s245 = ssub.s32 %s16, 1
        %p246 = scmp.lt.s32.totalorder %s21, 1
        %s247 = scalar_select %p246, %s21, 1
        %s248 = smul.addr %s247, 38
        %s249 = smul.addr %s248, 8
        %s250 = scalar_lea.vmem %s0, %s249
        %p251 = pneg %p42
        %p252 = pneg %p39
        %p253 = pneg %p63
        %p254 = pneg %p60
        %p255 = pneg %p84
        %p256 = pneg %p81
        %p257 = pneg %p105
        %p258 = pneg %p102
        %p259 = pneg %p126
        %p260 = pneg %p123
        %p261 = pneg %p147
        %p262 = pneg %p144
        %p263 = pneg %p168
        %p264 = pneg %p165
        %p265 = pneg %p194
        %p266 = pneg %p191
        %s267 = sand.u32 %s181, 1
        %s268 = scalar_lea.sflag [#allocation4], %s267
        %s269 = sand.u32 %s181, 1
        %s270 = scalar_lea.vmem [#allocation3], %s269
        %p271 = scmp.lt.s32.totalorder %s21, 1
        %s272 = scalar_select %p271, %s21, 1
        %s273 = smul.addr %s272, 38
        %s274 = smul.addr %s273, 8
        %s275 = scalar_lea.vmem %s0, %s274
        %v277 = vlaneseq
        %v278 = vshrl.u32 %v277, 7
        %v279 = vadd.s32 %v278, 8
        %v280 = vadd.s32 %v278, 16
        %v281 = vadd.s32 %v278, 24
        %v282 = vadd.s32 %v278, 32
        %v283 = vadd.s32 %v278, 40
        %v284 = vadd.s32 %v278, 48
        %v285 = vadd.s32 %v278, 56
        %v286 = vadd.s32 %v278, 64
        %v287 = vadd.s32 %v278, 72
        %v288 = vadd.s32 %v278, 80
        %v289 = vadd.s32 %v278, 88
        %v290 = vadd.s32 %v278, 96
        %v291 = vadd.s32 %v278, 104
        %v292 = vadd.s32 %v278, 112
        %v293 = vadd.s32 %v278, 120
        %v294 = vadd.s32 %v278, 128
        %v295 = vadd.s32 %v278, 136
        %v296 = vadd.s32 %v278, 144
        %v297 = vadd.s32 %v278, 152
        %v298 = vadd.s32 %v278, 160
        %v299 = vadd.s32 %v278, 168
        %v300 = vadd.s32 %v278, 176
        %v301 = vadd.s32 %v278, 184
        %v302 = vadd.s32 %v278, 192
        %v303 = vadd.s32 %v278, 200
        %v304 = vadd.s32 %v278, 208
        %v305 = vadd.s32 %v278, 216
        %v306 = vadd.s32 %v278, 224
        %v307 = vadd.s32 %v278, 232
        %v308 = vadd.s32 %v278, 240
        %v309 = vadd.s32 %v278, 248
        %vm310 = vcmp.lt.s32.totalorder %v278, 0
        %v311 = vsub.s32 0, %v278
        %v312 = vsel %vm310, %v311, %v278
        %v313 = vshrl.u32 %v312, 4
        %v314 = vand.u32 %v312, 15
        %v315 = vsub.s32 0, %v314
        %v316 = vsel %vm310, %v315, %v314
        %vm317 = vcmp.lt.s32.totalorder %v279, 0
        %v318 = vsub.s32 0, %v279
        %v319 = vsel %vm317, %v318, %v279
        %v320 = vshrl.u32 %v319, 4
        %v321 = vand.u32 %v319, 15
        %v322 = vsub.s32 0, %v321
        %v323 = vsel %vm317, %v322, %v321
        %vm324 = vcmp.lt.s32.totalorder %v280, 0
        %v325 = vsub.s32 0, %v280
        %v326 = vsel %vm324, %v325, %v280
        %v327 = vshrl.u32 %v326, 4
        %v328 = vand.u32 %v326, 15
        %v329 = vsub.s32 0, %v328
        %v330 = vsel %vm324, %v329, %v328
        %vm331 = vcmp.lt.s32.totalorder %v281, 0
        %v332 = vsub.s32 0, %v281
        %v333 = vsel %vm331, %v332, %v281
        %v334 = vshrl.u32 %v333, 4
        %v335 = vand.u32 %v333, 15
        %v336 = vsub.s32 0, %v335
        %v337 = vsel %vm331, %v336, %v335
        %vm338 = vcmp.lt.s32.totalorder %v282, 0
        %v339 = vsub.s32 0, %v282
        %v340 = vsel %vm338, %v339, %v282
        %v341 = vshrl.u32 %v340, 4
        %v342 = vand.u32 %v340, 15
        %v343 = vsub.s32 0, %v342
        %v344 = vsel %vm338, %v343, %v342
        %vm345 = vcmp.lt.s32.totalorder %v283, 0
        %v346 = vsub.s32 0, %v283
        %v347 = vsel %vm345, %v346, %v283
        %v348 = vshrl.u32 %v347, 4
        %v349 = vand.u32 %v347, 15
        %v350 = vsub.s32 0, %v349
        %v351 = vsel %vm345, %v350, %v349
        %vm352 = vcmp.lt.s32.totalorder %v284, 0
        %v353 = vsub.s32 0, %v284
        %v354 = vsel %vm352, %v353, %v284
        %v355 = vshrl.u32 %v354, 4
        %v356 = vand.u32 %v354, 15
        %v357 = vsub.s32 0, %v356
        %v358 = vsel %vm352, %v357, %v356
        %vm359 = vcmp.lt.s32.totalorder %v285, 0
        %v360 = vsub.s32 0, %v285
        %v361 = vsel %vm359, %v360, %v285
        %v362 = vshrl.u32 %v361, 4
        %v363 = vand.u32 %v361, 15
        %v364 = vsub.s32 0, %v363
        %v365 = vsel %vm359, %v364, %v363
        %vm366 = vcmp.lt.s32.totalorder %v286, 0
        %v367 = vsub.s32 0, %v286
        %v368 = vsel %vm366, %v367, %v286
        %v369 = vshrl.u32 %v368, 4
        %v370 = vand.u32 %v368, 15
        %v371 = vsub.s32 0, %v370
        %v372 = vsel %vm366, %v371, %v370
        %vm373 = vcmp.lt.s32.totalorder %v287, 0
        %v374 = vsub.s32 0, %v287
        %v375 = vsel %vm373, %v374, %v287
        %v376 = vshrl.u32 %v375, 4
        %v377 = vand.u32 %v375, 15
        %v378 = vsub.s32 0, %v377
        %v379 = vsel %vm373, %v378, %v377
        %vm380 = vcmp.lt.s32.totalorder %v288, 0
        %v381 = vsub.s32 0, %v288
        %v382 = vsel %vm380, %v381, %v288
        %v383 = vshrl.u32 %v382, 4
        %v384 = vand.u32 %v382, 15
        %v385 = vsub.s32 0, %v384
        %v386 = vsel %vm380, %v385, %v384
        %vm387 = vcmp.lt.s32.totalorder %v289, 0
        %v388 = vsub.s32 0, %v289
        %v389 = vsel %vm387, %v388, %v289
        %v390 = vshrl.u32 %v389, 4
        %v391 = vand.u32 %v389, 15
        %v392 = vsub.s32 0, %v391
        %v393 = vsel %vm387, %v392, %v391
        %vm394 = vcmp.lt.s32.totalorder %v290, 0
        %v395 = vsub.s32 0, %v290
        %v396 = vsel %vm394, %v395, %v290
        %v397 = vshrl.u32 %v396, 4
        %v398 = vand.u32 %v396, 15
        %v399 = vsub.s32 0, %v398
        %v400 = vsel %vm394, %v399, %v398
        %vm401 = vcmp.lt.s32.totalorder %v291, 0
        %v402 = vsub.s32 0, %v291
        %v403 = vsel %vm401, %v402, %v291
        %v404 = vshrl.u32 %v403, 4
        %v405 = vand.u32 %v403, 15
        %v406 = vsub.s32 0, %v405
        %v407 = vsel %vm401, %v406, %v405
        %vm408 = vcmp.lt.s32.totalorder %v292, 0
        %v409 = vsub.s32 0, %v292
        %v410 = vsel %vm408, %v409, %v292
        %v411 = vshrl.u32 %v410, 4
        %v412 = vand.u32 %v410, 15
        %v413 = vsub.s32 0, %v412
        %v414 = vsel %vm408, %v413, %v412
        %vm415 = vcmp.lt.s32.totalorder %v293, 0
        %v416 = vsub.s32 0, %v293
        %v417 = vsel %vm415, %v416, %v293
        %v418 = vshrl.u32 %v417, 4
        %v419 = vand.u32 %v417, 15
        %v420 = vsub.s32 0, %v419
        %v421 = vsel %vm415, %v420, %v419
        %vm422 = vcmp.lt.s32.totalorder %v294, 0
        %v423 = vsub.s32 0, %v294
        %v424 = vsel %vm422, %v423, %v294
        %v425 = vshrl.u32 %v424, 4
        %v426 = vand.u32 %v424, 15
        %v427 = vsub.s32 0, %v426
        %v428 = vsel %vm422, %v427, %v426
        %vm429 = vcmp.lt.s32.totalorder %v295, 0
        %v430 = vsub.s32 0, %v295
        %v431 = vsel %vm429, %v430, %v295
        %v432 = vshrl.u32 %v431, 4
        %v433 = vand.u32 %v431, 15
        %v434 = vsub.s32 0, %v433
        %v435 = vsel %vm429, %v434, %v433
        %vm436 = vcmp.lt.s32.totalorder %v296, 0
        %v437 = vsub.s32 0, %v296
        %v438 = vsel %vm436, %v437, %v296
        %v439 = vshrl.u32 %v438, 4
        %v440 = vand.u32 %v438, 15
        %v441 = vsub.s32 0, %v440
        %v442 = vsel %vm436, %v441, %v440
        %vm443 = vcmp.lt.s32.totalorder %v297, 0
        %v444 = vsub.s32 0, %v297
        %v445 = vsel %vm443, %v444, %v297
        %v446 = vshrl.u32 %v445, 4
        %v447 = vand.u32 %v445, 15
        %v448 = vsub.s32 0, %v447
        %v449 = vsel %vm443, %v448, %v447
        %vm450 = vcmp.lt.s32.totalorder %v298, 0
        %v451 = vsub.s32 0, %v298
        %v452 = vsel %vm450, %v451, %v298
        %v453 = vshrl.u32 %v452, 4
        %v454 = vand.u32 %v452, 15
        %v455 = vsub.s32 0, %v454
        %v456 = vsel %vm450, %v455, %v454
        %vm457 = vcmp.lt.s32.totalorder %v299, 0
        %v458 = vsub.s32 0, %v299
        %v459 = vsel %vm457, %v458, %v299
        %v460 = vshrl.u32 %v459, 4
        %v461 = vand.u32 %v459, 15
        %v462 = vsub.s32 0, %v461
        %v463 = vsel %vm457, %v462, %v461
        %vm464 = vcmp.lt.s32.totalorder %v300, 0
        %v465 = vsub.s32 0, %v300
        %v466 = vsel %vm464, %v465, %v300
        %v467 = vshrl.u32 %v466, 4
        %v468 = vand.u32 %v466, 15
        %v469 = vsub.s32 0, %v468
        %v470 = vsel %vm464, %v469, %v468
        %vm471 = vcmp.lt.s32.totalorder %v301, 0
        %v472 = vsub.s32 0, %v301
        %v473 = vsel %vm471, %v472, %v301
        %v474 = vshrl.u32 %v473, 4
        %v475 = vand.u32 %v473, 15
        %v476 = vsub.s32 0, %v475
        %v477 = vsel %vm471, %v476, %v475
        %vm478 = vcmp.lt.s32.totalorder %v302, 0
        %v479 = vsub.s32 0, %v302
        %v480 = vsel %vm478, %v479, %v302
        %v481 = vshrl.u32 %v480, 4
        %v482 = vand.u32 %v480, 15
        %v483 = vsub.s32 0, %v482
        %v484 = vsel %vm478, %v483, %v482
        %vm485 = vcmp.lt.s32.totalorder %v303, 0
        %v486 = vsub.s32 0, %v303
        %v487 = vsel %vm485, %v486, %v303
        %v488 = vshrl.u32 %v487, 4
        %v489 = vand.u32 %v487, 15
        %v490 = vsub.s32 0, %v489
        %v491 = vsel %vm485, %v490, %v489
        %vm492 = vcmp.lt.s32.totalorder %v304, 0
        %v493 = vsub.s32 0, %v304
        %v494 = vsel %vm492, %v493, %v304
        %v495 = vshrl.u32 %v494, 4
        %v496 = vand.u32 %v494, 15
        %v497 = vsub.s32 0, %v496
        %v498 = vsel %vm492, %v497, %v496
        %vm499 = vcmp.lt.s32.totalorder %v305, 0
        %v500 = vsub.s32 0, %v305
        %v501 = vsel %vm499, %v500, %v305
        %v502 = vshrl.u32 %v501, 4
        %v503 = vand.u32 %v501, 15
        %v504 = vsub.s32 0, %v503
        %v505 = vsel %vm499, %v504, %v503
        %vm506 = vcmp.lt.s32.totalorder %v306, 0
        %v507 = vsub.s32 0, %v306
        %v508 = vsel %vm506, %v507, %v306
        %v509 = vshrl.u32 %v508, 4
        %v510 = vand.u32 %v508, 15
        %v511 = vsub.s32 0, %v510
        %v512 = vsel %vm506, %v511, %v510
        %vm513 = vcmp.lt.s32.totalorder %v307, 0
        %v514 = vsub.s32 0, %v307
        %v515 = vsel %vm513, %v514, %v307
        %v516 = vshrl.u32 %v515, 4
        %v517 = vand.u32 %v515, 15
        %v518 = vsub.s32 0, %v517
        %v519 = vsel %vm513, %v518, %v517
        %vm520 = vcmp.lt.s32.totalorder %v308, 0
        %v521 = vsub.s32 0, %v308
        %v522 = vsel %vm520, %v521, %v308
        %v523 = vshrl.u32 %v522, 4
        %v524 = vand.u32 %v522, 15
        %v525 = vsub.s32 0, %v524
        %v526 = vsel %vm520, %v525, %v524
        %vm527 = vcmp.lt.s32.totalorder %v309, 0
        %v528 = vsub.s32 0, %v309
        %v529 = vsel %vm527, %v528, %v309
        %v530 = vshrl.u32 %v529, 4
        %v531 = vand.u32 %v529, 15
        %v532 = vsub.s32 0, %v531
        %v533 = vsel %vm527, %v532, %v531
        %vm534 = vcmp.ne.s32.totalorder %v316, 0
        %vm535 = vcmp.ne.s32.totalorder %v323, 0
        %vm536 = vcmp.ne.s32.totalorder %v330, 0
        %vm537 = vcmp.ne.s32.totalorder %v337, 0
        %vm538 = vcmp.ne.s32.totalorder %v344, 0
        %vm539 = vcmp.ne.s32.totalorder %v351, 0
        %vm540 = vcmp.ne.s32.totalorder %v358, 0
        %vm541 = vcmp.ne.s32.totalorder %v365, 0
        %vm542 = vcmp.ne.s32.totalorder %v372, 0
        %vm543 = vcmp.ne.s32.totalorder %v379, 0
        %vm544 = vcmp.ne.s32.totalorder %v386, 0
        %vm545 = vcmp.ne.s32.totalorder %v393, 0
        %vm546 = vcmp.ne.s32.totalorder %v400, 0
        %vm547 = vcmp.ne.s32.totalorder %v407, 0
        %vm548 = vcmp.ne.s32.totalorder %v414, 0
        %vm549 = vcmp.ne.s32.totalorder %v421, 0
        %vm550 = vcmp.ne.s32.totalorder %v428, 0
        %vm551 = vcmp.ne.s32.totalorder %v435, 0
        %vm552 = vcmp.ne.s32.totalorder %v442, 0
        %vm553 = vcmp.ne.s32.totalorder %v449, 0
        %vm554 = vcmp.ne.s32.totalorder %v456, 0
        %vm555 = vcmp.ne.s32.totalorder %v463, 0
        %vm556 = vcmp.ne.s32.totalorder %v470, 0
        %vm557 = vcmp.ne.s32.totalorder %v477, 0
        %vm558 = vcmp.ne.s32.totalorder %v484, 0
        %vm559 = vcmp.ne.s32.totalorder %v491, 0
        %vm560 = vcmp.ne.s32.totalorder %v498, 0
        %vm561 = vcmp.ne.s32.totalorder %v505, 0
        %vm562 = vcmp.ne.s32.totalorder %v512, 0
        %vm563 = vcmp.ne.s32.totalorder %v519, 0
        %vm564 = vcmp.ne.s32.totalorder %v526, 0
        %vm565 = vcmp.ne.s32.totalorder %v533, 0
        %vm566 = vcmp.lt.s32.totalorder %v316, 0
        %vm567 = vcmp.lt.s32.totalorder %v323, 0
        %vm568 = vcmp.lt.s32.totalorder %v330, 0
        %vm569 = vcmp.lt.s32.totalorder %v337, 0
        %vm570 = vcmp.lt.s32.totalorder %v344, 0
        %vm571 = vcmp.lt.s32.totalorder %v351, 0
        %vm572 = vcmp.lt.s32.totalorder %v358, 0
        %vm573 = vcmp.lt.s32.totalorder %v365, 0
        %vm574 = vcmp.lt.s32.totalorder %v372, 0
        %vm575 = vcmp.lt.s32.totalorder %v379, 0
        %vm576 = vcmp.lt.s32.totalorder %v386, 0
        %vm577 = vcmp.lt.s32.totalorder %v393, 0
        %vm578 = vcmp.lt.s32.totalorder %v400, 0
        %vm579 = vcmp.lt.s32.totalorder %v407, 0
        %vm580 = vcmp.lt.s32.totalorder %v414, 0
        %vm581 = vcmp.lt.s32.totalorder %v421, 0
        %vm582 = vcmp.lt.s32.totalorder %v428, 0
        %vm583 = vcmp.lt.s32.totalorder %v435, 0
        %vm584 = vcmp.lt.s32.totalorder %v442, 0
        %vm585 = vcmp.lt.s32.totalorder %v449, 0
        %vm586 = vcmp.lt.s32.totalorder %v456, 0
        %vm587 = vcmp.lt.s32.totalorder %v463, 0
        %vm588 = vcmp.lt.s32.totalorder %v470, 0
        %vm589 = vcmp.lt.s32.totalorder %v477, 0
        %vm590 = vcmp.lt.s32.totalorder %v484, 0
        %vm591 = vcmp.lt.s32.totalorder %v491, 0
        %vm592 = vcmp.lt.s32.totalorder %v498, 0
        %vm593 = vcmp.lt.s32.totalorder %v505, 0
        %vm594 = vcmp.lt.s32.totalorder %v512, 0
        %vm595 = vcmp.lt.s32.totalorder %v519, 0
        %vm596 = vcmp.lt.s32.totalorder %v526, 0
        %vm597 = vcmp.lt.s32.totalorder %v533, 0
        %vm598 = vmand %vm566, %vm534
        %vm599 = vmand %vm567, %vm535
        %vm600 = vmand %vm568, %vm536
        %vm601 = vmand %vm569, %vm537
        %vm602 = vmand %vm570, %vm538
        %vm603 = vmand %vm571, %vm539
        %vm604 = vmand %vm572, %vm540
        %vm605 = vmand %vm573, %vm541
        %vm606 = vmand %vm574, %vm542
        %vm607 = vmand %vm575, %vm543
        %vm608 = vmand %vm576, %vm544
        %vm609 = vmand %vm577, %vm545
        %vm610 = vmand %vm578, %vm546
        %vm611 = vmand %vm579, %vm547
        %vm612 = vmand %vm580, %vm548
        %vm613 = vmand %vm581, %vm549
        %vm614 = vmand %vm582, %vm550
        %vm615 = vmand %vm583, %vm551
        %vm616 = vmand %vm584, %vm552
        %vm617 = vmand %vm585, %vm553
        %vm618 = vmand %vm586, %vm554
        %vm619 = vmand %vm587, %vm555
        %vm620 = vmand %vm588, %vm556
        %vm621 = vmand %vm589, %vm557
        %vm622 = vmand %vm590, %vm558
        %vm623 = vmand %vm591, %vm559
        %vm624 = vmand %vm592, %vm560
        %vm625 = vmand %vm593, %vm561
        %vm626 = vmand %vm594, %vm562
        %vm627 = vmand %vm595, %vm563
        %vm628 = vmand %vm596, %vm564
        %vm629 = vmand %vm597, %vm565
        %v630 = vadd.s32 %v316, 16
        %v631 = vadd.s32 %v323, 16
        %v632 = vadd.s32 %v330, 16
        %v633 = vadd.s32 %v337, 16
        %v634 = vadd.s32 %v344, 16
        %v635 = vadd.s32 %v351, 16
        %v636 = vadd.s32 %v358, 16
        %v637 = vadd.s32 %v365, 16
        %v638 = vadd.s32 %v372, 16
        %v639 = vadd.s32 %v379, 16
        %v640 = vadd.s32 %v386, 16
        %v641 = vadd.s32 %v393, 16
        %v642 = vadd.s32 %v400, 16
        %v643 = vadd.s32 %v407, 16
        %v644 = vadd.s32 %v414, 16
        %v645 = vadd.s32 %v421, 16
        %v646 = vadd.s32 %v428, 16
        %v647 = vadd.s32 %v435, 16
        %v648 = vadd.s32 %v442, 16
        %v649 = vadd.s32 %v449, 16
        %v650 = vadd.s32 %v456, 16
        %v651 = vadd.s32 %v463, 16
        %v652 = vadd.s32 %v470, 16
        %v653 = vadd.s32 %v477, 16
        %v654 = vadd.s32 %v484, 16
        %v655 = vadd.s32 %v491, 16
        %v656 = vadd.s32 %v498, 16
        %v657 = vadd.s32 %v505, 16
        %v658 = vadd.s32 %v512, 16
        %v659 = vadd.s32 %v519, 16
        %v660 = vadd.s32 %v526, 16
        %v661 = vadd.s32 %v533, 16
        %v662 = vsel %vm598, %v630, %v316
        %v663 = vsel %vm599, %v631, %v323
        %v664 = vsel %vm600, %v632, %v330
        %v665 = vsel %vm601, %v633, %v337
        %v666 = vsel %vm602, %v634, %v344
        %v667 = vsel %vm603, %v635, %v351
        %v668 = vsel %vm604, %v636, %v358
        %v669 = vsel %vm605, %v637, %v365
        %v670 = vsel %vm606, %v638, %v372
        %v671 = vsel %vm607, %v639, %v379
        %v672 = vsel %vm608, %v640, %v386
        %v673 = vsel %vm609, %v641, %v393
        %v674 = vsel %vm610, %v642, %v400
        %v675 = vsel %vm611, %v643, %v407
        %v676 = vsel %vm612, %v644, %v414
        %v677 = vsel %vm613, %v645, %v421
        %v678 = vsel %vm614, %v646, %v428
        %v679 = vsel %vm615, %v647, %v435
        %v680 = vsel %vm616, %v648, %v442
        %v681 = vsel %vm617, %v649, %v449
        %v682 = vsel %vm618, %v650, %v456
        %v683 = vsel %vm619, %v651, %v463
        %v684 = vsel %vm620, %v652, %v470
        %v685 = vsel %vm621, %v653, %v477
        %v686 = vsel %vm622, %v654, %v484
        %v687 = vsel %vm623, %v655, %v491
        %v688 = vsel %vm624, %v656, %v498
        %v689 = vsel %vm625, %v657, %v505
        %v690 = vsel %vm626, %v658, %v512
        %v691 = vsel %vm627, %v659, %v519
        %v692 = vsel %vm628, %v660, %v526
        %v693 = vsel %vm629, %v661, %v533
        %vm694 = vcmp.gt.s32.totalorder %v662, 0
        %vm695 = vcmp.gt.s32.totalorder %v663, 0
        %vm696 = vcmp.gt.s32.totalorder %v664, 0
        %vm697 = vcmp.gt.s32.totalorder %v665, 0
        %vm698 = vcmp.gt.s32.totalorder %v666, 0
        %vm699 = vcmp.gt.s32.totalorder %v667, 0
        %vm700 = vcmp.gt.s32.totalorder %v668, 0
        %vm701 = vcmp.gt.s32.totalorder %v669, 0
        %vm702 = vcmp.gt.s32.totalorder %v670, 0
        %vm703 = vcmp.gt.s32.totalorder %v671, 0
        %vm704 = vcmp.gt.s32.totalorder %v672, 0
        %vm705 = vcmp.gt.s32.totalorder %v673, 0
        %vm706 = vcmp.gt.s32.totalorder %v674, 0
        %vm707 = vcmp.gt.s32.totalorder %v675, 0
        %vm708 = vcmp.gt.s32.totalorder %v676, 0
        %vm709 = vcmp.gt.s32.totalorder %v677, 0
        %vm710 = vcmp.gt.s32.totalorder %v678, 0
        %vm711 = vcmp.gt.s32.totalorder %v679, 0
        %vm712 = vcmp.gt.s32.totalorder %v680, 0
        %vm713 = vcmp.gt.s32.totalorder %v681, 0
        %vm714 = vcmp.gt.s32.totalorder %v682, 0
        %vm715 = vcmp.gt.s32.totalorder %v683, 0
        %vm716 = vcmp.gt.s32.totalorder %v684, 0
        %vm717 = vcmp.gt.s32.totalorder %v685, 0
        %vm718 = vcmp.gt.s32.totalorder %v686, 0
        %vm719 = vcmp.gt.s32.totalorder %v687, 0
        %vm720 = vcmp.gt.s32.totalorder %v688, 0
        %vm721 = vcmp.gt.s32.totalorder %v689, 0
        %vm722 = vcmp.gt.s32.totalorder %v690, 0
        %vm723 = vcmp.gt.s32.totalorder %v691, 0
        %vm724 = vcmp.gt.s32.totalorder %v692, 0
        %vm725 = vcmp.gt.s32.totalorder %v693, 0
        %vm726 = vcmp.lt.s32.totalorder %v662, 15
        %vm727 = vcmp.lt.s32.totalorder %v663, 15
        %vm728 = vcmp.lt.s32.totalorder %v664, 15
        %vm729 = vcmp.lt.s32.totalorder %v665, 15
        %vm730 = vcmp.lt.s32.totalorder %v666, 15
        %vm731 = vcmp.lt.s32.totalorder %v667, 15
        %vm732 = vcmp.lt.s32.totalorder %v668, 15
        %vm733 = vcmp.lt.s32.totalorder %v669, 15
        %vm734 = vcmp.lt.s32.totalorder %v670, 15
        %vm735 = vcmp.lt.s32.totalorder %v671, 15
        %vm736 = vcmp.lt.s32.totalorder %v672, 15
        %vm737 = vcmp.lt.s32.totalorder %v673, 15
        %vm738 = vcmp.lt.s32.totalorder %v674, 15
        %vm739 = vcmp.lt.s32.totalorder %v675, 15
        %vm740 = vcmp.lt.s32.totalorder %v676, 15
        %vm741 = vcmp.lt.s32.totalorder %v677, 15
        %vm742 = vcmp.lt.s32.totalorder %v678, 15
        %vm743 = vcmp.lt.s32.totalorder %v679, 15
        %vm744 = vcmp.lt.s32.totalorder %v680, 15
        %vm745 = vcmp.lt.s32.totalorder %v681, 15
        %vm746 = vcmp.lt.s32.totalorder %v682, 15
        %vm747 = vcmp.lt.s32.totalorder %v683, 15
        %vm748 = vcmp.lt.s32.totalorder %v684, 15
        %vm749 = vcmp.lt.s32.totalorder %v685, 15
        %vm750 = vcmp.lt.s32.totalorder %v686, 15
        %vm751 = vcmp.lt.s32.totalorder %v687, 15
        %vm752 = vcmp.lt.s32.totalorder %v688, 15
        %vm753 = vcmp.lt.s32.totalorder %v689, 15
        %vm754 = vcmp.lt.s32.totalorder %v690, 15
        %vm755 = vcmp.lt.s32.totalorder %v691, 15
        %vm756 = vcmp.lt.s32.totalorder %v692, 15
        %vm757 = vcmp.lt.s32.totalorder %v693, 15
        %v758 = vld [vmem:[%s275 + $0x7] sm:$0xff]
        %v759 = vld [vmem:[%s275 + $0xf] sm:$0xff]
        %v760 = vld [vmem:[%s275 + $0x17] sm:$0xff]
        %v761 = vld [vmem:[%s275 + $0x1f] sm:$0xff]
        %v762 = vld [vmem:[%s275 + $0x27] sm:$0xff]
        %v763 = vld [vmem:[%s275 + $0x2f] sm:$0xff]
        %v764 = vld [vmem:[%s275 + $0x37] sm:$0xff]
        %v765 = vld [vmem:[%s275 + $0x3f] sm:$0xff]
        %v766 = vld [vmem:[%s275 + $0x47] sm:$0xff]
        %v767 = vld [vmem:[%s275 + $0x4f] sm:$0xff]
        %v768 = vld [vmem:[%s275 + $0x57] sm:$0xff]
        %v769 = vld [vmem:[%s275 + $0x5f] sm:$0xff]
        %v770 = vld [vmem:[%s275 + $0x67] sm:$0xff]
        %v771 = vld [vmem:[%s275 + $0x6f] sm:$0xff]
        %v772 = vld [vmem:[%s275 + $0x77] sm:$0xff]
        %v773 = vld [vmem:[%s275 + $0x7f] sm:$0xff]
        %v774 = vld [vmem:[%s275 + $0x87] sm:$0xff]
        %v775 = vld [vmem:[%s275 + $0x8f] sm:$0xff]
        %v776 = vld [vmem:[%s275 + $0x97] sm:$0xff]
        %v777 = vld [vmem:[%s275 + $0x9f] sm:$0xff]
        %v778 = vld [vmem:[%s275 + $0xa7] sm:$0xff]
        %v779 = vld [vmem:[%s275 + $0xaf] sm:$0xff]
        %v780 = vld [vmem:[%s275 + $0xb7] sm:$0xff]
        %v781 = vld [vmem:[%s275 + $0xbf] sm:$0xff]
        %v782 = vld [vmem:[%s275 + $0xc7] sm:$0xff]
        %v783 = vld [vmem:[%s275 + $0xcf] sm:$0xff]
        %v784 = vld [vmem:[%s275 + $0xd7] sm:$0xff]
        %v785 = vld [vmem:[%s275 + $0xdf] sm:$0xff]
        %v786 = vld [vmem:[%s275 + $0xe7] sm:$0xff]
        %v787 = vld [vmem:[%s275 + $0xef] sm:$0xff]
        %v788 = vld [vmem:[%s275 + $0xf7] sm:$0xff]
        %v789 = vld [vmem:[%s275 + $0xff] sm:$0xff]
        %v790 = vpack.c.bf16 %v758, %v758
        %v791 = vpack.c.bf16 %v759, %v759
        %v792 = vpack.c.bf16 %v760, %v760
        %v793 = vpack.c.bf16 %v761, %v761
        %v794 = vpack.c.bf16 %v762, %v762
        %v795 = vpack.c.bf16 %v763, %v763
        %v796 = vpack.c.bf16 %v764, %v764
        %v797 = vpack.c.bf16 %v765, %v765
        %v798 = vpack.c.bf16 %v766, %v766
        %v799 = vpack.c.bf16 %v767, %v767
        %v800 = vpack.c.bf16 %v768, %v768
        %v801 = vpack.c.bf16 %v769, %v769
        %v802 = vpack.c.bf16 %v770, %v770
        %v803 = vpack.c.bf16 %v771, %v771
        %v804 = vpack.c.bf16 %v772, %v772
        %v805 = vpack.c.bf16 %v773, %v773
        %v806 = vpack.c.bf16 %v774, %v774
        %v807 = vpack.c.bf16 %v775, %v775
        %v808 = vpack.c.bf16 %v776, %v776
        %v809 = vpack.c.bf16 %v777, %v777
        %v810 = vpack.c.bf16 %v778, %v778
        %v811 = vpack.c.bf16 %v779, %v779
        %v812 = vpack.c.bf16 %v780, %v780
        %v813 = vpack.c.bf16 %v781, %v781
        %v814 = vpack.c.bf16 %v782, %v782
        %v815 = vpack.c.bf16 %v783, %v783
        %v816 = vpack.c.bf16 %v784, %v784
        %v817 = vpack.c.bf16 %v785, %v785
        %v818 = vpack.c.bf16 %v786, %v786
        %v819 = vpack.c.bf16 %v787, %v787
        %v820 = vpack.c.bf16 %v788, %v788
        %v821 = vpack.c.bf16 %v789, %v789
        %v822 = vsel %vm694, 1, 0
        %v823 = vsel %vm695, 1, 0
        %v824 = vsel %vm696, 1, 0
        %v825 = vsel %vm697, 1, 0
        %v826 = vsel %vm698, 1, 0
        %v827 = vsel %vm699, 1, 0
        %v828 = vsel %vm700, 1, 0
        %v829 = vsel %vm701, 1, 0
        %v830 = vsel %vm702, 1, 0
        %v831 = vsel %vm703, 1, 0
        %v832 = vsel %vm704, 1, 0
        %v833 = vsel %vm705, 1, 0
        %v834 = vsel %vm706, 1, 0
        %v835 = vsel %vm707, 1, 0
        %v836 = vsel %vm708, 1, 0
        %v837 = vsel %vm709, 1, 0
        %v838 = vsel %vm710, 1, 0
        %v839 = vsel %vm711, 1, 0
        %v840 = vsel %vm712, 1, 0
        %v841 = vsel %vm713, 1, 0
        %v842 = vsel %vm714, 1, 0
        %v843 = vsel %vm715, 1, 0
        %v844 = vsel %vm716, 1, 0
        %v845 = vsel %vm717, 1, 0
        %v846 = vsel %vm718, 1, 0
        %v847 = vsel %vm719, 1, 0
        %v848 = vsel %vm720, 1, 0
        %v849 = vsel %vm721, 1, 0
        %v850 = vsel %vm722, 1, 0
        %v851 = vsel %vm723, 1, 0
        %v852 = vsel %vm724, 1, 0
        %v853 = vsel %vm725, 1, 0
        %vm854 = vcmp.eq.s32.totalorder %v822, 1
        %vm855 = vcmp.eq.s32.totalorder %v823, 1
        %vm856 = vcmp.eq.s32.totalorder %v824, 1
        %vm857 = vcmp.eq.s32.totalorder %v825, 1
        %vm858 = vcmp.eq.s32.totalorder %v826, 1
        %vm859 = vcmp.eq.s32.totalorder %v827, 1
        %vm860 = vcmp.eq.s32.totalorder %v828, 1
        %vm861 = vcmp.eq.s32.totalorder %v829, 1
        %vm862 = vcmp.eq.s32.totalorder %v830, 1
        %vm863 = vcmp.eq.s32.totalorder %v831, 1
        %vm864 = vcmp.eq.s32.totalorder %v832, 1
        %vm865 = vcmp.eq.s32.totalorder %v833, 1
        %vm866 = vcmp.eq.s32.totalorder %v834, 1
        %vm867 = vcmp.eq.s32.totalorder %v835, 1
        %vm868 = vcmp.eq.s32.totalorder %v836, 1
        %vm869 = vcmp.eq.s32.totalorder %v837, 1
        %vm870 = vcmp.eq.s32.totalorder %v838, 1
        %vm871 = vcmp.eq.s32.totalorder %v839, 1
        %vm872 = vcmp.eq.s32.totalorder %v840, 1
        %vm873 = vcmp.eq.s32.totalorder %v841, 1
        %vm874 = vcmp.eq.s32.totalorder %v842, 1
        %vm875 = vcmp.eq.s32.totalorder %v843, 1
        %vm876 = vcmp.eq.s32.totalorder %v844, 1
        %vm877 = vcmp.eq.s32.totalorder %v845, 1
        %vm878 = vcmp.eq.s32.totalorder %v846, 1
        %vm879 = vcmp.eq.s32.totalorder %v847, 1
        %vm880 = vcmp.eq.s32.totalorder %v848, 1
        %vm881 = vcmp.eq.s32.totalorder %v849, 1
        %vm882 = vcmp.eq.s32.totalorder %v850, 1
        %vm883 = vcmp.eq.s32.totalorder %v851, 1
        %vm884 = vcmp.eq.s32.totalorder %v852, 1
        %vm885 = vcmp.eq.s32.totalorder %v853, 1
        %vm886 = vmpackc.low %vm854, %vm854
        %vm887 = vmpackc.low %vm855, %vm855
        %vm888 = vmpackc.low %vm856, %vm856
        %vm889 = vmpackc.low %vm857, %vm857
        %vm890 = vmpackc.low %vm858, %vm858
        %vm891 = vmpackc.low %vm859, %vm859
        %vm892 = vmpackc.low %vm860, %vm860
        %vm893 = vmpackc.low %vm861, %vm861
        %vm894 = vmpackc.low %vm862, %vm862
        %vm895 = vmpackc.low %vm863, %vm863
        %vm896 = vmpackc.low %vm864, %vm864
        %vm897 = vmpackc.low %vm865, %vm865
        %vm898 = vmpackc.low %vm866, %vm866
        %vm899 = vmpackc.low %vm867, %vm867
        %vm900 = vmpackc.low %vm868, %vm868
        %vm901 = vmpackc.low %vm869, %vm869
        %vm902 = vmpackc.low %vm870, %vm870
        %vm903 = vmpackc.low %vm871, %vm871
        %vm904 = vmpackc.low %vm872, %vm872
        %vm905 = vmpackc.low %vm873, %vm873
        %vm906 = vmpackc.low %vm874, %vm874
        %vm907 = vmpackc.low %vm875, %vm875
        %vm908 = vmpackc.low %vm876, %vm876
        %vm909 = vmpackc.low %vm877, %vm877
        %vm910 = vmpackc.low %vm878, %vm878
        %vm911 = vmpackc.low %vm879, %vm879
        %vm912 = vmpackc.low %vm880, %vm880
        %vm913 = vmpackc.low %vm881, %vm881
        %vm914 = vmpackc.low %vm882, %vm882
        %vm915 = vmpackc.low %vm883, %vm883
        %vm916 = vmpackc.low %vm884, %vm884
        %vm917 = vmpackc.low %vm885, %vm885
        %v918 = vsel %vm886, %v790, 0
        %v919 = vsel %vm887, %v791, 0
        %v920 = vsel %vm888, %v792, 0
        %v921 = vsel %vm889, %v793, 0
        %v922 = vsel %vm890, %v794, 0
        %v923 = vsel %vm891, %v795, 0
        %v924 = vsel %vm892, %v796, 0
        %v925 = vsel %vm893, %v797, 0
        %v926 = vsel %vm894, %v798, 0
        %v927 = vsel %vm895, %v799, 0
        %v928 = vsel %vm896, %v800, 0
        %v929 = vsel %vm897, %v801, 0
        %v930 = vsel %vm898, %v802, 0
        %v931 = vsel %vm899, %v803, 0
        %v932 = vsel %vm900, %v804, 0
        %v933 = vsel %vm901, %v805, 0
        %v934 = vsel %vm902, %v806, 0
        %v935 = vsel %vm903, %v807, 0
        %v936 = vsel %vm904, %v808, 0
        %v937 = vsel %vm905, %v809, 0
        %v938 = vsel %vm906, %v810, 0
        %v939 = vsel %vm907, %v811, 0
        %v940 = vsel %vm908, %v812, 0
        %v941 = vsel %vm909, %v813, 0
        %v942 = vsel %vm910, %v814, 0
        %v943 = vsel %vm911, %v815, 0
        %v944 = vsel %vm912, %v816, 0
        %v945 = vsel %vm913, %v817, 0
        %v946 = vsel %vm914, %v818, 0
        %v947 = vsel %vm915, %v819, 0
        %v948 = vsel %vm916, %v820, 0
        %v949 = vsel %vm917, %v821, 0
        %v950 = vld [vmem:[%s1] sm:$0x3]
        %v951 = vld [vmem:[%s275 + $0x8] sm:$0xff]
        %v952 = vld [vmem:[%s275 + $0x10] sm:$0xff]
        %v953 = vld [vmem:[%s275 + $0x18] sm:$0xff]
        %v954 = vld [vmem:[%s275 + $0x20] sm:$0xff]
        %v955 = vld [vmem:[%s275 + $0x28] sm:$0xff]
        %v956 = vld [vmem:[%s275 + $0x30] sm:$0xff]
        %v957 = vld [vmem:[%s275 + $0x38] sm:$0xff]
        %v958 = vld [vmem:[%s275 + $0x40] sm:$0xff]
        %v959 = vld [vmem:[%s275 + $0x48] sm:$0xff]
        %v960 = vld [vmem:[%s275 + $0x50] sm:$0xff]
        %v961 = vld [vmem:[%s275 + $0x58] sm:$0xff]
        %v962 = vld [vmem:[%s275 + $0x60] sm:$0xff]
        %v963 = vld [vmem:[%s275 + $0x68] sm:$0xff]
        %v964 = vld [vmem:[%s275 + $0x70] sm:$0xff]
        %v965 = vld [vmem:[%s275 + $0x78] sm:$0xff]
        %v966 = vld [vmem:[%s275 + $0x80] sm:$0xff]
        %v967 = vld [vmem:[%s275 + $0x88] sm:$0xff]
        %v968 = vld [vmem:[%s275 + $0x90] sm:$0xff]
        %v969 = vld [vmem:[%s275 + $0x98] sm:$0xff]
        %v970 = vld [vmem:[%s275 + $0xa0] sm:$0xff]
        %v971 = vld [vmem:[%s275 + $0xa8] sm:$0xff]
        %v972 = vld [vmem:[%s275 + $0xb0] sm:$0xff]
        %v973 = vld [vmem:[%s275 + $0xb8] sm:$0xff]
        %v974 = vld [vmem:[%s275 + $0xc0] sm:$0xff]
        %v975 = vld [vmem:[%s275 + $0xc8] sm:$0xff]
        %v976 = vld [vmem:[%s275 + $0xd0] sm:$0xff]
        %v977 = vld [vmem:[%s275 + $0xd8] sm:$0xff]
        %v978 = vld [vmem:[%s275 + $0xe0] sm:$0xff]
        %v979 = vld [vmem:[%s275 + $0xe8] sm:$0xff]
        %v980 = vld [vmem:[%s275 + $0xf0] sm:$0xff]
        %v981 = vld [vmem:[%s275 + $0xf8] sm:$0xff]
        %v982 = vld [vmem:[%s275 + $0x100] sm:$0xff]
        %v983 = vpack.c.bf16 %v952, %v951
        %v984 = vpack.c.bf16 %v954, %v953
        %v985 = vpack.c.bf16 %v956, %v955
        %v986 = vpack.c.bf16 %v958, %v957
        %v987 = vpack.c.bf16 %v960, %v959
        %v988 = vpack.c.bf16 %v962, %v961
        %v989 = vpack.c.bf16 %v964, %v963
        %v990 = vpack.c.bf16 %v966, %v965
        %v991 = vpack.c.bf16 %v968, %v967
        %v992 = vpack.c.bf16 %v970, %v969
        %v993 = vpack.c.bf16 %v972, %v971
        %v994 = vpack.c.bf16 %v974, %v973
        %v995 = vpack.c.bf16 %v976, %v975
        %v996 = vpack.c.bf16 %v978, %v977
        %v997 = vpack.c.bf16 %v980, %v979
        %v998 = vpack.c.bf16 %v982, %v981
        %s999 = scalar_lea.vmem %s1, 2
        %v1000 = vld [vmem:[%s999] sm:$0x3]
        %vm1001 = vcmask 23552
        %v1003 = vsel %vm1001, %v983, 0
        %v1006 = vsel %vm1001, %v984, 0
        %v1009 = vsel %vm1001, %v985, 0
        %v1012 = vsel %vm1001, %v986, 0
        %v1015 = vsel %vm1001, %v987, 0
        %v1018 = vsel %vm1001, %v988, 0
        %v1021 = vsel %vm1001, %v989, 0
        %v1024 = vsel %vm1001, %v990, 0
        %v1027 = vsel %vm1001, %v991, 0
        %v1030 = vsel %vm1001, %v992, 0
        %v1033 = vsel %vm1001, %v993, 0
        %v1036 = vsel %vm1001, %v994, 0
        %v1039 = vsel %vm1001, %v995, 0
        %v1042 = vsel %vm1001, %v996, 0
        %v1045 = vsel %vm1001, %v997, 0
        %v1048 = vsel %vm1001, %v998, 0
        %vm1050 = vcmask 1040384
        %vm1051 = vcmask 1041408
        %v1052 = vsel %vm1050, 4294967295, 65535
        %v1053 = vsel %vm1051, %v1052, 0
        %v1055 = vand.u32 %v1000, %v1053
        %1057 = vmatpush.bf16.msra.mxu0 0
        %1058 = vmatpush.bf16.msra.mxu0 0
        %1059 = vmatpush.bf16.msra.mxu0 0
        %1060 = vmatpush.bf16.msra.mxu0 0
        %1061 = vmatpush.bf16.msra.mxu0 0
        %1062 = vmatpush.bf16.msra.mxu0 0
        %1063 = vmatpush.bf16.msra.mxu0 0
        %1064 = vmatpush.bf16.msra.mxu0 %v1055
        %1065 = vmatmul.bf16.gmra.mxu0 %v1003
        %v1066 = vpop.f32.mrf.mxu0
        %v1067 = vadd.f32 0.0, %v1066
        %v1068 = vpop.f32.mrf.mxu0
        %v1069 = vadd.f32 0.0, %v1068
        %1070 = vmatmul.bf16.gmra.mxu0 %v1006
        %v1071 = vpop.f32.mrf.mxu0
        %v1072 = vadd.f32 0.0, %v1071
        %v1073 = vpop.f32.mrf.mxu0
        %v1074 = vadd.f32 0.0, %v1073
        %1075 = vmatmul.bf16.gmra.mxu0 %v1009
        %v1076 = vpop.f32.mrf.mxu0
        %v1077 = vadd.f32 0.0, %v1076
        %v1078 = vpop.f32.mrf.mxu0
        %v1079 = vadd.f32 0.0, %v1078
        %1080 = vmatmul.bf16.gmra.mxu0 %v1012
        %v1081 = vpop.f32.mrf.mxu0
        %v1082 = vadd.f32 0.0, %v1081
        %v1083 = vpop.f32.mrf.mxu0
        %v1084 = vadd.f32 0.0, %v1083
        %1085 = vmatmul.bf16.gmra.mxu0 %v1015
        %v1086 = vpop.f32.mrf.mxu0
        %v1087 = vadd.f32 0.0, %v1086
        %v1088 = vpop.f32.mrf.mxu0
        %v1089 = vadd.f32 0.0, %v1088
        %1090 = vmatmul.bf16.gmra.mxu0 %v1018
        %v1091 = vpop.f32.mrf.mxu0
        %v1092 = vadd.f32 0.0, %v1091
        %v1093 = vpop.f32.mrf.mxu0
        %v1094 = vadd.f32 0.0, %v1093
        %1095 = vmatmul.bf16.gmra.mxu0 %v1021
        %v1096 = vpop.f32.mrf.mxu0
        %v1097 = vadd.f32 0.0, %v1096
        %v1098 = vpop.f32.mrf.mxu0
        %v1099 = vadd.f32 0.0, %v1098
        %1100 = vmatmul.bf16.gmra.mxu0 %v1024
        %v1101 = vpop.f32.mrf.mxu0
        %v1102 = vadd.f32 0.0, %v1101
        %v1103 = vpop.f32.mrf.mxu0
        %v1104 = vadd.f32 0.0, %v1103
        %1105 = vmatmul.bf16.gmra.mxu0 %v1027
        %v1106 = vpop.f32.mrf.mxu0
        %v1107 = vadd.f32 0.0, %v1106
        %v1108 = vpop.f32.mrf.mxu0
        %v1109 = vadd.f32 0.0, %v1108
        %1110 = vmatmul.bf16.gmra.mxu0 %v1030
        %v1111 = vpop.f32.mrf.mxu0
        %v1112 = vadd.f32 0.0, %v1111
        %v1113 = vpop.f32.mrf.mxu0
        %v1114 = vadd.f32 0.0, %v1113
        %1115 = vmatmul.bf16.gmra.mxu0 %v1033
        %v1116 = vpop.f32.mrf.mxu0
        %v1117 = vadd.f32 0.0, %v1116
        %v1118 = vpop.f32.mrf.mxu0
        %v1119 = vadd.f32 0.0, %v1118
        %1120 = vmatmul.bf16.gmra.mxu0 %v1036
        %v1121 = vpop.f32.mrf.mxu0
        %v1122 = vadd.f32 0.0, %v1121
        %v1123 = vpop.f32.mrf.mxu0
        %v1124 = vadd.f32 0.0, %v1123
        %1125 = vmatmul.bf16.gmra.mxu0 %v1039
        %v1126 = vpop.f32.mrf.mxu0
        %v1127 = vadd.f32 0.0, %v1126
        %v1128 = vpop.f32.mrf.mxu0
        %v1129 = vadd.f32 0.0, %v1128
        %1130 = vmatmul.bf16.gmra.mxu0 %v1042
        %v1131 = vpop.f32.mrf.mxu0
        %v1132 = vadd.f32 0.0, %v1131
        %v1133 = vpop.f32.mrf.mxu0
        %v1134 = vadd.f32 0.0, %v1133
        %1135 = vmatmul.bf16.gmra.mxu0 %v1045
        %v1136 = vpop.f32.mrf.mxu0
        %v1137 = vadd.f32 0.0, %v1136
        %v1138 = vpop.f32.mrf.mxu0
        %v1139 = vadd.f32 0.0, %v1138
        %1140 = vmatmul.bf16.gmra.mxu0 %v1048
        %v1141 = vpop.f32.mrf.mxu0
        %v1142 = vadd.f32 0.0, %v1141
        %v1143 = vpop.f32.mrf.mxu0
        %v1144 = vadd.f32 0.0, %v1143
        %1145 = vdwg.mxu0
        %v1178 = vunpack.c.l.b16 %v918
        %v1179 = vunpack.c.l.b16 %v919
        %v1180 = vunpack.c.l.b16 %v920
        %v1181 = vunpack.c.l.b16 %v921
        %v1182 = vunpack.c.l.b16 %v922
        %v1183 = vunpack.c.l.b16 %v923
        %v1184 = vunpack.c.l.b16 %v924
        %v1185 = vunpack.c.l.b16 %v925
        %v1186 = vunpack.c.l.b16 %v926
        %v1187 = vunpack.c.l.b16 %v927
        %v1188 = vunpack.c.l.b16 %v928
        %v1189 = vunpack.c.l.b16 %v929
        %v1190 = vunpack.c.l.b16 %v930
        %v1191 = vunpack.c.l.b16 %v931
        %v1192 = vunpack.c.l.b16 %v932
        %v1193 = vunpack.c.l.b16 %v933
        %v1194 = vunpack.c.l.b16 %v934
        %v1195 = vunpack.c.l.b16 %v935
        %v1196 = vunpack.c.l.b16 %v936
        %v1197 = vunpack.c.l.b16 %v937
        %v1198 = vunpack.c.l.b16 %v938
        %v1199 = vunpack.c.l.b16 %v939
        %v1200 = vunpack.c.l.b16 %v940
        %v1201 = vunpack.c.l.b16 %v941
        %v1202 = vunpack.c.l.b16 %v942
        %v1203 = vunpack.c.l.b16 %v943
        %v1204 = vunpack.c.l.b16 %v944
        %v1205 = vunpack.c.l.b16 %v945
        %v1206 = vunpack.c.l.b16 %v946
        %v1207 = vunpack.c.l.b16 %v947
        %v1208 = vunpack.c.l.b16 %v948
        %v1209 = vunpack.c.l.b16 %v949
        %v1210 = vpack.c.b16 %v1179, %v1178
        %v1211 = vpack.c.b16 %v1181, %v1180
        %v1212 = vpack.c.b16 %v1183, %v1182
        %v1213 = vpack.c.b16 %v1185, %v1184
        %v1214 = vpack.c.b16 %v1187, %v1186
        %v1215 = vpack.c.b16 %v1189, %v1188
        %v1216 = vpack.c.b16 %v1191, %v1190
        %v1217 = vpack.c.b16 %v1193, %v1192
        %v1218 = vpack.c.b16 %v1195, %v1194
        %v1219 = vpack.c.b16 %v1197, %v1196
        %v1220 = vpack.c.b16 %v1199, %v1198
        %v1221 = vpack.c.b16 %v1201, %v1200
        %v1222 = vpack.c.b16 %v1203, %v1202
        %v1223 = vpack.c.b16 %v1205, %v1204
        %v1224 = vpack.c.b16 %v1207, %v1206
        %v1225 = vpack.c.b16 %v1209, %v1208
        %v1227 = vsel %vm1001, %v1210, 0
        %v1230 = vsel %vm1001, %v1211, 0
        %v1233 = vsel %vm1001, %v1212, 0
        %v1236 = vsel %vm1001, %v1213, 0
        %v1239 = vsel %vm1001, %v1214, 0
        %v1242 = vsel %vm1001, %v1215, 0
        %v1245 = vsel %vm1001, %v1216, 0
        %v1248 = vsel %vm1001, %v1217, 0
        %v1251 = vsel %vm1001, %v1218, 0
        %v1254 = vsel %vm1001, %v1219, 0
        %v1257 = vsel %vm1001, %v1220, 0
        %v1260 = vsel %vm1001, %v1221, 0
        %v1263 = vsel %vm1001, %v1222, 0
        %v1266 = vsel %vm1001, %v1223, 0
        %v1269 = vsel %vm1001, %v1224, 0
        %v1272 = vsel %vm1001, %v1225, 0
        %v1275 = vand.u32 %v950, %v1053
        %1277 = vmatpush.bf16.msra.mxu0 0
        %1278 = vmatpush.bf16.msra.mxu0 0
        %1279 = vmatpush.bf16.msra.mxu0 0
        %1280 = vmatpush.bf16.msra.mxu0 0
        %1281 = vmatpush.bf16.msra.mxu0 0
        %1282 = vmatpush.bf16.msra.mxu0 0
        %1283 = vmatpush.bf16.msra.mxu0 0
        %1284 = vmatpush.bf16.msra.mxu0 %v1275
        %1285 = vmatmul.bf16.gmra.mxu0 %v1227
        %v1286 = vpop.f32.mrf.mxu0
        %v1287 = vadd.f32 %v1067, %v1286
        %v1288 = vpop.f32.mrf.mxu0
        %v1289 = vadd.f32 %v1069, %v1288
        %1290 = vmatmul.bf16.gmra.mxu0 %v1230
        %v1291 = vpop.f32.mrf.mxu0
        %v1292 = vadd.f32 %v1072, %v1291
        %v1293 = vpop.f32.mrf.mxu0
        %v1294 = vadd.f32 %v1074, %v1293
        %1295 = vmatmul.bf16.gmra.mxu0 %v1233
        %v1296 = vpop.f32.mrf.mxu0
        %v1297 = vadd.f32 %v1077, %v1296
        %v1298 = vpop.f32.mrf.mxu0
        %v1299 = vadd.f32 %v1079, %v1298
        %1300 = vmatmul.bf16.gmra.mxu0 %v1236
        %v1301 = vpop.f32.mrf.mxu0
        %v1302 = vadd.f32 %v1082, %v1301
        %v1303 = vpop.f32.mrf.mxu0
        %v1304 = vadd.f32 %v1084, %v1303
        %1305 = vmatmul.bf16.gmra.mxu0 %v1239
        %v1306 = vpop.f32.mrf.mxu0
        %v1307 = vadd.f32 %v1087, %v1306
        %v1308 = vpop.f32.mrf.mxu0
        %v1309 = vadd.f32 %v1089, %v1308
        %1310 = vmatmul.bf16.gmra.mxu0 %v1242
        %v1311 = vpop.f32.mrf.mxu0
        %v1312 = vadd.f32 %v1092, %v1311
        %v1313 = vpop.f32.mrf.mxu0
        %v1314 = vadd.f32 %v1094, %v1313
        %1315 = vmatmul.bf16.gmra.mxu0 %v1245
        %v1316 = vpop.f32.mrf.mxu0
        %v1317 = vadd.f32 %v1097, %v1316
        %v1318 = vpop.f32.mrf.mxu0
        %v1319 = vadd.f32 %v1099, %v1318
        %1320 = vmatmul.bf16.gmra.mxu0 %v1248
        %v1321 = vpop.f32.mrf.mxu0
        %v1322 = vadd.f32 %v1102, %v1321
        %v1323 = vpop.f32.mrf.mxu0
        %v1324 = vadd.f32 %v1104, %v1323
        %1325 = vmatmul.bf16.gmra.mxu0 %v1251
        %v1326 = vpop.f32.mrf.mxu0
        %v1327 = vadd.f32 %v1107, %v1326
        %v1328 = vpop.f32.mrf.mxu0
        %v1329 = vadd.f32 %v1109, %v1328
        %1330 = vmatmul.bf16.gmra.mxu0 %v1254
        %v1331 = vpop.f32.mrf.mxu0
        %v1332 = vadd.f32 %v1112, %v1331
        %v1333 = vpop.f32.mrf.mxu0
        %v1334 = vadd.f32 %v1114, %v1333
        %1335 = vmatmul.bf16.gmra.mxu0 %v1257
        %v1336 = vpop.f32.mrf.mxu0
        %v1337 = vadd.f32 %v1117, %v1336
        %v1338 = vpop.f32.mrf.mxu0
        %v1339 = vadd.f32 %v1119, %v1338
        %1340 = vmatmul.bf16.gmra.mxu0 %v1260
        %v1341 = vpop.f32.mrf.mxu0
        %v1342 = vadd.f32 %v1122, %v1341
        %v1343 = vpop.f32.mrf.mxu0
        %v1344 = vadd.f32 %v1124, %v1343
        %1345 = vmatmul.bf16.gmra.mxu0 %v1263
        %v1346 = vpop.f32.mrf.mxu0
        %v1347 = vadd.f32 %v1127, %v1346
        %v1348 = vpop.f32.mrf.mxu0
        %v1349 = vadd.f32 %v1129, %v1348
        %1350 = vmatmul.bf16.gmra.mxu0 %v1266
        %v1351 = vpop.f32.mrf.mxu0
        %v1352 = vadd.f32 %v1132, %v1351
        %v1353 = vpop.f32.mrf.mxu0
        %v1354 = vadd.f32 %v1134, %v1353
        %1355 = vmatmul.bf16.gmra.mxu0 %v1269
        %v1356 = vpop.f32.mrf.mxu0
        %v1357 = vadd.f32 %v1137, %v1356
        %v1358 = vpop.f32.mrf.mxu0
        %v1359 = vadd.f32 %v1139, %v1358
        %1360 = vmatmul.bf16.gmra.mxu0 %v1272
        %v1361 = vpop.f32.mrf.mxu0
        %v1362 = vadd.f32 %v1142, %v1361
        %v1363 = vpop.f32.mrf.mxu0
        %v1364 = vadd.f32 %v1144, %v1363
        %1365 = vdwg.mxu0
        %v1366 = vld [vmem:[%s275 + $0x9] sm:$0xff]
        %v1367 = vld [vmem:[%s275 + $0x11] sm:$0xff]
        %v1368 = vld [vmem:[%s275 + $0x19] sm:$0xff]
        %v1369 = vld [vmem:[%s275 + $0x21] sm:$0xff]
        %v1370 = vld [vmem:[%s275 + $0x29] sm:$0xff]
        %v1371 = vld [vmem:[%s275 + $0x31] sm:$0xff]
        %v1372 = vld [vmem:[%s275 + $0x39] sm:$0xff]
        %v1373 = vld [vmem:[%s275 + $0x41] sm:$0xff]
        %v1374 = vld [vmem:[%s275 + $0x49] sm:$0xff]
        %v1375 = vld [vmem:[%s275 + $0x51] sm:$0xff]
        %v1376 = vld [vmem:[%s275 + $0x59] sm:$0xff]
        %v1377 = vld [vmem:[%s275 + $0x61] sm:$0xff]
        %v1378 = vld [vmem:[%s275 + $0x69] sm:$0xff]
        %v1379 = vld [vmem:[%s275 + $0x71] sm:$0xff]
        %v1380 = vld [vmem:[%s275 + $0x79] sm:$0xff]
        %v1381 = vld [vmem:[%s275 + $0x81] sm:$0xff]
        %v1382 = vld [vmem:[%s275 + $0x89] sm:$0xff]
        %v1383 = vld [vmem:[%s275 + $0x91] sm:$0xff]
        %v1384 = vld [vmem:[%s275 + $0x99] sm:$0xff]
        %v1385 = vld [vmem:[%s275 + $0xa1] sm:$0xff]
        %v1386 = vld [vmem:[%s275 + $0xa9] sm:$0xff]
        %v1387 = vld [vmem:[%s275 + $0xb1] sm:$0xff]
        %v1388 = vld [vmem:[%s275 + $0xb9] sm:$0xff]
        %v1389 = vld [vmem:[%s275 + $0xc1] sm:$0xff]
        %v1390 = vld [vmem:[%s275 + $0xc9] sm:$0xff]
        %v1391 = vld [vmem:[%s275 + $0xd1] sm:$0xff]
        %v1392 = vld [vmem:[%s275 + $0xd9] sm:$0xff]
        %v1393 = vld [vmem:[%s275 + $0xe1] sm:$0xff]
        %v1394 = vld [vmem:[%s275 + $0xe9] sm:$0xff]
        %v1395 = vld [vmem:[%s275 + $0xf1] sm:$0xff]
        %v1396 = vld [vmem:[%s275 + $0xf9] sm:$0xff]
        %v1397 = vld [vmem:[%s275 + $0x101] sm:$0xff]
        %v1398 = vpack.c.bf16 %v1366, %v1366
        %v1399 = vpack.c.bf16 %v1367, %v1367
        %v1400 = vpack.c.bf16 %v1368, %v1368
        %v1401 = vpack.c.bf16 %v1369, %v1369
        %v1402 = vpack.c.bf16 %v1370, %v1370
        %v1403 = vpack.c.bf16 %v1371, %v1371
        %v1404 = vpack.c.bf16 %v1372, %v1372
        %v1405 = vpack.c.bf16 %v1373, %v1373
        %v1406 = vpack.c.bf16 %v1374, %v1374
        %v1407 = vpack.c.bf16 %v1375, %v1375
        %v1408 = vpack.c.bf16 %v1376, %v1376
        %v1409 = vpack.c.bf16 %v1377, %v1377
        %v1410 = vpack.c.bf16 %v1378, %v1378
        %v1411 = vpack.c.bf16 %v1379, %v1379
        %v1412 = vpack.c.bf16 %v1380, %v1380
        %v1413 = vpack.c.bf16 %v1381, %v1381
        %v1414 = vpack.c.bf16 %v1382, %v1382
        %v1415 = vpack.c.bf16 %v1383, %v1383
        %v1416 = vpack.c.bf16 %v1384, %v1384
        %v1417 = vpack.c.bf16 %v1385, %v1385
        %v1418 = vpack.c.bf16 %v1386, %v1386
        %v1419 = vpack.c.bf16 %v1387, %v1387
        %v1420 = vpack.c.bf16 %v1388, %v1388
        %v1421 = vpack.c.bf16 %v1389, %v1389
        %v1422 = vpack.c.bf16 %v1390, %v1390
        %v1423 = vpack.c.bf16 %v1391, %v1391
        %v1424 = vpack.c.bf16 %v1392, %v1392
        %v1425 = vpack.c.bf16 %v1393, %v1393
        %v1426 = vpack.c.bf16 %v1394, %v1394
        %v1427 = vpack.c.bf16 %v1395, %v1395
        %v1428 = vpack.c.bf16 %v1396, %v1396
        %v1429 = vpack.c.bf16 %v1397, %v1397
        %v1430 = vsel %vm726, 1, 0
        %v1431 = vsel %vm727, 1, 0
        %v1432 = vsel %vm728, 1, 0
        %v1433 = vsel %vm729, 1, 0
        %v1434 = vsel %vm730, 1, 0
        %v1435 = vsel %vm731, 1, 0
        %v1436 = vsel %vm732, 1, 0
        %v1437 = vsel %vm733, 1, 0
        %v1438 = vsel %vm734, 1, 0
        %v1439 = vsel %vm735, 1, 0
        %v1440 = vsel %vm736, 1, 0
        %v1441 = vsel %vm737, 1, 0
        %v1442 = vsel %vm738, 1, 0
        %v1443 = vsel %vm739, 1, 0
        %v1444 = vsel %vm740, 1, 0
        %v1445 = vsel %vm741, 1, 0
        %v1446 = vsel %vm742, 1, 0
        %v1447 = vsel %vm743, 1, 0
        %v1448 = vsel %vm744, 1, 0
        %v1449 = vsel %vm745, 1, 0
        %v1450 = vsel %vm746, 1, 0
        %v1451 = vsel %vm747, 1, 0
        %v1452 = vsel %vm748, 1, 0
        %v1453 = vsel %vm749, 1, 0
        %v1454 = vsel %vm750, 1, 0
        %v1455 = vsel %vm751, 1, 0
        %v1456 = vsel %vm752, 1, 0
        %v1457 = vsel %vm753, 1, 0
        %v1458 = vsel %vm754, 1, 0
        %v1459 = vsel %vm755, 1, 0
        %v1460 = vsel %vm756, 1, 0
        %v1461 = vsel %vm757, 1, 0
        %vm1462 = vcmp.eq.s32.totalorder %v1430, 1
        %vm1463 = vcmp.eq.s32.totalorder %v1431, 1
        %vm1464 = vcmp.eq.s32.totalorder %v1432, 1
        %vm1465 = vcmp.eq.s32.totalorder %v1433, 1
        %vm1466 = vcmp.eq.s32.totalorder %v1434, 1
        %vm1467 = vcmp.eq.s32.totalorder %v1435, 1
        %vm1468 = vcmp.eq.s32.totalorder %v1436, 1
        %vm1469 = vcmp.eq.s32.totalorder %v1437, 1
        %vm1470 = vcmp.eq.s32.totalorder %v1438, 1
        %vm1471 = vcmp.eq.s32.totalorder %v1439, 1
        %vm1472 = vcmp.eq.s32.totalorder %v1440, 1
        %vm1473 = vcmp.eq.s32.totalorder %v1441, 1
        %vm1474 = vcmp.eq.s32.totalorder %v1442, 1
        %vm1475 = vcmp.eq.s32.totalorder %v1443, 1
        %vm1476 = vcmp.eq.s32.totalorder %v1444, 1
        %vm1477 = vcmp.eq.s32.totalorder %v1445, 1
        %vm1478 = vcmp.eq.s32.totalorder %v1446, 1
        %vm1479 = vcmp.eq.s32.totalorder %v1447, 1
        %vm1480 = vcmp.eq.s32.totalorder %v1448, 1
        %vm1481 = vcmp.eq.s32.totalorder %v1449, 1
        %vm1482 = vcmp.eq.s32.totalorder %v1450, 1
        %vm1483 = vcmp.eq.s32.totalorder %v1451, 1
        %vm1484 = vcmp.eq.s32.totalorder %v1452, 1
        %vm1485 = vcmp.eq.s32.totalorder %v1453, 1
        %vm1486 = vcmp.eq.s32.totalorder %v1454, 1
        %vm1487 = vcmp.eq.s32.totalorder %v1455, 1
        %vm1488 = vcmp.eq.s32.totalorder %v1456, 1
        %vm1489 = vcmp.eq.s32.totalorder %v1457, 1
        %vm1490 = vcmp.eq.s32.totalorder %v1458, 1
        %vm1491 = vcmp.eq.s32.totalorder %v1459, 1
        %vm1492 = vcmp.eq.s32.totalorder %v1460, 1
        %vm1493 = vcmp.eq.s32.totalorder %v1461, 1
        %vm1494 = vmpackc.low %vm1462, %vm1462
        %vm1495 = vmpackc.low %vm1463, %vm1463
        %vm1496 = vmpackc.low %vm1464, %vm1464
        %vm1497 = vmpackc.low %vm1465, %vm1465
        %vm1498 = vmpackc.low %vm1466, %vm1466
        %vm1499 = vmpackc.low %vm1467, %vm1467
        %vm1500 = vmpackc.low %vm1468, %vm1468
        %vm1501 = vmpackc.low %vm1469, %vm1469
        %vm1502 = vmpackc.low %vm1470, %vm1470
        %vm1503 = vmpackc.low %vm1471, %vm1471
        %vm1504 = vmpackc.low %vm1472, %vm1472
        %vm1505 = vmpackc.low %vm1473, %vm1473
        %vm1506 = vmpackc.low %vm1474, %vm1474
        %vm1507 = vmpackc.low %vm1475, %vm1475
        %vm1508 = vmpackc.low %vm1476, %vm1476
        %vm1509 = vmpackc.low %vm1477, %vm1477
        %vm1510 = vmpackc.low %vm1478, %vm1478
        %vm1511 = vmpackc.low %vm1479, %vm1479
        %vm1512 = vmpackc.low %vm1480, %vm1480
        %vm1513 = vmpackc.low %vm1481, %vm1481
        %vm1514 = vmpackc.low %vm1482, %vm1482
        %vm1515 = vmpackc.low %vm1483, %vm1483
        %vm1516 = vmpackc.low %vm1484, %vm1484
        %vm1517 = vmpackc.low %vm1485, %vm1485
        %vm1518 = vmpackc.low %vm1486, %vm1486
        %vm1519 = vmpackc.low %vm1487, %vm1487
        %vm1520 = vmpackc.low %vm1488, %vm1488
        %vm1521 = vmpackc.low %vm1489, %vm1489
        %vm1522 = vmpackc.low %vm1490, %vm1490
        %vm1523 = vmpackc.low %vm1491, %vm1491
        %vm1524 = vmpackc.low %vm1492, %vm1492
        %vm1525 = vmpackc.low %vm1493, %vm1493
        %v1526 = vsel %vm1494, %v1398, 0
        %v1527 = vsel %vm1495, %v1399, 0
        %v1528 = vsel %vm1496, %v1400, 0
        %v1529 = vsel %vm1497, %v1401, 0
        %v1530 = vsel %vm1498, %v1402, 0
        %v1531 = vsel %vm1499, %v1403, 0
        %v1532 = vsel %vm1500, %v1404, 0
        %v1533 = vsel %vm1501, %v1405, 0
        %v1534 = vsel %vm1502, %v1406, 0
        %v1535 = vsel %vm1503, %v1407, 0
        %v1536 = vsel %vm1504, %v1408, 0
        %v1537 = vsel %vm1505, %v1409, 0
        %v1538 = vsel %vm1506, %v1410, 0
        %v1539 = vsel %vm1507, %v1411, 0
        %v1540 = vsel %vm1508, %v1412, 0
        %v1541 = vsel %vm1509, %v1413, 0
        %v1542 = vsel %vm1510, %v1414, 0
        %v1543 = vsel %vm1511, %v1415, 0
        %v1544 = vsel %vm1512, %v1416, 0
        %v1545 = vsel %vm1513, %v1417, 0
        %v1546 = vsel %vm1514, %v1418, 0
        %v1547 = vsel %vm1515, %v1419, 0
        %v1548 = vsel %vm1516, %v1420, 0
        %v1549 = vsel %vm1517, %v1421, 0
        %v1550 = vsel %vm1518, %v1422, 0
        %v1551 = vsel %vm1519, %v1423, 0
        %v1552 = vsel %vm1520, %v1424, 0
        %v1553 = vsel %vm1521, %v1425, 0
        %v1554 = vsel %vm1522, %v1426, 0
        %v1555 = vsel %vm1523, %v1427, 0
        %v1556 = vsel %vm1524, %v1428, 0
        %v1557 = vsel %vm1525, %v1429, 0
        %s1558 = scalar_lea.vmem %s1, 4
        %v1559 = vld [vmem:[%s1558] sm:$0x3]
        %v1592 = vunpack.c.l.b16 %v1526
        %v1593 = vunpack.c.l.b16 %v1527
        %v1594 = vunpack.c.l.b16 %v1528
        %v1595 = vunpack.c.l.b16 %v1529
        %v1596 = vunpack.c.l.b16 %v1530
        %v1597 = vunpack.c.l.b16 %v1531
        %v1598 = vunpack.c.l.b16 %v1532
        %v1599 = vunpack.c.l.b16 %v1533
        %v1600 = vunpack.c.l.b16 %v1534
        %v1601 = vunpack.c.l.b16 %v1535
        %v1602 = vunpack.c.l.b16 %v1536
        %v1603 = vunpack.c.l.b16 %v1537
        %v1604 = vunpack.c.l.b16 %v1538
        %v1605 = vunpack.c.l.b16 %v1539
        %v1606 = vunpack.c.l.b16 %v1540
        %v1607 = vunpack.c.l.b16 %v1541
        %v1608 = vunpack.c.l.b16 %v1542
        %v1609 = vunpack.c.l.b16 %v1543
        %v1610 = vunpack.c.l.b16 %v1544
        %v1611 = vunpack.c.l.b16 %v1545
        %v1612 = vunpack.c.l.b16 %v1546
        %v1613 = vunpack.c.l.b16 %v1547
        %v1614 = vunpack.c.l.b16 %v1548
        %v1615 = vunpack.c.l.b16 %v1549
        %v1616 = vunpack.c.l.b16 %v1550
        %v1617 = vunpack.c.l.b16 %v1551
        %v1618 = vunpack.c.l.b16 %v1552
        %v1619 = vunpack.c.l.b16 %v1553
        %v1620 = vunpack.c.l.b16 %v1554
        %v1621 = vunpack.c.l.b16 %v1555
        %v1622 = vunpack.c.l.b16 %v1556
        %v1623 = vunpack.c.l.b16 %v1557
        %v1624 = vpack.c.b16 %v1593, %v1592
        %v1625 = vpack.c.b16 %v1595, %v1594
        %v1626 = vpack.c.b16 %v1597, %v1596
        %v1627 = vpack.c.b16 %v1599, %v1598
        %v1628 = vpack.c.b16 %v1601, %v1600
        %v1629 = vpack.c.b16 %v1603, %v1602
        %v1630 = vpack.c.b16 %v1605, %v1604
        %v1631 = vpack.c.b16 %v1607, %v1606
        %v1632 = vpack.c.b16 %v1609, %v1608
        %v1633 = vpack.c.b16 %v1611, %v1610
        %v1634 = vpack.c.b16 %v1613, %v1612
        %v1635 = vpack.c.b16 %v1615, %v1614
        %v1636 = vpack.c.b16 %v1617, %v1616
        %v1637 = vpack.c.b16 %v1619, %v1618
        %v1638 = vpack.c.b16 %v1621, %v1620
        %v1639 = vpack.c.b16 %v1623, %v1622
        %v1641 = vsel %vm1001, %v1624, 0
        %v1644 = vsel %vm1001, %v1625, 0
        %v1647 = vsel %vm1001, %v1626, 0
        %v1650 = vsel %vm1001, %v1627, 0
        %v1653 = vsel %vm1001, %v1628, 0
        %v1656 = vsel %vm1001, %v1629, 0
        %v1659 = vsel %vm1001, %v1630, 0
        %v1662 = vsel %vm1001, %v1631, 0
        %v1665 = vsel %vm1001, %v1632, 0
        %v1668 = vsel %vm1001, %v1633, 0
        %v1671 = vsel %vm1001, %v1634, 0
        %v1674 = vsel %vm1001, %v1635, 0
        %v1677 = vsel %vm1001, %v1636, 0
        %v1680 = vsel %vm1001, %v1637, 0
        %v1683 = vsel %vm1001, %v1638, 0
        %v1686 = vsel %vm1001, %v1639, 0
        %v1689 = vand.u32 %v1559, %v1053
        %1691 = vmatpush.bf16.msra.mxu0 0
        %1692 = vmatpush.bf16.msra.mxu0 0
        %1693 = vmatpush.bf16.msra.mxu0 0
        %1694 = vmatpush.bf16.msra.mxu0 0
        %1695 = vmatpush.bf16.msra.mxu0 0
        %1696 = vmatpush.bf16.msra.mxu0 0
        %1697 = vmatpush.bf16.msra.mxu0 0
        %1698 = vmatpush.bf16.msra.mxu0 %v1689
        %1699 = vmatmul.bf16.gmra.mxu0 %v1641
        %v1700 = vpop.f32.mrf.mxu0
        %v1701 = vadd.f32 0.0, %v1700
        %v1702 = vpop.f32.mrf.mxu0
        %v1703 = vadd.f32 0.0, %v1702
        %1704 = vmatmul.bf16.gmra.mxu0 %v1644
        %v1705 = vpop.f32.mrf.mxu0
        %v1706 = vadd.f32 0.0, %v1705
        %v1707 = vpop.f32.mrf.mxu0
        %v1708 = vadd.f32 0.0, %v1707
        %1709 = vmatmul.bf16.gmra.mxu0 %v1647
        %v1710 = vpop.f32.mrf.mxu0
        %v1711 = vadd.f32 0.0, %v1710
        %v1712 = vpop.f32.mrf.mxu0
        %v1713 = vadd.f32 0.0, %v1712
        %1714 = vmatmul.bf16.gmra.mxu0 %v1650
        %v1715 = vpop.f32.mrf.mxu0
        %v1716 = vadd.f32 0.0, %v1715
        %v1717 = vpop.f32.mrf.mxu0
        %v1718 = vadd.f32 0.0, %v1717
        %1719 = vmatmul.bf16.gmra.mxu0 %v1653
        %v1720 = vpop.f32.mrf.mxu0
        %v1721 = vadd.f32 0.0, %v1720
        %v1722 = vpop.f32.mrf.mxu0
        %v1723 = vadd.f32 0.0, %v1722
        %1724 = vmatmul.bf16.gmra.mxu0 %v1656
        %v1725 = vpop.f32.mrf.mxu0
        %v1726 = vadd.f32 0.0, %v1725
        %v1727 = vpop.f32.mrf.mxu0
        %v1728 = vadd.f32 0.0, %v1727
        %1729 = vmatmul.bf16.gmra.mxu0 %v1659
        %v1730 = vpop.f32.mrf.mxu0
        %v1731 = vadd.f32 0.0, %v1730
        %v1732 = vpop.f32.mrf.mxu0
        %v1733 = vadd.f32 0.0, %v1732
        %1734 = vmatmul.bf16.gmra.mxu0 %v1662
        %v1735 = vpop.f32.mrf.mxu0
        %v1736 = vadd.f32 0.0, %v1735
        %v1737 = vpop.f32.mrf.mxu0
        %v1738 = vadd.f32 0.0, %v1737
        %1739 = vmatmul.bf16.gmra.mxu0 %v1665
        %v1740 = vpop.f32.mrf.mxu0
        %v1741 = vadd.f32 0.0, %v1740
        %v1742 = vpop.f32.mrf.mxu0
        %v1743 = vadd.f32 0.0, %v1742
        %1744 = vmatmul.bf16.gmra.mxu0 %v1668
        %v1745 = vpop.f32.mrf.mxu0
        %v1746 = vadd.f32 0.0, %v1745
        %v1747 = vpop.f32.mrf.mxu0
        %v1748 = vadd.f32 0.0, %v1747
        %1749 = vmatmul.bf16.gmra.mxu0 %v1671
        %v1750 = vpop.f32.mrf.mxu0
        %v1751 = vadd.f32 0.0, %v1750
        %v1752 = vpop.f32.mrf.mxu0
        %v1753 = vadd.f32 0.0, %v1752
        %1754 = vmatmul.bf16.gmra.mxu0 %v1674
        %v1755 = vpop.f32.mrf.mxu0
        %v1756 = vadd.f32 0.0, %v1755
        %v1757 = vpop.f32.mrf.mxu0
        %v1758 = vadd.f32 0.0, %v1757
        %1759 = vmatmul.bf16.gmra.mxu0 %v1677
        %v1760 = vpop.f32.mrf.mxu0
        %v1761 = vadd.f32 0.0, %v1760
        %v1762 = vpop.f32.mrf.mxu0
        %v1763 = vadd.f32 0.0, %v1762
        %1764 = vmatmul.bf16.gmra.mxu0 %v1680
        %v1765 = vpop.f32.mrf.mxu0
        %v1766 = vadd.f32 0.0, %v1765
        %v1767 = vpop.f32.mrf.mxu0
        %v1768 = vadd.f32 0.0, %v1767
        %1769 = vmatmul.bf16.gmra.mxu0 %v1683
        %v1770 = vpop.f32.mrf.mxu0
        %v1771 = vadd.f32 0.0, %v1770
        %v1772 = vpop.f32.mrf.mxu0
        %v1773 = vadd.f32 0.0, %v1772
        %1774 = vmatmul.bf16.gmra.mxu0 %v1686
        %v1775 = vpop.f32.mrf.mxu0
        %v1776 = vadd.f32 0.0, %v1775
        %v1777 = vpop.f32.mrf.mxu0
        %v1778 = vadd.f32 0.0, %v1777
        %1779 = vdwg.mxu0
        %v1780 = vadd.f32 %v1287, %v1701
        %v1781 = vadd.f32 %v1289, %v1703
        %v1782 = vadd.f32 %v1292, %v1706
        %v1783 = vadd.f32 %v1294, %v1708
        %v1784 = vadd.f32 %v1297, %v1711
        %v1785 = vadd.f32 %v1299, %v1713
        %v1786 = vadd.f32 %v1302, %v1716
        %v1787 = vadd.f32 %v1304, %v1718
        %v1788 = vadd.f32 %v1307, %v1721
        %v1789 = vadd.f32 %v1309, %v1723
        %v1790 = vadd.f32 %v1312, %v1726
        %v1791 = vadd.f32 %v1314, %v1728
        %v1792 = vadd.f32 %v1317, %v1731
        %v1793 = vadd.f32 %v1319, %v1733
        %v1794 = vadd.f32 %v1322, %v1736
        %v1795 = vadd.f32 %v1324, %v1738
        %v1796 = vadd.f32 %v1327, %v1741
        %v1797 = vadd.f32 %v1329, %v1743
        %v1798 = vadd.f32 %v1332, %v1746
        %v1799 = vadd.f32 %v1334, %v1748
        %v1800 = vadd.f32 %v1337, %v1751
        %v1801 = vadd.f32 %v1339, %v1753
        %v1802 = vadd.f32 %v1342, %v1756
        %v1803 = vadd.f32 %v1344, %v1758
        %v1804 = vadd.f32 %v1347, %v1761
        %v1805 = vadd.f32 %v1349, %v1763
        %v1806 = vadd.f32 %v1352, %v1766
        %v1807 = vadd.f32 %v1354, %v1768
        %v1808 = vadd.f32 %v1357, %v1771
        %v1809 = vadd.f32 %v1359, %v1773
        %v1810 = vadd.f32 %v1362, %v1776
        %v1811 = vadd.f32 %v1364, %v1778
        %v1812 = vld [vmem:[%s275 + $0x17] sm:$0xff]
        %v1813 = vld [vmem:[%s275 + $0x1f] sm:$0xff]
        %v1814 = vld [vmem:[%s275 + $0x27] sm:$0xff]
        %v1815 = vld [vmem:[%s275 + $0x2f] sm:$0xff]
        %v1816 = vld [vmem:[%s275 + $0x37] sm:$0xff]
        %v1817 = vld [vmem:[%s275 + $0x3f] sm:$0xff]
        %v1818 = vld [vmem:[%s275 + $0x47] sm:$0xff]
        %v1819 = vld [vmem:[%s275 + $0x4f] sm:$0xff]
        %v1820 = vld [vmem:[%s275 + $0x57] sm:$0xff]
        %v1821 = vld [vmem:[%s275 + $0x5f] sm:$0xff]
        %v1822 = vld [vmem:[%s275 + $0x67] sm:$0xff]
        %v1823 = vld [vmem:[%s275 + $0x6f] sm:$0xff]
        %v1824 = vld [vmem:[%s275 + $0x77] sm:$0xff]
        %v1825 = vld [vmem:[%s275 + $0x7f] sm:$0xff]
        %v1826 = vld [vmem:[%s275 + $0x87] sm:$0xff]
        %v1827 = vld [vmem:[%s275 + $0x8f] sm:$0xff]
        %v1828 = vld [vmem:[%s275 + $0x97] sm:$0xff]
        %v1829 = vld [vmem:[%s275 + $0x9f] sm:$0xff]
        %v1830 = vld [vmem:[%s275 + $0xa7] sm:$0xff]
        %v1831 = vld [vmem:[%s275 + $0xaf] sm:$0xff]
        %v1832 = vld [vmem:[%s275 + $0xb7] sm:$0xff]
        %v1833 = vld [vmem:[%s275 + $0xbf] sm:$0xff]
        %v1834 = vld [vmem:[%s275 + $0xc7] sm:$0xff]
        %v1835 = vld [vmem:[%s275 + $0xcf] sm:$0xff]
        %v1836 = vld [vmem:[%s275 + $0xd7] sm:$0xff]
        %v1837 = vld [vmem:[%s275 + $0xdf] sm:$0xff]
        %v1838 = vld [vmem:[%s275 + $0xe7] sm:$0xff]
        %v1839 = vld [vmem:[%s275 + $0xef] sm:$0xff]
        %v1840 = vld [vmem:[%s275 + $0xf7] sm:$0xff]
        %v1841 = vld [vmem:[%s275 + $0xff] sm:$0xff]
        %v1842 = vld [vmem:[%s275 + $0x107] sm:$0xff]
        %v1843 = vld [vmem:[%s275 + $0x10f] sm:$0xff]
        %v1844 = vpack.c.bf16 %v1812, %v1812
        %v1845 = vpack.c.bf16 %v1813, %v1813
        %v1846 = vpack.c.bf16 %v1814, %v1814
        %v1847 = vpack.c.bf16 %v1815, %v1815
        %v1848 = vpack.c.bf16 %v1816, %v1816
        %v1849 = vpack.c.bf16 %v1817, %v1817
        %v1850 = vpack.c.bf16 %v1818, %v1818
        %v1851 = vpack.c.bf16 %v1819, %v1819
        %v1852 = vpack.c.bf16 %v1820, %v1820
        %v1853 = vpack.c.bf16 %v1821, %v1821
        %v1854 = vpack.c.bf16 %v1822, %v1822
        %v1855 = vpack.c.bf16 %v1823, %v1823
        %v1856 = vpack.c.bf16 %v1824, %v1824
        %v1857 = vpack.c.bf16 %v1825, %v1825
        %v1858 = vpack.c.bf16 %v1826, %v1826
        %v1859 = vpack.c.bf16 %v1827, %v1827
        %v1860 = vpack.c.bf16 %v1828, %v1828
        %v1861 = vpack.c.bf16 %v1829, %v1829
        %v1862 = vpack.c.bf16 %v1830, %v1830
        %v1863 = vpack.c.bf16 %v1831, %v1831
        %v1864 = vpack.c.bf16 %v1832, %v1832
        %v1865 = vpack.c.bf16 %v1833, %v1833
        %v1866 = vpack.c.bf16 %v1834, %v1834
        %v1867 = vpack.c.bf16 %v1835, %v1835
        %v1868 = vpack.c.bf16 %v1836, %v1836
        %v1869 = vpack.c.bf16 %v1837, %v1837
        %v1870 = vpack.c.bf16 %v1838, %v1838
        %v1871 = vpack.c.bf16 %v1839, %v1839
        %v1872 = vpack.c.bf16 %v1840, %v1840
        %v1873 = vpack.c.bf16 %v1841, %v1841
        %v1874 = vpack.c.bf16 %v1842, %v1842
        %v1875 = vpack.c.bf16 %v1843, %v1843
        %v1876 = vsel %vm886, %v1844, 0
        %v1877 = vsel %vm887, %v1845, 0
        %v1878 = vsel %vm888, %v1846, 0
        %v1879 = vsel %vm889, %v1847, 0
        %v1880 = vsel %vm890, %v1848, 0
        %v1881 = vsel %vm891, %v1849, 0
        %v1882 = vsel %vm892, %v1850, 0
        %v1883 = vsel %vm893, %v1851, 0
        %v1884 = vsel %vm894, %v1852, 0
        %v1885 = vsel %vm895, %v1853, 0
        %v1886 = vsel %vm896, %v1854, 0
        %v1887 = vsel %vm897, %v1855, 0
        %v1888 = vsel %vm898, %v1856, 0
        %v1889 = vsel %vm899, %v1857, 0
        %v1890 = vsel %vm900, %v1858, 0
        %v1891 = vsel %vm901, %v1859, 0
        %v1892 = vsel %vm902, %v1860, 0
        %v1893 = vsel %vm903, %v1861, 0
        %v1894 = vsel %vm904, %v1862, 0
        %v1895 = vsel %vm905, %v1863, 0
        %v1896 = vsel %vm906, %v1864, 0
        %v1897 = vsel %vm907, %v1865, 0
        %v1898 = vsel %vm908, %v1866, 0
        %v1899 = vsel %vm909, %v1867, 0
        %v1900 = vsel %vm910, %v1868, 0
        %v1901 = vsel %vm911, %v1869, 0
        %v1902 = vsel %vm912, %v1870, 0
        %v1903 = vsel %vm913, %v1871, 0
        %v1904 = vsel %vm914, %v1872, 0
        %v1905 = vsel %vm915, %v1873, 0
        %v1906 = vsel %vm916, %v1874, 0
        %v1907 = vsel %vm917, %v1875, 0
        %s1908 = scalar_lea.vmem %s1, 6
        %v1909 = vld [vmem:[%s1908] sm:$0x3]
        %v1942 = vunpack.c.l.b16 %v1876
        %v1943 = vunpack.c.l.b16 %v1877
        %v1944 = vunpack.c.l.b16 %v1878
        %v1945 = vunpack.c.l.b16 %v1879
        %v1946 = vunpack.c.l.b16 %v1880
        %v1947 = vunpack.c.l.b16 %v1881
        %v1948 = vunpack.c.l.b16 %v1882
        %v1949 = vunpack.c.l.b16 %v1883
        %v1950 = vunpack.c.l.b16 %v1884
        %v1951 = vunpack.c.l.b16 %v1885
        %v1952 = vunpack.c.l.b16 %v1886
        %v1953 = vunpack.c.l.b16 %v1887
        %v1954 = vunpack.c.l.b16 %v1888
        %v1955 = vunpack.c.l.b16 %v1889
        %v1956 = vunpack.c.l.b16 %v1890
        %v1957 = vunpack.c.l.b16 %v1891
        %v1958 = vunpack.c.l.b16 %v1892
        %v1959 = vunpack.c.l.b16 %v1893
        %v1960 = vunpack.c.l.b16 %v1894
        %v1961 = vunpack.c.l.b16 %v1895
        %v1962 = vunpack.c.l.b16 %v1896
        %v1963 = vunpack.c.l.b16 %v1897
        %v1964 = vunpack.c.l.b16 %v1898
        %v1965 = vunpack.c.l.b16 %v1899
        %v1966 = vunpack.c.l.b16 %v1900
        %v1967 = vunpack.c.l.b16 %v1901
        %v1968 = vunpack.c.l.b16 %v1902
        %v1969 = vunpack.c.l.b16 %v1903
        %v1970 = vunpack.c.l.b16 %v1904
        %v1971 = vunpack.c.l.b16 %v1905
        %v1972 = vunpack.c.l.b16 %v1906
        %v1973 = vunpack.c.l.b16 %v1907
        %v1974 = vpack.c.b16 %v1943, %v1942
        %v1975 = vpack.c.b16 %v1945, %v1944
        %v1976 = vpack.c.b16 %v1947, %v1946
        %v1977 = vpack.c.b16 %v1949, %v1948
        %v1978 = vpack.c.b16 %v1951, %v1950
        %v1979 = vpack.c.b16 %v1953, %v1952
        %v1980 = vpack.c.b16 %v1955, %v1954
        %v1981 = vpack.c.b16 %v1957, %v1956
        %v1982 = vpack.c.b16 %v1959, %v1958
        %v1983 = vpack.c.b16 %v1961, %v1960
        %v1984 = vpack.c.b16 %v1963, %v1962
        %v1985 = vpack.c.b16 %v1965, %v1964
        %v1986 = vpack.c.b16 %v1967, %v1966
        %v1987 = vpack.c.b16 %v1969, %v1968
        %v1988 = vpack.c.b16 %v1971, %v1970
        %v1989 = vpack.c.b16 %v1973, %v1972
        %v1991 = vsel %vm1001, %v1974, 0
        %v1994 = vsel %vm1001, %v1975, 0
        %v1997 = vsel %vm1001, %v1976, 0
        %v2000 = vsel %vm1001, %v1977, 0
        %v2003 = vsel %vm1001, %v1978, 0
        %v2006 = vsel %vm1001, %v1979, 0
        %v2009 = vsel %vm1001, %v1980, 0
        %v2012 = vsel %vm1001, %v1981, 0
        %v2015 = vsel %vm1001, %v1982, 0
        %v2018 = vsel %vm1001, %v1983, 0
        %v2021 = vsel %vm1001, %v1984, 0
        %v2024 = vsel %vm1001, %v1985, 0
        %v2027 = vsel %vm1001, %v1986, 0
        %v2030 = vsel %vm1001, %v1987, 0
        %v2033 = vsel %vm1001, %v1988, 0
        %v2036 = vsel %vm1001, %v1989, 0
        %v2039 = vand.u32 %v1909, %v1053
        %2041 = vmatpush.bf16.msra.mxu0 0
        %2042 = vmatpush.bf16.msra.mxu0 0
        %2043 = vmatpush.bf16.msra.mxu0 0
        %2044 = vmatpush.bf16.msra.mxu0 0
        %2045 = vmatpush.bf16.msra.mxu0 0
        %2046 = vmatpush.bf16.msra.mxu0 0
        %2047 = vmatpush.bf16.msra.mxu0 0
        %2048 = vmatpush.bf16.msra.mxu0 %v2039
        %2049 = vmatmul.bf16.gmra.mxu0 %v1991
        %v2050 = vpop.f32.mrf.mxu0
        %v2051 = vadd.f32 0.0, %v2050
        %v2052 = vpop.f32.mrf.mxu0
        %v2053 = vadd.f32 0.0, %v2052
        %2054 = vmatmul.bf16.gmra.mxu0 %v1994
        %v2055 = vpop.f32.mrf.mxu0
        %v2056 = vadd.f32 0.0, %v2055
        %v2057 = vpop.f32.mrf.mxu0
        %v2058 = vadd.f32 0.0, %v2057
        %2059 = vmatmul.bf16.gmra.mxu0 %v1997
        %v2060 = vpop.f32.mrf.mxu0
        %v2061 = vadd.f32 0.0, %v2060
        %v2062 = vpop.f32.mrf.mxu0
        %v2063 = vadd.f32 0.0, %v2062
        %2064 = vmatmul.bf16.gmra.mxu0 %v2000
        %v2065 = vpop.f32.mrf.mxu0
        %v2066 = vadd.f32 0.0, %v2065
        %v2067 = vpop.f32.mrf.mxu0
        %v2068 = vadd.f32 0.0, %v2067
        %2069 = vmatmul.bf16.gmra.mxu0 %v2003
        %v2070 = vpop.f32.mrf.mxu0
        %v2071 = vadd.f32 0.0, %v2070
        %v2072 = vpop.f32.mrf.mxu0
        %v2073 = vadd.f32 0.0, %v2072
        %2074 = vmatmul.bf16.gmra.mxu0 %v2006
        %v2075 = vpop.f32.mrf.mxu0
        %v2076 = vadd.f32 0.0, %v2075
        %v2077 = vpop.f32.mrf.mxu0
        %v2078 = vadd.f32 0.0, %v2077
        %2079 = vmatmul.bf16.gmra.mxu0 %v2009
        %v2080 = vpop.f32.mrf.mxu0
        %v2081 = vadd.f32 0.0, %v2080
        %v2082 = vpop.f32.mrf.mxu0
        %v2083 = vadd.f32 0.0, %v2082
        %2084 = vmatmul.bf16.gmra.mxu0 %v2012
        %v2085 = vpop.f32.mrf.mxu0
        %v2086 = vadd.f32 0.0, %v2085
        %v2087 = vpop.f32.mrf.mxu0
        %v2088 = vadd.f32 0.0, %v2087
        %2089 = vmatmul.bf16.gmra.mxu0 %v2015
        %v2090 = vpop.f32.mrf.mxu0
        %v2091 = vadd.f32 0.0, %v2090
        %v2092 = vpop.f32.mrf.mxu0
        %v2093 = vadd.f32 0.0, %v2092
        %2094 = vmatmul.bf16.gmra.mxu0 %v2018
        %v2095 = vpop.f32.mrf.mxu0
        %v2096 = vadd.f32 0.0, %v2095
        %v2097 = vpop.f32.mrf.mxu0
        %v2098 = vadd.f32 0.0, %v2097
        %2099 = vmatmul.bf16.gmra.mxu0 %v2021
        %v2100 = vpop.f32.mrf.mxu0
        %v2101 = vadd.f32 0.0, %v2100
        %v2102 = vpop.f32.mrf.mxu0
        %v2103 = vadd.f32 0.0, %v2102
        %2104 = vmatmul.bf16.gmra.mxu0 %v2024
        %v2105 = vpop.f32.mrf.mxu0
        %v2106 = vadd.f32 0.0, %v2105
        %v2107 = vpop.f32.mrf.mxu0
        %v2108 = vadd.f32 0.0, %v2107
        %2109 = vmatmul.bf16.gmra.mxu0 %v2027
        %v2110 = vpop.f32.mrf.mxu0
        %v2111 = vadd.f32 0.0, %v2110
        %v2112 = vpop.f32.mrf.mxu0
        %v2113 = vadd.f32 0.0, %v2112
        %2114 = vmatmul.bf16.gmra.mxu0 %v2030
        %v2115 = vpop.f32.mrf.mxu0
        %v2116 = vadd.f32 0.0, %v2115
        %v2117 = vpop.f32.mrf.mxu0
        %v2118 = vadd.f32 0.0, %v2117
        %2119 = vmatmul.bf16.gmra.mxu0 %v2033
        %v2120 = vpop.f32.mrf.mxu0
        %v2121 = vadd.f32 0.0, %v2120
        %v2122 = vpop.f32.mrf.mxu0
        %v2123 = vadd.f32 0.0, %v2122
        %2124 = vmatmul.bf16.gmra.mxu0 %v2036
        %v2125 = vpop.f32.mrf.mxu0
        %v2126 = vadd.f32 0.0, %v2125
        %v2127 = vpop.f32.mrf.mxu0
        %v2128 = vadd.f32 0.0, %v2127
        %2129 = vdwg.mxu0
        %v2130 = vadd.f32 %v1780, %v2051
        %v2131 = vadd.f32 %v1781, %v2053
        %v2132 = vadd.f32 %v1782, %v2056
        %v2133 = vadd.f32 %v1783, %v2058
        %v2134 = vadd.f32 %v1784, %v2061
        %v2135 = vadd.f32 %v1785, %v2063
        %v2136 = vadd.f32 %v1786, %v2066
        %v2137 = vadd.f32 %v1787, %v2068
        %v2138 = vadd.f32 %v1788, %v2071
        %v2139 = vadd.f32 %v1789, %v2073
        %v2140 = vadd.f32 %v1790, %v2076
        %v2141 = vadd.f32 %v1791, %v2078
        %v2142 = vadd.f32 %v1792, %v2081
        %v2143 = vadd.f32 %v1793, %v2083
        %v2144 = vadd.f32 %v1794, %v2086
        %v2145 = vadd.f32 %v1795, %v2088
        %v2146 = vadd.f32 %v1796, %v2091
        %v2147 = vadd.f32 %v1797, %v2093
        %v2148 = vadd.f32 %v1798, %v2096
        %v2149 = vadd.f32 %v1799, %v2098
        %v2150 = vadd.f32 %v1800, %v2101
        %v2151 = vadd.f32 %v1801, %v2103
        %v2152 = vadd.f32 %v1802, %v2106
        %v2153 = vadd.f32 %v1803, %v2108
        %v2154 = vadd.f32 %v1804, %v2111
        %v2155 = vadd.f32 %v1805, %v2113
        %v2156 = vadd.f32 %v1806, %v2116
        %v2157 = vadd.f32 %v1807, %v2118
        %v2158 = vadd.f32 %v1808, %v2121
        %v2159 = vadd.f32 %v1809, %v2123
        %v2160 = vadd.f32 %v1810, %v2126
        %v2161 = vadd.f32 %v1811, %v2128
        %v2162 = vld [vmem:[%s275 + $0x18] sm:$0xff]
        %v2163 = vld [vmem:[%s275 + $0x20] sm:$0xff]
        %v2164 = vld [vmem:[%s275 + $0x28] sm:$0xff]
        %v2165 = vld [vmem:[%s275 + $0x30] sm:$0xff]
        %v2166 = vld [vmem:[%s275 + $0x38] sm:$0xff]
        %v2167 = vld [vmem:[%s275 + $0x40] sm:$0xff]
        %v2168 = vld [vmem:[%s275 + $0x48] sm:$0xff]
        %v2169 = vld [vmem:[%s275 + $0x50] sm:$0xff]
        %v2170 = vld [vmem:[%s275 + $0x58] sm:$0xff]
        %v2171 = vld [vmem:[%s275 + $0x60] sm:$0xff]
        %v2172 = vld [vmem:[%s275 + $0x68] sm:$0xff]
        %v2173 = vld [vmem:[%s275 + $0x70] sm:$0xff]
        %v2174 = vld [vmem:[%s275 + $0x78] sm:$0xff]
        %v2175 = vld [vmem:[%s275 + $0x80] sm:$0xff]
        %v2176 = vld [vmem:[%s275 + $0x88] sm:$0xff]
        %v2177 = vld [vmem:[%s275 + $0x90] sm:$0xff]
        %v2178 = vld [vmem:[%s275 + $0x98] sm:$0xff]
        %v2179 = vld [vmem:[%s275 + $0xa0] sm:$0xff]
        %v2180 = vld [vmem:[%s275 + $0xa8] sm:$0xff]
        %v2181 = vld [vmem:[%s275 + $0xb0] sm:$0xff]
        %v2182 = vld [vmem:[%s275 + $0xb8] sm:$0xff]
        %v2183 = vld [vmem:[%s275 + $0xc0] sm:$0xff]
        %v2184 = vld [vmem:[%s275 + $0xc8] sm:$0xff]
        %v2185 = vld [vmem:[%s275 + $0xd0] sm:$0xff]
        %v2186 = vld [vmem:[%s275 + $0xd8] sm:$0xff]
        %v2187 = vld [vmem:[%s275 + $0xe0] sm:$0xff]
        %v2188 = vld [vmem:[%s275 + $0xe8] sm:$0xff]
        %v2189 = vld [vmem:[%s275 + $0xf0] sm:$0xff]
        %v2190 = vld [vmem:[%s275 + $0xf8] sm:$0xff]
        %v2191 = vld [vmem:[%s275 + $0x100] sm:$0xff]
        %v2192 = vld [vmem:[%s275 + $0x108] sm:$0xff]
        %v2193 = vld [vmem:[%s275 + $0x110] sm:$0xff]
        %v2194 = vpack.c.bf16 %v2163, %v2162
        %v2195 = vpack.c.bf16 %v2165, %v2164
        %v2196 = vpack.c.bf16 %v2167, %v2166
        %v2197 = vpack.c.bf16 %v2169, %v2168
        %v2198 = vpack.c.bf16 %v2171, %v2170
        %v2199 = vpack.c.bf16 %v2173, %v2172
        %v2200 = vpack.c.bf16 %v2175, %v2174
        %v2201 = vpack.c.bf16 %v2177, %v2176
        %v2202 = vpack.c.bf16 %v2179, %v2178
        %v2203 = vpack.c.bf16 %v2181, %v2180
        %v2204 = vpack.c.bf16 %v2183, %v2182
        %v2205 = vpack.c.bf16 %v2185, %v2184
        %v2206 = vpack.c.bf16 %v2187, %v2186
        %v2207 = vpack.c.bf16 %v2189, %v2188
        %v2208 = vpack.c.bf16 %v2191, %v2190
        %v2209 = vpack.c.bf16 %v2193, %v2192
        %s2210 = scalar_lea.vmem %s1, 8
        %v2211 = vld [vmem:[%s2210] sm:$0x3]
        %v2213 = vsel %vm1001, %v2194, 0
        %v2216 = vsel %vm1001, %v2195, 0
        %v2219 = vsel %vm1001, %v2196, 0
        %v2222 = vsel %vm1001, %v2197, 0
        %v2225 = vsel %vm1001, %v2198, 0
        %v2228 = vsel %vm1001, %v2199, 0
        %v2231 = vsel %vm1001, %v2200, 0
        %v2234 = vsel %vm1001, %v2201, 0
        %v2237 = vsel %vm1001, %v2202, 0
        %v2240 = vsel %vm1001, %v2203, 0
        %v2243 = vsel %vm1001, %v2204, 0
        %v2246 = vsel %vm1001, %v2205, 0
        %v2249 = vsel %vm1001, %v2206, 0
        %v2252 = vsel %vm1001, %v2207, 0
        %v2255 = vsel %vm1001, %v2208, 0
        %v2258 = vsel %vm1001, %v2209, 0
        %v2261 = vand.u32 %v2211, %v1053
        %2263 = vmatpush.bf16.msra.mxu0 0
        %2264 = vmatpush.bf16.msra.mxu0 0
        %2265 = vmatpush.bf16.msra.mxu0 0
        %2266 = vmatpush.bf16.msra.mxu0 0
        %2267 = vmatpush.bf16.msra.mxu0 0
        %2268 = vmatpush.bf16.msra.mxu0 0
        %2269 = vmatpush.bf16.msra.mxu0 0
        %2270 = vmatpush.bf16.msra.mxu0 %v2261
        %2271 = vmatmul.bf16.gmra.mxu0 %v2213
        %v2272 = vpop.f32.mrf.mxu0
        %v2273 = vadd.f32 0.0, %v2272
        %v2274 = vpop.f32.mrf.mxu0
        %v2275 = vadd.f32 0.0, %v2274
        %2276 = vmatmul.bf16.gmra.mxu0 %v2216
        %v2277 = vpop.f32.mrf.mxu0
        %v2278 = vadd.f32 0.0, %v2277
        %v2279 = vpop.f32.mrf.mxu0
        %v2280 = vadd.f32 0.0, %v2279
        %2281 = vmatmul.bf16.gmra.mxu0 %v2219
        %v2282 = vpop.f32.mrf.mxu0
        %v2283 = vadd.f32 0.0, %v2282
        %v2284 = vpop.f32.mrf.mxu0
        %v2285 = vadd.f32 0.0, %v2284
        %2286 = vmatmul.bf16.gmra.mxu0 %v2222
        %v2287 = vpop.f32.mrf.mxu0
        %v2288 = vadd.f32 0.0, %v2287
        %v2289 = vpop.f32.mrf.mxu0
        %v2290 = vadd.f32 0.0, %v2289
        %2291 = vmatmul.bf16.gmra.mxu0 %v2225
        %v2292 = vpop.f32.mrf.mxu0
        %v2293 = vadd.f32 0.0, %v2292
        %v2294 = vpop.f32.mrf.mxu0
        %v2295 = vadd.f32 0.0, %v2294
        %2296 = vmatmul.bf16.gmra.mxu0 %v2228
        %v2297 = vpop.f32.mrf.mxu0
        %v2298 = vadd.f32 0.0, %v2297
        %v2299 = vpop.f32.mrf.mxu0
        %v2300 = vadd.f32 0.0, %v2299
        %2301 = vmatmul.bf16.gmra.mxu0 %v2231
        %v2302 = vpop.f32.mrf.mxu0
        %v2303 = vadd.f32 0.0, %v2302
        %v2304 = vpop.f32.mrf.mxu0
        %v2305 = vadd.f32 0.0, %v2304
        %2306 = vmatmul.bf16.gmra.mxu0 %v2234
        %v2307 = vpop.f32.mrf.mxu0
        %v2308 = vadd.f32 0.0, %v2307
        %v2309 = vpop.f32.mrf.mxu0
        %v2310 = vadd.f32 0.0, %v2309
        %2311 = vmatmul.bf16.gmra.mxu0 %v2237
        %v2312 = vpop.f32.mrf.mxu0
        %v2313 = vadd.f32 0.0, %v2312
        %v2314 = vpop.f32.mrf.mxu0
        %v2315 = vadd.f32 0.0, %v2314
        %2316 = vmatmul.bf16.gmra.mxu0 %v2240
        %v2317 = vpop.f32.mrf.mxu0
        %v2318 = vadd.f32 0.0, %v2317
        %v2319 = vpop.f32.mrf.mxu0
        %v2320 = vadd.f32 0.0, %v2319
        %2321 = vmatmul.bf16.gmra.mxu0 %v2243
        %v2322 = vpop.f32.mrf.mxu0
        %v2323 = vadd.f32 0.0, %v2322
        %v2324 = vpop.f32.mrf.mxu0
        %v2325 = vadd.f32 0.0, %v2324
        %2326 = vmatmul.bf16.gmra.mxu0 %v2246
        %v2327 = vpop.f32.mrf.mxu0
        %v2328 = vadd.f32 0.0, %v2327
        %v2329 = vpop.f32.mrf.mxu0
        %v2330 = vadd.f32 0.0, %v2329
        %2331 = vmatmul.bf16.gmra.mxu0 %v2249
        %v2332 = vpop.f32.mrf.mxu0
        %v2333 = vadd.f32 0.0, %v2332
        %v2334 = vpop.f32.mrf.mxu0
        %v2335 = vadd.f32 0.0, %v2334
        %2336 = vmatmul.bf16.gmra.mxu0 %v2252
        %v2337 = vpop.f32.mrf.mxu0
        %v2338 = vadd.f32 0.0, %v2337
        %v2339 = vpop.f32.mrf.mxu0
        %v2340 = vadd.f32 0.0, %v2339
        %2341 = vmatmul.bf16.gmra.mxu0 %v2255
        %v2342 = vpop.f32.mrf.mxu0
        %v2343 = vadd.f32 0.0, %v2342
        %v2344 = vpop.f32.mrf.mxu0
        %v2345 = vadd.f32 0.0, %v2344
        %2346 = vmatmul.bf16.gmra.mxu0 %v2258
        %v2347 = vpop.f32.mrf.mxu0
        %v2348 = vadd.f32 0.0, %v2347
        %v2349 = vpop.f32.mrf.mxu0
        %v2350 = vadd.f32 0.0, %v2349
        %2351 = vdwg.mxu0
        %v2352 = vadd.f32 %v2130, %v2273
        %v2353 = vadd.f32 %v2131, %v2275
        %v2354 = vadd.f32 %v2132, %v2278
        %v2355 = vadd.f32 %v2133, %v2280
        %v2356 = vadd.f32 %v2134, %v2283
        %v2357 = vadd.f32 %v2135, %v2285
        %v2358 = vadd.f32 %v2136, %v2288
        %v2359 = vadd.f32 %v2137, %v2290
        %v2360 = vadd.f32 %v2138, %v2293
        %v2361 = vadd.f32 %v2139, %v2295
        %v2362 = vadd.f32 %v2140, %v2298
        %v2363 = vadd.f32 %v2141, %v2300
        %v2364 = vadd.f32 %v2142, %v2303
        %v2365 = vadd.f32 %v2143, %v2305
        %v2366 = vadd.f32 %v2144, %v2308
        %v2367 = vadd.f32 %v2145, %v2310
        %v2368 = vadd.f32 %v2146, %v2313
        %v2369 = vadd.f32 %v2147, %v2315
        %v2370 = vadd.f32 %v2148, %v2318
        %v2371 = vadd.f32 %v2149, %v2320
        %v2372 = vadd.f32 %v2150, %v2323
        %v2373 = vadd.f32 %v2151, %v2325
        %v2374 = vadd.f32 %v2152, %v2328
        %v2375 = vadd.f32 %v2153, %v2330
        %v2376 = vadd.f32 %v2154, %v2333
        %v2377 = vadd.f32 %v2155, %v2335
        %v2378 = vadd.f32 %v2156, %v2338
        %v2379 = vadd.f32 %v2157, %v2340
        %v2380 = vadd.f32 %v2158, %v2343
        %v2381 = vadd.f32 %v2159, %v2345
        %v2382 = vadd.f32 %v2160, %v2348
        %v2383 = vadd.f32 %v2161, %v2350
        %v2384 = vld [vmem:[%s275 + $0x19] sm:$0xff]
        %v2385 = vld [vmem:[%s275 + $0x21] sm:$0xff]
        %v2386 = vld [vmem:[%s275 + $0x29] sm:$0xff]
        %v2387 = vld [vmem:[%s275 + $0x31] sm:$0xff]
        %v2388 = vld [vmem:[%s275 + $0x39] sm:$0xff]
        %v2389 = vld [vmem:[%s275 + $0x41] sm:$0xff]
        %v2390 = vld [vmem:[%s275 + $0x49] sm:$0xff]
        %v2391 = vld [vmem:[%s275 + $0x51] sm:$0xff]
        %v2392 = vld [vmem:[%s275 + $0x59] sm:$0xff]
        %v2393 = vld [vmem:[%s275 + $0x61] sm:$0xff]
        %v2394 = vld [vmem:[%s275 + $0x69] sm:$0xff]
        %v2395 = vld [vmem:[%s275 + $0x71] sm:$0xff]
        %v2396 = vld [vmem:[%s275 + $0x79] sm:$0xff]
        %v2397 = vld [vmem:[%s275 + $0x81] sm:$0xff]
        %v2398 = vld [vmem:[%s275 + $0x89] sm:$0xff]
        %v2399 = vld [vmem:[%s275 + $0x91] sm:$0xff]
        %v2400 = vld [vmem:[%s275 + $0x99] sm:$0xff]
        %v2401 = vld [vmem:[%s275 + $0xa1] sm:$0xff]
        %v2402 = vld [vmem:[%s275 + $0xa9] sm:$0xff]
        %v2403 = vld [vmem:[%s275 + $0xb1] sm:$0xff]
        %v2404 = vld [vmem:[%s275 + $0xb9] sm:$0xff]
        %v2405 = vld [vmem:[%s275 + $0xc1] sm:$0xff]
        %v2406 = vld [vmem:[%s275 + $0xc9] sm:$0xff]
        %v2407 = vld [vmem:[%s275 + $0xd1] sm:$0xff]
        %v2408 = vld [vmem:[%s275 + $0xd9] sm:$0xff]
        %v2409 = vld [vmem:[%s275 + $0xe1] sm:$0xff]
        %v2410 = vld [vmem:[%s275 + $0xe9] sm:$0xff]
        %v2411 = vld [vmem:[%s275 + $0xf1] sm:$0xff]
        %v2412 = vld [vmem:[%s275 + $0xf9] sm:$0xff]
        %v2413 = vld [vmem:[%s275 + $0x101] sm:$0xff]
        %v2414 = vld [vmem:[%s275 + $0x109] sm:$0xff]
        %v2415 = vld [vmem:[%s275 + $0x111] sm:$0xff]
        %v2416 = vpack.c.bf16 %v2384, %v2384
        %v2417 = vpack.c.bf16 %v2385, %v2385
        %v2418 = vpack.c.bf16 %v2386, %v2386
        %v2419 = vpack.c.bf16 %v2387, %v2387
        %v2420 = vpack.c.bf16 %v2388, %v2388
        %v2421 = vpack.c.bf16 %v2389, %v2389
        %v2422 = vpack.c.bf16 %v2390, %v2390
        %v2423 = vpack.c.bf16 %v2391, %v2391
        %v2424 = vpack.c.bf16 %v2392, %v2392
        %v2425 = vpack.c.bf16 %v2393, %v2393
        %v2426 = vpack.c.bf16 %v2394, %v2394
        %v2427 = vpack.c.bf16 %v2395, %v2395
        %v2428 = vpack.c.bf16 %v2396, %v2396
        %v2429 = vpack.c.bf16 %v2397, %v2397
        %v2430 = vpack.c.bf16 %v2398, %v2398
        %v2431 = vpack.c.bf16 %v2399, %v2399
        %v2432 = vpack.c.bf16 %v2400, %v2400
        %v2433 = vpack.c.bf16 %v2401, %v2401
        %v2434 = vpack.c.bf16 %v2402, %v2402
        %v2435 = vpack.c.bf16 %v2403, %v2403
        %v2436 = vpack.c.bf16 %v2404, %v2404
        %v2437 = vpack.c.bf16 %v2405, %v2405
        %v2438 = vpack.c.bf16 %v2406, %v2406
        %v2439 = vpack.c.bf16 %v2407, %v2407
        %v2440 = vpack.c.bf16 %v2408, %v2408
        %v2441 = vpack.c.bf16 %v2409, %v2409
        %v2442 = vpack.c.bf16 %v2410, %v2410
        %v2443 = vpack.c.bf16 %v2411, %v2411
        %v2444 = vpack.c.bf16 %v2412, %v2412
        %v2445 = vpack.c.bf16 %v2413, %v2413
        %v2446 = vpack.c.bf16 %v2414, %v2414
        %v2447 = vpack.c.bf16 %v2415, %v2415
        %v2448 = vsel %vm1494, %v2416, 0
        %v2449 = vsel %vm1495, %v2417, 0
        %v2450 = vsel %vm1496, %v2418, 0
        %v2451 = vsel %vm1497, %v2419, 0
        %v2452 = vsel %vm1498, %v2420, 0
        %v2453 = vsel %vm1499, %v2421, 0
        %v2454 = vsel %vm1500, %v2422, 0
        %v2455 = vsel %vm1501, %v2423, 0
        %v2456 = vsel %vm1502, %v2424, 0
        %v2457 = vsel %vm1503, %v2425, 0
        %v2458 = vsel %vm1504, %v2426, 0
        %v2459 = vsel %vm1505, %v2427, 0
        %v2460 = vsel %vm1506, %v2428, 0
        %v2461 = vsel %vm1507, %v2429, 0
        %v2462 = vsel %vm1508, %v2430, 0
        %v2463 = vsel %vm1509, %v2431, 0
        %v2464 = vsel %vm1510, %v2432, 0
        %v2465 = vsel %vm1511, %v2433, 0
        %v2466 = vsel %vm1512, %v2434, 0
        %v2467 = vsel %vm1513, %v2435, 0
        %v2468 = vsel %vm1514, %v2436, 0
        %v2469 = vsel %vm1515, %v2437, 0
        %v2470 = vsel %vm1516, %v2438, 0
        %v2471 = vsel %vm1517, %v2439, 0
        %v2472 = vsel %vm1518, %v2440, 0
        %v2473 = vsel %vm1519, %v2441, 0
        %v2474 = vsel %vm1520, %v2442, 0
        %v2475 = vsel %vm1521, %v2443, 0
        %v2476 = vsel %vm1522, %v2444, 0
        %v2477 = vsel %vm1523, %v2445, 0
        %v2478 = vsel %vm1524, %v2446, 0
        %v2479 = vsel %vm1525, %v2447, 0
        %s2480 = scalar_lea.vmem %s1, 10
        %v2481 = vld [vmem:[%s2480] sm:$0x3]
        %v2514 = vunpack.c.l.b16 %v2448
        %v2515 = vunpack.c.l.b16 %v2449
        %v2516 = vunpack.c.l.b16 %v2450
        %v2517 = vunpack.c.l.b16 %v2451
        %v2518 = vunpack.c.l.b16 %v2452
        %v2519 = vunpack.c.l.b16 %v2453
        %v2520 = vunpack.c.l.b16 %v2454
        %v2521 = vunpack.c.l.b16 %v2455
        %v2522 = vunpack.c.l.b16 %v2456
        %v2523 = vunpack.c.l.b16 %v2457
        %v2524 = vunpack.c.l.b16 %v2458
        %v2525 = vunpack.c.l.b16 %v2459
        %v2526 = vunpack.c.l.b16 %v2460
        %v2527 = vunpack.c.l.b16 %v2461
        %v2528 = vunpack.c.l.b16 %v2462
        %v2529 = vunpack.c.l.b16 %v2463
        %v2530 = vunpack.c.l.b16 %v2464
        %v2531 = vunpack.c.l.b16 %v2465
        %v2532 = vunpack.c.l.b16 %v2466
        %v2533 = vunpack.c.l.b16 %v2467
        %v2534 = vunpack.c.l.b16 %v2468
        %v2535 = vunpack.c.l.b16 %v2469
        %v2536 = vunpack.c.l.b16 %v2470
        %v2537 = vunpack.c.l.b16 %v2471
        %v2538 = vunpack.c.l.b16 %v2472
        %v2539 = vunpack.c.l.b16 %v2473
        %v2540 = vunpack.c.l.b16 %v2474
        %v2541 = vunpack.c.l.b16 %v2475
        %v2542 = vunpack.c.l.b16 %v2476
        %v2543 = vunpack.c.l.b16 %v2477
        %v2544 = vunpack.c.l.b16 %v2478
        %v2545 = vunpack.c.l.b16 %v2479
        %v2546 = vpack.c.b16 %v2515, %v2514
        %v2547 = vpack.c.b16 %v2517, %v2516
        %v2548 = vpack.c.b16 %v2519, %v2518
        %v2549 = vpack.c.b16 %v2521, %v2520
        %v2550 = vpack.c.b16 %v2523, %v2522
        %v2551 = vpack.c.b16 %v2525, %v2524
        %v2552 = vpack.c.b16 %v2527, %v2526
        %v2553 = vpack.c.b16 %v2529, %v2528
        %v2554 = vpack.c.b16 %v2531, %v2530
        %v2555 = vpack.c.b16 %v2533, %v2532
        %v2556 = vpack.c.b16 %v2535, %v2534
        %v2557 = vpack.c.b16 %v2537, %v2536
        %v2558 = vpack.c.b16 %v2539, %v2538
        %v2559 = vpack.c.b16 %v2541, %v2540
        %v2560 = vpack.c.b16 %v2543, %v2542
        %v2561 = vpack.c.b16 %v2545, %v2544
        %v2563 = vsel %vm1001, %v2546, 0
        %v2566 = vsel %vm1001, %v2547, 0
        %v2569 = vsel %vm1001, %v2548, 0
        %v2572 = vsel %vm1001, %v2549, 0
        %v2575 = vsel %vm1001, %v2550, 0
        %v2578 = vsel %vm1001, %v2551, 0
        %v2581 = vsel %vm1001, %v2552, 0
        %v2584 = vsel %vm1001, %v2553, 0
        %v2587 = vsel %vm1001, %v2554, 0
        %v2590 = vsel %vm1001, %v2555, 0
        %v2593 = vsel %vm1001, %v2556, 0
        %v2596 = vsel %vm1001, %v2557, 0
        %v2599 = vsel %vm1001, %v2558, 0
        %v2602 = vsel %vm1001, %v2559, 0
        %v2605 = vsel %vm1001, %v2560, 0
        %v2608 = vsel %vm1001, %v2561, 0
        %v2611 = vand.u32 %v2481, %v1053
        %2613 = vmatpush.bf16.msra.mxu0 0
        %2614 = vmatpush.bf16.msra.mxu0 0
        %2615 = vmatpush.bf16.msra.mxu0 0
        %2616 = vmatpush.bf16.msra.mxu0 0
        %2617 = vmatpush.bf16.msra.mxu0 0
        %2618 = vmatpush.bf16.msra.mxu0 0
        %2619 = vmatpush.bf16.msra.mxu0 0
        %2620 = vmatpush.bf16.msra.mxu0 %v2611
        %2621 = vmatmul.bf16.gmra.mxu0 %v2563
        %v2622 = vpop.f32.mrf.mxu0
        %v2623 = vadd.f32 0.0, %v2622
        %v2624 = vpop.f32.mrf.mxu0
        %v2625 = vadd.f32 0.0, %v2624
        %2626 = vmatmul.bf16.gmra.mxu0 %v2566
        %v2627 = vpop.f32.mrf.mxu0
        %v2628 = vadd.f32 0.0, %v2627
        %v2629 = vpop.f32.mrf.mxu0
        %v2630 = vadd.f32 0.0, %v2629
        %2631 = vmatmul.bf16.gmra.mxu0 %v2569
        %v2632 = vpop.f32.mrf.mxu0
        %v2633 = vadd.f32 0.0, %v2632
        %v2634 = vpop.f32.mrf.mxu0
        %v2635 = vadd.f32 0.0, %v2634
        %2636 = vmatmul.bf16.gmra.mxu0 %v2572
        %v2637 = vpop.f32.mrf.mxu0
        %v2638 = vadd.f32 0.0, %v2637
        %v2639 = vpop.f32.mrf.mxu0
        %v2640 = vadd.f32 0.0, %v2639
        %2641 = vmatmul.bf16.gmra.mxu0 %v2575
        %v2642 = vpop.f32.mrf.mxu0
        %v2643 = vadd.f32 0.0, %v2642
        %v2644 = vpop.f32.mrf.mxu0
        %v2645 = vadd.f32 0.0, %v2644
        %2646 = vmatmul.bf16.gmra.mxu0 %v2578
        %v2647 = vpop.f32.mrf.mxu0
        %v2648 = vadd.f32 0.0, %v2647
        %v2649 = vpop.f32.mrf.mxu0
        %v2650 = vadd.f32 0.0, %v2649
        %2651 = vmatmul.bf16.gmra.mxu0 %v2581
        %v2652 = vpop.f32.mrf.mxu0
        %v2653 = vadd.f32 0.0, %v2652
        %v2654 = vpop.f32.mrf.mxu0
        %v2655 = vadd.f32 0.0, %v2654
        %2656 = vmatmul.bf16.gmra.mxu0 %v2584
        %v2657 = vpop.f32.mrf.mxu0
        %v2658 = vadd.f32 0.0, %v2657
        %v2659 = vpop.f32.mrf.mxu0
        %v2660 = vadd.f32 0.0, %v2659
        %2661 = vmatmul.bf16.gmra.mxu0 %v2587
        %v2662 = vpop.f32.mrf.mxu0
        %v2663 = vadd.f32 0.0, %v2662
        %v2664 = vpop.f32.mrf.mxu0
        %v2665 = vadd.f32 0.0, %v2664
        %2666 = vmatmul.bf16.gmra.mxu0 %v2590
        %v2667 = vpop.f32.mrf.mxu0
        %v2668 = vadd.f32 0.0, %v2667
        %v2669 = vpop.f32.mrf.mxu0
        %v2670 = vadd.f32 0.0, %v2669
        %2671 = vmatmul.bf16.gmra.mxu0 %v2593
        %v2672 = vpop.f32.mrf.mxu0
        %v2673 = vadd.f32 0.0, %v2672
        %v2674 = vpop.f32.mrf.mxu0
        %v2675 = vadd.f32 0.0, %v2674
        %2676 = vmatmul.bf16.gmra.mxu0 %v2596
        %v2677 = vpop.f32.mrf.mxu0
        %v2678 = vadd.f32 0.0, %v2677
        %v2679 = vpop.f32.mrf.mxu0
        %v2680 = vadd.f32 0.0, %v2679
        %2681 = vmatmul.bf16.gmra.mxu0 %v2599
        %v2682 = vpop.f32.mrf.mxu0
        %v2683 = vadd.f32 0.0, %v2682
        %v2684 = vpop.f32.mrf.mxu0
        %v2685 = vadd.f32 0.0, %v2684
        %2686 = vmatmul.bf16.gmra.mxu0 %v2602
        %v2687 = vpop.f32.mrf.mxu0
        %v2688 = vadd.f32 0.0, %v2687
        %v2689 = vpop.f32.mrf.mxu0
        %v2690 = vadd.f32 0.0, %v2689
        %2691 = vmatmul.bf16.gmra.mxu0 %v2605
        %v2692 = vpop.f32.mrf.mxu0
        %v2693 = vadd.f32 0.0, %v2692
        %v2694 = vpop.f32.mrf.mxu0
        %v2695 = vadd.f32 0.0, %v2694
        %2696 = vmatmul.bf16.gmra.mxu0 %v2608
        %v2697 = vpop.f32.mrf.mxu0
        %v2698 = vadd.f32 0.0, %v2697
        %v2699 = vpop.f32.mrf.mxu0
        %v2700 = vadd.f32 0.0, %v2699
        %2701 = vdwg.mxu0
        %v2702 = vadd.f32 %v2352, %v2623
        %v2703 = vadd.f32 %v2353, %v2625
        %v2704 = vadd.f32 %v2354, %v2628
        %v2705 = vadd.f32 %v2355, %v2630
        %v2706 = vadd.f32 %v2356, %v2633
        %v2707 = vadd.f32 %v2357, %v2635
        %v2708 = vadd.f32 %v2358, %v2638
        %v2709 = vadd.f32 %v2359, %v2640
        %v2710 = vadd.f32 %v2360, %v2643
        %v2711 = vadd.f32 %v2361, %v2645
        %v2712 = vadd.f32 %v2362, %v2648
        %v2713 = vadd.f32 %v2363, %v2650
        %v2714 = vadd.f32 %v2364, %v2653
        %v2715 = vadd.f32 %v2365, %v2655
        %v2716 = vadd.f32 %v2366, %v2658
        %v2717 = vadd.f32 %v2367, %v2660
        %v2718 = vadd.f32 %v2368, %v2663
        %v2719 = vadd.f32 %v2369, %v2665
        %v2720 = vadd.f32 %v2370, %v2668
        %v2721 = vadd.f32 %v2371, %v2670
        %v2722 = vadd.f32 %v2372, %v2673
        %v2723 = vadd.f32 %v2373, %v2675
        %v2724 = vadd.f32 %v2374, %v2678
        %v2725 = vadd.f32 %v2375, %v2680
        %v2726 = vadd.f32 %v2376, %v2683
        %v2727 = vadd.f32 %v2377, %v2685
        %v2728 = vadd.f32 %v2378, %v2688
        %v2729 = vadd.f32 %v2379, %v2690
        %v2730 = vadd.f32 %v2380, %v2693
        %v2731 = vadd.f32 %v2381, %v2695
        %v2732 = vadd.f32 %v2382, %v2698
        %v2733 = vadd.f32 %v2383, %v2700
        %v2734 = vld [vmem:[%s275 + $0x27] sm:$0xff]
        %v2735 = vld [vmem:[%s275 + $0x2f] sm:$0xff]
        %v2736 = vld [vmem:[%s275 + $0x37] sm:$0xff]
        %v2737 = vld [vmem:[%s275 + $0x3f] sm:$0xff]
        %v2738 = vld [vmem:[%s275 + $0x47] sm:$0xff]
        %v2739 = vld [vmem:[%s275 + $0x4f] sm:$0xff]
        %v2740 = vld [vmem:[%s275 + $0x57] sm:$0xff]
        %v2741 = vld [vmem:[%s275 + $0x5f] sm:$0xff]
        %v2742 = vld [vmem:[%s275 + $0x67] sm:$0xff]
        %v2743 = vld [vmem:[%s275 + $0x6f] sm:$0xff]
        %v2744 = vld [vmem:[%s275 + $0x77] sm:$0xff]
        %v2745 = vld [vmem:[%s275 + $0x7f] sm:$0xff]
        %v2746 = vld [vmem:[%s275 + $0x87] sm:$0xff]
        %v2747 = vld [vmem:[%s275 + $0x8f] sm:$0xff]
        %v2748 = vld [vmem:[%s275 + $0x97] sm:$0xff]
        %v2749 = vld [vmem:[%s275 + $0x9f] sm:$0xff]
        %v2750 = vld [vmem:[%s275 + $0xa7] sm:$0xff]
        %v2751 = vld [vmem:[%s275 + $0xaf] sm:$0xff]
        %v2752 = vld [vmem:[%s275 + $0xb7] sm:$0xff]
        %v2753 = vld [vmem:[%s275 + $0xbf] sm:$0xff]
        %v2754 = vld [vmem:[%s275 + $0xc7] sm:$0xff]
        %v2755 = vld [vmem:[%s275 + $0xcf] sm:$0xff]
        %v2756 = vld [vmem:[%s275 + $0xd7] sm:$0xff]
        %v2757 = vld [vmem:[%s275 + $0xdf] sm:$0xff]
        %v2758 = vld [vmem:[%s275 + $0xe7] sm:$0xff]
        %v2759 = vld [vmem:[%s275 + $0xef] sm:$0xff]
        %v2760 = vld [vmem:[%s275 + $0xf7] sm:$0xff]
        %v2761 = vld [vmem:[%s275 + $0xff] sm:$0xff]
        %v2762 = vld [vmem:[%s275 + $0x107] sm:$0xff]
        %v2763 = vld [vmem:[%s275 + $0x10f] sm:$0xff]
        %v2764 = vld [vmem:[%s275 + $0x117] sm:$0xff]
        %v2765 = vld [vmem:[%s275 + $0x11f] sm:$0xff]
        %v2766 = vpack.c.bf16 %v2734, %v2734
        %v2767 = vpack.c.bf16 %v2735, %v2735
        %v2768 = vpack.c.bf16 %v2736, %v2736
        %v2769 = vpack.c.bf16 %v2737, %v2737
        %v2770 = vpack.c.bf16 %v2738, %v2738
        %v2771 = vpack.c.bf16 %v2739, %v2739
        %v2772 = vpack.c.bf16 %v2740, %v2740
        %v2773 = vpack.c.bf16 %v2741, %v2741
        %v2774 = vpack.c.bf16 %v2742, %v2742
        %v2775 = vpack.c.bf16 %v2743, %v2743
        %v2776 = vpack.c.bf16 %v2744, %v2744
        %v2777 = vpack.c.bf16 %v2745, %v2745
        %v2778 = vpack.c.bf16 %v2746, %v2746
        %v2779 = vpack.c.bf16 %v2747, %v2747
        %v2780 = vpack.c.bf16 %v2748, %v2748
        %v2781 = vpack.c.bf16 %v2749, %v2749
        %v2782 = vpack.c.bf16 %v2750, %v2750
        %v2783 = vpack.c.bf16 %v2751, %v2751
        %v2784 = vpack.c.bf16 %v2752, %v2752
        %v2785 = vpack.c.bf16 %v2753, %v2753
        %v2786 = vpack.c.bf16 %v2754, %v2754
        %v2787 = vpack.c.bf16 %v2755, %v2755
        %v2788 = vpack.c.bf16 %v2756, %v2756
        %v2789 = vpack.c.bf16 %v2757, %v2757
        %v2790 = vpack.c.bf16 %v2758, %v2758
        %v2791 = vpack.c.bf16 %v2759, %v2759
        %v2792 = vpack.c.bf16 %v2760, %v2760
        %v2793 = vpack.c.bf16 %v2761, %v2761
        %v2794 = vpack.c.bf16 %v2762, %v2762
        %v2795 = vpack.c.bf16 %v2763, %v2763
        %v2796 = vpack.c.bf16 %v2764, %v2764
        %v2797 = vpack.c.bf16 %v2765, %v2765
        %v2798 = vsel %vm886, %v2766, 0
        %v2799 = vsel %vm887, %v2767, 0
        %v2800 = vsel %vm888, %v2768, 0
        %v2801 = vsel %vm889, %v2769, 0
        %v2802 = vsel %vm890, %v2770, 0
        %v2803 = vsel %vm891, %v2771, 0
        %v2804 = vsel %vm892, %v2772, 0
        %v2805 = vsel %vm893, %v2773, 0
        %v2806 = vsel %vm894, %v2774, 0
        %v2807 = vsel %vm895, %v2775, 0
        %v2808 = vsel %vm896, %v2776, 0
        %v2809 = vsel %vm897, %v2777, 0
        %v2810 = vsel %vm898, %v2778, 0
        %v2811 = vsel %vm899, %v2779, 0
        %v2812 = vsel %vm900, %v2780, 0
        %v2813 = vsel %vm901, %v2781, 0
        %v2814 = vsel %vm902, %v2782, 0
        %v2815 = vsel %vm903, %v2783, 0
        %v2816 = vsel %vm904, %v2784, 0
        %v2817 = vsel %vm905, %v2785, 0
        %v2818 = vsel %vm906, %v2786, 0
        %v2819 = vsel %vm907, %v2787, 0
        %v2820 = vsel %vm908, %v2788, 0
        %v2821 = vsel %vm909, %v2789, 0
        %v2822 = vsel %vm910, %v2790, 0
        %v2823 = vsel %vm911, %v2791, 0
        %v2824 = vsel %vm912, %v2792, 0
        %v2825 = vsel %vm913, %v2793, 0
        %v2826 = vsel %vm914, %v2794, 0
        %v2827 = vsel %vm915, %v2795, 0
        %v2828 = vsel %vm916, %v2796, 0
        %v2829 = vsel %vm917, %v2797, 0
        %s2830 = scalar_lea.vmem %s1, 12
        %v2831 = vld [vmem:[%s2830] sm:$0x3]
        %v2864 = vunpack.c.l.b16 %v2798
        %v2865 = vunpack.c.l.b16 %v2799
        %v2866 = vunpack.c.l.b16 %v2800
        %v2867 = vunpack.c.l.b16 %v2801
        %v2868 = vunpack.c.l.b16 %v2802
        %v2869 = vunpack.c.l.b16 %v2803
        %v2870 = vunpack.c.l.b16 %v2804
        %v2871 = vunpack.c.l.b16 %v2805
        %v2872 = vunpack.c.l.b16 %v2806
        %v2873 = vunpack.c.l.b16 %v2807
        %v2874 = vunpack.c.l.b16 %v2808
        %v2875 = vunpack.c.l.b16 %v2809
        %v2876 = vunpack.c.l.b16 %v2810
        %v2877 = vunpack.c.l.b16 %v2811
        %v2878 = vunpack.c.l.b16 %v2812
        %v2879 = vunpack.c.l.b16 %v2813
        %v2880 = vunpack.c.l.b16 %v2814
        %v2881 = vunpack.c.l.b16 %v2815
        %v2882 = vunpack.c.l.b16 %v2816
        %v2883 = vunpack.c.l.b16 %v2817
        %v2884 = vunpack.c.l.b16 %v2818
        %v2885 = vunpack.c.l.b16 %v2819
        %v2886 = vunpack.c.l.b16 %v2820
        %v2887 = vunpack.c.l.b16 %v2821
        %v2888 = vunpack.c.l.b16 %v2822
        %v2889 = vunpack.c.l.b16 %v2823
        %v2890 = vunpack.c.l.b16 %v2824
        %v2891 = vunpack.c.l.b16 %v2825
        %v2892 = vunpack.c.l.b16 %v2826
        %v2893 = vunpack.c.l.b16 %v2827
        %v2894 = vunpack.c.l.b16 %v2828
        %v2895 = vunpack.c.l.b16 %v2829
        %v2896 = vpack.c.b16 %v2865, %v2864
        %v2897 = vpack.c.b16 %v2867, %v2866
        %v2898 = vpack.c.b16 %v2869, %v2868
        %v2899 = vpack.c.b16 %v2871, %v2870
        %v2900 = vpack.c.b16 %v2873, %v2872
        %v2901 = vpack.c.b16 %v2875, %v2874
        %v2902 = vpack.c.b16 %v2877, %v2876
        %v2903 = vpack.c.b16 %v2879, %v2878
        %v2904 = vpack.c.b16 %v2881, %v2880
        %v2905 = vpack.c.b16 %v2883, %v2882
        %v2906 = vpack.c.b16 %v2885, %v2884
        %v2907 = vpack.c.b16 %v2887, %v2886
        %v2908 = vpack.c.b16 %v2889, %v2888
        %v2909 = vpack.c.b16 %v2891, %v2890
        %v2910 = vpack.c.b16 %v2893, %v2892
        %v2911 = vpack.c.b16 %v2895, %v2894
        %v2913 = vsel %vm1001, %v2896, 0
        %v2916 = vsel %vm1001, %v2897, 0
        %v2919 = vsel %vm1001, %v2898, 0
        %v2922 = vsel %vm1001, %v2899, 0
        %v2925 = vsel %vm1001, %v2900, 0
        %v2928 = vsel %vm1001, %v2901, 0
        %v2931 = vsel %vm1001, %v2902, 0
        %v2934 = vsel %vm1001, %v2903, 0
        %v2937 = vsel %vm1001, %v2904, 0
        %v2940 = vsel %vm1001, %v2905, 0
        %v2943 = vsel %vm1001, %v2906, 0
        %v2946 = vsel %vm1001, %v2907, 0
        %v2949 = vsel %vm1001, %v2908, 0
        %v2952 = vsel %vm1001, %v2909, 0
        %v2955 = vsel %vm1001, %v2910, 0
        %v2958 = vsel %vm1001, %v2911, 0
        %v2961 = vand.u32 %v2831, %v1053
        %2963 = vmatpush.bf16.msra.mxu0 0
        %2964 = vmatpush.bf16.msra.mxu0 0
        %2965 = vmatpush.bf16.msra.mxu0 0
        %2966 = vmatpush.bf16.msra.mxu0 0
        %2967 = vmatpush.bf16.msra.mxu0 0
        %2968 = vmatpush.bf16.msra.mxu0 0
        %2969 = vmatpush.bf16.msra.mxu0 0
        %2970 = vmatpush.bf16.msra.mxu0 %v2961
        %2971 = vmatmul.bf16.gmra.mxu0 %v2913
        %v2972 = vpop.f32.mrf.mxu0
        %v2973 = vadd.f32 0.0, %v2972
        %v2974 = vpop.f32.mrf.mxu0
        %v2975 = vadd.f32 0.0, %v2974
        %2976 = vmatmul.bf16.gmra.mxu0 %v2916
        %v2977 = vpop.f32.mrf.mxu0
        %v2978 = vadd.f32 0.0, %v2977
        %v2979 = vpop.f32.mrf.mxu0
        %v2980 = vadd.f32 0.0, %v2979
        %2981 = vmatmul.bf16.gmra.mxu0 %v2919
        %v2982 = vpop.f32.mrf.mxu0
        %v2983 = vadd.f32 0.0, %v2982
        %v2984 = vpop.f32.mrf.mxu0
        %v2985 = vadd.f32 0.0, %v2984
        %2986 = vmatmul.bf16.gmra.mxu0 %v2922
        %v2987 = vpop.f32.mrf.mxu0
        %v2988 = vadd.f32 0.0, %v2987
        %v2989 = vpop.f32.mrf.mxu0
        %v2990 = vadd.f32 0.0, %v2989
        %2991 = vmatmul.bf16.gmra.mxu0 %v2925
        %v2992 = vpop.f32.mrf.mxu0
        %v2993 = vadd.f32 0.0, %v2992
        %v2994 = vpop.f32.mrf.mxu0
        %v2995 = vadd.f32 0.0, %v2994
        %2996 = vmatmul.bf16.gmra.mxu0 %v2928
        %v2997 = vpop.f32.mrf.mxu0
        %v2998 = vadd.f32 0.0, %v2997
        %v2999 = vpop.f32.mrf.mxu0
        %v3000 = vadd.f32 0.0, %v2999
        %3001 = vmatmul.bf16.gmra.mxu0 %v2931
        %v3002 = vpop.f32.mrf.mxu0
        %v3003 = vadd.f32 0.0, %v3002
        %v3004 = vpop.f32.mrf.mxu0
        %v3005 = vadd.f32 0.0, %v3004
        %3006 = vmatmul.bf16.gmra.mxu0 %v2934
        %v3007 = vpop.f32.mrf.mxu0
        %v3008 = vadd.f32 0.0, %v3007
        %v3009 = vpop.f32.mrf.mxu0
        %v3010 = vadd.f32 0.0, %v3009
        %3011 = vmatmul.bf16.gmra.mxu0 %v2937
        %v3012 = vpop.f32.mrf.mxu0
        %v3013 = vadd.f32 0.0, %v3012
        %v3014 = vpop.f32.mrf.mxu0
        %v3015 = vadd.f32 0.0, %v3014
        %3016 = vmatmul.bf16.gmra.mxu0 %v2940
        %v3017 = vpop.f32.mrf.mxu0
        %v3018 = vadd.f32 0.0, %v3017
        %v3019 = vpop.f32.mrf.mxu0
        %v3020 = vadd.f32 0.0, %v3019
        %3021 = vmatmul.bf16.gmra.mxu0 %v2943
        %v3022 = vpop.f32.mrf.mxu0
        %v3023 = vadd.f32 0.0, %v3022
        %v3024 = vpop.f32.mrf.mxu0
        %v3025 = vadd.f32 0.0, %v3024
        %3026 = vmatmul.bf16.gmra.mxu0 %v2946
        %v3027 = vpop.f32.mrf.mxu0
        %v3028 = vadd.f32 0.0, %v3027
        %v3029 = vpop.f32.mrf.mxu0
        %v3030 = vadd.f32 0.0, %v3029
        %3031 = vmatmul.bf16.gmra.mxu0 %v2949
        %v3032 = vpop.f32.mrf.mxu0
        %v3033 = vadd.f32 0.0, %v3032
        %v3034 = vpop.f32.mrf.mxu0
        %v3035 = vadd.f32 0.0, %v3034
        %3036 = vmatmul.bf16.gmra.mxu0 %v2952
        %v3037 = vpop.f32.mrf.mxu0
        %v3038 = vadd.f32 0.0, %v3037
        %v3039 = vpop.f32.mrf.mxu0
        %v3040 = vadd.f32 0.0, %v3039
        %3041 = vmatmul.bf16.gmra.mxu0 %v2955
        %v3042 = vpop.f32.mrf.mxu0
        %v3043 = vadd.f32 0.0, %v3042
        %v3044 = vpop.f32.mrf.mxu0
        %v3045 = vadd.f32 0.0, %v3044
        %3046 = vmatmul.bf16.gmra.mxu0 %v2958
        %v3047 = vpop.f32.mrf.mxu0
        %v3048 = vadd.f32 0.0, %v3047
        %v3049 = vpop.f32.mrf.mxu0
        %v3050 = vadd.f32 0.0, %v3049
        %3051 = vdwg.mxu0
        %v3052 = vadd.f32 %v2702, %v2973
        %v3053 = vadd.f32 %v2703, %v2975
        %v3054 = vadd.f32 %v2704, %v2978
        %v3055 = vadd.f32 %v2705, %v2980
        %v3056 = vadd.f32 %v2706, %v2983
        %v3057 = vadd.f32 %v2707, %v2985
        %v3058 = vadd.f32 %v2708, %v2988
        %v3059 = vadd.f32 %v2709, %v2990
        %v3060 = vadd.f32 %v2710, %v2993
        %v3061 = vadd.f32 %v2711, %v2995
        %v3062 = vadd.f32 %v2712, %v2998
        %v3063 = vadd.f32 %v2713, %v3000
        %v3064 = vadd.f32 %v2714, %v3003
        %v3065 = vadd.f32 %v2715, %v3005
        %v3066 = vadd.f32 %v2716, %v3008
        %v3067 = vadd.f32 %v2717, %v3010
        %v3068 = vadd.f32 %v2718, %v3013
        %v3069 = vadd.f32 %v2719, %v3015
        %v3070 = vadd.f32 %v2720, %v3018
        %v3071 = vadd.f32 %v2721, %v3020
        %v3072 = vadd.f32 %v2722, %v3023
        %v3073 = vadd.f32 %v2723, %v3025
        %v3074 = vadd.f32 %v2724, %v3028
        %v3075 = vadd.f32 %v2725, %v3030
        %v3076 = vadd.f32 %v2726, %v3033
        %v3077 = vadd.f32 %v2727, %v3035
        %v3078 = vadd.f32 %v2728, %v3038
        %v3079 = vadd.f32 %v2729, %v3040
        %v3080 = vadd.f32 %v2730, %v3043
        %v3081 = vadd.f32 %v2731, %v3045
        %v3082 = vadd.f32 %v2732, %v3048
        %v3083 = vadd.f32 %v2733, %v3050
        %v3084 = vld [vmem:[%s275 + $0x28] sm:$0xff]
        %v3085 = vld [vmem:[%s275 + $0x30] sm:$0xff]
        %v3086 = vld [vmem:[%s275 + $0x38] sm:$0xff]
        %v3087 = vld [vmem:[%s275 + $0x40] sm:$0xff]
        %v3088 = vld [vmem:[%s275 + $0x48] sm:$0xff]
        %v3089 = vld [vmem:[%s275 + $0x50] sm:$0xff]
        %v3090 = vld [vmem:[%s275 + $0x58] sm:$0xff]
        %v3091 = vld [vmem:[%s275 + $0x60] sm:$0xff]
        %v3092 = vld [vmem:[%s275 + $0x68] sm:$0xff]
        %v3093 = vld [vmem:[%s275 + $0x70] sm:$0xff]
        %v3094 = vld [vmem:[%s275 + $0x78] sm:$0xff]
        %v3095 = vld [vmem:[%s275 + $0x80] sm:$0xff]
        %v3096 = vld [vmem:[%s275 + $0x88] sm:$0xff]
        %v3097 = vld [vmem:[%s275 + $0x90] sm:$0xff]
        %v3098 = vld [vmem:[%s275 + $0x98] sm:$0xff]
        %v3099 = vld [vmem:[%s275 + $0xa0] sm:$0xff]
        %v3100 = vld [vmem:[%s275 + $0xa8] sm:$0xff]
        %v3101 = vld [vmem:[%s275 + $0xb0] sm:$0xff]
        %v3102 = vld [vmem:[%s275 + $0xb8] sm:$0xff]
        %v3103 = vld [vmem:[%s275 + $0xc0] sm:$0xff]
        %v3104 = vld [vmem:[%s275 + $0xc8] sm:$0xff]
        %v3105 = vld [vmem:[%s275 + $0xd0] sm:$0xff]
        %v3106 = vld [vmem:[%s275 + $0xd8] sm:$0xff]
        %v3107 = vld [vmem:[%s275 + $0xe0] sm:$0xff]
        %v3108 = vld [vmem:[%s275 + $0xe8] sm:$0xff]
        %v3109 = vld [vmem:[%s275 + $0xf0] sm:$0xff]
        %v3110 = vld [vmem:[%s275 + $0xf8] sm:$0xff]
        %v3111 = vld [vmem:[%s275 + $0x100] sm:$0xff]
        %v3112 = vld [vmem:[%s275 + $0x108] sm:$0xff]
        %v3113 = vld [vmem:[%s275 + $0x110] sm:$0xff]
        %v3114 = vld [vmem:[%s275 + $0x118] sm:$0xff]
        %v3115 = vld [vmem:[%s275 + $0x120] sm:$0xff]
        %v3116 = vpack.c.bf16 %v3085, %v3084
        %v3117 = vpack.c.bf16 %v3087, %v3086
        %v3118 = vpack.c.bf16 %v3089, %v3088
        %v3119 = vpack.c.bf16 %v3091, %v3090
        %v3120 = vpack.c.bf16 %v3093, %v3092
        %v3121 = vpack.c.bf16 %v3095, %v3094
        %v3122 = vpack.c.bf16 %v3097, %v3096
        %v3123 = vpack.c.bf16 %v3099, %v3098
        %v3124 = vpack.c.bf16 %v3101, %v3100
        %v3125 = vpack.c.bf16 %v3103, %v3102
        %v3126 = vpack.c.bf16 %v3105, %v3104
        %v3127 = vpack.c.bf16 %v3107, %v3106
        %v3128 = vpack.c.bf16 %v3109, %v3108
        %v3129 = vpack.c.bf16 %v3111, %v3110
        %v3130 = vpack.c.bf16 %v3113, %v3112
        %v3131 = vpack.c.bf16 %v3115, %v3114
        %s3132 = scalar_lea.vmem %s1, 14
        %v3133 = vld [vmem:[%s3132] sm:$0x3]
        %v3135 = vsel %vm1001, %v3116, 0
        %v3138 = vsel %vm1001, %v3117, 0
        %v3141 = vsel %vm1001, %v3118, 0
        %v3144 = vsel %vm1001, %v3119, 0
        %v3147 = vsel %vm1001, %v3120, 0
        %v3150 = vsel %vm1001, %v3121, 0
        %v3153 = vsel %vm1001, %v3122, 0
        %v3156 = vsel %vm1001, %v3123, 0
        %v3159 = vsel %vm1001, %v3124, 0
        %v3162 = vsel %vm1001, %v3125, 0
        %v3165 = vsel %vm1001, %v3126, 0
        %v3168 = vsel %vm1001, %v3127, 0
        %v3171 = vsel %vm1001, %v3128, 0
        %v3174 = vsel %vm1001, %v3129, 0
        %v3177 = vsel %vm1001, %v3130, 0
        %v3180 = vsel %vm1001, %v3131, 0
        %v3183 = vand.u32 %v3133, %v1053
        %3185 = vmatpush.bf16.msra.mxu0 0
        %3186 = vmatpush.bf16.msra.mxu0 0
        %3187 = vmatpush.bf16.msra.mxu0 0
        %3188 = vmatpush.bf16.msra.mxu0 0
        %3189 = vmatpush.bf16.msra.mxu0 0
        %3190 = vmatpush.bf16.msra.mxu0 0
        %3191 = vmatpush.bf16.msra.mxu0 0
        %3192 = vmatpush.bf16.msra.mxu0 %v3183
        %3193 = vmatmul.bf16.gmra.mxu0 %v3135
        %v3194 = vpop.f32.mrf.mxu0
        %v3195 = vadd.f32 0.0, %v3194
        %v3196 = vpop.f32.mrf.mxu0
        %v3197 = vadd.f32 0.0, %v3196
        %3198 = vmatmul.bf16.gmra.mxu0 %v3138
        %v3199 = vpop.f32.mrf.mxu0
        %v3200 = vadd.f32 0.0, %v3199
        %v3201 = vpop.f32.mrf.mxu0
        %v3202 = vadd.f32 0.0, %v3201
        %3203 = vmatmul.bf16.gmra.mxu0 %v3141
        %v3204 = vpop.f32.mrf.mxu0
        %v3205 = vadd.f32 0.0, %v3204
        %v3206 = vpop.f32.mrf.mxu0
        %v3207 = vadd.f32 0.0, %v3206
        %3208 = vmatmul.bf16.gmra.mxu0 %v3144
        %v3209 = vpop.f32.mrf.mxu0
        %v3210 = vadd.f32 0.0, %v3209
        %v3211 = vpop.f32.mrf.mxu0
        %v3212 = vadd.f32 0.0, %v3211
        %3213 = vmatmul.bf16.gmra.mxu0 %v3147
        %v3214 = vpop.f32.mrf.mxu0
        %v3215 = vadd.f32 0.0, %v3214
        %v3216 = vpop.f32.mrf.mxu0
        %v3217 = vadd.f32 0.0, %v3216
        %3218 = vmatmul.bf16.gmra.mxu0 %v3150
        %v3219 = vpop.f32.mrf.mxu0
        %v3220 = vadd.f32 0.0, %v3219
        %v3221 = vpop.f32.mrf.mxu0
        %v3222 = vadd.f32 0.0, %v3221
        %3223 = vmatmul.bf16.gmra.mxu0 %v3153
        %v3224 = vpop.f32.mrf.mxu0
        %v3225 = vadd.f32 0.0, %v3224
        %v3226 = vpop.f32.mrf.mxu0
        %v3227 = vadd.f32 0.0, %v3226
        %3228 = vmatmul.bf16.gmra.mxu0 %v3156
        %v3229 = vpop.f32.mrf.mxu0
        %v3230 = vadd.f32 0.0, %v3229
        %v3231 = vpop.f32.mrf.mxu0
        %v3232 = vadd.f32 0.0, %v3231
        %3233 = vmatmul.bf16.gmra.mxu0 %v3159
        %v3234 = vpop.f32.mrf.mxu0
        %v3235 = vadd.f32 0.0, %v3234
        %v3236 = vpop.f32.mrf.mxu0
        %v3237 = vadd.f32 0.0, %v3236
        %3238 = vmatmul.bf16.gmra.mxu0 %v3162
        %v3239 = vpop.f32.mrf.mxu0
        %v3240 = vadd.f32 0.0, %v3239
        %v3241 = vpop.f32.mrf.mxu0
        %v3242 = vadd.f32 0.0, %v3241
        %3243 = vmatmul.bf16.gmra.mxu0 %v3165
        %v3244 = vpop.f32.mrf.mxu0
        %v3245 = vadd.f32 0.0, %v3244
        %v3246 = vpop.f32.mrf.mxu0
        %v3247 = vadd.f32 0.0, %v3246
        %3248 = vmatmul.bf16.gmra.mxu0 %v3168
        %v3249 = vpop.f32.mrf.mxu0
        %v3250 = vadd.f32 0.0, %v3249
        %v3251 = vpop.f32.mrf.mxu0
        %v3252 = vadd.f32 0.0, %v3251
        %3253 = vmatmul.bf16.gmra.mxu0 %v3171
        %v3254 = vpop.f32.mrf.mxu0
        %v3255 = vadd.f32 0.0, %v3254
        %v3256 = vpop.f32.mrf.mxu0
        %v3257 = vadd.f32 0.0, %v3256
        %3258 = vmatmul.bf16.gmra.mxu0 %v3174
        %v3259 = vpop.f32.mrf.mxu0
        %v3260 = vadd.f32 0.0, %v3259
        %v3261 = vpop.f32.mrf.mxu0
        %v3262 = vadd.f32 0.0, %v3261
        %3263 = vmatmul.bf16.gmra.mxu0 %v3177
        %v3264 = vpop.f32.mrf.mxu0
        %v3265 = vadd.f32 0.0, %v3264
        %v3266 = vpop.f32.mrf.mxu0
        %v3267 = vadd.f32 0.0, %v3266
        %3268 = vmatmul.bf16.gmra.mxu0 %v3180
        %v3269 = vpop.f32.mrf.mxu0
        %v3270 = vadd.f32 0.0, %v3269
        %v3271 = vpop.f32.mrf.mxu0
        %v3272 = vadd.f32 0.0, %v3271
        %3273 = vdwg.mxu0
        %v3274 = vadd.f32 %v3052, %v3195
        %v3275 = vadd.f32 %v3053, %v3197
        %v3276 = vadd.f32 %v3054, %v3200
        %v3277 = vadd.f32 %v3055, %v3202
        %v3278 = vadd.f32 %v3056, %v3205
        %v3279 = vadd.f32 %v3057, %v3207
        %v3280 = vadd.f32 %v3058, %v3210
        %v3281 = vadd.f32 %v3059, %v3212
        %v3282 = vadd.f32 %v3060, %v3215
        %v3283 = vadd.f32 %v3061, %v3217
        %v3284 = vadd.f32 %v3062, %v3220
        %v3285 = vadd.f32 %v3063, %v3222
        %v3286 = vadd.f32 %v3064, %v3225
        %v3287 = vadd.f32 %v3065, %v3227
        %v3288 = vadd.f32 %v3066, %v3230
        %v3289 = vadd.f32 %v3067, %v3232
        %v3290 = vadd.f32 %v3068, %v3235
        %v3291 = vadd.f32 %v3069, %v3237
        %v3292 = vadd.f32 %v3070, %v3240
        %v3293 = vadd.f32 %v3071, %v3242
        %v3294 = vadd.f32 %v3072, %v3245
        %v3295 = vadd.f32 %v3073, %v3247
        %v3296 = vadd.f32 %v3074, %v3250
        %v3297 = vadd.f32 %v3075, %v3252
        %v3298 = vadd.f32 %v3076, %v3255
        %v3299 = vadd.f32 %v3077, %v3257
        %v3300 = vadd.f32 %v3078, %v3260
        %v3301 = vadd.f32 %v3079, %v3262
        %v3302 = vadd.f32 %v3080, %v3265
        %v3303 = vadd.f32 %v3081, %v3267
        %v3304 = vadd.f32 %v3082, %v3270
        %v3305 = vadd.f32 %v3083, %v3272
        %v3306 = vld [vmem:[%s275 + $0x29] sm:$0xff]
        %v3307 = vld [vmem:[%s275 + $0x31] sm:$0xff]
        %v3308 = vld [vmem:[%s275 + $0x39] sm:$0xff]
        %v3309 = vld [vmem:[%s275 + $0x41] sm:$0xff]
        %v3310 = vld [vmem:[%s275 + $0x49] sm:$0xff]
        %v3311 = vld [vmem:[%s275 + $0x51] sm:$0xff]
        %v3312 = vld [vmem:[%s275 + $0x59] sm:$0xff]
        %v3313 = vld [vmem:[%s275 + $0x61] sm:$0xff]
        %v3314 = vld [vmem:[%s275 + $0x69] sm:$0xff]
        %v3315 = vld [vmem:[%s275 + $0x71] sm:$0xff]
        %v3316 = vld [vmem:[%s275 + $0x79] sm:$0xff]
        %v3317 = vld [vmem:[%s275 + $0x81] sm:$0xff]
        %v3318 = vld [vmem:[%s275 + $0x89] sm:$0xff]
        %v3319 = vld [vmem:[%s275 + $0x91] sm:$0xff]
        %v3320 = vld [vmem:[%s275 + $0x99] sm:$0xff]
        %v3321 = vld [vmem:[%s275 + $0xa1] sm:$0xff]
        %v3322 = vld [vmem:[%s275 + $0xa9] sm:$0xff]
        %v3323 = vld [vmem:[%s275 + $0xb1] sm:$0xff]
        %v3324 = vld [vmem:[%s275 + $0xb9] sm:$0xff]
        %v3325 = vld [vmem:[%s275 + $0xc1] sm:$0xff]
        %v3326 = vld [vmem:[%s275 + $0xc9] sm:$0xff]
        %v3327 = vld [vmem:[%s275 + $0xd1] sm:$0xff]
        %v3328 = vld [vmem:[%s275 + $0xd9] sm:$0xff]
        %v3329 = vld [vmem:[%s275 + $0xe1] sm:$0xff]
        %v3330 = vld [vmem:[%s275 + $0xe9] sm:$0xff]
        %v3331 = vld [vmem:[%s275 + $0xf1] sm:$0xff]
        %v3332 = vld [vmem:[%s275 + $0xf9] sm:$0xff]
        %v3333 = vld [vmem:[%s275 + $0x101] sm:$0xff]
        %v3334 = vld [vmem:[%s275 + $0x109] sm:$0xff]
        %v3335 = vld [vmem:[%s275 + $0x111] sm:$0xff]
        %v3336 = vld [vmem:[%s275 + $0x119] sm:$0xff]
        %v3337 = vld [vmem:[%s275 + $0x121] sm:$0xff]
        %v3338 = vpack.c.bf16 %v3306, %v3306
        %v3339 = vpack.c.bf16 %v3307, %v3307
        %v3340 = vpack.c.bf16 %v3308, %v3308
        %v3341 = vpack.c.bf16 %v3309, %v3309
        %v3342 = vpack.c.bf16 %v3310, %v3310
        %v3343 = vpack.c.bf16 %v3311, %v3311
        %v3344 = vpack.c.bf16 %v3312, %v3312
        %v3345 = vpack.c.bf16 %v3313, %v3313
        %v3346 = vpack.c.bf16 %v3314, %v3314
        %v3347 = vpack.c.bf16 %v3315, %v3315
        %v3348 = vpack.c.bf16 %v3316, %v3316
        %v3349 = vpack.c.bf16 %v3317, %v3317
        %v3350 = vpack.c.bf16 %v3318, %v3318
        %v3351 = vpack.c.bf16 %v3319, %v3319
        %v3352 = vpack.c.bf16 %v3320, %v3320
        %v3353 = vpack.c.bf16 %v3321, %v3321
        %v3354 = vpack.c.bf16 %v3322, %v3322
        %v3355 = vpack.c.bf16 %v3323, %v3323
        %v3356 = vpack.c.bf16 %v3324, %v3324
        %v3357 = vpack.c.bf16 %v3325, %v3325
        %v3358 = vpack.c.bf16 %v3326, %v3326
        %v3359 = vpack.c.bf16 %v3327, %v3327
        %v3360 = vpack.c.bf16 %v3328, %v3328
        %v3361 = vpack.c.bf16 %v3329, %v3329
        %v3362 = vpack.c.bf16 %v3330, %v3330
        %v3363 = vpack.c.bf16 %v3331, %v3331
        %v3364 = vpack.c.bf16 %v3332, %v3332
        %v3365 = vpack.c.bf16 %v3333, %v3333
        %v3366 = vpack.c.bf16 %v3334, %v3334
        %v3367 = vpack.c.bf16 %v3335, %v3335
        %v3368 = vpack.c.bf16 %v3336, %v3336
        %v3369 = vpack.c.bf16 %v3337, %v3337
        %v3370 = vsel %vm1494, %v3338, 0
        %v3371 = vsel %vm1495, %v3339, 0
        %v3372 = vsel %vm1496, %v3340, 0
        %v3373 = vsel %vm1497, %v3341, 0
        %v3374 = vsel %vm1498, %v3342, 0
        %v3375 = vsel %vm1499, %v3343, 0
        %v3376 = vsel %vm1500, %v3344, 0
        %v3377 = vsel %vm1501, %v3345, 0
        %v3378 = vsel %vm1502, %v3346, 0
        %v3379 = vsel %vm1503, %v3347, 0
        %v3380 = vsel %vm1504, %v3348, 0
        %v3381 = vsel %vm1505, %v3349, 0
        %v3382 = vsel %vm1506, %v3350, 0
        %v3383 = vsel %vm1507, %v3351, 0
        %v3384 = vsel %vm1508, %v3352, 0
        %v3385 = vsel %vm1509, %v3353, 0
        %v3386 = vsel %vm1510, %v3354, 0
        %v3387 = vsel %vm1511, %v3355, 0
        %v3388 = vsel %vm1512, %v3356, 0
        %v3389 = vsel %vm1513, %v3357, 0
        %v3390 = vsel %vm1514, %v3358, 0
        %v3391 = vsel %vm1515, %v3359, 0
        %v3392 = vsel %vm1516, %v3360, 0
        %v3393 = vsel %vm1517, %v3361, 0
        %v3394 = vsel %vm1518, %v3362, 0
        %v3395 = vsel %vm1519, %v3363, 0
        %v3396 = vsel %vm1520, %v3364, 0
        %v3397 = vsel %vm1521, %v3365, 0
        %v3398 = vsel %vm1522, %v3366, 0
        %v3399 = vsel %vm1523, %v3367, 0
        %v3400 = vsel %vm1524, %v3368, 0
        %v3401 = vsel %vm1525, %v3369, 0
        %s3402 = scalar_lea.vmem %s1, 16
        %v3403 = vld [vmem:[%s3402] sm:$0x3]
        %v3436 = vunpack.c.l.b16 %v3370
        %v3437 = vunpack.c.l.b16 %v3371
        %v3438 = vunpack.c.l.b16 %v3372
        %v3439 = vunpack.c.l.b16 %v3373
        %v3440 = vunpack.c.l.b16 %v3374
        %v3441 = vunpack.c.l.b16 %v3375
        %v3442 = vunpack.c.l.b16 %v3376
        %v3443 = vunpack.c.l.b16 %v3377
        %v3444 = vunpack.c.l.b16 %v3378
        %v3445 = vunpack.c.l.b16 %v3379
        %v3446 = vunpack.c.l.b16 %v3380
        %v3447 = vunpack.c.l.b16 %v3381
        %v3448 = vunpack.c.l.b16 %v3382
        %v3449 = vunpack.c.l.b16 %v3383
        %v3450 = vunpack.c.l.b16 %v3384
        %v3451 = vunpack.c.l.b16 %v3385
        %v3452 = vunpack.c.l.b16 %v3386
        %v3453 = vunpack.c.l.b16 %v3387
        %v3454 = vunpack.c.l.b16 %v3388
        %v3455 = vunpack.c.l.b16 %v3389
        %v3456 = vunpack.c.l.b16 %v3390
        %v3457 = vunpack.c.l.b16 %v3391
        %v3458 = vunpack.c.l.b16 %v3392
        %v3459 = vunpack.c.l.b16 %v3393
        %v3460 = vunpack.c.l.b16 %v3394
        %v3461 = vunpack.c.l.b16 %v3395
        %v3462 = vunpack.c.l.b16 %v3396
        %v3463 = vunpack.c.l.b16 %v3397
        %v3464 = vunpack.c.l.b16 %v3398
        %v3465 = vunpack.c.l.b16 %v3399
        %v3466 = vunpack.c.l.b16 %v3400
        %v3467 = vunpack.c.l.b16 %v3401
        %v3468 = vpack.c.b16 %v3437, %v3436
        %v3469 = vpack.c.b16 %v3439, %v3438
        %v3470 = vpack.c.b16 %v3441, %v3440
        %v3471 = vpack.c.b16 %v3443, %v3442
        %v3472 = vpack.c.b16 %v3445, %v3444
        %v3473 = vpack.c.b16 %v3447, %v3446
        %v3474 = vpack.c.b16 %v3449, %v3448
        %v3475 = vpack.c.b16 %v3451, %v3450
        %v3476 = vpack.c.b16 %v3453, %v3452
        %v3477 = vpack.c.b16 %v3455, %v3454
        %v3478 = vpack.c.b16 %v3457, %v3456
        %v3479 = vpack.c.b16 %v3459, %v3458
        %v3480 = vpack.c.b16 %v3461, %v3460
        %v3481 = vpack.c.b16 %v3463, %v3462
        %v3482 = vpack.c.b16 %v3465, %v3464
        %v3483 = vpack.c.b16 %v3467, %v3466
        %v3485 = vsel %vm1001, %v3468, 0
        %v3488 = vsel %vm1001, %v3469, 0
        %v3491 = vsel %vm1001, %v3470, 0
        %v3494 = vsel %vm1001, %v3471, 0
        %v3497 = vsel %vm1001, %v3472, 0
        %v3500 = vsel %vm1001, %v3473, 0
        %v3503 = vsel %vm1001, %v3474, 0
        %v3506 = vsel %vm1001, %v3475, 0
        %v3509 = vsel %vm1001, %v3476, 0
        %v3512 = vsel %vm1001, %v3477, 0
        %v3515 = vsel %vm1001, %v3478, 0
        %v3518 = vsel %vm1001, %v3479, 0
        %v3521 = vsel %vm1001, %v3480, 0
        %v3524 = vsel %vm1001, %v3481, 0
        %v3527 = vsel %vm1001, %v3482, 0
        %v3530 = vsel %vm1001, %v3483, 0
        %v3533 = vand.u32 %v3403, %v1053
        %3535 = vmatpush.bf16.msra.mxu0 0
        %3536 = vmatpush.bf16.msra.mxu0 0
        %3537 = vmatpush.bf16.msra.mxu0 0
        %3538 = vmatpush.bf16.msra.mxu0 0
        %3539 = vmatpush.bf16.msra.mxu0 0
        %3540 = vmatpush.bf16.msra.mxu0 0
        %3541 = vmatpush.bf16.msra.mxu0 0
        %3542 = vmatpush.bf16.msra.mxu0 %v3533
        %3543 = vmatmul.bf16.gmra.mxu0 %v3485
        %v3544 = vpop.f32.mrf.mxu0
        %v3545 = vadd.f32 0.0, %v3544
        %v3546 = vpop.f32.mrf.mxu0
        %v3547 = vadd.f32 0.0, %v3546
        %3548 = vmatmul.bf16.gmra.mxu0 %v3488
        %v3549 = vpop.f32.mrf.mxu0
        %v3550 = vadd.f32 0.0, %v3549
        %v3551 = vpop.f32.mrf.mxu0
        %v3552 = vadd.f32 0.0, %v3551
        %3553 = vmatmul.bf16.gmra.mxu0 %v3491
        %v3554 = vpop.f32.mrf.mxu0
        %v3555 = vadd.f32 0.0, %v3554
        %v3556 = vpop.f32.mrf.mxu0
        %v3557 = vadd.f32 0.0, %v3556
        %3558 = vmatmul.bf16.gmra.mxu0 %v3494
        %v3559 = vpop.f32.mrf.mxu0
        %v3560 = vadd.f32 0.0, %v3559
        %v3561 = vpop.f32.mrf.mxu0
        %v3562 = vadd.f32 0.0, %v3561
        %3563 = vmatmul.bf16.gmra.mxu0 %v3497
        %v3564 = vpop.f32.mrf.mxu0
        %v3565 = vadd.f32 0.0, %v3564
        %v3566 = vpop.f32.mrf.mxu0
        %v3567 = vadd.f32 0.0, %v3566
        %3568 = vmatmul.bf16.gmra.mxu0 %v3500
        %v3569 = vpop.f32.mrf.mxu0
        %v3570 = vadd.f32 0.0, %v3569
        %v3571 = vpop.f32.mrf.mxu0
        %v3572 = vadd.f32 0.0, %v3571
        %3573 = vmatmul.bf16.gmra.mxu0 %v3503
        %v3574 = vpop.f32.mrf.mxu0
        %v3575 = vadd.f32 0.0, %v3574
        %v3576 = vpop.f32.mrf.mxu0
        %v3577 = vadd.f32 0.0, %v3576
        %3578 = vmatmul.bf16.gmra.mxu0 %v3506
        %v3579 = vpop.f32.mrf.mxu0
        %v3580 = vadd.f32 0.0, %v3579
        %v3581 = vpop.f32.mrf.mxu0
        %v3582 = vadd.f32 0.0, %v3581
        %3583 = vmatmul.bf16.gmra.mxu0 %v3509
        %v3584 = vpop.f32.mrf.mxu0
        %v3585 = vadd.f32 0.0, %v3584
        %v3586 = vpop.f32.mrf.mxu0
        %v3587 = vadd.f32 0.0, %v3586
        %3588 = vmatmul.bf16.gmra.mxu0 %v3512
        %v3589 = vpop.f32.mrf.mxu0
        %v3590 = vadd.f32 0.0, %v3589
        %v3591 = vpop.f32.mrf.mxu0
        %v3592 = vadd.f32 0.0, %v3591
        %3593 = vmatmul.bf16.gmra.mxu0 %v3515
        %v3594 = vpop.f32.mrf.mxu0
        %v3595 = vadd.f32 0.0, %v3594
        %v3596 = vpop.f32.mrf.mxu0
        %v3597 = vadd.f32 0.0, %v3596
        %3598 = vmatmul.bf16.gmra.mxu0 %v3518
        %v3599 = vpop.f32.mrf.mxu0
        %v3600 = vadd.f32 0.0, %v3599
        %v3601 = vpop.f32.mrf.mxu0
        %v3602 = vadd.f32 0.0, %v3601
        %3603 = vmatmul.bf16.gmra.mxu0 %v3521
        %v3604 = vpop.f32.mrf.mxu0
        %v3605 = vadd.f32 0.0, %v3604
        %v3606 = vpop.f32.mrf.mxu0
        %v3607 = vadd.f32 0.0, %v3606
        %3608 = vmatmul.bf16.gmra.mxu0 %v3524
        %v3609 = vpop.f32.mrf.mxu0
        %v3610 = vadd.f32 0.0, %v3609
        %v3611 = vpop.f32.mrf.mxu0
        %v3612 = vadd.f32 0.0, %v3611
        %3613 = vmatmul.bf16.gmra.mxu0 %v3527
        %v3614 = vpop.f32.mrf.mxu0
        %v3615 = vadd.f32 0.0, %v3614
        %v3616 = vpop.f32.mrf.mxu0
        %v3617 = vadd.f32 0.0, %v3616
        %3618 = vmatmul.bf16.gmra.mxu0 %v3530
        %v3619 = vpop.f32.mrf.mxu0
        %v3620 = vadd.f32 0.0, %v3619
        %v3621 = vpop.f32.mrf.mxu0
        %v3622 = vadd.f32 0.0, %v3621
        %3623 = vdwg.mxu0
        %v3624 = vadd.f32 %v3274, %v3545
        %v3625 = vadd.f32 %v3275, %v3547
        %v3626 = vadd.f32 %v3276, %v3550
        %v3627 = vadd.f32 %v3277, %v3552
        %v3628 = vadd.f32 %v3278, %v3555
        %v3629 = vadd.f32 %v3279, %v3557
        %v3630 = vadd.f32 %v3280, %v3560
        %v3631 = vadd.f32 %v3281, %v3562
        %v3632 = vadd.f32 %v3282, %v3565
        %v3633 = vadd.f32 %v3283, %v3567
        %v3634 = vadd.f32 %v3284, %v3570
        %v3635 = vadd.f32 %v3285, %v3572
        %v3636 = vadd.f32 %v3286, %v3575
        %v3637 = vadd.f32 %v3287, %v3577
        %v3638 = vadd.f32 %v3288, %v3580
        %v3639 = vadd.f32 %v3289, %v3582
        %v3640 = vadd.f32 %v3290, %v3585
        %v3641 = vadd.f32 %v3291, %v3587
        %v3642 = vadd.f32 %v3292, %v3590
        %v3643 = vadd.f32 %v3293, %v3592
        %v3644 = vadd.f32 %v3294, %v3595
        %v3645 = vadd.f32 %v3295, %v3597
        %v3646 = vadd.f32 %v3296, %v3600
        %v3647 = vadd.f32 %v3297, %v3602
        %v3648 = vadd.f32 %v3298, %v3605
        %v3649 = vadd.f32 %v3299, %v3607
        %v3650 = vadd.f32 %v3300, %v3610
        %v3651 = vadd.f32 %v3301, %v3612
        %v3652 = vadd.f32 %v3302, %v3615
        %v3653 = vadd.f32 %v3303, %v3617
        %v3654 = vadd.f32 %v3304, %v3620
        %v3655 = vadd.f32 %v3305, %v3622
        %v3656 = vld [vmem:[%s2] sm:$0x1]
        %v3658 = vperm.slane %v3656, 0
        %v3660 = vadd.f32 %v3624, %v3658
        %v3661 = vadd.f32 %v3625, %v3658
        %v3662 = vadd.f32 %v3626, %v3658
        %v3663 = vadd.f32 %v3627, %v3658
        %v3664 = vadd.f32 %v3628, %v3658
        %v3665 = vadd.f32 %v3629, %v3658
        %v3666 = vadd.f32 %v3630, %v3658
        %v3667 = vadd.f32 %v3631, %v3658
        %v3668 = vadd.f32 %v3632, %v3658
        %v3669 = vadd.f32 %v3633, %v3658
        %v3670 = vadd.f32 %v3634, %v3658
        %v3671 = vadd.f32 %v3635, %v3658
        %v3672 = vadd.f32 %v3636, %v3658
        %v3673 = vadd.f32 %v3637, %v3658
        %v3674 = vadd.f32 %v3638, %v3658
        %v3675 = vadd.f32 %v3639, %v3658
        %v3676 = vadd.f32 %v3640, %v3658
        %v3677 = vadd.f32 %v3641, %v3658
        %v3678 = vadd.f32 %v3642, %v3658
        %v3679 = vadd.f32 %v3643, %v3658
        %v3680 = vadd.f32 %v3644, %v3658
        %v3681 = vadd.f32 %v3645, %v3658
        %v3682 = vadd.f32 %v3646, %v3658
        %v3683 = vadd.f32 %v3647, %v3658
        %v3684 = vadd.f32 %v3648, %v3658
        %v3685 = vadd.f32 %v3649, %v3658
        %v3686 = vadd.f32 %v3650, %v3658
        %v3687 = vadd.f32 %v3651, %v3658
        %v3688 = vadd.f32 %v3652, %v3658
        %v3689 = vadd.f32 %v3653, %v3658
        %v3690 = vadd.f32 %v3654, %v3658
        %v3691 = vadd.f32 %v3655, %v3658
        %v3692 = vmax.f32 %v3660, 0.0
        %v3693 = vmax.f32 %v3661, 0.0
        %v3694 = vmax.f32 %v3662, 0.0
        %v3695 = vmax.f32 %v3663, 0.0
        %v3696 = vmax.f32 %v3664, 0.0
        %v3697 = vmax.f32 %v3665, 0.0
        %v3698 = vmax.f32 %v3666, 0.0
        %v3699 = vmax.f32 %v3667, 0.0
        %v3700 = vmax.f32 %v3668, 0.0
        %v3701 = vmax.f32 %v3669, 0.0
        %v3702 = vmax.f32 %v3670, 0.0
        %v3703 = vmax.f32 %v3671, 0.0
        %v3704 = vmax.f32 %v3672, 0.0
        %v3705 = vmax.f32 %v3673, 0.0
        %v3706 = vmax.f32 %v3674, 0.0
        %v3707 = vmax.f32 %v3675, 0.0
        %v3708 = vmax.f32 %v3676, 0.0
        %v3709 = vmax.f32 %v3677, 0.0
        %v3710 = vmax.f32 %v3678, 0.0
        %v3711 = vmax.f32 %v3679, 0.0
        %v3712 = vmax.f32 %v3680, 0.0
        %v3713 = vmax.f32 %v3681, 0.0
        %v3714 = vmax.f32 %v3682, 0.0
        %v3715 = vmax.f32 %v3683, 0.0
        %v3716 = vmax.f32 %v3684, 0.0
        %v3717 = vmax.f32 %v3685, 0.0
        %v3718 = vmax.f32 %v3686, 0.0
        %v3719 = vmax.f32 %v3687, 0.0
        %v3720 = vmax.f32 %v3688, 0.0
        %v3721 = vmax.f32 %v3689, 0.0
        %v3722 = vmax.f32 %v3690, 0.0
        %v3723 = vmax.f32 %v3691, 0.0
        %vm3724 = vcmask 523264
        %3725 = vst.msk [vmem:[#allocation2] sm:$0xff] %vm3724, 0.0
        %3726 = vst.msk [vmem:[#allocation2 + $0x8] sm:$0xff] %vm3724, 0.0
        %3727 = vst.msk [vmem:[#allocation2 + $0x10] sm:$0xff] %vm3724, 0.0
        %3728 = vst.msk [vmem:[#allocation2 + $0x118] sm:$0xff] %vm3724, 0.0
        %3729 = vst.msk [vmem:[#allocation2 + $0x120] sm:$0xff] %vm3724, 0.0
        %3730 = vst.msk [vmem:[#allocation2 + $0x128] sm:$0xff] %vm3724, 0.0
        %3731 = vst.msk [vmem:[#allocation2 + $0x18] sm:$0xff] %vm3724, %v3692
        %3732 = vst.msk [vmem:[#allocation2 + $0x20] sm:$0xff] %vm3724, %v3693
        %3733 = vst.msk [vmem:[#allocation2 + $0x28] sm:$0xff] %vm3724, %v3694
        %3734 = vst.msk [vmem:[#allocation2 + $0x30] sm:$0xff] %vm3724, %v3695
        %3735 = vst.msk [vmem:[#allocation2 + $0x38] sm:$0xff] %vm3724, %v3696
        %3736 = vst.msk [vmem:[#allocation2 + $0x40] sm:$0xff] %vm3724, %v3697
        %3737 = vst.msk [vmem:[#allocation2 + $0x48] sm:$0xff] %vm3724, %v3698
        %3738 = vst.msk [vmem:[#allocation2 + $0x50] sm:$0xff] %vm3724, %v3699
        %3739 = vst.msk [vmem:[#allocation2 + $0x58] sm:$0xff] %vm3724, %v3700
        %3740 = vst.msk [vmem:[#allocation2 + $0x60] sm:$0xff] %vm3724, %v3701
        %3741 = vst.msk [vmem:[#allocation2 + $0x68] sm:$0xff] %vm3724, %v3702
        %3742 = vst.msk [vmem:[#allocation2 + $0x70] sm:$0xff] %vm3724, %v3703
        %3743 = vst.msk [vmem:[#allocation2 + $0x78] sm:$0xff] %vm3724, %v3704
        %3744 = vst.msk [vmem:[#allocation2 + $0x80] sm:$0xff] %vm3724, %v3705
        %3745 = vst.msk [vmem:[#allocation2 + $0x88] sm:$0xff] %vm3724, %v3706
        %3746 = vst.msk [vmem:[#allocation2 + $0x90] sm:$0xff] %vm3724, %v3707
        %3747 = vst.msk [vmem:[#allocation2 + $0x98] sm:$0xff] %vm3724, %v3708
        %3748 = vst.msk [vmem:[#allocation2 + $0xa0] sm:$0xff] %vm3724, %v3709
        %3749 = vst.msk [vmem:[#allocation2 + $0xa8] sm:$0xff] %vm3724, %v3710
        %3750 = vst.msk [vmem:[#allocation2 + $0xb0] sm:$0xff] %vm3724, %v3711
        %3751 = vst.msk [vmem:[#allocation2 + $0xb8] sm:$0xff] %vm3724, %v3712
        %3752 = vst.msk [vmem:[#allocation2 + $0xc0] sm:$0xff] %vm3724, %v3713
        %3753 = vst.msk [vmem:[#allocation2 + $0xc8] sm:$0xff] %vm3724, %v3714
        %3754 = vst.msk [vmem:[#allocation2 + $0xd0] sm:$0xff] %vm3724, %v3715
        %3755 = vst.msk [vmem:[#allocation2 + $0xd8] sm:$0xff] %vm3724, %v3716
        %3756 = vst.msk [vmem:[#allocation2 + $0xe0] sm:$0xff] %vm3724, %v3717
        %3757 = vst.msk [vmem:[#allocation2 + $0xe8] sm:$0xff] %vm3724, %v3718
        %3758 = vst.msk [vmem:[#allocation2 + $0xf0] sm:$0xff] %vm3724, %v3719
        %3759 = vst.msk [vmem:[#allocation2 + $0xf8] sm:$0xff] %vm3724, %v3720
        %3760 = vst.msk [vmem:[#allocation2 + $0x100] sm:$0xff] %vm3724, %v3721
        %3761 = vst.msk [vmem:[#allocation2 + $0x108] sm:$0xff] %vm3724, %v3722
        %3762 = vst.msk [vmem:[#allocation2 + $0x110] sm:$0xff] %vm3724, %v3723
        %v3763 = vld [vmem:[#allocation2 + $0x7] sm:$0xff]
        %v3764 = vld [vmem:[#allocation2 + $0xf] sm:$0xff]
        %v3765 = vld [vmem:[#allocation2 + $0x17] sm:$0xff]
        %v3766 = vld [vmem:[#allocation2 + $0x1f] sm:$0xff]
        %v3767 = vld [vmem:[#allocation2 + $0x27] sm:$0xff]
        %v3768 = vld [vmem:[#allocation2 + $0x2f] sm:$0xff]
        %v3769 = vld [vmem:[#allocation2 + $0x37] sm:$0xff]
        %v3770 = vld [vmem:[#allocation2 + $0x3f] sm:$0xff]
        %v3771 = vld [vmem:[#allocation2 + $0x47] sm:$0xff]
        %v3772 = vld [vmem:[#allocation2 + $0x4f] sm:$0xff]
        %v3773 = vld [vmem:[#allocation2 + $0x57] sm:$0xff]
        %v3774 = vld [vmem:[#allocation2 + $0x5f] sm:$0xff]
        %v3775 = vld [vmem:[#allocation2 + $0x67] sm:$0xff]
        %v3776 = vld [vmem:[#allocation2 + $0x6f] sm:$0xff]
        %v3777 = vld [vmem:[#allocation2 + $0x77] sm:$0xff]
        %v3778 = vld [vmem:[#allocation2 + $0x7f] sm:$0xff]
        %v3779 = vld [vmem:[#allocation2 + $0x87] sm:$0xff]
        %v3780 = vld [vmem:[#allocation2 + $0x8f] sm:$0xff]
        %v3781 = vld [vmem:[#allocation2 + $0x97] sm:$0xff]
        %v3782 = vld [vmem:[#allocation2 + $0x9f] sm:$0xff]
        %v3783 = vld [vmem:[#allocation2 + $0xa7] sm:$0xff]
        %v3784 = vld [vmem:[#allocation2 + $0xaf] sm:$0xff]
        %v3785 = vld [vmem:[#allocation2 + $0xb7] sm:$0xff]
        %v3786 = vld [vmem:[#allocation2 + $0xbf] sm:$0xff]
        %v3787 = vld [vmem:[#allocation2 + $0xc7] sm:$0xff]
        %v3788 = vld [vmem:[#allocation2 + $0xcf] sm:$0xff]
        %v3789 = vld [vmem:[#allocation2 + $0xd7] sm:$0xff]
        %v3790 = vld [vmem:[#allocation2 + $0xdf] sm:$0xff]
        %v3791 = vld [vmem:[#allocation2 + $0xe7] sm:$0xff]
        %v3792 = vld [vmem:[#allocation2 + $0xef] sm:$0xff]
        %v3793 = vld [vmem:[#allocation2 + $0xf7] sm:$0xff]
        %v3794 = vld [vmem:[#allocation2 + $0xff] sm:$0xff]
        %v3795 = vpack.c.bf16 %v3763, %v3763
        %v3796 = vpack.c.bf16 %v3764, %v3764
        %v3797 = vpack.c.bf16 %v3765, %v3765
        %v3798 = vpack.c.bf16 %v3766, %v3766
        %v3799 = vpack.c.bf16 %v3767, %v3767
        %v3800 = vpack.c.bf16 %v3768, %v3768
        %v3801 = vpack.c.bf16 %v3769, %v3769
        %v3802 = vpack.c.bf16 %v3770, %v3770
        %v3803 = vpack.c.bf16 %v3771, %v3771
        %v3804 = vpack.c.bf16 %v3772, %v3772
        %v3805 = vpack.c.bf16 %v3773, %v3773
        %v3806 = vpack.c.bf16 %v3774, %v3774
        %v3807 = vpack.c.bf16 %v3775, %v3775
        %v3808 = vpack.c.bf16 %v3776, %v3776
        %v3809 = vpack.c.bf16 %v3777, %v3777
        %v3810 = vpack.c.bf16 %v3778, %v3778
        %v3811 = vpack.c.bf16 %v3779, %v3779
        %v3812 = vpack.c.bf16 %v3780, %v3780
        %v3813 = vpack.c.bf16 %v3781, %v3781
        %v3814 = vpack.c.bf16 %v3782, %v3782
        %v3815 = vpack.c.bf16 %v3783, %v3783
        %v3816 = vpack.c.bf16 %v3784, %v3784
        %v3817 = vpack.c.bf16 %v3785, %v3785
        %v3818 = vpack.c.bf16 %v3786, %v3786
        %v3819 = vpack.c.bf16 %v3787, %v3787
        %v3820 = vpack.c.bf16 %v3788, %v3788
        %v3821 = vpack.c.bf16 %v3789, %v3789
        %v3822 = vpack.c.bf16 %v3790, %v3790
        %v3823 = vpack.c.bf16 %v3791, %v3791
        %v3824 = vpack.c.bf16 %v3792, %v3792
        %v3825 = vpack.c.bf16 %v3793, %v3793
        %v3826 = vpack.c.bf16 %v3794, %v3794
        %v3827 = vsel %vm886, %v3795, 0
        %v3828 = vsel %vm887, %v3796, 0
        %v3829 = vsel %vm888, %v3797, 0
        %v3830 = vsel %vm889, %v3798, 0
        %v3831 = vsel %vm890, %v3799, 0
        %v3832 = vsel %vm891, %v3800, 0
        %v3833 = vsel %vm892, %v3801, 0
        %v3834 = vsel %vm893, %v3802, 0
        %v3835 = vsel %vm894, %v3803, 0
        %v3836 = vsel %vm895, %v3804, 0
        %v3837 = vsel %vm896, %v3805, 0
        %v3838 = vsel %vm897, %v3806, 0
        %v3839 = vsel %vm898, %v3807, 0
        %v3840 = vsel %vm899, %v3808, 0
        %v3841 = vsel %vm900, %v3809, 0
        %v3842 = vsel %vm901, %v3810, 0
        %v3843 = vsel %vm902, %v3811, 0
        %v3844 = vsel %vm903, %v3812, 0
        %v3845 = vsel %vm904, %v3813, 0
        %v3846 = vsel %vm905, %v3814, 0
        %v3847 = vsel %vm906, %v3815, 0
        %v3848 = vsel %vm907, %v3816, 0
        %v3849 = vsel %vm908, %v3817, 0
        %v3850 = vsel %vm909, %v3818, 0
        %v3851 = vsel %vm910, %v3819, 0
        %v3852 = vsel %vm911, %v3820, 0
        %v3853 = vsel %vm912, %v3821, 0
        %v3854 = vsel %vm913, %v3822, 0
        %v3855 = vsel %vm914, %v3823, 0
        %v3856 = vsel %vm915, %v3824, 0
        %v3857 = vsel %vm916, %v3825, 0
        %v3858 = vsel %vm917, %v3826, 0
        %v3859 = vld [vmem:[%s3] sm:$0xf]
        %v3860 = vld [vmem:[%s3 + $0x4] sm:$0xf]
        %v3861 = vld [vmem:[%s3 + $0x8] sm:$0xf]
        %v3862 = vld [vmem:[%s3 + $0xc] sm:$0xf]
        %v3863 = vld [vmem:[%s3 + $0x10] sm:$0xf]
        %v3864 = vld [vmem:[%s3 + $0x14] sm:$0xf]
        %v3865 = vld [vmem:[%s3 + $0x18] sm:$0xf]
        %v3866 = vld [vmem:[%s3 + $0x1c] sm:$0xf]
        %v3867 = vld [vmem:[#allocation2 + $0x8] sm:$0xff]
        %v3868 = vld [vmem:[#allocation2 + $0x10] sm:$0xff]
        %v3869 = vld [vmem:[#allocation2 + $0x18] sm:$0xff]
        %v3870 = vld [vmem:[#allocation2 + $0x20] sm:$0xff]
        %v3871 = vld [vmem:[#allocation2 + $0x28] sm:$0xff]
        %v3872 = vld [vmem:[#allocation2 + $0x30] sm:$0xff]
        %v3873 = vld [vmem:[#allocation2 + $0x38] sm:$0xff]
        %v3874 = vld [vmem:[#allocation2 + $0x40] sm:$0xff]
        %v3875 = vld [vmem:[#allocation2 + $0x48] sm:$0xff]
        %v3876 = vld [vmem:[#allocation2 + $0x50] sm:$0xff]
        %v3877 = vld [vmem:[#allocation2 + $0x58] sm:$0xff]
        %v3878 = vld [vmem:[#allocation2 + $0x60] sm:$0xff]
        %v3879 = vld [vmem:[#allocation2 + $0x68] sm:$0xff]
        %v3880 = vld [vmem:[#allocation2 + $0x70] sm:$0xff]
        %v3881 = vld [vmem:[#allocation2 + $0x78] sm:$0xff]
        %v3882 = vld [vmem:[#allocation2 + $0x80] sm:$0xff]
        %v3883 = vld [vmem:[#allocation2 + $0x88] sm:$0xff]
        %v3884 = vld [vmem:[#allocation2 + $0x90] sm:$0xff]
        %v3885 = vld [vmem:[#allocation2 + $0x98] sm:$0xff]
        %v3886 = vld [vmem:[#allocation2 + $0xa0] sm:$0xff]
        %v3887 = vld [vmem:[#allocation2 + $0xa8] sm:$0xff]
        %v3888 = vld [vmem:[#allocation2 + $0xb0] sm:$0xff]
        %v3889 = vld [vmem:[#allocation2 + $0xb8] sm:$0xff]
        %v3890 = vld [vmem:[#allocation2 + $0xc0] sm:$0xff]
        %v3891 = vld [vmem:[#allocation2 + $0xc8] sm:$0xff]
        %v3892 = vld [vmem:[#allocation2 + $0xd0] sm:$0xff]
        %v3893 = vld [vmem:[#allocation2 + $0xd8] sm:$0xff]
        %v3894 = vld [vmem:[#allocation2 + $0xe0] sm:$0xff]
        %v3895 = vld [vmem:[#allocation2 + $0xe8] sm:$0xff]
        %v3896 = vld [vmem:[#allocation2 + $0xf0] sm:$0xff]
        %v3897 = vld [vmem:[#allocation2 + $0xf8] sm:$0xff]
        %v3898 = vld [vmem:[#allocation2 + $0x100] sm:$0xff]
        %v3899 = vpack.c.bf16 %v3868, %v3867
        %v3900 = vpack.c.bf16 %v3870, %v3869
        %v3901 = vpack.c.bf16 %v3872, %v3871
        %v3902 = vpack.c.bf16 %v3874, %v3873
        %v3903 = vpack.c.bf16 %v3876, %v3875
        %v3904 = vpack.c.bf16 %v3878, %v3877
        %v3905 = vpack.c.bf16 %v3880, %v3879
        %v3906 = vpack.c.bf16 %v3882, %v3881
        %v3907 = vpack.c.bf16 %v3884, %v3883
        %v3908 = vpack.c.bf16 %v3886, %v3885
        %v3909 = vpack.c.bf16 %v3888, %v3887
        %v3910 = vpack.c.bf16 %v3890, %v3889
        %v3911 = vpack.c.bf16 %v3892, %v3891
        %v3912 = vpack.c.bf16 %v3894, %v3893
        %v3913 = vpack.c.bf16 %v3896, %v3895
        %v3914 = vpack.c.bf16 %v3898, %v3897
        %s3915 = scalar_lea.vmem %s3, 32
        %v3916 = vld [vmem:[%s3915] sm:$0xf]
        %v3917 = vld [vmem:[%s3915 + $0x4] sm:$0xf]
        %v3918 = vld [vmem:[%s3915 + $0x8] sm:$0xf]
        %v3919 = vld [vmem:[%s3915 + $0xc] sm:$0xf]
        %v3920 = vld [vmem:[%s3915 + $0x10] sm:$0xf]
        %v3921 = vld [vmem:[%s3915 + $0x14] sm:$0xf]
        %v3922 = vld [vmem:[%s3915 + $0x18] sm:$0xf]
        %v3923 = vld [vmem:[%s3915 + $0x1c] sm:$0xf]
        %v3932 = vunpack.c.l.b16 %v3916
        %v3933 = vunpack.c.l.b16 %v3917
        %v3934 = vunpack.c.l.b16 %v3918
        %v3935 = vunpack.c.l.b16 %v3919
        %v3936 = vunpack.c.l.b16 %v3920
        %v3937 = vunpack.c.l.b16 %v3921
        %v3938 = vunpack.c.l.b16 %v3922
        %v3939 = vunpack.c.l.b16 %v3923
        %v3940 = vpack.c.b16 %v3933, %v3932
        %v3941 = vpack.c.b16 %v3935, %v3934
        %v3942 = vpack.c.b16 %v3937, %v3936
        %v3943 = vpack.c.b16 %v3939, %v3938
        %v3949 = vsel %vm3724, %v3899, 0
        %v3952 = vsel %vm3724, %v3900, 0
        %v3955 = vsel %vm3724, %v3901, 0
        %v3958 = vsel %vm3724, %v3902, 0
        %v3961 = vsel %vm3724, %v3903, 0
        %v3964 = vsel %vm3724, %v3904, 0
        %v3967 = vsel %vm3724, %v3905, 0
        %v3970 = vsel %vm3724, %v3906, 0
        %v3973 = vsel %vm3724, %v3907, 0
        %v3976 = vsel %vm3724, %v3908, 0
        %v3979 = vsel %vm3724, %v3909, 0
        %v3982 = vsel %vm3724, %v3910, 0
        %v3985 = vsel %vm3724, %v3911, 0
        %v3988 = vsel %vm3724, %v3912, 0
        %v3991 = vsel %vm3724, %v3913, 0
        %v3994 = vsel %vm3724, %v3914, 0
        %3996 = vmatpush.bf16.msra.mxu0 0
        %3997 = vmatpush.bf16.msra.mxu0 0
        %3998 = vmatpush.bf16.msra.mxu0 0
        %3999 = vmatpush.bf16.msra.mxu0 0
        %4000 = vmatpush.bf16.msra.mxu0 %v3943
        %4001 = vmatpush.bf16.msra.mxu0 %v3942
        %4002 = vmatpush.bf16.msra.mxu0 %v3941
        %4003 = vmatpush.bf16.msra.mxu0 %v3940
        %4004 = vmatmul.bf16.gmra.mxu0 %v3949
        %v4005 = vpop.f32.mrf.mxu0
        %v4006 = vadd.f32 0.0, %v4005
        %v4007 = vpop.f32.mrf.mxu0
        %v4008 = vadd.f32 0.0, %v4007
        %4009 = vmatmul.bf16.gmra.mxu0 %v3952
        %v4010 = vpop.f32.mrf.mxu0
        %v4011 = vadd.f32 0.0, %v4010
        %v4012 = vpop.f32.mrf.mxu0
        %v4013 = vadd.f32 0.0, %v4012
        %4014 = vmatmul.bf16.gmra.mxu0 %v3955
        %v4015 = vpop.f32.mrf.mxu0
        %v4016 = vadd.f32 0.0, %v4015
        %v4017 = vpop.f32.mrf.mxu0
        %v4018 = vadd.f32 0.0, %v4017
        %4019 = vmatmul.bf16.gmra.mxu0 %v3958
        %v4020 = vpop.f32.mrf.mxu0
        %v4021 = vadd.f32 0.0, %v4020
        %v4022 = vpop.f32.mrf.mxu0
        %v4023 = vadd.f32 0.0, %v4022
        %4024 = vmatmul.bf16.gmra.mxu0 %v3961
        %v4025 = vpop.f32.mrf.mxu0
        %v4026 = vadd.f32 0.0, %v4025
        %v4027 = vpop.f32.mrf.mxu0
        %v4028 = vadd.f32 0.0, %v4027
        %4029 = vmatmul.bf16.gmra.mxu0 %v3964
        %v4030 = vpop.f32.mrf.mxu0
        %v4031 = vadd.f32 0.0, %v4030
        %v4032 = vpop.f32.mrf.mxu0
        %v4033 = vadd.f32 0.0, %v4032
        %4034 = vmatmul.bf16.gmra.mxu0 %v3967
        %v4035 = vpop.f32.mrf.mxu0
        %v4036 = vadd.f32 0.0, %v4035
        %v4037 = vpop.f32.mrf.mxu0
        %v4038 = vadd.f32 0.0, %v4037
        %4039 = vmatmul.bf16.gmra.mxu0 %v3970
        %v4040 = vpop.f32.mrf.mxu0
        %v4041 = vadd.f32 0.0, %v4040
        %v4042 = vpop.f32.mrf.mxu0
        %v4043 = vadd.f32 0.0, %v4042
        %4044 = vmatmul.bf16.gmra.mxu0 %v3973
        %v4045 = vpop.f32.mrf.mxu0
        %v4046 = vadd.f32 0.0, %v4045
        %v4047 = vpop.f32.mrf.mxu0
        %v4048 = vadd.f32 0.0, %v4047
        %4049 = vmatmul.bf16.gmra.mxu0 %v3976
        %v4050 = vpop.f32.mrf.mxu0
        %v4051 = vadd.f32 0.0, %v4050
        %v4052 = vpop.f32.mrf.mxu0
        %v4053 = vadd.f32 0.0, %v4052
        %4054 = vmatmul.bf16.gmra.mxu0 %v3979
        %v4055 = vpop.f32.mrf.mxu0
        %v4056 = vadd.f32 0.0, %v4055
        %v4057 = vpop.f32.mrf.mxu0
        %v4058 = vadd.f32 0.0, %v4057
        %4059 = vmatmul.bf16.gmra.mxu0 %v3982
        %v4060 = vpop.f32.mrf.mxu0
        %v4061 = vadd.f32 0.0, %v4060
        %v4062 = vpop.f32.mrf.mxu0
        %v4063 = vadd.f32 0.0, %v4062
        %4064 = vmatmul.bf16.gmra.mxu0 %v3985
        %v4065 = vpop.f32.mrf.mxu0
        %v4066 = vadd.f32 0.0, %v4065
        %v4067 = vpop.f32.mrf.mxu0
        %v4068 = vadd.f32 0.0, %v4067
        %4069 = vmatmul.bf16.gmra.mxu0 %v3988
        %v4070 = vpop.f32.mrf.mxu0
        %v4071 = vadd.f32 0.0, %v4070
        %v4072 = vpop.f32.mrf.mxu0
        %v4073 = vadd.f32 0.0, %v4072
        %4074 = vmatmul.bf16.gmra.mxu0 %v3991
        %v4075 = vpop.f32.mrf.mxu0
        %v4076 = vadd.f32 0.0, %v4075
        %v4077 = vpop.f32.mrf.mxu0
        %v4078 = vadd.f32 0.0, %v4077
        %4079 = vmatmul.bf16.gmra.mxu0 %v3994
        %v4080 = vpop.f32.mrf.mxu0
        %v4081 = vadd.f32 0.0, %v4080
        %v4082 = vpop.f32.mrf.mxu0
        %v4083 = vadd.f32 0.0, %v4082
        %4084 = vdwg.mxu0
        %v4117 = vunpack.c.l.b16 %v3827
        %v4118 = vunpack.c.l.b16 %v3828
        %v4119 = vunpack.c.l.b16 %v3829
        %v4120 = vunpack.c.l.b16 %v3830
        %v4121 = vunpack.c.l.b16 %v3831
        %v4122 = vunpack.c.l.b16 %v3832
        %v4123 = vunpack.c.l.b16 %v3833
        %v4124 = vunpack.c.l.b16 %v3834
        %v4125 = vunpack.c.l.b16 %v3835
        %v4126 = vunpack.c.l.b16 %v3836
        %v4127 = vunpack.c.l.b16 %v3837
        %v4128 = vunpack.c.l.b16 %v3838
        %v4129 = vunpack.c.l.b16 %v3839
        %v4130 = vunpack.c.l.b16 %v3840
        %v4131 = vunpack.c.l.b16 %v3841
        %v4132 = vunpack.c.l.b16 %v3842
        %v4133 = vunpack.c.l.b16 %v3843
        %v4134 = vunpack.c.l.b16 %v3844
        %v4135 = vunpack.c.l.b16 %v3845
        %v4136 = vunpack.c.l.b16 %v3846
        %v4137 = vunpack.c.l.b16 %v3847
        %v4138 = vunpack.c.l.b16 %v3848
        %v4139 = vunpack.c.l.b16 %v3849
        %v4140 = vunpack.c.l.b16 %v3850
        %v4141 = vunpack.c.l.b16 %v3851
        %v4142 = vunpack.c.l.b16 %v3852
        %v4143 = vunpack.c.l.b16 %v3853
        %v4144 = vunpack.c.l.b16 %v3854
        %v4145 = vunpack.c.l.b16 %v3855
        %v4146 = vunpack.c.l.b16 %v3856
        %v4147 = vunpack.c.l.b16 %v3857
        %v4148 = vunpack.c.l.b16 %v3858
        %v4149 = vpack.c.b16 %v4118, %v4117
        %v4150 = vpack.c.b16 %v4120, %v4119
        %v4151 = vpack.c.b16 %v4122, %v4121
        %v4152 = vpack.c.b16 %v4124, %v4123
        %v4153 = vpack.c.b16 %v4126, %v4125
        %v4154 = vpack.c.b16 %v4128, %v4127
        %v4155 = vpack.c.b16 %v4130, %v4129
        %v4156 = vpack.c.b16 %v4132, %v4131
        %v4157 = vpack.c.b16 %v4134, %v4133
        %v4158 = vpack.c.b16 %v4136, %v4135
        %v4159 = vpack.c.b16 %v4138, %v4137
        %v4160 = vpack.c.b16 %v4140, %v4139
        %v4161 = vpack.c.b16 %v4142, %v4141
        %v4162 = vpack.c.b16 %v4144, %v4143
        %v4163 = vpack.c.b16 %v4146, %v4145
        %v4164 = vpack.c.b16 %v4148, %v4147
        %v4173 = vunpack.c.l.b16 %v3859
        %v4174 = vunpack.c.l.b16 %v3860
        %v4175 = vunpack.c.l.b16 %v3861
        %v4176 = vunpack.c.l.b16 %v3862
        %v4177 = vunpack.c.l.b16 %v3863
        %v4178 = vunpack.c.l.b16 %v3864
        %v4179 = vunpack.c.l.b16 %v3865
        %v4180 = vunpack.c.l.b16 %v3866
        %v4181 = vpack.c.b16 %v4174, %v4173
        %v4182 = vpack.c.b16 %v4176, %v4175
        %v4183 = vpack.c.b16 %v4178, %v4177
        %v4184 = vpack.c.b16 %v4180, %v4179
        %v4190 = vsel %vm3724, %v4149, 0
        %v4193 = vsel %vm3724, %v4150, 0
        %v4196 = vsel %vm3724, %v4151, 0
        %v4199 = vsel %vm3724, %v4152, 0
        %v4202 = vsel %vm3724, %v4153, 0
        %v4205 = vsel %vm3724, %v4154, 0
        %v4208 = vsel %vm3724, %v4155, 0
        %v4211 = vsel %vm3724, %v4156, 0
        %v4214 = vsel %vm3724, %v4157, 0
        %v4217 = vsel %vm3724, %v4158, 0
        %v4220 = vsel %vm3724, %v4159, 0
        %v4223 = vsel %vm3724, %v4160, 0
        %v4226 = vsel %vm3724, %v4161, 0
        %v4229 = vsel %vm3724, %v4162, 0
        %v4232 = vsel %vm3724, %v4163, 0
        %v4235 = vsel %vm3724, %v4164, 0
        %4237 = vmatpush.bf16.msra.mxu0 0
        %4238 = vmatpush.bf16.msra.mxu0 0
        %4239 = vmatpush.bf16.msra.mxu0 0
        %4240 = vmatpush.bf16.msra.mxu0 0
        %4241 = vmatpush.bf16.msra.mxu0 %v4184
        %4242 = vmatpush.bf16.msra.mxu0 %v4183
        %4243 = vmatpush.bf16.msra.mxu0 %v4182
        %4244 = vmatpush.bf16.msra.mxu0 %v4181
        %4245 = vmatmul.bf16.gmra.mxu0 %v4190
        %v4246 = vpop.f32.mrf.mxu0
        %v4247 = vadd.f32 %v4006, %v4246
        %v4248 = vpop.f32.mrf.mxu0
        %v4249 = vadd.f32 %v4008, %v4248
        %4250 = vmatmul.bf16.gmra.mxu0 %v4193
        %v4251 = vpop.f32.mrf.mxu0
        %v4252 = vadd.f32 %v4011, %v4251
        %v4253 = vpop.f32.mrf.mxu0
        %v4254 = vadd.f32 %v4013, %v4253
        %4255 = vmatmul.bf16.gmra.mxu0 %v4196
        %v4256 = vpop.f32.mrf.mxu0
        %v4257 = vadd.f32 %v4016, %v4256
        %v4258 = vpop.f32.mrf.mxu0
        %v4259 = vadd.f32 %v4018, %v4258
        %4260 = vmatmul.bf16.gmra.mxu0 %v4199
        %v4261 = vpop.f32.mrf.mxu0
        %v4262 = vadd.f32 %v4021, %v4261
        %v4263 = vpop.f32.mrf.mxu0
        %v4264 = vadd.f32 %v4023, %v4263
        %4265 = vmatmul.bf16.gmra.mxu0 %v4202
        %v4266 = vpop.f32.mrf.mxu0
        %v4267 = vadd.f32 %v4026, %v4266
        %v4268 = vpop.f32.mrf.mxu0
        %v4269 = vadd.f32 %v4028, %v4268
        %4270 = vmatmul.bf16.gmra.mxu0 %v4205
        %v4271 = vpop.f32.mrf.mxu0
        %v4272 = vadd.f32 %v4031, %v4271
        %v4273 = vpop.f32.mrf.mxu0
        %v4274 = vadd.f32 %v4033, %v4273
        %4275 = vmatmul.bf16.gmra.mxu0 %v4208
        %v4276 = vpop.f32.mrf.mxu0
        %v4277 = vadd.f32 %v4036, %v4276
        %v4278 = vpop.f32.mrf.mxu0
        %v4279 = vadd.f32 %v4038, %v4278
        %4280 = vmatmul.bf16.gmra.mxu0 %v4211
        %v4281 = vpop.f32.mrf.mxu0
        %v4282 = vadd.f32 %v4041, %v4281
        %v4283 = vpop.f32.mrf.mxu0
        %v4284 = vadd.f32 %v4043, %v4283
        %4285 = vmatmul.bf16.gmra.mxu0 %v4214
        %v4286 = vpop.f32.mrf.mxu0
        %v4287 = vadd.f32 %v4046, %v4286
        %v4288 = vpop.f32.mrf.mxu0
        %v4289 = vadd.f32 %v4048, %v4288
        %4290 = vmatmul.bf16.gmra.mxu0 %v4217
        %v4291 = vpop.f32.mrf.mxu0
        %v4292 = vadd.f32 %v4051, %v4291
        %v4293 = vpop.f32.mrf.mxu0
        %v4294 = vadd.f32 %v4053, %v4293
        %4295 = vmatmul.bf16.gmra.mxu0 %v4220
        %v4296 = vpop.f32.mrf.mxu0
        %v4297 = vadd.f32 %v4056, %v4296
        %v4298 = vpop.f32.mrf.mxu0
        %v4299 = vadd.f32 %v4058, %v4298
        %4300 = vmatmul.bf16.gmra.mxu0 %v4223
        %v4301 = vpop.f32.mrf.mxu0
        %v4302 = vadd.f32 %v4061, %v4301
        %v4303 = vpop.f32.mrf.mxu0
        %v4304 = vadd.f32 %v4063, %v4303
        %4305 = vmatmul.bf16.gmra.mxu0 %v4226
        %v4306 = vpop.f32.mrf.mxu0
        %v4307 = vadd.f32 %v4066, %v4306
        %v4308 = vpop.f32.mrf.mxu0
        %v4309 = vadd.f32 %v4068, %v4308
        %4310 = vmatmul.bf16.gmra.mxu0 %v4229
        %v4311 = vpop.f32.mrf.mxu0
        %v4312 = vadd.f32 %v4071, %v4311
        %v4313 = vpop.f32.mrf.mxu0
        %v4314 = vadd.f32 %v4073, %v4313
        %4315 = vmatmul.bf16.gmra.mxu0 %v4232
        %v4316 = vpop.f32.mrf.mxu0
        %v4317 = vadd.f32 %v4076, %v4316
        %v4318 = vpop.f32.mrf.mxu0
        %v4319 = vadd.f32 %v4078, %v4318
        %4320 = vmatmul.bf16.gmra.mxu0 %v4235
        %v4321 = vpop.f32.mrf.mxu0
        %v4322 = vadd.f32 %v4081, %v4321
        %v4323 = vpop.f32.mrf.mxu0
        %v4324 = vadd.f32 %v4083, %v4323
        %4325 = vdwg.mxu0
        %v4326 = vld [vmem:[#allocation2 + $0x9] sm:$0xff]
        %v4327 = vld [vmem:[#allocation2 + $0x11] sm:$0xff]
        %v4328 = vld [vmem:[#allocation2 + $0x19] sm:$0xff]
        %v4329 = vld [vmem:[#allocation2 + $0x21] sm:$0xff]
        %v4330 = vld [vmem:[#allocation2 + $0x29] sm:$0xff]
        %v4331 = vld [vmem:[#allocation2 + $0x31] sm:$0xff]
        %v4332 = vld [vmem:[#allocation2 + $0x39] sm:$0xff]
        %v4333 = vld [vmem:[#allocation2 + $0x41] sm:$0xff]
        %v4334 = vld [vmem:[#allocation2 + $0x49] sm:$0xff]
        %v4335 = vld [vmem:[#allocation2 + $0x51] sm:$0xff]
        %v4336 = vld [vmem:[#allocation2 + $0x59] sm:$0xff]
        %v4337 = vld [vmem:[#allocation2 + $0x61] sm:$0xff]
        %v4338 = vld [vmem:[#allocation2 + $0x69] sm:$0xff]
        %v4339 = vld [vmem:[#allocation2 + $0x71] sm:$0xff]
        %v4340 = vld [vmem:[#allocation2 + $0x79] sm:$0xff]
        %v4341 = vld [vmem:[#allocation2 + $0x81] sm:$0xff]
        %v4342 = vld [vmem:[#allocation2 + $0x89] sm:$0xff]
        %v4343 = vld [vmem:[#allocation2 + $0x91] sm:$0xff]
        %v4344 = vld [vmem:[#allocation2 + $0x99] sm:$0xff]
        %v4345 = vld [vmem:[#allocation2 + $0xa1] sm:$0xff]
        %v4346 = vld [vmem:[#allocation2 + $0xa9] sm:$0xff]
        %v4347 = vld [vmem:[#allocation2 + $0xb1] sm:$0xff]
        %v4348 = vld [vmem:[#allocation2 + $0xb9] sm:$0xff]
        %v4349 = vld [vmem:[#allocation2 + $0xc1] sm:$0xff]
        %v4350 = vld [vmem:[#allocation2 + $0xc9] sm:$0xff]
        %v4351 = vld [vmem:[#allocation2 + $0xd1] sm:$0xff]
        %v4352 = vld [vmem:[#allocation2 + $0xd9] sm:$0xff]
        %v4353 = vld [vmem:[#allocation2 + $0xe1] sm:$0xff]
        %v4354 = vld [vmem:[#allocation2 + $0xe9] sm:$0xff]
        %v4355 = vld [vmem:[#allocation2 + $0xf1] sm:$0xff]
        %v4356 = vld [vmem:[#allocation2 + $0xf9] sm:$0xff]
        %v4357 = vld [vmem:[#allocation2 + $0x101] sm:$0xff]
        %v4358 = vpack.c.bf16 %v4326, %v4326
        %v4359 = vpack.c.bf16 %v4327, %v4327
        %v4360 = vpack.c.bf16 %v4328, %v4328
        %v4361 = vpack.c.bf16 %v4329, %v4329
        %v4362 = vpack.c.bf16 %v4330, %v4330
        %v4363 = vpack.c.bf16 %v4331, %v4331
        %v4364 = vpack.c.bf16 %v4332, %v4332
        %v4365 = vpack.c.bf16 %v4333, %v4333
        %v4366 = vpack.c.bf16 %v4334, %v4334
        %v4367 = vpack.c.bf16 %v4335, %v4335
        %v4368 = vpack.c.bf16 %v4336, %v4336
        %v4369 = vpack.c.bf16 %v4337, %v4337
        %v4370 = vpack.c.bf16 %v4338, %v4338
        %v4371 = vpack.c.bf16 %v4339, %v4339
        %v4372 = vpack.c.bf16 %v4340, %v4340
        %v4373 = vpack.c.bf16 %v4341, %v4341
        %v4374 = vpack.c.bf16 %v4342, %v4342
        %v4375 = vpack.c.bf16 %v4343, %v4343
        %v4376 = vpack.c.bf16 %v4344, %v4344
        %v4377 = vpack.c.bf16 %v4345, %v4345
        %v4378 = vpack.c.bf16 %v4346, %v4346
        %v4379 = vpack.c.bf16 %v4347, %v4347
        %v4380 = vpack.c.bf16 %v4348, %v4348
        %v4381 = vpack.c.bf16 %v4349, %v4349
        %v4382 = vpack.c.bf16 %v4350, %v4350
        %v4383 = vpack.c.bf16 %v4351, %v4351
        %v4384 = vpack.c.bf16 %v4352, %v4352
        %v4385 = vpack.c.bf16 %v4353, %v4353
        %v4386 = vpack.c.bf16 %v4354, %v4354
        %v4387 = vpack.c.bf16 %v4355, %v4355
        %v4388 = vpack.c.bf16 %v4356, %v4356
        %v4389 = vpack.c.bf16 %v4357, %v4357
        %v4390 = vsel %vm1494, %v4358, 0
        %v4391 = vsel %vm1495, %v4359, 0
        %v4392 = vsel %vm1496, %v4360, 0
        %v4393 = vsel %vm1497, %v4361, 0
        %v4394 = vsel %vm1498, %v4362, 0
        %v4395 = vsel %vm1499, %v4363, 0
        %v4396 = vsel %vm1500, %v4364, 0
        %v4397 = vsel %vm1501, %v4365, 0
        %v4398 = vsel %vm1502, %v4366, 0
        %v4399 = vsel %vm1503, %v4367, 0
        %v4400 = vsel %vm1504, %v4368, 0
        %v4401 = vsel %vm1505, %v4369, 0
        %v4402 = vsel %vm1506, %v4370, 0
        %v4403 = vsel %vm1507, %v4371, 0
        %v4404 = vsel %vm1508, %v4372, 0
        %v4405 = vsel %vm1509, %v4373, 0
        %v4406 = vsel %vm1510, %v4374, 0
        %v4407 = vsel %vm1511, %v4375, 0
        %v4408 = vsel %vm1512, %v4376, 0
        %v4409 = vsel %vm1513, %v4377, 0
        %v4410 = vsel %vm1514, %v4378, 0
        %v4411 = vsel %vm1515, %v4379, 0
        %v4412 = vsel %vm1516, %v4380, 0
        %v4413 = vsel %vm1517, %v4381, 0
        %v4414 = vsel %vm1518, %v4382, 0
        %v4415 = vsel %vm1519, %v4383, 0
        %v4416 = vsel %vm1520, %v4384, 0
        %v4417 = vsel %vm1521, %v4385, 0
        %v4418 = vsel %vm1522, %v4386, 0
        %v4419 = vsel %vm1523, %v4387, 0
        %v4420 = vsel %vm1524, %v4388, 0
        %v4421 = vsel %vm1525, %v4389, 0
        %s4422 = scalar_lea.vmem %s3, 64
        %v4423 = vld [vmem:[%s4422] sm:$0xf]
        %v4424 = vld [vmem:[%s4422 + $0x4] sm:$0xf]
        %v4425 = vld [vmem:[%s4422 + $0x8] sm:$0xf]
        %v4426 = vld [vmem:[%s4422 + $0xc] sm:$0xf]
        %v4427 = vld [vmem:[%s4422 + $0x10] sm:$0xf]
        %v4428 = vld [vmem:[%s4422 + $0x14] sm:$0xf]
        %v4429 = vld [vmem:[%s4422 + $0x18] sm:$0xf]
        %v4430 = vld [vmem:[%s4422 + $0x1c] sm:$0xf]
        %v4463 = vunpack.c.l.b16 %v4390
        %v4464 = vunpack.c.l.b16 %v4391
        %v4465 = vunpack.c.l.b16 %v4392
        %v4466 = vunpack.c.l.b16 %v4393
        %v4467 = vunpack.c.l.b16 %v4394
        %v4468 = vunpack.c.l.b16 %v4395
        %v4469 = vunpack.c.l.b16 %v4396
        %v4470 = vunpack.c.l.b16 %v4397
        %v4471 = vunpack.c.l.b16 %v4398
        %v4472 = vunpack.c.l.b16 %v4399
        %v4473 = vunpack.c.l.b16 %v4400
        %v4474 = vunpack.c.l.b16 %v4401
        %v4475 = vunpack.c.l.b16 %v4402
        %v4476 = vunpack.c.l.b16 %v4403
        %v4477 = vunpack.c.l.b16 %v4404
        %v4478 = vunpack.c.l.b16 %v4405
        %v4479 = vunpack.c.l.b16 %v4406
        %v4480 = vunpack.c.l.b16 %v4407
        %v4481 = vunpack.c.l.b16 %v4408
        %v4482 = vunpack.c.l.b16 %v4409
        %v4483 = vunpack.c.l.b16 %v4410
        %v4484 = vunpack.c.l.b16 %v4411
        %v4485 = vunpack.c.l.b16 %v4412
        %v4486 = vunpack.c.l.b16 %v4413
        %v4487 = vunpack.c.l.b16 %v4414
        %v4488 = vunpack.c.l.b16 %v4415
        %v4489 = vunpack.c.l.b16 %v4416
        %v4490 = vunpack.c.l.b16 %v4417
        %v4491 = vunpack.c.l.b16 %v4418
        %v4492 = vunpack.c.l.b16 %v4419
        %v4493 = vunpack.c.l.b16 %v4420
        %v4494 = vunpack.c.l.b16 %v4421
        %v4495 = vpack.c.b16 %v4464, %v4463
        %v4496 = vpack.c.b16 %v4466, %v4465
        %v4497 = vpack.c.b16 %v4468, %v4467
        %v4498 = vpack.c.b16 %v4470, %v4469
        %v4499 = vpack.c.b16 %v4472, %v4471
        %v4500 = vpack.c.b16 %v4474, %v4473
        %v4501 = vpack.c.b16 %v4476, %v4475
        %v4502 = vpack.c.b16 %v4478, %v4477
        %v4503 = vpack.c.b16 %v4480, %v4479
        %v4504 = vpack.c.b16 %v4482, %v4481
        %v4505 = vpack.c.b16 %v4484, %v4483
        %v4506 = vpack.c.b16 %v4486, %v4485
        %v4507 = vpack.c.b16 %v4488, %v4487
        %v4508 = vpack.c.b16 %v4490, %v4489
        %v4509 = vpack.c.b16 %v4492, %v4491
        %v4510 = vpack.c.b16 %v4494, %v4493
        %v4519 = vunpack.c.l.b16 %v4423
        %v4520 = vunpack.c.l.b16 %v4424
        %v4521 = vunpack.c.l.b16 %v4425
        %v4522 = vunpack.c.l.b16 %v4426
        %v4523 = vunpack.c.l.b16 %v4427
        %v4524 = vunpack.c.l.b16 %v4428
        %v4525 = vunpack.c.l.b16 %v4429
        %v4526 = vunpack.c.l.b16 %v4430
        %v4527 = vpack.c.b16 %v4520, %v4519
        %v4528 = vpack.c.b16 %v4522, %v4521
        %v4529 = vpack.c.b16 %v4524, %v4523
        %v4530 = vpack.c.b16 %v4526, %v4525
        %v4536 = vsel %vm3724, %v4495, 0
        %v4539 = vsel %vm3724, %v4496, 0
        %v4542 = vsel %vm3724, %v4497, 0
        %v4545 = vsel %vm3724, %v4498, 0
        %v4548 = vsel %vm3724, %v4499, 0
        %v4551 = vsel %vm3724, %v4500, 0
        %v4554 = vsel %vm3724, %v4501, 0
        %v4557 = vsel %vm3724, %v4502, 0
        %v4560 = vsel %vm3724, %v4503, 0
        %v4563 = vsel %vm3724, %v4504, 0
        %v4566 = vsel %vm3724, %v4505, 0
        %v4569 = vsel %vm3724, %v4506, 0
        %v4572 = vsel %vm3724, %v4507, 0
        %v4575 = vsel %vm3724, %v4508, 0
        %v4578 = vsel %vm3724, %v4509, 0
        %v4581 = vsel %vm3724, %v4510, 0
        %4583 = vmatpush.bf16.msra.mxu0 0
        %4584 = vmatpush.bf16.msra.mxu0 0
        %4585 = vmatpush.bf16.msra.mxu0 0
        %4586 = vmatpush.bf16.msra.mxu0 0
        %4587 = vmatpush.bf16.msra.mxu0 %v4530
        %4588 = vmatpush.bf16.msra.mxu0 %v4529
        %4589 = vmatpush.bf16.msra.mxu0 %v4528
        %4590 = vmatpush.bf16.msra.mxu0 %v4527
        %4591 = vmatmul.bf16.gmra.mxu0 %v4536
        %v4592 = vpop.f32.mrf.mxu0
        %v4593 = vadd.f32 0.0, %v4592
        %v4594 = vpop.f32.mrf.mxu0
        %v4595 = vadd.f32 0.0, %v4594
        %4596 = vmatmul.bf16.gmra.mxu0 %v4539
        %v4597 = vpop.f32.mrf.mxu0
        %v4598 = vadd.f32 0.0, %v4597
        %v4599 = vpop.f32.mrf.mxu0
        %v4600 = vadd.f32 0.0, %v4599
        %4601 = vmatmul.bf16.gmra.mxu0 %v4542
        %v4602 = vpop.f32.mrf.mxu0
        %v4603 = vadd.f32 0.0, %v4602
        %v4604 = vpop.f32.mrf.mxu0
        %v4605 = vadd.f32 0.0, %v4604
        %4606 = vmatmul.bf16.gmra.mxu0 %v4545
        %v4607 = vpop.f32.mrf.mxu0
        %v4608 = vadd.f32 0.0, %v4607
        %v4609 = vpop.f32.mrf.mxu0
        %v4610 = vadd.f32 0.0, %v4609
        %4611 = vmatmul.bf16.gmra.mxu0 %v4548
        %v4612 = vpop.f32.mrf.mxu0
        %v4613 = vadd.f32 0.0, %v4612
        %v4614 = vpop.f32.mrf.mxu0
        %v4615 = vadd.f32 0.0, %v4614
        %4616 = vmatmul.bf16.gmra.mxu0 %v4551
        %v4617 = vpop.f32.mrf.mxu0
        %v4618 = vadd.f32 0.0, %v4617
        %v4619 = vpop.f32.mrf.mxu0
        %v4620 = vadd.f32 0.0, %v4619
        %4621 = vmatmul.bf16.gmra.mxu0 %v4554
        %v4622 = vpop.f32.mrf.mxu0
        %v4623 = vadd.f32 0.0, %v4622
        %v4624 = vpop.f32.mrf.mxu0
        %v4625 = vadd.f32 0.0, %v4624
        %4626 = vmatmul.bf16.gmra.mxu0 %v4557
        %v4627 = vpop.f32.mrf.mxu0
        %v4628 = vadd.f32 0.0, %v4627
        %v4629 = vpop.f32.mrf.mxu0
        %v4630 = vadd.f32 0.0, %v4629
        %4631 = vmatmul.bf16.gmra.mxu0 %v4560
        %v4632 = vpop.f32.mrf.mxu0
        %v4633 = vadd.f32 0.0, %v4632
        %v4634 = vpop.f32.mrf.mxu0
        %v4635 = vadd.f32 0.0, %v4634
        %4636 = vmatmul.bf16.gmra.mxu0 %v4563
        %v4637 = vpop.f32.mrf.mxu0
        %v4638 = vadd.f32 0.0, %v4637
        %v4639 = vpop.f32.mrf.mxu0
        %v4640 = vadd.f32 0.0, %v4639
        %4641 = vmatmul.bf16.gmra.mxu0 %v4566
        %v4642 = vpop.f32.mrf.mxu0
        %v4643 = vadd.f32 0.0, %v4642
        %v4644 = vpop.f32.mrf.mxu0
        %v4645 = vadd.f32 0.0, %v4644
        %4646 = vmatmul.bf16.gmra.mxu0 %v4569
        %v4647 = vpop.f32.mrf.mxu0
        %v4648 = vadd.f32 0.0, %v4647
        %v4649 = vpop.f32.mrf.mxu0
        %v4650 = vadd.f32 0.0, %v4649
        %4651 = vmatmul.bf16.gmra.mxu0 %v4572
        %v4652 = vpop.f32.mrf.mxu0
        %v4653 = vadd.f32 0.0, %v4652
        %v4654 = vpop.f32.mrf.mxu0
        %v4655 = vadd.f32 0.0, %v4654
        %4656 = vmatmul.bf16.gmra.mxu0 %v4575
        %v4657 = vpop.f32.mrf.mxu0
        %v4658 = vadd.f32 0.0, %v4657
        %v4659 = vpop.f32.mrf.mxu0
        %v4660 = vadd.f32 0.0, %v4659
        %4661 = vmatmul.bf16.gmra.mxu0 %v4578
        %v4662 = vpop.f32.mrf.mxu0
        %v4663 = vadd.f32 0.0, %v4662
        %v4664 = vpop.f32.mrf.mxu0
        %v4665 = vadd.f32 0.0, %v4664
        %4666 = vmatmul.bf16.gmra.mxu0 %v4581
        %v4667 = vpop.f32.mrf.mxu0
        %v4668 = vadd.f32 0.0, %v4667
        %v4669 = vpop.f32.mrf.mxu0
        %v4670 = vadd.f32 0.0, %v4669
        %4671 = vdwg.mxu0
        %v4672 = vadd.f32 %v4247, %v4593
        %v4673 = vadd.f32 %v4249, %v4595
        %v4674 = vadd.f32 %v4252, %v4598
        %v4675 = vadd.f32 %v4254, %v4600
        %v4676 = vadd.f32 %v4257, %v4603
        %v4677 = vadd.f32 %v4259, %v4605
        %v4678 = vadd.f32 %v4262, %v4608
        %v4679 = vadd.f32 %v4264, %v4610
        %v4680 = vadd.f32 %v4267, %v4613
        %v4681 = vadd.f32 %v4269, %v4615
        %v4682 = vadd.f32 %v4272, %v4618
        %v4683 = vadd.f32 %v4274, %v4620
        %v4684 = vadd.f32 %v4277, %v4623
        %v4685 = vadd.f32 %v4279, %v4625
        %v4686 = vadd.f32 %v4282, %v4628
        %v4687 = vadd.f32 %v4284, %v4630
        %v4688 = vadd.f32 %v4287, %v4633
        %v4689 = vadd.f32 %v4289, %v4635
        %v4690 = vadd.f32 %v4292, %v4638
        %v4691 = vadd.f32 %v4294, %v4640
        %v4692 = vadd.f32 %v4297, %v4643
        %v4693 = vadd.f32 %v4299, %v4645
        %v4694 = vadd.f32 %v4302, %v4648
        %v4695 = vadd.f32 %v4304, %v4650
        %v4696 = vadd.f32 %v4307, %v4653
        %v4697 = vadd.f32 %v4309, %v4655
        %v4698 = vadd.f32 %v4312, %v4658
        %v4699 = vadd.f32 %v4314, %v4660
        %v4700 = vadd.f32 %v4317, %v4663
        %v4701 = vadd.f32 %v4319, %v4665
        %v4702 = vadd.f32 %v4322, %v4668
        %v4703 = vadd.f32 %v4324, %v4670
        %v4704 = vld [vmem:[#allocation2 + $0x17] sm:$0xff]
        %v4705 = vld [vmem:[#allocation2 + $0x1f] sm:$0xff]
        %v4706 = vld [vmem:[#allocation2 + $0x27] sm:$0xff]
        %v4707 = vld [vmem:[#allocation2 + $0x2f] sm:$0xff]
        %v4708 = vld [vmem:[#allocation2 + $0x37] sm:$0xff]
        %v4709 = vld [vmem:[#allocation2 + $0x3f] sm:$0xff]
        %v4710 = vld [vmem:[#allocation2 + $0x47] sm:$0xff]
        %v4711 = vld [vmem:[#allocation2 + $0x4f] sm:$0xff]
        %v4712 = vld [vmem:[#allocation2 + $0x57] sm:$0xff]
        %v4713 = vld [vmem:[#allocation2 + $0x5f] sm:$0xff]
        %v4714 = vld [vmem:[#allocation2 + $0x67] sm:$0xff]
        %v4715 = vld [vmem:[#allocation2 + $0x6f] sm:$0xff]
        %v4716 = vld [vmem:[#allocation2 + $0x77] sm:$0xff]
        %v4717 = vld [vmem:[#allocation2 + $0x7f] sm:$0xff]
        %v4718 = vld [vmem:[#allocation2 + $0x87] sm:$0xff]
        %v4719 = vld [vmem:[#allocation2 + $0x8f] sm:$0xff]
        %v4720 = vld [vmem:[#allocation2 + $0x97] sm:$0xff]
        %v4721 = vld [vmem:[#allocation2 + $0x9f] sm:$0xff]
        %v4722 = vld [vmem:[#allocation2 + $0xa7] sm:$0xff]
        %v4723 = vld [vmem:[#allocation2 + $0xaf] sm:$0xff]
        %v4724 = vld [vmem:[#allocation2 + $0xb7] sm:$0xff]
        %v4725 = vld [vmem:[#allocation2 + $0xbf] sm:$0xff]
        %v4726 = vld [vmem:[#allocation2 + $0xc7] sm:$0xff]
        %v4727 = vld [vmem:[#allocation2 + $0xcf] sm:$0xff]
        %v4728 = vld [vmem:[#allocation2 + $0xd7] sm:$0xff]
        %v4729 = vld [vmem:[#allocation2 + $0xdf] sm:$0xff]
        %v4730 = vld [vmem:[#allocation2 + $0xe7] sm:$0xff]
        %v4731 = vld [vmem:[#allocation2 + $0xef] sm:$0xff]
        %v4732 = vld [vmem:[#allocation2 + $0xf7] sm:$0xff]
        %v4733 = vld [vmem:[#allocation2 + $0xff] sm:$0xff]
        %v4734 = vld [vmem:[#allocation2 + $0x107] sm:$0xff]
        %v4735 = vld [vmem:[#allocation2 + $0x10f] sm:$0xff]
        %v4736 = vpack.c.bf16 %v4704, %v4704
        %v4737 = vpack.c.bf16 %v4705, %v4705
        %v4738 = vpack.c.bf16 %v4706, %v4706
        %v4739 = vpack.c.bf16 %v4707, %v4707
        %v4740 = vpack.c.bf16 %v4708, %v4708
        %v4741 = vpack.c.bf16 %v4709, %v4709
        %v4742 = vpack.c.bf16 %v4710, %v4710
        %v4743 = vpack.c.bf16 %v4711, %v4711
        %v4744 = vpack.c.bf16 %v4712, %v4712
        %v4745 = vpack.c.bf16 %v4713, %v4713
        %v4746 = vpack.c.bf16 %v4714, %v4714
        %v4747 = vpack.c.bf16 %v4715, %v4715
        %v4748 = vpack.c.bf16 %v4716, %v4716
        %v4749 = vpack.c.bf16 %v4717, %v4717
        %v4750 = vpack.c.bf16 %v4718, %v4718
        %v4751 = vpack.c.bf16 %v4719, %v4719
        %v4752 = vpack.c.bf16 %v4720, %v4720
        %v4753 = vpack.c.bf16 %v4721, %v4721
        %v4754 = vpack.c.bf16 %v4722, %v4722
        %v4755 = vpack.c.bf16 %v4723, %v4723
        %v4756 = vpack.c.bf16 %v4724, %v4724
        %v4757 = vpack.c.bf16 %v4725, %v4725
        %v4758 = vpack.c.bf16 %v4726, %v4726
        %v4759 = vpack.c.bf16 %v4727, %v4727
        %v4760 = vpack.c.bf16 %v4728, %v4728
        %v4761 = vpack.c.bf16 %v4729, %v4729
        %v4762 = vpack.c.bf16 %v4730, %v4730
        %v4763 = vpack.c.bf16 %v4731, %v4731
        %v4764 = vpack.c.bf16 %v4732, %v4732
        %v4765 = vpack.c.bf16 %v4733, %v4733
        %v4766 = vpack.c.bf16 %v4734, %v4734
        %v4767 = vpack.c.bf16 %v4735, %v4735
        %v4768 = vsel %vm886, %v4736, 0
        %v4769 = vsel %vm887, %v4737, 0
        %v4770 = vsel %vm888, %v4738, 0
        %v4771 = vsel %vm889, %v4739, 0
        %v4772 = vsel %vm890, %v4740, 0
        %v4773 = vsel %vm891, %v4741, 0
        %v4774 = vsel %vm892, %v4742, 0
        %v4775 = vsel %vm893, %v4743, 0
        %v4776 = vsel %vm894, %v4744, 0
        %v4777 = vsel %vm895, %v4745, 0
        %v4778 = vsel %vm896, %v4746, 0
        %v4779 = vsel %vm897, %v4747, 0
        %v4780 = vsel %vm898, %v4748, 0
        %v4781 = vsel %vm899, %v4749, 0
        %v4782 = vsel %vm900, %v4750, 0
        %v4783 = vsel %vm901, %v4751, 0
        %v4784 = vsel %vm902, %v4752, 0
        %v4785 = vsel %vm903, %v4753, 0
        %v4786 = vsel %vm904, %v4754, 0
        %v4787 = vsel %vm905, %v4755, 0
        %v4788 = vsel %vm906, %v4756, 0
        %v4789 = vsel %vm907, %v4757, 0
        %v4790 = vsel %vm908, %v4758, 0
        %v4791 = vsel %vm909, %v4759, 0
        %v4792 = vsel %vm910, %v4760, 0
        %v4793 = vsel %vm911, %v4761, 0
        %v4794 = vsel %vm912, %v4762, 0
        %v4795 = vsel %vm913, %v4763, 0
        %v4796 = vsel %vm914, %v4764, 0
        %v4797 = vsel %vm915, %v4765, 0
        %v4798 = vsel %vm916, %v4766, 0
        %v4799 = vsel %vm917, %v4767, 0
        %s4800 = scalar_lea.vmem %s3, 96
        %v4801 = vld [vmem:[%s4800] sm:$0xf]
        %v4802 = vld [vmem:[%s4800 + $0x4] sm:$0xf]
        %v4803 = vld [vmem:[%s4800 + $0x8] sm:$0xf]
        %v4804 = vld [vmem:[%s4800 + $0xc] sm:$0xf]
        %v4805 = vld [vmem:[%s4800 + $0x10] sm:$0xf]
        %v4806 = vld [vmem:[%s4800 + $0x14] sm:$0xf]
        %v4807 = vld [vmem:[%s4800 + $0x18] sm:$0xf]
        %v4808 = vld [vmem:[%s4800 + $0x1c] sm:$0xf]
        %v4841 = vunpack.c.l.b16 %v4768
        %v4842 = vunpack.c.l.b16 %v4769
        %v4843 = vunpack.c.l.b16 %v4770
        %v4844 = vunpack.c.l.b16 %v4771
        %v4845 = vunpack.c.l.b16 %v4772
        %v4846 = vunpack.c.l.b16 %v4773
        %v4847 = vunpack.c.l.b16 %v4774
        %v4848 = vunpack.c.l.b16 %v4775
        %v4849 = vunpack.c.l.b16 %v4776
        %v4850 = vunpack.c.l.b16 %v4777
        %v4851 = vunpack.c.l.b16 %v4778
        %v4852 = vunpack.c.l.b16 %v4779
        %v4853 = vunpack.c.l.b16 %v4780
        %v4854 = vunpack.c.l.b16 %v4781
        %v4855 = vunpack.c.l.b16 %v4782
        %v4856 = vunpack.c.l.b16 %v4783
        %v4857 = vunpack.c.l.b16 %v4784
        %v4858 = vunpack.c.l.b16 %v4785
        %v4859 = vunpack.c.l.b16 %v4786
        %v4860 = vunpack.c.l.b16 %v4787
        %v4861 = vunpack.c.l.b16 %v4788
        %v4862 = vunpack.c.l.b16 %v4789
        %v4863 = vunpack.c.l.b16 %v4790
        %v4864 = vunpack.c.l.b16 %v4791
        %v4865 = vunpack.c.l.b16 %v4792
        %v4866 = vunpack.c.l.b16 %v4793
        %v4867 = vunpack.c.l.b16 %v4794
        %v4868 = vunpack.c.l.b16 %v4795
        %v4869 = vunpack.c.l.b16 %v4796
        %v4870 = vunpack.c.l.b16 %v4797
        %v4871 = vunpack.c.l.b16 %v4798
        %v4872 = vunpack.c.l.b16 %v4799
        %v4873 = vpack.c.b16 %v4842, %v4841
        %v4874 = vpack.c.b16 %v4844, %v4843
        %v4875 = vpack.c.b16 %v4846, %v4845
        %v4876 = vpack.c.b16 %v4848, %v4847
        %v4877 = vpack.c.b16 %v4850, %v4849
        %v4878 = vpack.c.b16 %v4852, %v4851
        %v4879 = vpack.c.b16 %v4854, %v4853
        %v4880 = vpack.c.b16 %v4856, %v4855
        %v4881 = vpack.c.b16 %v4858, %v4857
        %v4882 = vpack.c.b16 %v4860, %v4859
        %v4883 = vpack.c.b16 %v4862, %v4861
        %v4884 = vpack.c.b16 %v4864, %v4863
        %v4885 = vpack.c.b16 %v4866, %v4865
        %v4886 = vpack.c.b16 %v4868, %v4867
        %v4887 = vpack.c.b16 %v4870, %v4869
        %v4888 = vpack.c.b16 %v4872, %v4871
        %v4897 = vunpack.c.l.b16 %v4801
        %v4898 = vunpack.c.l.b16 %v4802
        %v4899 = vunpack.c.l.b16 %v4803
        %v4900 = vunpack.c.l.b16 %v4804
        %v4901 = vunpack.c.l.b16 %v4805
        %v4902 = vunpack.c.l.b16 %v4806
        %v4903 = vunpack.c.l.b16 %v4807
        %v4904 = vunpack.c.l.b16 %v4808
        %v4905 = vpack.c.b16 %v4898, %v4897
        %v4906 = vpack.c.b16 %v4900, %v4899
        %v4907 = vpack.c.b16 %v4902, %v4901
        %v4908 = vpack.c.b16 %v4904, %v4903
        %v4914 = vsel %vm3724, %v4873, 0
        %v4917 = vsel %vm3724, %v4874, 0
        %v4920 = vsel %vm3724, %v4875, 0
        %v4923 = vsel %vm3724, %v4876, 0
        %v4926 = vsel %vm3724, %v4877, 0
        %v4929 = vsel %vm3724, %v4878, 0
        %v4932 = vsel %vm3724, %v4879, 0
        %v4935 = vsel %vm3724, %v4880, 0
        %v4938 = vsel %vm3724, %v4881, 0
        %v4941 = vsel %vm3724, %v4882, 0
        %v4944 = vsel %vm3724, %v4883, 0
        %v4947 = vsel %vm3724, %v4884, 0
        %v4950 = vsel %vm3724, %v4885, 0
        %v4953 = vsel %vm3724, %v4886, 0
        %v4956 = vsel %vm3724, %v4887, 0
        %v4959 = vsel %vm3724, %v4888, 0
        %4961 = vmatpush.bf16.msra.mxu0 0
        %4962 = vmatpush.bf16.msra.mxu0 0
        %4963 = vmatpush.bf16.msra.mxu0 0
        %4964 = vmatpush.bf16.msra.mxu0 0
        %4965 = vmatpush.bf16.msra.mxu0 %v4908
        %4966 = vmatpush.bf16.msra.mxu0 %v4907
        %4967 = vmatpush.bf16.msra.mxu0 %v4906
        %4968 = vmatpush.bf16.msra.mxu0 %v4905
        %4969 = vmatmul.bf16.gmra.mxu0 %v4914
        %v4970 = vpop.f32.mrf.mxu0
        %v4971 = vadd.f32 0.0, %v4970
        %v4972 = vpop.f32.mrf.mxu0
        %v4973 = vadd.f32 0.0, %v4972
        %4974 = vmatmul.bf16.gmra.mxu0 %v4917
        %v4975 = vpop.f32.mrf.mxu0
        %v4976 = vadd.f32 0.0, %v4975
        %v4977 = vpop.f32.mrf.mxu0
        %v4978 = vadd.f32 0.0, %v4977
        %4979 = vmatmul.bf16.gmra.mxu0 %v4920
        %v4980 = vpop.f32.mrf.mxu0
        %v4981 = vadd.f32 0.0, %v4980
        %v4982 = vpop.f32.mrf.mxu0
        %v4983 = vadd.f32 0.0, %v4982
        %4984 = vmatmul.bf16.gmra.mxu0 %v4923
        %v4985 = vpop.f32.mrf.mxu0
        %v4986 = vadd.f32 0.0, %v4985
        %v4987 = vpop.f32.mrf.mxu0
        %v4988 = vadd.f32 0.0, %v4987
        %4989 = vmatmul.bf16.gmra.mxu0 %v4926
        %v4990 = vpop.f32.mrf.mxu0
        %v4991 = vadd.f32 0.0, %v4990
        %v4992 = vpop.f32.mrf.mxu0
        %v4993 = vadd.f32 0.0, %v4992
        %4994 = vmatmul.bf16.gmra.mxu0 %v4929
        %v4995 = vpop.f32.mrf.mxu0
        %v4996 = vadd.f32 0.0, %v4995
        %v4997 = vpop.f32.mrf.mxu0
        %v4998 = vadd.f32 0.0, %v4997
        %4999 = vmatmul.bf16.gmra.mxu0 %v4932
        %v5000 = vpop.f32.mrf.mxu0
        %v5001 = vadd.f32 0.0, %v5000
        %v5002 = vpop.f32.mrf.mxu0
        %v5003 = vadd.f32 0.0, %v5002
        %5004 = vmatmul.bf16.gmra.mxu0 %v4935
        %v5005 = vpop.f32.mrf.mxu0
        %v5006 = vadd.f32 0.0, %v5005
        %v5007 = vpop.f32.mrf.mxu0
        %v5008 = vadd.f32 0.0, %v5007
        %5009 = vmatmul.bf16.gmra.mxu0 %v4938
        %v5010 = vpop.f32.mrf.mxu0
        %v5011 = vadd.f32 0.0, %v5010
        %v5012 = vpop.f32.mrf.mxu0
        %v5013 = vadd.f32 0.0, %v5012
        %5014 = vmatmul.bf16.gmra.mxu0 %v4941
        %v5015 = vpop.f32.mrf.mxu0
        %v5016 = vadd.f32 0.0, %v5015
        %v5017 = vpop.f32.mrf.mxu0
        %v5018 = vadd.f32 0.0, %v5017
        %5019 = vmatmul.bf16.gmra.mxu0 %v4944
        %v5020 = vpop.f32.mrf.mxu0
        %v5021 = vadd.f32 0.0, %v5020
        %v5022 = vpop.f32.mrf.mxu0
        %v5023 = vadd.f32 0.0, %v5022
        %5024 = vmatmul.bf16.gmra.mxu0 %v4947
        %v5025 = vpop.f32.mrf.mxu0
        %v5026 = vadd.f32 0.0, %v5025
        %v5027 = vpop.f32.mrf.mxu0
        %v5028 = vadd.f32 0.0, %v5027
        %5029 = vmatmul.bf16.gmra.mxu0 %v4950
        %v5030 = vpop.f32.mrf.mxu0
        %v5031 = vadd.f32 0.0, %v5030
        %v5032 = vpop.f32.mrf.mxu0
        %v5033 = vadd.f32 0.0, %v5032
        %5034 = vmatmul.bf16.gmra.mxu0 %v4953
        %v5035 = vpop.f32.mrf.mxu0
        %v5036 = vadd.f32 0.0, %v5035
        %v5037 = vpop.f32.mrf.mxu0
        %v5038 = vadd.f32 0.0, %v5037
        %5039 = vmatmul.bf16.gmra.mxu0 %v4956
        %v5040 = vpop.f32.mrf.mxu0
        %v5041 = vadd.f32 0.0, %v5040
        %v5042 = vpop.f32.mrf.mxu0
        %v5043 = vadd.f32 0.0, %v5042
        %5044 = vmatmul.bf16.gmra.mxu0 %v4959
        %v5045 = vpop.f32.mrf.mxu0
        %v5046 = vadd.f32 0.0, %v5045
        %v5047 = vpop.f32.mrf.mxu0
        %v5048 = vadd.f32 0.0, %v5047
        %5049 = vdwg.mxu0
        %v5050 = vadd.f32 %v4672, %v4971
        %v5051 = vadd.f32 %v4673, %v4973
        %v5052 = vadd.f32 %v4674, %v4976
        %v5053 = vadd.f32 %v4675, %v4978
        %v5054 = vadd.f32 %v4676, %v4981
        %v5055 = vadd.f32 %v4677, %v4983
        %v5056 = vadd.f32 %v4678, %v4986
        %v5057 = vadd.f32 %v4679, %v4988
        %v5058 = vadd.f32 %v4680, %v4991
        %v5059 = vadd.f32 %v4681, %v4993
        %v5060 = vadd.f32 %v4682, %v4996
        %v5061 = vadd.f32 %v4683, %v4998
        %v5062 = vadd.f32 %v4684, %v5001
        %v5063 = vadd.f32 %v4685, %v5003
        %v5064 = vadd.f32 %v4686, %v5006
        %v5065 = vadd.f32 %v4687, %v5008
        %v5066 = vadd.f32 %v4688, %v5011
        %v5067 = vadd.f32 %v4689, %v5013
        %v5068 = vadd.f32 %v4690, %v5016
        %v5069 = vadd.f32 %v4691, %v5018
        %v5070 = vadd.f32 %v4692, %v5021
        %v5071 = vadd.f32 %v4693, %v5023
        %v5072 = vadd.f32 %v4694, %v5026
        %v5073 = vadd.f32 %v4695, %v5028
        %v5074 = vadd.f32 %v4696, %v5031
        %v5075 = vadd.f32 %v4697, %v5033
        %v5076 = vadd.f32 %v4698, %v5036
        %v5077 = vadd.f32 %v4699, %v5038
        %v5078 = vadd.f32 %v4700, %v5041
        %v5079 = vadd.f32 %v4701, %v5043
        %v5080 = vadd.f32 %v4702, %v5046
        %v5081 = vadd.f32 %v4703, %v5048
        %v5082 = vld [vmem:[#allocation2 + $0x18] sm:$0xff]
        %v5083 = vld [vmem:[#allocation2 + $0x20] sm:$0xff]
        %v5084 = vld [vmem:[#allocation2 + $0x28] sm:$0xff]
        %v5085 = vld [vmem:[#allocation2 + $0x30] sm:$0xff]
        %v5086 = vld [vmem:[#allocation2 + $0x38] sm:$0xff]
        %v5087 = vld [vmem:[#allocation2 + $0x40] sm:$0xff]
        %v5088 = vld [vmem:[#allocation2 + $0x48] sm:$0xff]
        %v5089 = vld [vmem:[#allocation2 + $0x50] sm:$0xff]
        %v5090 = vld [vmem:[#allocation2 + $0x58] sm:$0xff]
        %v5091 = vld [vmem:[#allocation2 + $0x60] sm:$0xff]
        %v5092 = vld [vmem:[#allocation2 + $0x68] sm:$0xff]
        %v5093 = vld [vmem:[#allocation2 + $0x70] sm:$0xff]
        %v5094 = vld [vmem:[#allocation2 + $0x78] sm:$0xff]
        %v5095 = vld [vmem:[#allocation2 + $0x80] sm:$0xff]
        %v5096 = vld [vmem:[#allocation2 + $0x88] sm:$0xff]
        %v5097 = vld [vmem:[#allocation2 + $0x90] sm:$0xff]
        %v5098 = vld [vmem:[#allocation2 + $0x98] sm:$0xff]
        %v5099 = vld [vmem:[#allocation2 + $0xa0] sm:$0xff]
        %v5100 = vld [vmem:[#allocation2 + $0xa8] sm:$0xff]
        %v5101 = vld [vmem:[#allocation2 + $0xb0] sm:$0xff]
        %v5102 = vld [vmem:[#allocation2 + $0xb8] sm:$0xff]
        %v5103 = vld [vmem:[#allocation2 + $0xc0] sm:$0xff]
        %v5104 = vld [vmem:[#allocation2 + $0xc8] sm:$0xff]
        %v5105 = vld [vmem:[#allocation2 + $0xd0] sm:$0xff]
        %v5106 = vld [vmem:[#allocation2 + $0xd8] sm:$0xff]
        %v5107 = vld [vmem:[#allocation2 + $0xe0] sm:$0xff]
        %v5108 = vld [vmem:[#allocation2 + $0xe8] sm:$0xff]
        %v5109 = vld [vmem:[#allocation2 + $0xf0] sm:$0xff]
        %v5110 = vld [vmem:[#allocation2 + $0xf8] sm:$0xff]
        %v5111 = vld [vmem:[#allocation2 + $0x100] sm:$0xff]
        %v5112 = vld [vmem:[#allocation2 + $0x108] sm:$0xff]
        %v5113 = vld [vmem:[#allocation2 + $0x110] sm:$0xff]
        %v5114 = vpack.c.bf16 %v5083, %v5082
        %v5115 = vpack.c.bf16 %v5085, %v5084
        %v5116 = vpack.c.bf16 %v5087, %v5086
        %v5117 = vpack.c.bf16 %v5089, %v5088
        %v5118 = vpack.c.bf16 %v5091, %v5090
        %v5119 = vpack.c.bf16 %v5093, %v5092
        %v5120 = vpack.c.bf16 %v5095, %v5094
        %v5121 = vpack.c.bf16 %v5097, %v5096
        %v5122 = vpack.c.bf16 %v5099, %v5098
        %v5123 = vpack.c.bf16 %v5101, %v5100
        %v5124 = vpack.c.bf16 %v5103, %v5102
        %v5125 = vpack.c.bf16 %v5105, %v5104
        %v5126 = vpack.c.bf16 %v5107, %v5106
        %v5127 = vpack.c.bf16 %v5109, %v5108
        %v5128 = vpack.c.bf16 %v5111, %v5110
        %v5129 = vpack.c.bf16 %v5113, %v5112
        %s5130 = scalar_lea.vmem %s3, 128
        %v5131 = vld [vmem:[%s5130] sm:$0xf]
        %v5132 = vld [vmem:[%s5130 + $0x4] sm:$0xf]
        %v5133 = vld [vmem:[%s5130 + $0x8] sm:$0xf]
        %v5134 = vld [vmem:[%s5130 + $0xc] sm:$0xf]
        %v5135 = vld [vmem:[%s5130 + $0x10] sm:$0xf]
        %v5136 = vld [vmem:[%s5130 + $0x14] sm:$0xf]
        %v5137 = vld [vmem:[%s5130 + $0x18] sm:$0xf]
        %v5138 = vld [vmem:[%s5130 + $0x1c] sm:$0xf]
        %v5147 = vunpack.c.l.b16 %v5131
        %v5148 = vunpack.c.l.b16 %v5132
        %v5149 = vunpack.c.l.b16 %v5133
        %v5150 = vunpack.c.l.b16 %v5134
        %v5151 = vunpack.c.l.b16 %v5135
        %v5152 = vunpack.c.l.b16 %v5136
        %v5153 = vunpack.c.l.b16 %v5137
        %v5154 = vunpack.c.l.b16 %v5138
        %v5155 = vpack.c.b16 %v5148, %v5147
        %v5156 = vpack.c.b16 %v5150, %v5149
        %v5157 = vpack.c.b16 %v5152, %v5151
        %v5158 = vpack.c.b16 %v5154, %v5153
        %v5164 = vsel %vm3724, %v5114, 0
        %v5167 = vsel %vm3724, %v5115, 0
        %v5170 = vsel %vm3724, %v5116, 0
        %v5173 = vsel %vm3724, %v5117, 0
        %v5176 = vsel %vm3724, %v5118, 0
        %v5179 = vsel %vm3724, %v5119, 0
        %v5182 = vsel %vm3724, %v5120, 0
        %v5185 = vsel %vm3724, %v5121, 0
        %v5188 = vsel %vm3724, %v5122, 0
        %v5191 = vsel %vm3724, %v5123, 0
        %v5194 = vsel %vm3724, %v5124, 0
        %v5197 = vsel %vm3724, %v5125, 0
        %v5200 = vsel %vm3724, %v5126, 0
        %v5203 = vsel %vm3724, %v5127, 0
        %v5206 = vsel %vm3724, %v5128, 0
        %v5209 = vsel %vm3724, %v5129, 0
        %5211 = vmatpush.bf16.msra.mxu0 0
        %5212 = vmatpush.bf16.msra.mxu0 0
        %5213 = vmatpush.bf16.msra.mxu0 0
        %5214 = vmatpush.bf16.msra.mxu0 0
        %5215 = vmatpush.bf16.msra.mxu0 %v5158
        %5216 = vmatpush.bf16.msra.mxu0 %v5157
        %5217 = vmatpush.bf16.msra.mxu0 %v5156
        %5218 = vmatpush.bf16.msra.mxu0 %v5155
        %5219 = vmatmul.bf16.gmra.mxu0 %v5164
        %v5220 = vpop.f32.mrf.mxu0
        %v5221 = vadd.f32 0.0, %v5220
        %v5222 = vpop.f32.mrf.mxu0
        %v5223 = vadd.f32 0.0, %v5222
        %5224 = vmatmul.bf16.gmra.mxu0 %v5167
        %v5225 = vpop.f32.mrf.mxu0
        %v5226 = vadd.f32 0.0, %v5225
        %v5227 = vpop.f32.mrf.mxu0
        %v5228 = vadd.f32 0.0, %v5227
        %5229 = vmatmul.bf16.gmra.mxu0 %v5170
        %v5230 = vpop.f32.mrf.mxu0
        %v5231 = vadd.f32 0.0, %v5230
        %v5232 = vpop.f32.mrf.mxu0
        %v5233 = vadd.f32 0.0, %v5232
        %5234 = vmatmul.bf16.gmra.mxu0 %v5173
        %v5235 = vpop.f32.mrf.mxu0
        %v5236 = vadd.f32 0.0, %v5235
        %v5237 = vpop.f32.mrf.mxu0
        %v5238 = vadd.f32 0.0, %v5237
        %5239 = vmatmul.bf16.gmra.mxu0 %v5176
        %v5240 = vpop.f32.mrf.mxu0
        %v5241 = vadd.f32 0.0, %v5240
        %v5242 = vpop.f32.mrf.mxu0
        %v5243 = vadd.f32 0.0, %v5242
        %5244 = vmatmul.bf16.gmra.mxu0 %v5179
        %v5245 = vpop.f32.mrf.mxu0
        %v5246 = vadd.f32 0.0, %v5245
        %v5247 = vpop.f32.mrf.mxu0
        %v5248 = vadd.f32 0.0, %v5247
        %5249 = vmatmul.bf16.gmra.mxu0 %v5182
        %v5250 = vpop.f32.mrf.mxu0
        %v5251 = vadd.f32 0.0, %v5250
        %v5252 = vpop.f32.mrf.mxu0
        %v5253 = vadd.f32 0.0, %v5252
        %5254 = vmatmul.bf16.gmra.mxu0 %v5185
        %v5255 = vpop.f32.mrf.mxu0
        %v5256 = vadd.f32 0.0, %v5255
        %v5257 = vpop.f32.mrf.mxu0
        %v5258 = vadd.f32 0.0, %v5257
        %5259 = vmatmul.bf16.gmra.mxu0 %v5188
        %v5260 = vpop.f32.mrf.mxu0
        %v5261 = vadd.f32 0.0, %v5260
        %v5262 = vpop.f32.mrf.mxu0
        %v5263 = vadd.f32 0.0, %v5262
        %5264 = vmatmul.bf16.gmra.mxu0 %v5191
        %v5265 = vpop.f32.mrf.mxu0
        %v5266 = vadd.f32 0.0, %v5265
        %v5267 = vpop.f32.mrf.mxu0
        %v5268 = vadd.f32 0.0, %v5267
        %5269 = vmatmul.bf16.gmra.mxu0 %v5194
        %v5270 = vpop.f32.mrf.mxu0
        %v5271 = vadd.f32 0.0, %v5270
        %v5272 = vpop.f32.mrf.mxu0
        %v5273 = vadd.f32 0.0, %v5272
        %5274 = vmatmul.bf16.gmra.mxu0 %v5197
        %v5275 = vpop.f32.mrf.mxu0
        %v5276 = vadd.f32 0.0, %v5275
        %v5277 = vpop.f32.mrf.mxu0
        %v5278 = vadd.f32 0.0, %v5277
        %5279 = vmatmul.bf16.gmra.mxu0 %v5200
        %v5280 = vpop.f32.mrf.mxu0
        %v5281 = vadd.f32 0.0, %v5280
        %v5282 = vpop.f32.mrf.mxu0
        %v5283 = vadd.f32 0.0, %v5282
        %5284 = vmatmul.bf16.gmra.mxu0 %v5203
        %v5285 = vpop.f32.mrf.mxu0
        %v5286 = vadd.f32 0.0, %v5285
        %v5287 = vpop.f32.mrf.mxu0
        %v5288 = vadd.f32 0.0, %v5287
        %5289 = vmatmul.bf16.gmra.mxu0 %v5206
        %v5290 = vpop.f32.mrf.mxu0
        %v5291 = vadd.f32 0.0, %v5290
        %v5292 = vpop.f32.mrf.mxu0
        %v5293 = vadd.f32 0.0, %v5292
        %5294 = vmatmul.bf16.gmra.mxu0 %v5209
        %v5295 = vpop.f32.mrf.mxu0
        %v5296 = vadd.f32 0.0, %v5295
        %v5297 = vpop.f32.mrf.mxu0
        %v5298 = vadd.f32 0.0, %v5297
        %5299 = vdwg.mxu0
        %v5300 = vadd.f32 %v5050, %v5221
        %v5301 = vadd.f32 %v5051, %v5223
        %v5302 = vadd.f32 %v5052, %v5226
        %v5303 = vadd.f32 %v5053, %v5228
        %v5304 = vadd.f32 %v5054, %v5231
        %v5305 = vadd.f32 %v5055, %v5233
        %v5306 = vadd.f32 %v5056, %v5236
        %v5307 = vadd.f32 %v5057, %v5238
        %v5308 = vadd.f32 %v5058, %v5241
        %v5309 = vadd.f32 %v5059, %v5243
        %v5310 = vadd.f32 %v5060, %v5246
        %v5311 = vadd.f32 %v5061, %v5248
        %v5312 = vadd.f32 %v5062, %v5251
        %v5313 = vadd.f32 %v5063, %v5253
        %v5314 = vadd.f32 %v5064, %v5256
        %v5315 = vadd.f32 %v5065, %v5258
        %v5316 = vadd.f32 %v5066, %v5261
        %v5317 = vadd.f32 %v5067, %v5263
        %v5318 = vadd.f32 %v5068, %v5266
        %v5319 = vadd.f32 %v5069, %v5268
        %v5320 = vadd.f32 %v5070, %v5271
        %v5321 = vadd.f32 %v5071, %v5273
        %v5322 = vadd.f32 %v5072, %v5276
        %v5323 = vadd.f32 %v5073, %v5278
        %v5324 = vadd.f32 %v5074, %v5281
        %v5325 = vadd.f32 %v5075, %v5283
        %v5326 = vadd.f32 %v5076, %v5286
        %v5327 = vadd.f32 %v5077, %v5288
        %v5328 = vadd.f32 %v5078, %v5291
        %v5329 = vadd.f32 %v5079, %v5293
        %v5330 = vadd.f32 %v5080, %v5296
        %v5331 = vadd.f32 %v5081, %v5298
        %v5332 = vld [vmem:[#allocation2 + $0x19] sm:$0xff]
        %v5333 = vld [vmem:[#allocation2 + $0x21] sm:$0xff]
        %v5334 = vld [vmem:[#allocation2 + $0x29] sm:$0xff]
        %v5335 = vld [vmem:[#allocation2 + $0x31] sm:$0xff]
        %v5336 = vld [vmem:[#allocation2 + $0x39] sm:$0xff]
        %v5337 = vld [vmem:[#allocation2 + $0x41] sm:$0xff]
        %v5338 = vld [vmem:[#allocation2 + $0x49] sm:$0xff]
        %v5339 = vld [vmem:[#allocation2 + $0x51] sm:$0xff]
        %v5340 = vld [vmem:[#allocation2 + $0x59] sm:$0xff]
        %v5341 = vld [vmem:[#allocation2 + $0x61] sm:$0xff]
        %v5342 = vld [vmem:[#allocation2 + $0x69] sm:$0xff]
        %v5343 = vld [vmem:[#allocation2 + $0x71] sm:$0xff]
        %v5344 = vld [vmem:[#allocation2 + $0x79] sm:$0xff]
        %v5345 = vld [vmem:[#allocation2 + $0x81] sm:$0xff]
        %v5346 = vld [vmem:[#allocation2 + $0x89] sm:$0xff]
        %v5347 = vld [vmem:[#allocation2 + $0x91] sm:$0xff]
        %v5348 = vld [vmem:[#allocation2 + $0x99] sm:$0xff]
        %v5349 = vld [vmem:[#allocation2 + $0xa1] sm:$0xff]
        %v5350 = vld [vmem:[#allocation2 + $0xa9] sm:$0xff]
        %v5351 = vld [vmem:[#allocation2 + $0xb1] sm:$0xff]
        %v5352 = vld [vmem:[#allocation2 + $0xb9] sm:$0xff]
        %v5353 = vld [vmem:[#allocation2 + $0xc1] sm:$0xff]
        %v5354 = vld [vmem:[#allocation2 + $0xc9] sm:$0xff]
        %v5355 = vld [vmem:[#allocation2 + $0xd1] sm:$0xff]
        %v5356 = vld [vmem:[#allocation2 + $0xd9] sm:$0xff]
        %v5357 = vld [vmem:[#allocation2 + $0xe1] sm:$0xff]
        %v5358 = vld [vmem:[#allocation2 + $0xe9] sm:$0xff]
        %v5359 = vld [vmem:[#allocation2 + $0xf1] sm:$0xff]
        %v5360 = vld [vmem:[#allocation2 + $0xf9] sm:$0xff]
        %v5361 = vld [vmem:[#allocation2 + $0x101] sm:$0xff]
        %v5362 = vld [vmem:[#allocation2 + $0x109] sm:$0xff]
        %v5363 = vld [vmem:[#allocation2 + $0x111] sm:$0xff]
        %v5364 = vpack.c.bf16 %v5332, %v5332
        %v5365 = vpack.c.bf16 %v5333, %v5333
        %v5366 = vpack.c.bf16 %v5334, %v5334
        %v5367 = vpack.c.bf16 %v5335, %v5335
        %v5368 = vpack.c.bf16 %v5336, %v5336
        %v5369 = vpack.c.bf16 %v5337, %v5337
        %v5370 = vpack.c.bf16 %v5338, %v5338
        %v5371 = vpack.c.bf16 %v5339, %v5339
        %v5372 = vpack.c.bf16 %v5340, %v5340
        %v5373 = vpack.c.bf16 %v5341, %v5341
        %v5374 = vpack.c.bf16 %v5342, %v5342
        %v5375 = vpack.c.bf16 %v5343, %v5343
        %v5376 = vpack.c.bf16 %v5344, %v5344
        %v5377 = vpack.c.bf16 %v5345, %v5345
        %v5378 = vpack.c.bf16 %v5346, %v5346
        %v5379 = vpack.c.bf16 %v5347, %v5347
        %v5380 = vpack.c.bf16 %v5348, %v5348
        %v5381 = vpack.c.bf16 %v5349, %v5349
        %v5382 = vpack.c.bf16 %v5350, %v5350
        %v5383 = vpack.c.bf16 %v5351, %v5351
        %v5384 = vpack.c.bf16 %v5352, %v5352
        %v5385 = vpack.c.bf16 %v5353, %v5353
        %v5386 = vpack.c.bf16 %v5354, %v5354
        %v5387 = vpack.c.bf16 %v5355, %v5355
        %v5388 = vpack.c.bf16 %v5356, %v5356
        %v5389 = vpack.c.bf16 %v5357, %v5357
        %v5390 = vpack.c.bf16 %v5358, %v5358
        %v5391 = vpack.c.bf16 %v5359, %v5359
        %v5392 = vpack.c.bf16 %v5360, %v5360
        %v5393 = vpack.c.bf16 %v5361, %v5361
        %v5394 = vpack.c.bf16 %v5362, %v5362
        %v5395 = vpack.c.bf16 %v5363, %v5363
        %v5396 = vsel %vm1494, %v5364, 0
        %v5397 = vsel %vm1495, %v5365, 0
        %v5398 = vsel %vm1496, %v5366, 0
        %v5399 = vsel %vm1497, %v5367, 0
        %v5400 = vsel %vm1498, %v5368, 0
        %v5401 = vsel %vm1499, %v5369, 0
        %v5402 = vsel %vm1500, %v5370, 0
        %v5403 = vsel %vm1501, %v5371, 0
        %v5404 = vsel %vm1502, %v5372, 0
        %v5405 = vsel %vm1503, %v5373, 0
        %v5406 = vsel %vm1504, %v5374, 0
        %v5407 = vsel %vm1505, %v5375, 0
        %v5408 = vsel %vm1506, %v5376, 0
        %v5409 = vsel %vm1507, %v5377, 0
        %v5410 = vsel %vm1508, %v5378, 0
        %v5411 = vsel %vm1509, %v5379, 0
        %v5412 = vsel %vm1510, %v5380, 0
        %v5413 = vsel %vm1511, %v5381, 0
        %v5414 = vsel %vm1512, %v5382, 0
        %v5415 = vsel %vm1513, %v5383, 0
        %v5416 = vsel %vm1514, %v5384, 0
        %v5417 = vsel %vm1515, %v5385, 0
        %v5418 = vsel %vm1516, %v5386, 0
        %v5419 = vsel %vm1517, %v5387, 0
        %v5420 = vsel %vm1518, %v5388, 0
        %v5421 = vsel %vm1519, %v5389, 0
        %v5422 = vsel %vm1520, %v5390, 0
        %v5423 = vsel %vm1521, %v5391, 0
        %v5424 = vsel %vm1522, %v5392, 0
        %v5425 = vsel %vm1523, %v5393, 0
        %v5426 = vsel %vm1524, %v5394, 0
        %v5427 = vsel %vm1525, %v5395, 0
        %s5428 = scalar_lea.vmem %s3, 160
        %v5429 = vld [vmem:[%s5428] sm:$0xf]
        %v5430 = vld [vmem:[%s5428 + $0x4] sm:$0xf]
        %v5431 = vld [vmem:[%s5428 + $0x8] sm:$0xf]
        %v5432 = vld [vmem:[%s5428 + $0xc] sm:$0xf]
        %v5433 = vld [vmem:[%s5428 + $0x10] sm:$0xf]
        %v5434 = vld [vmem:[%s5428 + $0x14] sm:$0xf]
        %v5435 = vld [vmem:[%s5428 + $0x18] sm:$0xf]
        %v5436 = vld [vmem:[%s5428 + $0x1c] sm:$0xf]
        %v5469 = vunpack.c.l.b16 %v5396
        %v5470 = vunpack.c.l.b16 %v5397
        %v5471 = vunpack.c.l.b16 %v5398
        %v5472 = vunpack.c.l.b16 %v5399
        %v5473 = vunpack.c.l.b16 %v5400
        %v5474 = vunpack.c.l.b16 %v5401
        %v5475 = vunpack.c.l.b16 %v5402
        %v5476 = vunpack.c.l.b16 %v5403
        %v5477 = vunpack.c.l.b16 %v5404
        %v5478 = vunpack.c.l.b16 %v5405
        %v5479 = vunpack.c.l.b16 %v5406
        %v5480 = vunpack.c.l.b16 %v5407
        %v5481 = vunpack.c.l.b16 %v5408
        %v5482 = vunpack.c.l.b16 %v5409
        %v5483 = vunpack.c.l.b16 %v5410
        %v5484 = vunpack.c.l.b16 %v5411
        %v5485 = vunpack.c.l.b16 %v5412
        %v5486 = vunpack.c.l.b16 %v5413
        %v5487 = vunpack.c.l.b16 %v5414
        %v5488 = vunpack.c.l.b16 %v5415
        %v5489 = vunpack.c.l.b16 %v5416
        %v5490 = vunpack.c.l.b16 %v5417
        %v5491 = vunpack.c.l.b16 %v5418
        %v5492 = vunpack.c.l.b16 %v5419
        %v5493 = vunpack.c.l.b16 %v5420
        %v5494 = vunpack.c.l.b16 %v5421
        %v5495 = vunpack.c.l.b16 %v5422
        %v5496 = vunpack.c.l.b16 %v5423
        %v5497 = vunpack.c.l.b16 %v5424
        %v5498 = vunpack.c.l.b16 %v5425
        %v5499 = vunpack.c.l.b16 %v5426
        %v5500 = vunpack.c.l.b16 %v5427
        %v5501 = vpack.c.b16 %v5470, %v5469
        %v5502 = vpack.c.b16 %v5472, %v5471
        %v5503 = vpack.c.b16 %v5474, %v5473
        %v5504 = vpack.c.b16 %v5476, %v5475
        %v5505 = vpack.c.b16 %v5478, %v5477
        %v5506 = vpack.c.b16 %v5480, %v5479
        %v5507 = vpack.c.b16 %v5482, %v5481
        %v5508 = vpack.c.b16 %v5484, %v5483
        %v5509 = vpack.c.b16 %v5486, %v5485
        %v5510 = vpack.c.b16 %v5488, %v5487
        %v5511 = vpack.c.b16 %v5490, %v5489
        %v5512 = vpack.c.b16 %v5492, %v5491
        %v5513 = vpack.c.b16 %v5494, %v5493
        %v5514 = vpack.c.b16 %v5496, %v5495
        %v5515 = vpack.c.b16 %v5498, %v5497
        %v5516 = vpack.c.b16 %v5500, %v5499
        %v5525 = vunpack.c.l.b16 %v5429
        %v5526 = vunpack.c.l.b16 %v5430
        %v5527 = vunpack.c.l.b16 %v5431
        %v5528 = vunpack.c.l.b16 %v5432
        %v5529 = vunpack.c.l.b16 %v5433
        %v5530 = vunpack.c.l.b16 %v5434
        %v5531 = vunpack.c.l.b16 %v5435
        %v5532 = vunpack.c.l.b16 %v5436
        %v5533 = vpack.c.b16 %v5526, %v5525
        %v5534 = vpack.c.b16 %v5528, %v5527
        %v5535 = vpack.c.b16 %v5530, %v5529
        %v5536 = vpack.c.b16 %v5532, %v5531
        %v5542 = vsel %vm3724, %v5501, 0
        %v5545 = vsel %vm3724, %v5502, 0
        %v5548 = vsel %vm3724, %v5503, 0
        %v5551 = vsel %vm3724, %v5504, 0
        %v5554 = vsel %vm3724, %v5505, 0
        %v5557 = vsel %vm3724, %v5506, 0
        %v5560 = vsel %vm3724, %v5507, 0
        %v5563 = vsel %vm3724, %v5508, 0
        %v5566 = vsel %vm3724, %v5509, 0
        %v5569 = vsel %vm3724, %v5510, 0
        %v5572 = vsel %vm3724, %v5511, 0
        %v5575 = vsel %vm3724, %v5512, 0
        %v5578 = vsel %vm3724, %v5513, 0
        %v5581 = vsel %vm3724, %v5514, 0
        %v5584 = vsel %vm3724, %v5515, 0
        %v5587 = vsel %vm3724, %v5516, 0
        %5589 = vmatpush.bf16.msra.mxu0 0
        %5590 = vmatpush.bf16.msra.mxu0 0
        %5591 = vmatpush.bf16.msra.mxu0 0
        %5592 = vmatpush.bf16.msra.mxu0 0
        %5593 = vmatpush.bf16.msra.mxu0 %v5536
        %5594 = vmatpush.bf16.msra.mxu0 %v5535
        %5595 = vmatpush.bf16.msra.mxu0 %v5534
        %5596 = vmatpush.bf16.msra.mxu0 %v5533
        %5597 = vmatmul.bf16.gmra.mxu0 %v5542
        %v5598 = vpop.f32.mrf.mxu0
        %v5599 = vadd.f32 0.0, %v5598
        %v5600 = vpop.f32.mrf.mxu0
        %v5601 = vadd.f32 0.0, %v5600
        %5602 = vmatmul.bf16.gmra.mxu0 %v5545
        %v5603 = vpop.f32.mrf.mxu0
        %v5604 = vadd.f32 0.0, %v5603
        %v5605 = vpop.f32.mrf.mxu0
        %v5606 = vadd.f32 0.0, %v5605
        %5607 = vmatmul.bf16.gmra.mxu0 %v5548
        %v5608 = vpop.f32.mrf.mxu0
        %v5609 = vadd.f32 0.0, %v5608
        %v5610 = vpop.f32.mrf.mxu0
        %v5611 = vadd.f32 0.0, %v5610
        %5612 = vmatmul.bf16.gmra.mxu0 %v5551
        %v5613 = vpop.f32.mrf.mxu0
        %v5614 = vadd.f32 0.0, %v5613
        %v5615 = vpop.f32.mrf.mxu0
        %v5616 = vadd.f32 0.0, %v5615
        %5617 = vmatmul.bf16.gmra.mxu0 %v5554
        %v5618 = vpop.f32.mrf.mxu0
        %v5619 = vadd.f32 0.0, %v5618
        %v5620 = vpop.f32.mrf.mxu0
        %v5621 = vadd.f32 0.0, %v5620
        %5622 = vmatmul.bf16.gmra.mxu0 %v5557
        %v5623 = vpop.f32.mrf.mxu0
        %v5624 = vadd.f32 0.0, %v5623
        %v5625 = vpop.f32.mrf.mxu0
        %v5626 = vadd.f32 0.0, %v5625
        %5627 = vmatmul.bf16.gmra.mxu0 %v5560
        %v5628 = vpop.f32.mrf.mxu0
        %v5629 = vadd.f32 0.0, %v5628
        %v5630 = vpop.f32.mrf.mxu0
        %v5631 = vadd.f32 0.0, %v5630
        %5632 = vmatmul.bf16.gmra.mxu0 %v5563
        %v5633 = vpop.f32.mrf.mxu0
        %v5634 = vadd.f32 0.0, %v5633
        %v5635 = vpop.f32.mrf.mxu0
        %v5636 = vadd.f32 0.0, %v5635
        %5637 = vmatmul.bf16.gmra.mxu0 %v5566
        %v5638 = vpop.f32.mrf.mxu0
        %v5639 = vadd.f32 0.0, %v5638
        %v5640 = vpop.f32.mrf.mxu0
        %v5641 = vadd.f32 0.0, %v5640
        %5642 = vmatmul.bf16.gmra.mxu0 %v5569
        %v5643 = vpop.f32.mrf.mxu0
        %v5644 = vadd.f32 0.0, %v5643
        %v5645 = vpop.f32.mrf.mxu0
        %v5646 = vadd.f32 0.0, %v5645
        %5647 = vmatmul.bf16.gmra.mxu0 %v5572
        %v5648 = vpop.f32.mrf.mxu0
        %v5649 = vadd.f32 0.0, %v5648
        %v5650 = vpop.f32.mrf.mxu0
        %v5651 = vadd.f32 0.0, %v5650
        %5652 = vmatmul.bf16.gmra.mxu0 %v5575
        %v5653 = vpop.f32.mrf.mxu0
        %v5654 = vadd.f32 0.0, %v5653
        %v5655 = vpop.f32.mrf.mxu0
        %v5656 = vadd.f32 0.0, %v5655
        %5657 = vmatmul.bf16.gmra.mxu0 %v5578
        %v5658 = vpop.f32.mrf.mxu0
        %v5659 = vadd.f32 0.0, %v5658
        %v5660 = vpop.f32.mrf.mxu0
        %v5661 = vadd.f32 0.0, %v5660
        %5662 = vmatmul.bf16.gmra.mxu0 %v5581
        %v5663 = vpop.f32.mrf.mxu0
        %v5664 = vadd.f32 0.0, %v5663
        %v5665 = vpop.f32.mrf.mxu0
        %v5666 = vadd.f32 0.0, %v5665
        %5667 = vmatmul.bf16.gmra.mxu0 %v5584
        %v5668 = vpop.f32.mrf.mxu0
        %v5669 = vadd.f32 0.0, %v5668
        %v5670 = vpop.f32.mrf.mxu0
        %v5671 = vadd.f32 0.0, %v5670
        %5672 = vmatmul.bf16.gmra.mxu0 %v5587
        %v5673 = vpop.f32.mrf.mxu0
        %v5674 = vadd.f32 0.0, %v5673
        %v5675 = vpop.f32.mrf.mxu0
        %v5676 = vadd.f32 0.0, %v5675
        %5677 = vdwg.mxu0
        %v5678 = vadd.f32 %v5300, %v5599
        %v5679 = vadd.f32 %v5301, %v5601
        %v5680 = vadd.f32 %v5302, %v5604
        %v5681 = vadd.f32 %v5303, %v5606
        %v5682 = vadd.f32 %v5304, %v5609
        %v5683 = vadd.f32 %v5305, %v5611
        %v5684 = vadd.f32 %v5306, %v5614
        %v5685 = vadd.f32 %v5307, %v5616
        %v5686 = vadd.f32 %v5308, %v5619
        %v5687 = vadd.f32 %v5309, %v5621
        %v5688 = vadd.f32 %v5310, %v5624
        %v5689 = vadd.f32 %v5311, %v5626
        %v5690 = vadd.f32 %v5312, %v5629
        %v5691 = vadd.f32 %v5313, %v5631
        %v5692 = vadd.f32 %v5314, %v5634
        %v5693 = vadd.f32 %v5315, %v5636
        %v5694 = vadd.f32 %v5316, %v5639
        %v5695 = vadd.f32 %v5317, %v5641
        %v5696 = vadd.f32 %v5318, %v5644
        %v5697 = vadd.f32 %v5319, %v5646
        %v5698 = vadd.f32 %v5320, %v5649
        %v5699 = vadd.f32 %v5321, %v5651
        %v5700 = vadd.f32 %v5322, %v5654
        %v5701 = vadd.f32 %v5323, %v5656
        %v5702 = vadd.f32 %v5324, %v5659
        %v5703 = vadd.f32 %v5325, %v5661
        %v5704 = vadd.f32 %v5326, %v5664
        %v5705 = vadd.f32 %v5327, %v5666
        %v5706 = vadd.f32 %v5328, %v5669
        %v5707 = vadd.f32 %v5329, %v5671
        %v5708 = vadd.f32 %v5330, %v5674
        %v5709 = vadd.f32 %v5331, %v5676
        %v5710 = vld [vmem:[#allocation2 + $0x27] sm:$0xff]
        %v5711 = vld [vmem:[#allocation2 + $0x2f] sm:$0xff]
        %v5712 = vld [vmem:[#allocation2 + $0x37] sm:$0xff]
        %v5713 = vld [vmem:[#allocation2 + $0x3f] sm:$0xff]
        %v5714 = vld [vmem:[#allocation2 + $0x47] sm:$0xff]
        %v5715 = vld [vmem:[#allocation2 + $0x4f] sm:$0xff]
        %v5716 = vld [vmem:[#allocation2 + $0x57] sm:$0xff]
        %v5717 = vld [vmem:[#allocation2 + $0x5f] sm:$0xff]
        %v5718 = vld [vmem:[#allocation2 + $0x67] sm:$0xff]
        %v5719 = vld [vmem:[#allocation2 + $0x6f] sm:$0xff]
        %v5720 = vld [vmem:[#allocation2 + $0x77] sm:$0xff]
        %v5721 = vld [vmem:[#allocation2 + $0x7f] sm:$0xff]
        %v5722 = vld [vmem:[#allocation2 + $0x87] sm:$0xff]
        %v5723 = vld [vmem:[#allocation2 + $0x8f] sm:$0xff]
        %v5724 = vld [vmem:[#allocation2 + $0x97] sm:$0xff]
        %v5725 = vld [vmem:[#allocation2 + $0x9f] sm:$0xff]
        %v5726 = vld [vmem:[#allocation2 + $0xa7] sm:$0xff]
        %v5727 = vld [vmem:[#allocation2 + $0xaf] sm:$0xff]
        %v5728 = vld [vmem:[#allocation2 + $0xb7] sm:$0xff]
        %v5729 = vld [vmem:[#allocation2 + $0xbf] sm:$0xff]
        %v5730 = vld [vmem:[#allocation2 + $0xc7] sm:$0xff]
        %v5731 = vld [vmem:[#allocation2 + $0xcf] sm:$0xff]
        %v5732 = vld [vmem:[#allocation2 + $0xd7] sm:$0xff]
        %v5733 = vld [vmem:[#allocation2 + $0xdf] sm:$0xff]
        %v5734 = vld [vmem:[#allocation2 + $0xe7] sm:$0xff]
        %v5735 = vld [vmem:[#allocation2 + $0xef] sm:$0xff]
        %v5736 = vld [vmem:[#allocation2 + $0xf7] sm:$0xff]
        %v5737 = vld [vmem:[#allocation2 + $0xff] sm:$0xff]
        %v5738 = vld [vmem:[#allocation2 + $0x107] sm:$0xff]
        %v5739 = vld [vmem:[#allocation2 + $0x10f] sm:$0xff]
        %v5740 = vld [vmem:[#allocation2 + $0x117] sm:$0xff]
        %v5741 = vld [vmem:[#allocation2 + $0x11f] sm:$0xff]
        %v5742 = vpack.c.bf16 %v5710, %v5710
        %v5743 = vpack.c.bf16 %v5711, %v5711
        %v5744 = vpack.c.bf16 %v5712, %v5712
        %v5745 = vpack.c.bf16 %v5713, %v5713
        %v5746 = vpack.c.bf16 %v5714, %v5714
        %v5747 = vpack.c.bf16 %v5715, %v5715
        %v5748 = vpack.c.bf16 %v5716, %v5716
        %v5749 = vpack.c.bf16 %v5717, %v5717
        %v5750 = vpack.c.bf16 %v5718, %v5718
        %v5751 = vpack.c.bf16 %v5719, %v5719
        %v5752 = vpack.c.bf16 %v5720, %v5720
        %v5753 = vpack.c.bf16 %v5721, %v5721
        %v5754 = vpack.c.bf16 %v5722, %v5722
        %v5755 = vpack.c.bf16 %v5723, %v5723
        %v5756 = vpack.c.bf16 %v5724, %v5724
        %v5757 = vpack.c.bf16 %v5725, %v5725
        %v5758 = vpack.c.bf16 %v5726, %v5726
        %v5759 = vpack.c.bf16 %v5727, %v5727
        %v5760 = vpack.c.bf16 %v5728, %v5728
        %v5761 = vpack.c.bf16 %v5729, %v5729
        %v5762 = vpack.c.bf16 %v5730, %v5730
        %v5763 = vpack.c.bf16 %v5731, %v5731
        %v5764 = vpack.c.bf16 %v5732, %v5732
        %v5765 = vpack.c.bf16 %v5733, %v5733
        %v5766 = vpack.c.bf16 %v5734, %v5734
        %v5767 = vpack.c.bf16 %v5735, %v5735
        %v5768 = vpack.c.bf16 %v5736, %v5736
        %v5769 = vpack.c.bf16 %v5737, %v5737
        %v5770 = vpack.c.bf16 %v5738, %v5738
        %v5771 = vpack.c.bf16 %v5739, %v5739
        %v5772 = vpack.c.bf16 %v5740, %v5740
        %v5773 = vpack.c.bf16 %v5741, %v5741
        %v5774 = vsel %vm886, %v5742, 0
        %v5775 = vsel %vm887, %v5743, 0
        %v5776 = vsel %vm888, %v5744, 0
        %v5777 = vsel %vm889, %v5745, 0
        %v5778 = vsel %vm890, %v5746, 0
        %v5779 = vsel %vm891, %v5747, 0
        %v5780 = vsel %vm892, %v5748, 0
        %v5781 = vsel %vm893, %v5749, 0
        %v5782 = vsel %vm894, %v5750, 0
        %v5783 = vsel %vm895, %v5751, 0
        %v5784 = vsel %vm896, %v5752, 0
        %v5785 = vsel %vm897, %v5753, 0
        %v5786 = vsel %vm898, %v5754, 0
        %v5787 = vsel %vm899, %v5755, 0
        %v5788 = vsel %vm900, %v5756, 0
        %v5789 = vsel %vm901, %v5757, 0
        %v5790 = vsel %vm902, %v5758, 0
        %v5791 = vsel %vm903, %v5759, 0
        %v5792 = vsel %vm904, %v5760, 0
        %v5793 = vsel %vm905, %v5761, 0
        %v5794 = vsel %vm906, %v5762, 0
        %v5795 = vsel %vm907, %v5763, 0
        %v5796 = vsel %vm908, %v5764, 0
        %v5797 = vsel %vm909, %v5765, 0
        %v5798 = vsel %vm910, %v5766, 0
        %v5799 = vsel %vm911, %v5767, 0
        %v5800 = vsel %vm912, %v5768, 0
        %v5801 = vsel %vm913, %v5769, 0
        %v5802 = vsel %vm914, %v5770, 0
        %v5803 = vsel %vm915, %v5771, 0
        %v5804 = vsel %vm916, %v5772, 0
        %v5805 = vsel %vm917, %v5773, 0
        %s5806 = scalar_lea.vmem %s3, 192
        %v5807 = vld [vmem:[%s5806] sm:$0xf]
        %v5808 = vld [vmem:[%s5806 + $0x4] sm:$0xf]
        %v5809 = vld [vmem:[%s5806 + $0x8] sm:$0xf]
        %v5810 = vld [vmem:[%s5806 + $0xc] sm:$0xf]
        %v5811 = vld [vmem:[%s5806 + $0x10] sm:$0xf]
        %v5812 = vld [vmem:[%s5806 + $0x14] sm:$0xf]
        %v5813 = vld [vmem:[%s5806 + $0x18] sm:$0xf]
        %v5814 = vld [vmem:[%s5806 + $0x1c] sm:$0xf]
        %v5847 = vunpack.c.l.b16 %v5774
        %v5848 = vunpack.c.l.b16 %v5775
        %v5849 = vunpack.c.l.b16 %v5776
        %v5850 = vunpack.c.l.b16 %v5777
        %v5851 = vunpack.c.l.b16 %v5778
        %v5852 = vunpack.c.l.b16 %v5779
        %v5853 = vunpack.c.l.b16 %v5780
        %v5854 = vunpack.c.l.b16 %v5781
        %v5855 = vunpack.c.l.b16 %v5782
        %v5856 = vunpack.c.l.b16 %v5783
        %v5857 = vunpack.c.l.b16 %v5784
        %v5858 = vunpack.c.l.b16 %v5785
        %v5859 = vunpack.c.l.b16 %v5786
        %v5860 = vunpack.c.l.b16 %v5787
        %v5861 = vunpack.c.l.b16 %v5788
        %v5862 = vunpack.c.l.b16 %v5789
        %v5863 = vunpack.c.l.b16 %v5790
        %v5864 = vunpack.c.l.b16 %v5791
        %v5865 = vunpack.c.l.b16 %v5792
        %v5866 = vunpack.c.l.b16 %v5793
        %v5867 = vunpack.c.l.b16 %v5794
        %v5868 = vunpack.c.l.b16 %v5795
        %v5869 = vunpack.c.l.b16 %v5796
        %v5870 = vunpack.c.l.b16 %v5797
        %v5871 = vunpack.c.l.b16 %v5798
        %v5872 = vunpack.c.l.b16 %v5799
        %v5873 = vunpack.c.l.b16 %v5800
        %v5874 = vunpack.c.l.b16 %v5801
        %v5875 = vunpack.c.l.b16 %v5802
        %v5876 = vunpack.c.l.b16 %v5803
        %v5877 = vunpack.c.l.b16 %v5804
        %v5878 = vunpack.c.l.b16 %v5805
        %v5879 = vpack.c.b16 %v5848, %v5847
        %v5880 = vpack.c.b16 %v5850, %v5849
        %v5881 = vpack.c.b16 %v5852, %v5851
        %v5882 = vpack.c.b16 %v5854, %v5853
        %v5883 = vpack.c.b16 %v5856, %v5855
        %v5884 = vpack.c.b16 %v5858, %v5857
        %v5885 = vpack.c.b16 %v5860, %v5859
        %v5886 = vpack.c.b16 %v5862, %v5861
        %v5887 = vpack.c.b16 %v5864, %v5863
        %v5888 = vpack.c.b16 %v5866, %v5865
        %v5889 = vpack.c.b16 %v5868, %v5867
        %v5890 = vpack.c.b16 %v5870, %v5869
        %v5891 = vpack.c.b16 %v5872, %v5871
        %v5892 = vpack.c.b16 %v5874, %v5873
        %v5893 = vpack.c.b16 %v5876, %v5875
        %v5894 = vpack.c.b16 %v5878, %v5877
        %v5903 = vunpack.c.l.b16 %v5807
        %v5904 = vunpack.c.l.b16 %v5808
        %v5905 = vunpack.c.l.b16 %v5809
        %v5906 = vunpack.c.l.b16 %v5810
        %v5907 = vunpack.c.l.b16 %v5811
        %v5908 = vunpack.c.l.b16 %v5812
        %v5909 = vunpack.c.l.b16 %v5813
        %v5910 = vunpack.c.l.b16 %v5814
        %v5911 = vpack.c.b16 %v5904, %v5903
        %v5912 = vpack.c.b16 %v5906, %v5905
        %v5913 = vpack.c.b16 %v5908, %v5907
        %v5914 = vpack.c.b16 %v5910, %v5909
        %v5920 = vsel %vm3724, %v5879, 0
        %v5923 = vsel %vm3724, %v5880, 0
        %v5926 = vsel %vm3724, %v5881, 0
        %v5929 = vsel %vm3724, %v5882, 0
        %v5932 = vsel %vm3724, %v5883, 0
        %v5935 = vsel %vm3724, %v5884, 0
        %v5938 = vsel %vm3724, %v5885, 0
        %v5941 = vsel %vm3724, %v5886, 0
        %v5944 = vsel %vm3724, %v5887, 0
        %v5947 = vsel %vm3724, %v5888, 0
        %v5950 = vsel %vm3724, %v5889, 0
        %v5953 = vsel %vm3724, %v5890, 0
        %v5956 = vsel %vm3724, %v5891, 0
        %v5959 = vsel %vm3724, %v5892, 0
        %v5962 = vsel %vm3724, %v5893, 0
        %v5965 = vsel %vm3724, %v5894, 0
        %5967 = vmatpush.bf16.msra.mxu0 0
        %5968 = vmatpush.bf16.msra.mxu0 0
        %5969 = vmatpush.bf16.msra.mxu0 0
        %5970 = vmatpush.bf16.msra.mxu0 0
        %5971 = vmatpush.bf16.msra.mxu0 %v5914
        %5972 = vmatpush.bf16.msra.mxu0 %v5913
        %5973 = vmatpush.bf16.msra.mxu0 %v5912
        %5974 = vmatpush.bf16.msra.mxu0 %v5911
        %5975 = vmatmul.bf16.gmra.mxu0 %v5920
        %v5976 = vpop.f32.mrf.mxu0
        %v5977 = vadd.f32 0.0, %v5976
        %v5978 = vpop.f32.mrf.mxu0
        %v5979 = vadd.f32 0.0, %v5978
        %5980 = vmatmul.bf16.gmra.mxu0 %v5923
        %v5981 = vpop.f32.mrf.mxu0
        %v5982 = vadd.f32 0.0, %v5981
        %v5983 = vpop.f32.mrf.mxu0
        %v5984 = vadd.f32 0.0, %v5983
        %5985 = vmatmul.bf16.gmra.mxu0 %v5926
        %v5986 = vpop.f32.mrf.mxu0
        %v5987 = vadd.f32 0.0, %v5986
        %v5988 = vpop.f32.mrf.mxu0
        %v5989 = vadd.f32 0.0, %v5988
        %5990 = vmatmul.bf16.gmra.mxu0 %v5929
        %v5991 = vpop.f32.mrf.mxu0
        %v5992 = vadd.f32 0.0, %v5991
        %v5993 = vpop.f32.mrf.mxu0
        %v5994 = vadd.f32 0.0, %v5993
        %5995 = vmatmul.bf16.gmra.mxu0 %v5932
        %v5996 = vpop.f32.mrf.mxu0
        %v5997 = vadd.f32 0.0, %v5996
        %v5998 = vpop.f32.mrf.mxu0
        %v5999 = vadd.f32 0.0, %v5998
        %6000 = vmatmul.bf16.gmra.mxu0 %v5935
        %v6001 = vpop.f32.mrf.mxu0
        %v6002 = vadd.f32 0.0, %v6001
        %v6003 = vpop.f32.mrf.mxu0
        %v6004 = vadd.f32 0.0, %v6003
        %6005 = vmatmul.bf16.gmra.mxu0 %v5938
        %v6006 = vpop.f32.mrf.mxu0
        %v6007 = vadd.f32 0.0, %v6006
        %v6008 = vpop.f32.mrf.mxu0
        %v6009 = vadd.f32 0.0, %v6008
        %6010 = vmatmul.bf16.gmra.mxu0 %v5941
        %v6011 = vpop.f32.mrf.mxu0
        %v6012 = vadd.f32 0.0, %v6011
        %v6013 = vpop.f32.mrf.mxu0
        %v6014 = vadd.f32 0.0, %v6013
        %6015 = vmatmul.bf16.gmra.mxu0 %v5944
        %v6016 = vpop.f32.mrf.mxu0
        %v6017 = vadd.f32 0.0, %v6016
        %v6018 = vpop.f32.mrf.mxu0
        %v6019 = vadd.f32 0.0, %v6018
        %6020 = vmatmul.bf16.gmra.mxu0 %v5947
        %v6021 = vpop.f32.mrf.mxu0
        %v6022 = vadd.f32 0.0, %v6021
        %v6023 = vpop.f32.mrf.mxu0
        %v6024 = vadd.f32 0.0, %v6023
        %6025 = vmatmul.bf16.gmra.mxu0 %v5950
        %v6026 = vpop.f32.mrf.mxu0
        %v6027 = vadd.f32 0.0, %v6026
        %v6028 = vpop.f32.mrf.mxu0
        %v6029 = vadd.f32 0.0, %v6028
        %6030 = vmatmul.bf16.gmra.mxu0 %v5953
        %v6031 = vpop.f32.mrf.mxu0
        %v6032 = vadd.f32 0.0, %v6031
        %v6033 = vpop.f32.mrf.mxu0
        %v6034 = vadd.f32 0.0, %v6033
        %6035 = vmatmul.bf16.gmra.mxu0 %v5956
        %v6036 = vpop.f32.mrf.mxu0
        %v6037 = vadd.f32 0.0, %v6036
        %v6038 = vpop.f32.mrf.mxu0
        %v6039 = vadd.f32 0.0, %v6038
        %6040 = vmatmul.bf16.gmra.mxu0 %v5959
        %v6041 = vpop.f32.mrf.mxu0
        %v6042 = vadd.f32 0.0, %v6041
        %v6043 = vpop.f32.mrf.mxu0
        %v6044 = vadd.f32 0.0, %v6043
        %6045 = vmatmul.bf16.gmra.mxu0 %v5962
        %v6046 = vpop.f32.mrf.mxu0
        %v6047 = vadd.f32 0.0, %v6046
        %v6048 = vpop.f32.mrf.mxu0
        %v6049 = vadd.f32 0.0, %v6048
        %6050 = vmatmul.bf16.gmra.mxu0 %v5965
        %v6051 = vpop.f32.mrf.mxu0
        %v6052 = vadd.f32 0.0, %v6051
        %v6053 = vpop.f32.mrf.mxu0
        %v6054 = vadd.f32 0.0, %v6053
        %6055 = vdwg.mxu0
        %v6056 = vadd.f32 %v5678, %v5977
        %v6057 = vadd.f32 %v5679, %v5979
        %v6058 = vadd.f32 %v5680, %v5982
        %v6059 = vadd.f32 %v5681, %v5984
        %v6060 = vadd.f32 %v5682, %v5987
        %v6061 = vadd.f32 %v5683, %v5989
        %v6062 = vadd.f32 %v5684, %v5992
        %v6063 = vadd.f32 %v5685, %v5994
        %v6064 = vadd.f32 %v5686, %v5997
        %v6065 = vadd.f32 %v5687, %v5999
        %v6066 = vadd.f32 %v5688, %v6002
        %v6067 = vadd.f32 %v5689, %v6004
        %v6068 = vadd.f32 %v5690, %v6007
        %v6069 = vadd.f32 %v5691, %v6009
        %v6070 = vadd.f32 %v5692, %v6012
        %v6071 = vadd.f32 %v5693, %v6014
        %v6072 = vadd.f32 %v5694, %v6017
        %v6073 = vadd.f32 %v5695, %v6019
        %v6074 = vadd.f32 %v5696, %v6022
        %v6075 = vadd.f32 %v5697, %v6024
        %v6076 = vadd.f32 %v5698, %v6027
        %v6077 = vadd.f32 %v5699, %v6029
        %v6078 = vadd.f32 %v5700, %v6032
        %v6079 = vadd.f32 %v5701, %v6034
        %v6080 = vadd.f32 %v5702, %v6037
        %v6081 = vadd.f32 %v5703, %v6039
        %v6082 = vadd.f32 %v5704, %v6042
        %v6083 = vadd.f32 %v5705, %v6044
        %v6084 = vadd.f32 %v5706, %v6047
        %v6085 = vadd.f32 %v5707, %v6049
        %v6086 = vadd.f32 %v5708, %v6052
        %v6087 = vadd.f32 %v5709, %v6054
        %v6088 = vld [vmem:[#allocation2 + $0x28] sm:$0xff]
        %v6089 = vld [vmem:[#allocation2 + $0x30] sm:$0xff]
        %v6090 = vld [vmem:[#allocation2 + $0x38] sm:$0xff]
        %v6091 = vld [vmem:[#allocation2 + $0x40] sm:$0xff]
        %v6092 = vld [vmem:[#allocation2 + $0x48] sm:$0xff]
        %v6093 = vld [vmem:[#allocation2 + $0x50] sm:$0xff]
        %v6094 = vld [vmem:[#allocation2 + $0x58] sm:$0xff]
        %v6095 = vld [vmem:[#allocation2 + $0x60] sm:$0xff]
        %v6096 = vld [vmem:[#allocation2 + $0x68] sm:$0xff]
        %v6097 = vld [vmem:[#allocation2 + $0x70] sm:$0xff]
        %v6098 = vld [vmem:[#allocation2 + $0x78] sm:$0xff]
        %v6099 = vld [vmem:[#allocation2 + $0x80] sm:$0xff]
        %v6100 = vld [vmem:[#allocation2 + $0x88] sm:$0xff]
        %v6101 = vld [vmem:[#allocation2 + $0x90] sm:$0xff]
        %v6102 = vld [vmem:[#allocation2 + $0x98] sm:$0xff]
        %v6103 = vld [vmem:[#allocation2 + $0xa0] sm:$0xff]
        %v6104 = vld [vmem:[#allocation2 + $0xa8] sm:$0xff]
        %v6105 = vld [vmem:[#allocation2 + $0xb0] sm:$0xff]
        %v6106 = vld [vmem:[#allocation2 + $0xb8] sm:$0xff]
        %v6107 = vld [vmem:[#allocation2 + $0xc0] sm:$0xff]
        %v6108 = vld [vmem:[#allocation2 + $0xc8] sm:$0xff]
        %v6109 = vld [vmem:[#allocation2 + $0xd0] sm:$0xff]
        %v6110 = vld [vmem:[#allocation2 + $0xd8] sm:$0xff]
        %v6111 = vld [vmem:[#allocation2 + $0xe0] sm:$0xff]
        %v6112 = vld [vmem:[#allocation2 + $0xe8] sm:$0xff]
        %v6113 = vld [vmem:[#allocation2 + $0xf0] sm:$0xff]
        %v6114 = vld [vmem:[#allocation2 + $0xf8] sm:$0xff]
        %v6115 = vld [vmem:[#allocation2 + $0x100] sm:$0xff]
        %v6116 = vld [vmem:[#allocation2 + $0x108] sm:$0xff]
        %v6117 = vld [vmem:[#allocation2 + $0x110] sm:$0xff]
        %v6118 = vld [vmem:[#allocation2 + $0x118] sm:$0xff]
        %v6119 = vld [vmem:[#allocation2 + $0x120] sm:$0xff]
        %v6120 = vpack.c.bf16 %v6089, %v6088
        %v6121 = vpack.c.bf16 %v6091, %v6090
        %v6122 = vpack.c.bf16 %v6093, %v6092
        %v6123 = vpack.c.bf16 %v6095, %v6094
        %v6124 = vpack.c.bf16 %v6097, %v6096
        %v6125 = vpack.c.bf16 %v6099, %v6098
        %v6126 = vpack.c.bf16 %v6101, %v6100
        %v6127 = vpack.c.bf16 %v6103, %v6102
        %v6128 = vpack.c.bf16 %v6105, %v6104
        %v6129 = vpack.c.bf16 %v6107, %v6106
        %v6130 = vpack.c.bf16 %v6109, %v6108
        %v6131 = vpack.c.bf16 %v6111, %v6110
        %v6132 = vpack.c.bf16 %v6113, %v6112
        %v6133 = vpack.c.bf16 %v6115, %v6114
        %v6134 = vpack.c.bf16 %v6117, %v6116
        %v6135 = vpack.c.bf16 %v6119, %v6118
        %s6136 = scalar_lea.vmem %s3, 224
        %v6137 = vld [vmem:[%s6136] sm:$0xf]
        %v6138 = vld [vmem:[%s6136 + $0x4] sm:$0xf]
        %v6139 = vld [vmem:[%s6136 + $0x8] sm:$0xf]
        %v6140 = vld [vmem:[%s6136 + $0xc] sm:$0xf]
        %v6141 = vld [vmem:[%s6136 + $0x10] sm:$0xf]
        %v6142 = vld [vmem:[%s6136 + $0x14] sm:$0xf]
        %v6143 = vld [vmem:[%s6136 + $0x18] sm:$0xf]
        %v6144 = vld [vmem:[%s6136 + $0x1c] sm:$0xf]
        %v6153 = vunpack.c.l.b16 %v6137
        %v6154 = vunpack.c.l.b16 %v6138
        %v6155 = vunpack.c.l.b16 %v6139
        %v6156 = vunpack.c.l.b16 %v6140
        %v6157 = vunpack.c.l.b16 %v6141
        %v6158 = vunpack.c.l.b16 %v6142
        %v6159 = vunpack.c.l.b16 %v6143
        %v6160 = vunpack.c.l.b16 %v6144
        %v6161 = vpack.c.b16 %v6154, %v6153
        %v6162 = vpack.c.b16 %v6156, %v6155
        %v6163 = vpack.c.b16 %v6158, %v6157
        %v6164 = vpack.c.b16 %v6160, %v6159
        %v6170 = vsel %vm3724, %v6120, 0
        %v6173 = vsel %vm3724, %v6121, 0
        %v6176 = vsel %vm3724, %v6122, 0
        %v6179 = vsel %vm3724, %v6123, 0
        %v6182 = vsel %vm3724, %v6124, 0
        %v6185 = vsel %vm3724, %v6125, 0
        %v6188 = vsel %vm3724, %v6126, 0
        %v6191 = vsel %vm3724, %v6127, 0
        %v6194 = vsel %vm3724, %v6128, 0
        %v6197 = vsel %vm3724, %v6129, 0
        %v6200 = vsel %vm3724, %v6130, 0
        %v6203 = vsel %vm3724, %v6131, 0
        %v6206 = vsel %vm3724, %v6132, 0
        %v6209 = vsel %vm3724, %v6133, 0
        %v6212 = vsel %vm3724, %v6134, 0
        %v6215 = vsel %vm3724, %v6135, 0
        %6217 = vmatpush.bf16.msra.mxu0 0
        %6218 = vmatpush.bf16.msra.mxu0 0
        %6219 = vmatpush.bf16.msra.mxu0 0
        %6220 = vmatpush.bf16.msra.mxu0 0
        %6221 = vmatpush.bf16.msra.mxu0 %v6164
        %6222 = vmatpush.bf16.msra.mxu0 %v6163
        %6223 = vmatpush.bf16.msra.mxu0 %v6162
        %6224 = vmatpush.bf16.msra.mxu0 %v6161
        %6225 = vmatmul.bf16.gmra.mxu0 %v6170
        %v6226 = vpop.f32.mrf.mxu0
        %v6227 = vadd.f32 0.0, %v6226
        %v6228 = vpop.f32.mrf.mxu0
        %v6229 = vadd.f32 0.0, %v6228
        %6230 = vmatmul.bf16.gmra.mxu0 %v6173
        %v6231 = vpop.f32.mrf.mxu0
        %v6232 = vadd.f32 0.0, %v6231
        %v6233 = vpop.f32.mrf.mxu0
        %v6234 = vadd.f32 0.0, %v6233
        %6235 = vmatmul.bf16.gmra.mxu0 %v6176
        %v6236 = vpop.f32.mrf.mxu0
        %v6237 = vadd.f32 0.0, %v6236
        %v6238 = vpop.f32.mrf.mxu0
        %v6239 = vadd.f32 0.0, %v6238
        %6240 = vmatmul.bf16.gmra.mxu0 %v6179
        %v6241 = vpop.f32.mrf.mxu0
        %v6242 = vadd.f32 0.0, %v6241
        %v6243 = vpop.f32.mrf.mxu0
        %v6244 = vadd.f32 0.0, %v6243
        %6245 = vmatmul.bf16.gmra.mxu0 %v6182
        %v6246 = vpop.f32.mrf.mxu0
        %v6247 = vadd.f32 0.0, %v6246
        %v6248 = vpop.f32.mrf.mxu0
        %v6249 = vadd.f32 0.0, %v6248
        %6250 = vmatmul.bf16.gmra.mxu0 %v6185
        %v6251 = vpop.f32.mrf.mxu0
        %v6252 = vadd.f32 0.0, %v6251
        %v6253 = vpop.f32.mrf.mxu0
        %v6254 = vadd.f32 0.0, %v6253
        %6255 = vmatmul.bf16.gmra.mxu0 %v6188
        %v6256 = vpop.f32.mrf.mxu0
        %v6257 = vadd.f32 0.0, %v6256
        %v6258 = vpop.f32.mrf.mxu0
        %v6259 = vadd.f32 0.0, %v6258
        %6260 = vmatmul.bf16.gmra.mxu0 %v6191
        %v6261 = vpop.f32.mrf.mxu0
        %v6262 = vadd.f32 0.0, %v6261
        %v6263 = vpop.f32.mrf.mxu0
        %v6264 = vadd.f32 0.0, %v6263
        %6265 = vmatmul.bf16.gmra.mxu0 %v6194
        %v6266 = vpop.f32.mrf.mxu0
        %v6267 = vadd.f32 0.0, %v6266
        %v6268 = vpop.f32.mrf.mxu0
        %v6269 = vadd.f32 0.0, %v6268
        %6270 = vmatmul.bf16.gmra.mxu0 %v6197
        %v6271 = vpop.f32.mrf.mxu0
        %v6272 = vadd.f32 0.0, %v6271
        %v6273 = vpop.f32.mrf.mxu0
        %v6274 = vadd.f32 0.0, %v6273
        %6275 = vmatmul.bf16.gmra.mxu0 %v6200
        %v6276 = vpop.f32.mrf.mxu0
        %v6277 = vadd.f32 0.0, %v6276
        %v6278 = vpop.f32.mrf.mxu0
        %v6279 = vadd.f32 0.0, %v6278
        %6280 = vmatmul.bf16.gmra.mxu0 %v6203
        %v6281 = vpop.f32.mrf.mxu0
        %v6282 = vadd.f32 0.0, %v6281
        %v6283 = vpop.f32.mrf.mxu0
        %v6284 = vadd.f32 0.0, %v6283
        %6285 = vmatmul.bf16.gmra.mxu0 %v6206
        %v6286 = vpop.f32.mrf.mxu0
        %v6287 = vadd.f32 0.0, %v6286
        %v6288 = vpop.f32.mrf.mxu0
        %v6289 = vadd.f32 0.0, %v6288
        %6290 = vmatmul.bf16.gmra.mxu0 %v6209
        %v6291 = vpop.f32.mrf.mxu0
        %v6292 = vadd.f32 0.0, %v6291
        %v6293 = vpop.f32.mrf.mxu0
        %v6294 = vadd.f32 0.0, %v6293
        %6295 = vmatmul.bf16.gmra.mxu0 %v6212
        %v6296 = vpop.f32.mrf.mxu0
        %v6297 = vadd.f32 0.0, %v6296
        %v6298 = vpop.f32.mrf.mxu0
        %v6299 = vadd.f32 0.0, %v6298
        %6300 = vmatmul.bf16.gmra.mxu0 %v6215
        %v6301 = vpop.f32.mrf.mxu0
        %v6302 = vadd.f32 0.0, %v6301
        %v6303 = vpop.f32.mrf.mxu0
        %v6304 = vadd.f32 0.0, %v6303
        %6305 = vdwg.mxu0
        %v6306 = vadd.f32 %v6056, %v6227
        %v6307 = vadd.f32 %v6057, %v6229
        %v6308 = vadd.f32 %v6058, %v6232
        %v6309 = vadd.f32 %v6059, %v6234
        %v6310 = vadd.f32 %v6060, %v6237
        %v6311 = vadd.f32 %v6061, %v6239
        %v6312 = vadd.f32 %v6062, %v6242
        %v6313 = vadd.f32 %v6063, %v6244
        %v6314 = vadd.f32 %v6064, %v6247
        %v6315 = vadd.f32 %v6065, %v6249
        %v6316 = vadd.f32 %v6066, %v6252
        %v6317 = vadd.f32 %v6067, %v6254
        %v6318 = vadd.f32 %v6068, %v6257
        %v6319 = vadd.f32 %v6069, %v6259
        %v6320 = vadd.f32 %v6070, %v6262
        %v6321 = vadd.f32 %v6071, %v6264
        %v6322 = vadd.f32 %v6072, %v6267
        %v6323 = vadd.f32 %v6073, %v6269
        %v6324 = vadd.f32 %v6074, %v6272
        %v6325 = vadd.f32 %v6075, %v6274
        %v6326 = vadd.f32 %v6076, %v6277
        %v6327 = vadd.f32 %v6077, %v6279
        %v6328 = vadd.f32 %v6078, %v6282
        %v6329 = vadd.f32 %v6079, %v6284
        %v6330 = vadd.f32 %v6080, %v6287
        %v6331 = vadd.f32 %v6081, %v6289
        %v6332 = vadd.f32 %v6082, %v6292
        %v6333 = vadd.f32 %v6083, %v6294
        %v6334 = vadd.f32 %v6084, %v6297
        %v6335 = vadd.f32 %v6085, %v6299
        %v6336 = vadd.f32 %v6086, %v6302
        %v6337 = vadd.f32 %v6087, %v6304
        %v6338 = vld [vmem:[#allocation2 + $0x29] sm:$0xff]
        %v6339 = vld [vmem:[#allocation2 + $0x31] sm:$0xff]
        %v6340 = vld [vmem:[#allocation2 + $0x39] sm:$0xff]
        %v6341 = vld [vmem:[#allocation2 + $0x41] sm:$0xff]
        %v6342 = vld [vmem:[#allocation2 + $0x49] sm:$0xff]
        %v6343 = vld [vmem:[#allocation2 + $0x51] sm:$0xff]
        %v6344 = vld [vmem:[#allocation2 + $0x59] sm:$0xff]
        %v6345 = vld [vmem:[#allocation2 + $0x61] sm:$0xff]
        %v6346 = vld [vmem:[#allocation2 + $0x69] sm:$0xff]
        %v6347 = vld [vmem:[#allocation2 + $0x71] sm:$0xff]
        %v6348 = vld [vmem:[#allocation2 + $0x79] sm:$0xff]
        %v6349 = vld [vmem:[#allocation2 + $0x81] sm:$0xff]
        %v6350 = vld [vmem:[#allocation2 + $0x89] sm:$0xff]
        %v6351 = vld [vmem:[#allocation2 + $0x91] sm:$0xff]
        %v6352 = vld [vmem:[#allocation2 + $0x99] sm:$0xff]
        %v6353 = vld [vmem:[#allocation2 + $0xa1] sm:$0xff]
        %v6354 = vld [vmem:[#allocation2 + $0xa9] sm:$0xff]
        %v6355 = vld [vmem:[#allocation2 + $0xb1] sm:$0xff]
        %v6356 = vld [vmem:[#allocation2 + $0xb9] sm:$0xff]
        %v6357 = vld [vmem:[#allocation2 + $0xc1] sm:$0xff]
        %v6358 = vld [vmem:[#allocation2 + $0xc9] sm:$0xff]
        %v6359 = vld [vmem:[#allocation2 + $0xd1] sm:$0xff]
        %v6360 = vld [vmem:[#allocation2 + $0xd9] sm:$0xff]
        %v6361 = vld [vmem:[#allocation2 + $0xe1] sm:$0xff]
        %v6362 = vld [vmem:[#allocation2 + $0xe9] sm:$0xff]
        %v6363 = vld [vmem:[#allocation2 + $0xf1] sm:$0xff]
        %v6364 = vld [vmem:[#allocation2 + $0xf9] sm:$0xff]
        %v6365 = vld [vmem:[#allocation2 + $0x101] sm:$0xff]
        %v6366 = vld [vmem:[#allocation2 + $0x109] sm:$0xff]
        %v6367 = vld [vmem:[#allocation2 + $0x111] sm:$0xff]
        %v6368 = vld [vmem:[#allocation2 + $0x119] sm:$0xff]
        %v6369 = vld [vmem:[#allocation2 + $0x121] sm:$0xff]
        %v6370 = vpack.c.bf16 %v6338, %v6338
        %v6371 = vpack.c.bf16 %v6339, %v6339
        %v6372 = vpack.c.bf16 %v6340, %v6340
        %v6373 = vpack.c.bf16 %v6341, %v6341
        %v6374 = vpack.c.bf16 %v6342, %v6342
        %v6375 = vpack.c.bf16 %v6343, %v6343
        %v6376 = vpack.c.bf16 %v6344, %v6344
        %v6377 = vpack.c.bf16 %v6345, %v6345
        %v6378 = vpack.c.bf16 %v6346, %v6346
        %v6379 = vpack.c.bf16 %v6347, %v6347
        %v6380 = vpack.c.bf16 %v6348, %v6348
        %v6381 = vpack.c.bf16 %v6349, %v6349
        %v6382 = vpack.c.bf16 %v6350, %v6350
        %v6383 = vpack.c.bf16 %v6351, %v6351
        %v6384 = vpack.c.bf16 %v6352, %v6352
        %v6385 = vpack.c.bf16 %v6353, %v6353
        %v6386 = vpack.c.bf16 %v6354, %v6354
        %v6387 = vpack.c.bf16 %v6355, %v6355
        %v6388 = vpack.c.bf16 %v6356, %v6356
        %v6389 = vpack.c.bf16 %v6357, %v6357
        %v6390 = vpack.c.bf16 %v6358, %v6358
        %v6391 = vpack.c.bf16 %v6359, %v6359
        %v6392 = vpack.c.bf16 %v6360, %v6360
        %v6393 = vpack.c.bf16 %v6361, %v6361
        %v6394 = vpack.c.bf16 %v6362, %v6362
        %v6395 = vpack.c.bf16 %v6363, %v6363
        %v6396 = vpack.c.bf16 %v6364, %v6364
        %v6397 = vpack.c.bf16 %v6365, %v6365
        %v6398 = vpack.c.bf16 %v6366, %v6366
        %v6399 = vpack.c.bf16 %v6367, %v6367
        %v6400 = vpack.c.bf16 %v6368, %v6368
        %v6401 = vpack.c.bf16 %v6369, %v6369
        %v6402 = vsel %vm1494, %v6370, 0
        %v6403 = vsel %vm1495, %v6371, 0
        %v6404 = vsel %vm1496, %v6372, 0
        %v6405 = vsel %vm1497, %v6373, 0
        %v6406 = vsel %vm1498, %v6374, 0
        %v6407 = vsel %vm1499, %v6375, 0
        %v6408 = vsel %vm1500, %v6376, 0
        %v6409 = vsel %vm1501, %v6377, 0
        %v6410 = vsel %vm1502, %v6378, 0
        %v6411 = vsel %vm1503, %v6379, 0
        %v6412 = vsel %vm1504, %v6380, 0
        %v6413 = vsel %vm1505, %v6381, 0
        %v6414 = vsel %vm1506, %v6382, 0
        %v6415 = vsel %vm1507, %v6383, 0
        %v6416 = vsel %vm1508, %v6384, 0
        %v6417 = vsel %vm1509, %v6385, 0
        %v6418 = vsel %vm1510, %v6386, 0
        %v6419 = vsel %vm1511, %v6387, 0
        %v6420 = vsel %vm1512, %v6388, 0
        %v6421 = vsel %vm1513, %v6389, 0
        %v6422 = vsel %vm1514, %v6390, 0
        %v6423 = vsel %vm1515, %v6391, 0
        %v6424 = vsel %vm1516, %v6392, 0
        %v6425 = vsel %vm1517, %v6393, 0
        %v6426 = vsel %vm1518, %v6394, 0
        %v6427 = vsel %vm1519, %v6395, 0
        %v6428 = vsel %vm1520, %v6396, 0
        %v6429 = vsel %vm1521, %v6397, 0
        %v6430 = vsel %vm1522, %v6398, 0
        %v6431 = vsel %vm1523, %v6399, 0
        %v6432 = vsel %vm1524, %v6400, 0
        %v6433 = vsel %vm1525, %v6401, 0
        %s6434 = scalar_lea.vmem %s3, 256
        %v6435 = vld [vmem:[%s6434] sm:$0xf]
        %v6436 = vld [vmem:[%s6434 + $0x4] sm:$0xf]
        %v6437 = vld [vmem:[%s6434 + $0x8] sm:$0xf]
        %v6438 = vld [vmem:[%s6434 + $0xc] sm:$0xf]
        %v6439 = vld [vmem:[%s6434 + $0x10] sm:$0xf]
        %v6440 = vld [vmem:[%s6434 + $0x14] sm:$0xf]
        %v6441 = vld [vmem:[%s6434 + $0x18] sm:$0xf]
        %v6442 = vld [vmem:[%s6434 + $0x1c] sm:$0xf]
        %v6475 = vunpack.c.l.b16 %v6402
        %v6476 = vunpack.c.l.b16 %v6403
        %v6477 = vunpack.c.l.b16 %v6404
        %v6478 = vunpack.c.l.b16 %v6405
        %v6479 = vunpack.c.l.b16 %v6406
        %v6480 = vunpack.c.l.b16 %v6407
        %v6481 = vunpack.c.l.b16 %v6408
        %v6482 = vunpack.c.l.b16 %v6409
        %v6483 = vunpack.c.l.b16 %v6410
        %v6484 = vunpack.c.l.b16 %v6411
        %v6485 = vunpack.c.l.b16 %v6412
        %v6486 = vunpack.c.l.b16 %v6413
        %v6487 = vunpack.c.l.b16 %v6414
        %v6488 = vunpack.c.l.b16 %v6415
        %v6489 = vunpack.c.l.b16 %v6416
        %v6490 = vunpack.c.l.b16 %v6417
        %v6491 = vunpack.c.l.b16 %v6418
        %v6492 = vunpack.c.l.b16 %v6419
        %v6493 = vunpack.c.l.b16 %v6420
        %v6494 = vunpack.c.l.b16 %v6421
        %v6495 = vunpack.c.l.b16 %v6422
        %v6496 = vunpack.c.l.b16 %v6423
        %v6497 = vunpack.c.l.b16 %v6424
        %v6498 = vunpack.c.l.b16 %v6425
        %v6499 = vunpack.c.l.b16 %v6426
        %v6500 = vunpack.c.l.b16 %v6427
        %v6501 = vunpack.c.l.b16 %v6428
        %v6502 = vunpack.c.l.b16 %v6429
        %v6503 = vunpack.c.l.b16 %v6430
        %v6504 = vunpack.c.l.b16 %v6431
        %v6505 = vunpack.c.l.b16 %v6432
        %v6506 = vunpack.c.l.b16 %v6433
        %v6507 = vpack.c.b16 %v6476, %v6475
        %v6508 = vpack.c.b16 %v6478, %v6477
        %v6509 = vpack.c.b16 %v6480, %v6479
        %v6510 = vpack.c.b16 %v6482, %v6481
        %v6511 = vpack.c.b16 %v6484, %v6483
        %v6512 = vpack.c.b16 %v6486, %v6485
        %v6513 = vpack.c.b16 %v6488, %v6487
        %v6514 = vpack.c.b16 %v6490, %v6489
        %v6515 = vpack.c.b16 %v6492, %v6491
        %v6516 = vpack.c.b16 %v6494, %v6493
        %v6517 = vpack.c.b16 %v6496, %v6495
        %v6518 = vpack.c.b16 %v6498, %v6497
        %v6519 = vpack.c.b16 %v6500, %v6499
        %v6520 = vpack.c.b16 %v6502, %v6501
        %v6521 = vpack.c.b16 %v6504, %v6503
        %v6522 = vpack.c.b16 %v6506, %v6505
        %v6531 = vunpack.c.l.b16 %v6435
        %v6532 = vunpack.c.l.b16 %v6436
        %v6533 = vunpack.c.l.b16 %v6437
        %v6534 = vunpack.c.l.b16 %v6438
        %v6535 = vunpack.c.l.b16 %v6439
        %v6536 = vunpack.c.l.b16 %v6440
        %v6537 = vunpack.c.l.b16 %v6441
        %v6538 = vunpack.c.l.b16 %v6442
        %v6539 = vpack.c.b16 %v6532, %v6531
        %v6540 = vpack.c.b16 %v6534, %v6533
        %v6541 = vpack.c.b16 %v6536, %v6535
        %v6542 = vpack.c.b16 %v6538, %v6537
        %v6548 = vsel %vm3724, %v6507, 0
        %v6551 = vsel %vm3724, %v6508, 0
        %v6554 = vsel %vm3724, %v6509, 0
        %v6557 = vsel %vm3724, %v6510, 0
        %v6560 = vsel %vm3724, %v6511, 0
        %v6563 = vsel %vm3724, %v6512, 0
        %v6566 = vsel %vm3724, %v6513, 0
        %v6569 = vsel %vm3724, %v6514, 0
        %v6572 = vsel %vm3724, %v6515, 0
        %v6575 = vsel %vm3724, %v6516, 0
        %v6578 = vsel %vm3724, %v6517, 0
        %v6581 = vsel %vm3724, %v6518, 0
        %v6584 = vsel %vm3724, %v6519, 0
        %v6587 = vsel %vm3724, %v6520, 0
        %v6590 = vsel %vm3724, %v6521, 0
        %v6593 = vsel %vm3724, %v6522, 0
        %6595 = vmatpush.bf16.msra.mxu0 0
        %6596 = vmatpush.bf16.msra.mxu0 0
        %6597 = vmatpush.bf16.msra.mxu0 0
        %6598 = vmatpush.bf16.msra.mxu0 0
        %6599 = vmatpush.bf16.msra.mxu0 %v6542
        %6600 = vmatpush.bf16.msra.mxu0 %v6541
        %6601 = vmatpush.bf16.msra.mxu0 %v6540
        %6602 = vmatpush.bf16.msra.mxu0 %v6539
        %6603 = vmatmul.bf16.gmra.mxu0 %v6548
        %v6604 = vpop.f32.mrf.mxu0
        %v6605 = vadd.f32 0.0, %v6604
        %v6606 = vpop.f32.mrf.mxu0
        %v6607 = vadd.f32 0.0, %v6606
        %6608 = vmatmul.bf16.gmra.mxu0 %v6551
        %v6609 = vpop.f32.mrf.mxu0
        %v6610 = vadd.f32 0.0, %v6609
        %v6611 = vpop.f32.mrf.mxu0
        %v6612 = vadd.f32 0.0, %v6611
        %6613 = vmatmul.bf16.gmra.mxu0 %v6554
        %v6614 = vpop.f32.mrf.mxu0
        %v6615 = vadd.f32 0.0, %v6614
        %v6616 = vpop.f32.mrf.mxu0
        %v6617 = vadd.f32 0.0, %v6616
        %6618 = vmatmul.bf16.gmra.mxu0 %v6557
        %v6619 = vpop.f32.mrf.mxu0
        %v6620 = vadd.f32 0.0, %v6619
        %v6621 = vpop.f32.mrf.mxu0
        %v6622 = vadd.f32 0.0, %v6621
        %6623 = vmatmul.bf16.gmra.mxu0 %v6560
        %v6624 = vpop.f32.mrf.mxu0
        %v6625 = vadd.f32 0.0, %v6624
        %v6626 = vpop.f32.mrf.mxu0
        %v6627 = vadd.f32 0.0, %v6626
        %6628 = vmatmul.bf16.gmra.mxu0 %v6563
        %v6629 = vpop.f32.mrf.mxu0
        %v6630 = vadd.f32 0.0, %v6629
        %v6631 = vpop.f32.mrf.mxu0
        %v6632 = vadd.f32 0.0, %v6631
        %6633 = vmatmul.bf16.gmra.mxu0 %v6566
        %v6634 = vpop.f32.mrf.mxu0
        %v6635 = vadd.f32 0.0, %v6634
        %v6636 = vpop.f32.mrf.mxu0
        %v6637 = vadd.f32 0.0, %v6636
        %6638 = vmatmul.bf16.gmra.mxu0 %v6569
        %v6639 = vpop.f32.mrf.mxu0
        %v6640 = vadd.f32 0.0, %v6639
        %v6641 = vpop.f32.mrf.mxu0
        %v6642 = vadd.f32 0.0, %v6641
        %6643 = vmatmul.bf16.gmra.mxu0 %v6572
        %v6644 = vpop.f32.mrf.mxu0
        %v6645 = vadd.f32 0.0, %v6644
        %v6646 = vpop.f32.mrf.mxu0
        %v6647 = vadd.f32 0.0, %v6646
        %6648 = vmatmul.bf16.gmra.mxu0 %v6575
        %v6649 = vpop.f32.mrf.mxu0
        %v6650 = vadd.f32 0.0, %v6649
        %v6651 = vpop.f32.mrf.mxu0
        %v6652 = vadd.f32 0.0, %v6651
        %6653 = vmatmul.bf16.gmra.mxu0 %v6578
        %v6654 = vpop.f32.mrf.mxu0
        %v6655 = vadd.f32 0.0, %v6654
        %v6656 = vpop.f32.mrf.mxu0
        %v6657 = vadd.f32 0.0, %v6656
        %6658 = vmatmul.bf16.gmra.mxu0 %v6581
        %v6659 = vpop.f32.mrf.mxu0
        %v6660 = vadd.f32 0.0, %v6659
        %v6661 = vpop.f32.mrf.mxu0
        %v6662 = vadd.f32 0.0, %v6661
        %6663 = vmatmul.bf16.gmra.mxu0 %v6584
        %v6664 = vpop.f32.mrf.mxu0
        %v6665 = vadd.f32 0.0, %v6664
        %v6666 = vpop.f32.mrf.mxu0
        %v6667 = vadd.f32 0.0, %v6666
        %6668 = vmatmul.bf16.gmra.mxu0 %v6587
        %v6669 = vpop.f32.mrf.mxu0
        %v6670 = vadd.f32 0.0, %v6669
        %v6671 = vpop.f32.mrf.mxu0
        %v6672 = vadd.f32 0.0, %v6671
        %6673 = vmatmul.bf16.gmra.mxu0 %v6590
        %v6674 = vpop.f32.mrf.mxu0
        %v6675 = vadd.f32 0.0, %v6674
        %v6676 = vpop.f32.mrf.mxu0
        %v6677 = vadd.f32 0.0, %v6676
        %6678 = vmatmul.bf16.gmra.mxu0 %v6593
        %v6679 = vpop.f32.mrf.mxu0
        %v6680 = vadd.f32 0.0, %v6679
        %v6681 = vpop.f32.mrf.mxu0
        %v6682 = vadd.f32 0.0, %v6681
        %6683 = vdwg.mxu0
        %v6684 = vadd.f32 %v6306, %v6605
        %v6685 = vadd.f32 %v6307, %v6607
        %v6686 = vadd.f32 %v6308, %v6610
        %v6687 = vadd.f32 %v6309, %v6612
        %v6688 = vadd.f32 %v6310, %v6615
        %v6689 = vadd.f32 %v6311, %v6617
        %v6690 = vadd.f32 %v6312, %v6620
        %v6691 = vadd.f32 %v6313, %v6622
        %v6692 = vadd.f32 %v6314, %v6625
        %v6693 = vadd.f32 %v6315, %v6627
        %v6694 = vadd.f32 %v6316, %v6630
        %v6695 = vadd.f32 %v6317, %v6632
        %v6696 = vadd.f32 %v6318, %v6635
        %v6697 = vadd.f32 %v6319, %v6637
        %v6698 = vadd.f32 %v6320, %v6640
        %v6699 = vadd.f32 %v6321, %v6642
        %v6700 = vadd.f32 %v6322, %v6645
        %v6701 = vadd.f32 %v6323, %v6647
        %v6702 = vadd.f32 %v6324, %v6650
        %v6703 = vadd.f32 %v6325, %v6652
        %v6704 = vadd.f32 %v6326, %v6655
        %v6705 = vadd.f32 %v6327, %v6657
        %v6706 = vadd.f32 %v6328, %v6660
        %v6707 = vadd.f32 %v6329, %v6662
        %v6708 = vadd.f32 %v6330, %v6665
        %v6709 = vadd.f32 %v6331, %v6667
        %v6710 = vadd.f32 %v6332, %v6670
        %v6711 = vadd.f32 %v6333, %v6672
        %v6712 = vadd.f32 %v6334, %v6675
        %v6713 = vadd.f32 %v6335, %v6677
        %v6714 = vadd.f32 %v6336, %v6680
        %v6715 = vadd.f32 %v6337, %v6682
        %v6716 = vld [vmem:[%s4] sm:$0x1]
        %v6718 = vperm.slane %v6716, 0
        %v6720 = vadd.f32 %v6684, %v6718
        %v6721 = vadd.f32 %v6685, %v6718
        %v6722 = vadd.f32 %v6686, %v6718
        %v6723 = vadd.f32 %v6687, %v6718
        %v6724 = vadd.f32 %v6688, %v6718
        %v6725 = vadd.f32 %v6689, %v6718
        %v6726 = vadd.f32 %v6690, %v6718
        %v6727 = vadd.f32 %v6691, %v6718
        %v6728 = vadd.f32 %v6692, %v6718
        %v6729 = vadd.f32 %v6693, %v6718
        %v6730 = vadd.f32 %v6694, %v6718
        %v6731 = vadd.f32 %v6695, %v6718
        %v6732 = vadd.f32 %v6696, %v6718
        %v6733 = vadd.f32 %v6697, %v6718
        %v6734 = vadd.f32 %v6698, %v6718
        %v6735 = vadd.f32 %v6699, %v6718
        %v6736 = vadd.f32 %v6700, %v6718
        %v6737 = vadd.f32 %v6701, %v6718
        %v6738 = vadd.f32 %v6702, %v6718
        %v6739 = vadd.f32 %v6703, %v6718
        %v6740 = vadd.f32 %v6704, %v6718
        %v6741 = vadd.f32 %v6705, %v6718
        %v6742 = vadd.f32 %v6706, %v6718
        %v6743 = vadd.f32 %v6707, %v6718
        %v6744 = vadd.f32 %v6708, %v6718
        %v6745 = vadd.f32 %v6709, %v6718
        %v6746 = vadd.f32 %v6710, %v6718
        %v6747 = vadd.f32 %v6711, %v6718
        %v6748 = vadd.f32 %v6712, %v6718
        %v6749 = vadd.f32 %v6713, %v6718
        %v6750 = vadd.f32 %v6714, %v6718
        %v6751 = vadd.f32 %v6715, %v6718
        %v6752 = vmax.f32 %v6720, 0.0
        %v6753 = vmax.f32 %v6721, 0.0
        %v6754 = vmax.f32 %v6722, 0.0
        %v6755 = vmax.f32 %v6723, 0.0
        %v6756 = vmax.f32 %v6724, 0.0
        %v6757 = vmax.f32 %v6725, 0.0
        %v6758 = vmax.f32 %v6726, 0.0
        %v6759 = vmax.f32 %v6727, 0.0
        %v6760 = vmax.f32 %v6728, 0.0
        %v6761 = vmax.f32 %v6729, 0.0
        %v6762 = vmax.f32 %v6730, 0.0
        %v6763 = vmax.f32 %v6731, 0.0
        %v6764 = vmax.f32 %v6732, 0.0
        %v6765 = vmax.f32 %v6733, 0.0
        %v6766 = vmax.f32 %v6734, 0.0
        %v6767 = vmax.f32 %v6735, 0.0
        %v6768 = vmax.f32 %v6736, 0.0
        %v6769 = vmax.f32 %v6737, 0.0
        %v6770 = vmax.f32 %v6738, 0.0
        %v6771 = vmax.f32 %v6739, 0.0
        %v6772 = vmax.f32 %v6740, 0.0
        %v6773 = vmax.f32 %v6741, 0.0
        %v6774 = vmax.f32 %v6742, 0.0
        %v6775 = vmax.f32 %v6743, 0.0
        %v6776 = vmax.f32 %v6744, 0.0
        %v6777 = vmax.f32 %v6745, 0.0
        %v6778 = vmax.f32 %v6746, 0.0
        %v6779 = vmax.f32 %v6747, 0.0
        %v6780 = vmax.f32 %v6748, 0.0
        %v6781 = vmax.f32 %v6749, 0.0
        %v6782 = vmax.f32 %v6750, 0.0
        %v6783 = vmax.f32 %v6751, 0.0
        %v6784 = vadd.f32 %v6752, %v6753
        %v6785 = vadd.f32 %v6784, %v6754
        %v6786 = vadd.f32 %v6785, %v6755
        %v6787 = vadd.f32 %v6786, %v6756
        %v6788 = vadd.f32 %v6787, %v6757
        %v6789 = vadd.f32 %v6788, %v6758
        %v6790 = vadd.f32 %v6789, %v6759
        %v6791 = vadd.f32 %v6790, %v6760
        %v6792 = vadd.f32 %v6791, %v6761
        %v6793 = vadd.f32 %v6792, %v6762
        %v6794 = vadd.f32 %v6793, %v6763
        %v6795 = vadd.f32 %v6794, %v6764
        %v6796 = vadd.f32 %v6795, %v6765
        %v6797 = vadd.f32 %v6796, %v6766
        %v6798 = vadd.f32 %v6797, %v6767
        %v6799 = vadd.f32 %v6798, %v6768
        %v6800 = vadd.f32 %v6799, %v6769
        %v6801 = vadd.f32 %v6800, %v6770
        %v6802 = vadd.f32 %v6801, %v6771
        %v6803 = vadd.f32 %v6802, %v6772
        %v6804 = vadd.f32 %v6803, %v6773
        %v6805 = vadd.f32 %v6804, %v6774
        %v6806 = vadd.f32 %v6805, %v6775
        %v6807 = vadd.f32 %v6806, %v6776
        %v6808 = vadd.f32 %v6807, %v6777
        %v6809 = vadd.f32 %v6808, %v6778
        %v6810 = vadd.f32 %v6809, %v6779
        %v6811 = vadd.f32 %v6810, %v6780
        %v6812 = vadd.f32 %v6811, %v6781
        %v6813 = vadd.f32 %v6812, %v6782
        %v6814 = vadd.f32 %v6813, %v6783
        %v6815 = vrot.slane %v6814, 4
        %v6816 = vadd.f32 %v6814, %v6815
        %v6817 = vrot.slane %v6816, 2
        %v6818 = vadd.f32 %v6816, %v6817
        %v6819 = vrot.slane %v6818, 1
        %v6820 = vadd.f32 %v6818, %v6819
        %v6821 = vmul.f32 %v6820, 0.00390625
        %v6822 = vpack.c.bf16 %v6821, %v6821
        %v6823 = vld [vmem:[%s5] sm:$0xf]
        %v6824 = vld [vmem:[%s5 + $0x4] sm:$0xf]
        %v6825 = vld [vmem:[%s5 + $0x8] sm:$0xf]
        %v6826 = vld [vmem:[%s5 + $0xc] sm:$0xf]
        %v6827 = vld [vmem:[%s5 + $0x10] sm:$0xf]
        %v6828 = vld [vmem:[%s5 + $0x14] sm:$0xf]
        %v6829 = vld [vmem:[%s5 + $0x18] sm:$0xf]
        %v6830 = vld [vmem:[%s5 + $0x1c] sm:$0xf]
        %v6831 = vld [vmem:[%s5 + $0x20] sm:$0xf]
        %v6832 = vld [vmem:[%s5 + $0x24] sm:$0xf]
        %v6833 = vld [vmem:[%s5 + $0x28] sm:$0xf]
        %v6834 = vld [vmem:[%s5 + $0x2c] sm:$0xf]
        %v6835 = vld [vmem:[%s5 + $0x30] sm:$0xf]
        %v6836 = vld [vmem:[%s5 + $0x34] sm:$0xf]
        %v6837 = vld [vmem:[%s5 + $0x38] sm:$0xf]
        %v6838 = vld [vmem:[%s5 + $0x3c] sm:$0xf]
        %v6839 = vld [vmem:[%s6] sm:$0x1]
        %v6856 = vunpack.c.l.b16 %v6823
        %v6857 = vunpack.c.l.b16 %v6824
        %v6858 = vunpack.c.l.b16 %v6825
        %v6859 = vunpack.c.l.b16 %v6826
        %v6860 = vunpack.c.l.b16 %v6827
        %v6861 = vunpack.c.l.b16 %v6828
        %v6862 = vunpack.c.l.b16 %v6829
        %v6863 = vunpack.c.l.b16 %v6830
        %v6864 = vunpack.c.l.b16 %v6831
        %v6865 = vunpack.c.l.b16 %v6832
        %v6866 = vunpack.c.l.b16 %v6833
        %v6867 = vunpack.c.l.b16 %v6834
        %v6868 = vunpack.c.l.b16 %v6835
        %v6869 = vunpack.c.l.b16 %v6836
        %v6870 = vunpack.c.l.b16 %v6837
        %v6871 = vunpack.c.l.b16 %v6838
        %v6872 = vpack.c.b16 %v6857, %v6856
        %v6873 = vpack.c.b16 %v6859, %v6858
        %v6874 = vpack.c.b16 %v6861, %v6860
        %v6875 = vpack.c.b16 %v6863, %v6862
        %v6876 = vpack.c.b16 %v6865, %v6864
        %v6877 = vpack.c.b16 %v6867, %v6866
        %v6878 = vpack.c.b16 %v6869, %v6868
        %v6879 = vpack.c.b16 %v6871, %v6870
        %6888 = vmatpush.bf16.msra.mxu0 %v6879
        %6889 = vmatpush.bf16.msra.mxu0 %v6878
        %6890 = vmatpush.bf16.msra.mxu0 %v6877
        %6891 = vmatpush.bf16.msra.mxu0 %v6876
        %6892 = vmatpush.bf16.msra.mxu0 %v6875
        %6893 = vmatpush.bf16.msra.mxu0 %v6874
        %6894 = vmatpush.bf16.msra.mxu0 %v6873
        %6895 = vmatpush.bf16.msra.mxu0 %v6872
        %6896 = vmatmul.bf16.gmra.mxu0 %v6822
        %v6897 = vpop.f32.mrf.mxu0
        %v6898 = vadd.f32 %v6839, %v6897
        %v6899 = vpop.f32.mrf.mxu0
        %6900 = vdwg.mxu0
        %6901 = vst [vmem:[%s270] sm:$0x1] %v6898
        %s6902 = sand.u32 %s181, 1
        %s6903 = scalar_lea.sflag [#allocation4], %s6902
        %s6904 = sand.u32 %s181, 1
        %s6905 = scalar_lea.vmem [#allocation3], %s6904
        // Predicated region
        $region49: #{simple_cnn_forward.1} parent=47 // pred_check
          %p6906 = pneg %p191
        $region50: #{simple_cnn_forward.1} parent=47 // pred_check_branch
          %6908 = sbr.rel (%p6906) target = $region52
        $region51: #{simple_cnn_forward.1} parent=47 // pred_region
          %6910 = vsyncadd %s6903, 0
          %s6911 = scalar_lea.hbm %s7, %s21
          %s6913 = sshll.u32 %s6905, 4
          %s6914 = int_to_ptr.vmem [resolvable:$true] %s6913
          %s6915 = sshll.u32 %s6911, 4
          %s6916 = int_to_ptr.hbm [resolvable:$true] %s6915
          %6918 = dma.vmem_to_hbm [thread:$0]  %s6914, 16, %s6916, %s6903
        $region52: #{simple_cnn_forward.1} parent=47 // pred_fallthru
          _
      $region48: #{simple_cnn_forward.1} parent=5 // pred_fallthru
        _
      %p6919 = scmp.le.s32.totalorder 2, %s16
      // Predicated region
      $region53: #{simple_cnn_forward.1} parent=5 // pred_check
        %p6920 = pneg %p6919
      $region54: #{simple_cnn_forward.1} parent=5 // pred_check_branch
        %6922 = sbr.rel (%p6920) target = $region56
      $region55: #{simple_cnn_forward.1} parent=5 // pred_region
        %s6923 = ssub.s32 %s16, 2
        // Predicated region
        $region57: #{simple_cnn_forward.1} parent=55 // pred_check
          %p6924 = pneg %p197
        $region58: #{simple_cnn_forward.1} parent=55 // pred_check_branch
          %6926 = sbr.rel (%p6924) target = $region60
        $region59: #{simple_cnn_forward.1} parent=55 // pred_region
          %s6927 = sand.u32 %s182, 1
          %s6928 = scalar_lea.sflag [#allocation4], %s6927
          %s6929 = sand.u32 %s182, 1
          %s6930 = scalar_lea.vmem [#allocation3], %s6929
          %6932 = dma.done %s6928, 16
        $region60: #{simple_cnn_forward.1} parent=55 // pred_fallthru
          _
      $region56: #{simple_cnn_forward.1} parent=5 // pred_fallthru
        _
    $region6: #{simple_cnn_forward.1} parent=1 // loop_footer
      %s20 = sadd.s32 1, %s16
    $region7: #{simple_cnn_forward.1} parent=1 // loop_footer_branch
      %15 = sbr.rel target = $region3
    $region8: #{simple_cnn_forward.1} parent=1 // loop_exit
      _
    %6933 = vsyncpa [#allocation4], 1
    %s6934 = scalar_lea.sflag [#allocation4], 1
    %6935 = vsyncpa %s6934, 1

</llo_original>
